<compile_context>
chip_gen: v5e
topology: v5e:2x2
jax: 0.10.0
libtpu: 0.0.40
codegen_flags: <defaults>
</compile_context>

<pallas_src>
import jax
import jax.numpy as jnp
from jax.experimental import pallas as pl
from jax.experimental.pallas import tpu as pltpu

EPS = 1e-5
NUM_CLASSES = 1000
VMEM_LIMIT = 32 * 1024 * 1024


# ----------------------------- parameter helpers ---------------------------

def _uniform(key, shape, lo, hi):
    return jax.random.uniform(key, shape, jnp.float32, lo, hi)


def _bn_params(key, c):
    k = jax.random.split(key, 4)
    return (_uniform(k[0], (c,), 0.5, 1.5), _uniform(k[1], (c,), -0.1, 0.1),
            _uniform(k[2], (c,), -0.1, 0.1), _uniform(k[3], (c,), 0.5, 1.5))


def _fold_bn(w, bn):
    gamma, beta, mean, var = bn
    scale = gamma / jnp.sqrt(var + EPS)
    return w * scale[:, None, None, None], beta - mean * scale


def _bn_affine(bn):
    gamma, beta, mean, var = bn
    s = gamma / jnp.sqrt(var + EPS)
    return s, beta - mean * s


def _expand_groups(w, groups):
    # Grouped weight (Cout, Cin/g, 3, 3) -> block-diagonal full (Cout, Cin, 3, 3).
    cout, cin_g = w.shape[0], w.shape[1]
    cout_g = cout // groups
    full = jnp.zeros((cout, cin_g * groups, 3, 3), w.dtype)
    for g in range(groups):
        full = full.at[g * cout_g:(g + 1) * cout_g,
                       g * cin_g:(g + 1) * cin_g].set(w[g * cout_g:(g + 1) * cout_g])
    return full


def make_block_params(key, cin, cout, stride, groups=1):
    """RepVGG-style block re-parameterized into a single fused 3x3 conv + SE."""
    cin_g = cin // groups
    ks = jax.random.split(key, 10)
    w3 = _uniform(ks[0], (cout, cin_g, 3, 3), -0.3, 0.3)
    fw, fb = _fold_bn(w3, _bn_params(ks[1], cout))
    w1 = _uniform(ks[2], (cout, cin_g, 1, 1), -0.3, 0.3)
    fw1, fb1 = _fold_bn(w1, _bn_params(ks[3], cout))
    fw = fw + jnp.pad(fw1, ((0, 0), (0, 0), (1, 1), (1, 1)))
    fb = fb + fb1
    o_idx = jnp.arange(cout)
    if cin == cout and stride == 1:                       # identity-BN branch
        w_id = jnp.zeros((cout, cin_g, 3, 3), jnp.float32)
        w_id = w_id.at[o_idx, o_idx % cin_g, 1, 1].set(1.0)
        fwi, fbi = _fold_bn(w_id, _bn_params(ks[4], cout))
        fw, fb = fw + fwi, fb + fbi
    if cin == cout:                                       # 3x3 avgpool-BN branch
        w_av = jnp.zeros((cout, cin_g, 3, 3), jnp.float32)
        w_av = w_av.at[o_idx, o_idx % cin_g, :, :].set(1.0 / 9.0)
        fwa, fba = _fold_bn(w_av, _bn_params(ks[5], cout))
        fw, fb = fw + fwa, fb + fba
    cr = max(1, cout // 4)
    return dict(
        fw=_expand_groups(fw, groups) if groups > 1 else fw, fb=fb,
        cin=cin, cout=cout, cr=cr, stride=stride,
        se_w1=_uniform(ks[6], (cout, cr), -0.3, 0.3),
        se_b1=_uniform(ks[7], (cr,), -0.1, 0.1),
        se_w2=_uniform(ks[8], (cr, cout), -0.3, 0.3),
        se_b2=_uniform(ks[9], (cout,), -0.1, 0.1),
    )


def _build_select(hin, win, stride):
    """0/1 gather matrices S (9, HoWo, HinWin): S[t] @ x_flat == tap-t patch rows of
    a 3x3 / pad-1 / stride-s conv (zero rows where the tap falls in padding)."""
    ho = (hin - 1) // stride + 1
    wo = (win - 1) // stride + 1
    oi, oj = jnp.meshgrid(jnp.arange(ho), jnp.arange(wo), indexing="ij")
    mats = []
    for di in range(3):
        for dj in range(3):
            ii = stride * oi + di - 1
            ij = stride * oj + dj - 1
            valid = (ii >= 0) & (ii < hin) & (ij >= 0) & (ij < win)
            q = jnp.clip(ii, 0, hin - 1) * win + jnp.clip(ij, 0, win - 1)
            sel = jax.nn.one_hot(q.reshape(-1), hin * win, dtype=jnp.float32)
            mats.append(sel * valid.reshape(-1, 1).astype(jnp.float32))
    return jnp.stack(mats)


def _to_taps(fw):      # (Cout, Cin, 3, 3) -> (9, Cin, Cout), tap index = 3*di + dj
    cout, cin = fw.shape[0], fw.shape[1]
    return jnp.transpose(fw, (2, 3, 1, 0)).reshape(9, cin, cout)


def _to_mat(fw):       # (Cout, Cin, 3, 3) -> (9*Cin, Cout), tap-major / channel-minor
    return jnp.transpose(fw, (2, 3, 1, 0)).reshape(-1, fw.shape[0])


def _pad_to(a, shape):
    return jnp.pad(a, [(0, s - d) for d, s in zip(a.shape, shape)])


def im2col(x, k, stride, pad):
    # XLA-side patch extraction, used ONLY for the network input (block 1).
    B, H, W, C = x.shape
    Ho = (H + 2 * pad - k) // stride + 1
    Wo = (W + 2 * pad - k) // stride + 1
    xp = jnp.pad(x, ((0, 0), (pad, pad), (pad, pad), (0, 0)))
    cols = []
    for ki in range(k):
        for kj in range(k):
            cols.append(xp[:, ki:ki + stride * (Ho - 1) + 1:stride,
                              kj:kj + stride * (Wo - 1) + 1:stride, :])
    return jnp.concatenate(cols, axis=-1).reshape(B, Ho * Wo, k * k * C)


# ----------------------------- model builder -------------------------------

def build_simpnet(key, planes=(8, 16, 32), num_blocks=(2, 2, 1), image_hw=32):
    assert num_blocks[-1] == 1 and num_blocks[-2] != 1
    last_planes = planes[-1]
    planes = planes[:-1]
    num_blocks = num_blocks[:-1]
    in_planes0 = min(64, planes[0])
    keys = iter(jax.random.split(key, 64))

    blocks = []

    def add_block(cin, cout, stride, groups=1, pair=False, first=False):
        blk = make_block_params(next(keys), cin, cout, stride, groups)
        blk["pair"], blk["first"] = pair, first
        blocks.append(blk)
        return len(blocks) - 1

    b_init0a = add_block(3, in_planes0, 2, first=True)
    b_init0b = add_block(in_planes0, planes[0], 2)
    b_inits = [add_block(planes[i], planes[i + 1], 2) for i in range(len(planes) - 1)]
    b_streams = [[add_block(p, p, 1) for _ in range(nb - 1)]
                 for nb, p in zip(num_blocks, planes)]

    affines, downs_aff, b_downs = [], {}, []

    def add_aff(c):
        affines.append(_bn_affine(_bn_params(next(keys), c)))
        return len(affines) - 1

    for i in range(len(planes) - 1):
        if i == 0:
            b_downs.append(add_block(planes[0], planes[1], 2))
        else:
            downs_aff[i] = (add_aff(planes[i]), add_aff(planes[i]))
            b_downs.append(add_block(2 * planes[i], planes[i + 1], 2,
                                     groups=2, pair=True))
    pc = planes[-1]
    comb_aff = (add_aff(pc), add_aff(pc))
    b_comb0 = add_block(2 * pc, pc, 1, groups=2, pair=True)
    b_comb1 = add_block(pc, last_planes, 2)

    # weight-slot assignment (pair blocks get even/odd interleaved-concat halves)
    wtaps_raw = []
    for blk in blocks:
        if blk["first"]:
            continue
        if blk["pair"]:
            blk["widx_a"] = len(wtaps_raw); wtaps_raw.append(_to_taps(blk["fw"][:, 0::2]))
            blk["widx_b"] = len(wtaps_raw); wtaps_raw.append(_to_taps(blk["fw"][:, 1::2]))
        else:
            blk["widx"] = len(wtaps_raw); wtaps_raw.append(_to_taps(blk["fw"]))

    # spatial gather matrices (deduped on (spatial size, stride))
    s_list, s_cache = [], {}

    def s_slot(h, stride):
        k_ = (h, stride)
        if k_ not in s_cache:
            s_cache[k_] = len(s_list)
            s_list.append(_build_select(h, h, stride))
        return s_cache[k_]

    # --- emit the forward program (mirrors SimpNet.forward exactly) ---------
    instrs, hw_of, counter = [], {}, [0]

    def fresh():
        counter[0] += 1
        return counter[0]

    def out_hw(h, stride):
        return (h - 1) // stride + 1

    def emit_single(src, bslot):
        blk = blocks[bslot]
        h_in = hw_of[src]
        dst = fresh()
        hw_of[dst] = out_hw(h_in, blk["stride"])
        instrs.append(dict(op="single", src=src, dst=dst,
                           sidx=s_slot(h_in, blk["stride"]),
                           pin=h_in * h_in, pout=hw_of[dst] * hw_of[dst],
                           widx=blk["widx"], bidx=bslot,
                           cin=blk["cin"], cout=blk["cout"], cr=blk["cr"]))
        return dst

    def emit_pair(src_a, src_b, bslot, aff_a, aff_b):
        blk = blocks[bslot]
        h_in = hw_of[src_a]
        dst = fresh()
        hw_of[dst] = out_hw(h_in, blk["stride"])
        instrs.append(dict(op="pair", src_a=src_a, src_b=src_b, dst=dst,
                           sidx=s_slot(h_in, blk["stride"]),
                           pin=h_in * h_in, pout=hw_of[dst] * hw_of[dst],
                           widx_a=blk["widx_a"], widx_b=blk["widx_b"], bidx=bslot,
                           cin=blk["cin"] // 2, cout=blk["cout"], cr=blk["cr"],
                           aff_a=aff_a, aff_b=aff_b))
        return dst

    blk0 = blocks[b_init0a]
    v0 = fresh()
    hw_of[v0] = out_hw(image_hw, blk0["stride"])
    block1_meta = dict(dst=v0, bidx=b_init0a, cout=blk0["cout"], cr=blk0["cr"])

    x = emit_single(v0, b_init0b)
    x_list = [x]
    for bs in b_inits:
        x = emit_single(x, bs)
        x_list.append(x)

    y_old = None
    n_down = len(b_downs)
    for i in range(len(b_streams)):
        y = x_list[i]
        for bs in b_streams[i]:
            y = emit_single(y, bs)
        if y_old is None:
            y_old = emit_single(y, b_downs[0])
        elif i < n_down:
            aa, ab = downs_aff[i]
            y_old = emit_pair(y, y_old, b_downs[i], aa, ab)
        else:
            y_old = (y, y_old)

    a_v, b_v = y_old
    final = emit_single(emit_pair(a_v, b_v, b_comb0, comb_aff[0], comb_aff[1]),
                        b_comb1)

    # --- pack all parameters into a handful of padded operands --------------
    cout_max = max(b["cout"] for b in blocks)
    cr_max = max(b["cr"] for b in blocks)
    cin_max = max(w.shape[1] for w in wtaps_raw)
    pout_max = max(s.shape[1] for s in s_list)
    pin_max = max(s.shape[2] for s in s_list)
    c_aff_max = max(s.shape[0] for (s, _) in affines)

    def pad1(v, n):
        return jnp.pad(v, (0, n - v.shape[0]))

    npad = ((NUM_CLASSES + 127) // 128) * 128            # 1024: lane-dense logits
    head_w = _uniform(next(keys), (last_planes, NUM_CLASSES), -0.05, 0.05)
    head_b = _uniform(next(keys), (NUM_CLASSES,), -0.05, 0.05)

    params = dict(
        w1mat=_to_mat(blocks[b_init0a]["fw"]),
        wtaps=jnp.stack([_pad_to(w, (9, cin_max, cout_max)) for w in wtaps_raw]),
        s_all=jnp.stack([_pad_to(s, (9, pout_max, pin_max)) for s in s_list]),
        sew1=jnp.stack([_pad_to(b["se_w1"], (cout_max, cr_max)) for b in blocks]),
        sew2=jnp.stack([_pad_to(b["se_w2"], (cr_max, cout_max)) for b in blocks]),
        vecs=jnp.stack([jnp.stack([pad1(b["fb"], cout_max),
                                   pad1(b["se_b1"], cout_max),
                                   pad1(b["se_b2"], cout_max)]) for b in blocks]),
        aff=jnp.stack([jnp.stack([pad1(s, c_aff_max), pad1(t, c_aff_max)])
                       for (s, t) in affines]),
        head=jnp.concatenate(
            [jnp.pad(head_w, ((0, 0), (0, npad - NUM_CLASSES))),
             jnp.pad(head_b, (0, npad - NUM_CLASSES)).reshape(1, npad)], axis=0),
    )
    prog = dict(block1=block1_meta, steps=instrs, final=final,
                stride0=blk0["stride"], p0=hw_of[v0] * hw_of[v0],
                k0=9 * blk0["cin"],
                head=dict(c=last_planes, npad=npad, nc=NUM_CLASSES))
    return params, prog


# ------------------------------ fused kernel --------------------------------

def make_kernel(prog):
    b1 = prog["block1"]
    steps = prog["steps"]
    head = prog["head"]

    def kernel(p0_ref, w1_ref, s_ref, wt_ref, sw1_ref, sw2_ref, vec_ref,
               aff_ref, head_ref, o_ref):
        def se_relu(conv, bidx, cout, cr):
            # SE (gap -> fc -> relu -> fc -> sigmoid -> scale) then ReLU, all f32.
            gap = jnp.mean(conv, axis=0, keepdims=True)                 # (1, cout)
            t = jnp.maximum(
                jnp.dot(gap, sw1_ref[bidx, 0:cout, 0:cr],
                        preferred_element_type=jnp.float32)
                + vec_ref[bidx, 1:2, 0:cr], 0.0)
            s = jax.nn.sigmoid(
                jnp.dot(t, sw2_ref[bidx, 0:cr, 0:cout],
                        preferred_element_type=jnp.float32)
                + vec_ref[bidx, 2:3, 0:cout])
            return jnp.maximum(conv * s, 0.0)

        env = {}
        # Block 1: conv over the pre-extracted input patches (one matmul).
        conv = (jnp.dot(p0_ref[0], w1_ref[...], preferred_element_type=jnp.float32)
                + vec_ref[b1["bidx"], 0:1, 0:b1["cout"]])
        env[b1["dst"]] = se_relu(conv, b1["bidx"], b1["cout"], b1["cr"])

        # Remaining blocks: in-kernel im2col via 0/1 gather matmuls; activations
        # stay in VMEM/vregs for the whole network.
        for st in steps:
            pout, pin, cout, cr = st["pout"], st["pin"], st["cout"], st["cr"]
            acc = jnp.zeros((pout, cout), jnp.float32)
            if st["op"] == "single":
                x = env[st["src"]]
                cin = st["cin"]
                for t in range(9):
                    S = s_ref[st["sidx"], t, 0:pout, 0:pin]
                    W = wt_ref[st["widx"], t, 0:cin, 0:cout]
                    g = jnp.dot(S, x, preferred_element_type=jnp.float32)
                    acc = acc + jnp.dot(g, W, preferred_element_type=jnp.float32)
            else:
                # MultiBatchNorm2d affines + Concat2d(shuffle) + grouped conv,
                # folded into the even/odd weight halves (single accumulation
                # stream; the interleaved concat never materializes).
                ca = st["cin"]
                a = env[st["src_a"]]
                b = env[st["src_b"]]
                a = a * aff_ref[st["aff_a"], 0:1, 0:ca] + aff_ref[st["aff_a"], 1:2, 0:ca]
                b = b * aff_ref[st["aff_b"], 0:1, 0:ca] + aff_ref[st["aff_b"], 1:2, 0:ca]
                for t in range(9):
                    S = s_ref[st["sidx"], t, 0:pout, 0:pin]
                    Wa = wt_ref[st["widx_a"], t, 0:ca, 0:cout]
                    Wb = wt_ref[st["widx_b"], t, 0:ca, 0:cout]
                    z = (jnp.dot(a, Wa, preferred_element_type=jnp.float32)
                         + jnp.dot(b, Wb, preferred_element_type=jnp.float32))
                    acc = acc + jnp.dot(S, z, preferred_element_type=jnp.float32)
            conv = acc + vec_ref[st["bidx"], 0:1, 0:cout]
            env[st["dst"]] = se_relu(conv, st["bidx"], cout, cr)

        # ClassifierHead fused in: global average pool (f32) + linear.
        # TODO(synk): dropout_lin is identity at inference; no RNG applied.
        z = env[prog["final"]]
        gap = jnp.mean(z, axis=0, keepdims=True)                        # (1, C) f32
        c = head["c"]
        o_ref[0] = (jnp.dot(gap, head_ref[0:c, :], preferred_element_type=jnp.float32)
                    + head_ref[c:c + 1, :])

    return kernel


def make_forward(prog):
    kernel = make_kernel(prog)
    p0, k0, npad = prog["p0"], prog["k0"], prog["head"]["npad"]

    def forward(params, img_nchw):
        # NCHW -> NHWC.  Only the network *input* is patch-extracted in XLA (it
        # must cross HBM anyway); no intermediate activation ever leaves the kernel.
        x = jnp.transpose(img_nchw, (0, 2, 3, 1)).astype(jnp.float32)
        patches0 = im2col(x, 3, prog["stride0"], 1)                     # (B, p0, k0)
        B = x.shape[0]

        def rep(a):
            nd = a.ndim
            return pl.BlockSpec(a.shape, lambda b: (0,) * nd)  # grid-invariant

        out = pl.pallas_call(
            kernel,
            out_shape=jax.ShapeDtypeStruct((B, 1, npad), jnp.float32),
            grid=(B,),
            in_specs=[pl.BlockSpec((1, p0, k0), lambda b: (b, 0, 0)),
                      rep(params["w1mat"]), rep(params["s_all"]),
                      rep(params["wtaps"]), rep(params["sew1"]),
                      rep(params["sew2"]), rep(params["vecs"]),
                      rep(params["aff"]), rep(params["head"])],
            out_specs=pl.BlockSpec((1, 1, npad), lambda b: (b, 0, 0)),
            compiler_params=pltpu.CompilerParams(
                dimension_semantics=("parallel",),   # one sample per v7x TensorCore
                vmem_limit_bytes=VMEM_LIMIT),
        )(patches0, params["w1mat"], params["s_all"], params["wtaps"],
          params["sew1"], params["sew2"], params["vecs"], params["aff"],
          params["head"])
        return out.reshape(B, npad)[:, :prog["head"]["nc"]]

    return forward


# ---------------------- pure-XLA f32 reference (same math) ------------------

def forward_reference(params, img_nchw, prog):
    hp = jax.lax.Precision.HIGHEST
    vecs, sew1, sew2 = params["vecs"], params["sew1"], params["sew2"]
    s_all, wt, aff = params["s_all"], params["wtaps"], params["aff"]

    def se_relu(conv, bidx, cout, cr):
        gap = jnp.mean(conv, axis=1, keepdims=True)
        t = jnp.maximum(jnp.einsum("bxc,cr->bxr", gap, sew1[bidx, :cout, :cr],
                                   precision=hp) + vecs[bidx, 1, :cr], 0.0)
        s = jax.nn.sigmoid(jnp.einsum("bxr,rc->bxc", t, sew2[bidx, :cr, :cout],
                                      precision=hp) + vecs[bidx, 2, :cout])
        return jnp.maximum(conv * s, 0.0)

    x = jnp.transpose(img_nchw, (0, 2, 3, 1)).astype(jnp.float32)
    patches0 = im2col(x, 3, prog["stride0"], 1)
    env = {}
    m = prog["block1"]
    conv = (jnp.einsum("bpk,kc->bpc", patches0, params["w1mat"], precision=hp)
            + vecs[m["bidx"], 0, :m["cout"]])
    env[m["dst"]] = se_relu(conv, m["bidx"], m["cout"], m["cr"])

    for st in prog["steps"]:
        pout, pin, cout = st["pout"], st["pin"], st["cout"]
        acc = 0.0
        if st["op"] == "single":
            xv = env[st["src"]]
            cin = st["cin"]
            for t in range(9):
                S = s_all[st["sidx"], t, :pout, :pin]
                W = wt[st["widx"], t, :cin, :cout]
                g = jnp.einsum("pq,bqc->bpc", S, xv, precision=hp)
                acc = acc + jnp.einsum("bpc,cd->bpd", g, W, precision=hp)
        else:
            ca = st["cin"]
            a = env[st["src_a"]]
            b = env[st["src_b"]]
            a = a * aff[st["aff_a"], 0, :ca] + aff[st["aff_a"], 1, :ca]
            b = b * aff[st["aff_b"], 0, :ca] + aff[st["aff_b"], 1, :ca]
            for t in range(9):
                S = s_all[st["sidx"], t, :pout, :pin]
                Wa = wt[st["widx_a"], t, :ca, :cout]
                Wb = wt[st["widx_b"], t, :ca, :cout]
                z = (jnp.einsum("bqc,cd->bqd", a, Wa, precision=hp)
                     + jnp.einsum("bqc,cd->bqd", b, Wb, precision=hp))
                acc = acc + jnp.einsum("pq,bqd->bpd", S, z, precision=hp)
        conv = acc + vecs[st["bidx"], 0, :cout]
        env[st["dst"]] = se_relu(conv, st["bidx"], cout, st["cr"])

    z = env[prog["final"]]
    gap = jnp.mean(z, axis=1)
    c = prog["head"]["c"]
    logits = jnp.einsum("bc,cn->bn", gap, params["head"][:c], precision=hp) \
        + params["head"][c]
    return logits[:, :prog["head"]["nc"]]


# ----------------------------------- main -----------------------------------

if __name__ == "__main__":
    key = jax.random.PRNGKey(0)
    pkey, xkey = jax.random.split(key)
    params, prog = build_simpnet(pkey, planes=(8, 16, 32), num_blocks=(2, 2, 1),
                                 image_hw=32)
    img = jax.random.normal(xkey, (2, 3, 32, 32), jnp.float32)          # NCHW

    forward = jax.jit(make_forward(prog))
    logits = forward(params, img)
    jax.block_until_ready(logits)
    assert logits.shape == (2, NUM_CLASSES) and logits.dtype == jnp.float32
    assert bool(jnp.all(jnp.isfinite(logits)))

    # End-to-end check of the fused kernel against a pure-XLA f32 reference of
    # the same math (same packed parameters and program).
    ref = jax.jit(lambda p, im: forward_reference(p, im, prog))(params, img)
    jax.block_until_ready(ref)
    rel_err = float(jnp.max(jnp.abs(logits - ref)) / (jnp.max(jnp.abs(ref)) + 1e-6))
    assert rel_err < 0.1, f"kernel vs reference mismatch: rel err {rel_err}"
    print("KERNEL_OK")
</pallas_src>

<mosaic_0001>
module attributes {stable_mosaic.version = 11 : i64} {
  func.func @kernel(%arg0: i32, %arg1: memref<1x256x27xf32, #tpu.memory_space<vmem>>, %arg2: memref<27x8xf32, #tpu.memory_space<vmem>>, %arg3: memref<5x9x64x256xf32, #tpu.memory_space<vmem>>, %arg4: memref<8x9x16x32xf32, #tpu.memory_space<vmem>>, %arg5: memref<8x32x8xf32, #tpu.memory_space<vmem>>, %arg6: memref<8x8x32xf32, #tpu.memory_space<vmem>>, %arg7: memref<8x3x32xf32, #tpu.memory_space<vmem>>, %arg8: memref<2x2x16xf32, #tpu.memory_space<vmem>>, %arg9: memref<33x1024xf32, #tpu.memory_space<vmem>>, %arg10: memref<1x1x1024xf32, #tpu.memory_space<vmem>>) attributes {dimension_semantics = [#tpu.dimension_semantics<parallel>], iteration_bounds = array<i64: 2>, scalar_prefetch = 0 : i64, scratch_operands = 0 : i64, tpu.core_type = #tpu.core_type<tc>, window_params = [{transform_indices = @transform_0, window_bounds = array<i64: 1, 256, 27>}, {pipeline_mode = #tpu.pipeline_mode<synchronous>, transform_indices = @transform_1, window_bounds = array<i64: 27, 8>}, {pipeline_mode = #tpu.pipeline_mode<synchronous>, transform_indices = @transform_2, window_bounds = array<i64: 5, 9, 64, 256>}, {pipeline_mode = #tpu.pipeline_mode<synchronous>, transform_indices = @transform_3, window_bounds = array<i64: 8, 9, 16, 32>}, {pipeline_mode = #tpu.pipeline_mode<synchronous>, transform_indices = @transform_4, window_bounds = array<i64: 8, 32, 8>}, {pipeline_mode = #tpu.pipeline_mode<synchronous>, transform_indices = @transform_5, window_bounds = array<i64: 8, 8, 32>}, {pipeline_mode = #tpu.pipeline_mode<synchronous>, transform_indices = @transform_6, window_bounds = array<i64: 8, 3, 32>}, {pipeline_mode = #tpu.pipeline_mode<synchronous>, transform_indices = @transform_7, window_bounds = array<i64: 2, 2, 16>}, {pipeline_mode = #tpu.pipeline_mode<synchronous>, transform_indices = @transform_8, window_bounds = array<i64: 33, 1024>}, {transform_indices = @transform_9, window_bounds = array<i64: 1, 1, 1024>}]} {
    %c0 = arith.constant 0 : index
    %c0_0 = arith.constant 0 : index
    %c0_1 = arith.constant 0 : index
    %0 = vector.load %arg1[%c0, %c0_0, %c0_1] : memref<1x256x27xf32, #tpu.memory_space<vmem>>, vector<1x256x27xf32>
    %1 = vector.shape_cast %0 : vector<1x256x27xf32> to vector<256x27xf32>
    %c0_2 = arith.constant 0 : index
    %c0_3 = arith.constant 0 : index
    %2 = vector.load %arg2[%c0_2, %c0_3] : memref<27x8xf32, #tpu.memory_space<vmem>>, vector<27x8xf32>
    %cst = arith.constant dense<0.000000e+00> : vector<256x8xf32>
    %3 = tpu.matmul %1, %2, %cst {dimension_numbers = #tpu.dot_dimension_numbers<[1], [0], [0], [1], [0, 0, 1, 1], [], []>} : vector<256x27xf32>, vector<27x8xf32>, vector<256x8xf32> -> vector<256x8xf32>
    %c0_4 = arith.constant 0 : index
    %c0_5 = arith.constant 0 : index
    %c0_6 = arith.constant 0 : index
    %4 = vector.load %arg7[%c0_4, %c0_5, %c0_6] : memref<8x3x32xf32, #tpu.memory_space<vmem>>, vector<1x1x8xf32>
    %5 = vector.shape_cast %4 : vector<1x1x8xf32> to vector<1x8xf32>
    %6 = vector.broadcast %5 : vector<1x8xf32> to vector<256x8xf32>
    %7 = arith.addf %3, %6 : vector<256x8xf32>
    %cst_7 = arith.constant dense<0.000000e+00> : vector<8xf32>
    %8 = vector.multi_reduction <add>, %7, %cst_7 [0] : vector<256x8xf32> to vector<8xf32>
    %9 = vector.shape_cast %8 : vector<8xf32> to vector<1x8xf32>
    %cst_8 = arith.constant 2.560000e+02 : f32
    %10 = vector.broadcast %cst_8 : f32 to vector<1x8xf32>
    %11 = arith.divf %9, %10 : vector<1x8xf32>
    %c0_9 = arith.constant 0 : index
    %c0_10 = arith.constant 0 : index
    %c0_11 = arith.constant 0 : index
    %12 = vector.load %arg5[%c0_9, %c0_10, %c0_11] : memref<8x32x8xf32, #tpu.memory_space<vmem>>, vector<1x8x2xf32>
    %13 = vector.shape_cast %12 : vector<1x8x2xf32> to vector<8x2xf32>
    %cst_12 = arith.constant dense<0.000000e+00> : vector<1x2xf32>
    %14 = tpu.matmul %11, %13, %cst_12 {dimension_numbers = #tpu.dot_dimension_numbers<[1], [0], [0], [1], [0, 0, 1, 1], [], []>} : vector<1x8xf32>, vector<8x2xf32>, vector<1x2xf32> -> vector<1x2xf32>
    %c0_13 = arith.constant 0 : index
    %c1 = arith.constant 1 : index
    %c0_14 = arith.constant 0 : index
    %15 = vector.load %arg7[%c0_13, %c1, %c0_14] : memref<8x3x32xf32, #tpu.memory_space<vmem>>, vector<1x1x2xf32>
    %16 = vector.shape_cast %15 : vector<1x1x2xf32> to vector<1x2xf32>
    %17 = arith.addf %14, %16 : vector<1x2xf32>
    %cst_15 = arith.constant 0.000000e+00 : f32
    %18 = vector.broadcast %cst_15 : f32 to vector<1x2xf32>
    %19 = arith.maximumf %17, %18 : vector<1x2xf32>
    %c0_16 = arith.constant 0 : index
    %c0_17 = arith.constant 0 : index
    %c0_18 = arith.constant 0 : index
    %20 = vector.load %arg6[%c0_16, %c0_17, %c0_18] : memref<8x8x32xf32, #tpu.memory_space<vmem>>, vector<1x2x8xf32>
    %21 = vector.shape_cast %20 : vector<1x2x8xf32> to vector<2x8xf32>
    %cst_19 = arith.constant dense<0.000000e+00> : vector<1x8xf32>
    %22 = tpu.matmul %19, %21, %cst_19 {dimension_numbers = #tpu.dot_dimension_numbers<[1], [0], [0], [1], [0, 0, 1, 1], [], []>} : vector<1x2xf32>, vector<2x8xf32>, vector<1x8xf32> -> vector<1x8xf32>
    %c0_20 = arith.constant 0 : index
    %c2 = arith.constant 2 : index
    %c0_21 = arith.constant 0 : index
    %23 = vector.load %arg7[%c0_20, %c2, %c0_21] : memref<8x3x32xf32, #tpu.memory_space<vmem>>, vector<1x1x8xf32>
    %24 = vector.shape_cast %23 : vector<1x1x8xf32> to vector<1x8xf32>
    %25 = arith.addf %22, %24 : vector<1x8xf32>
    %26 = arith.negf %25 : vector<1x8xf32>
    %27 = math.exp %26 : vector<1x8xf32>
    %cst_22 = arith.constant 1.000000e+00 : f32
    %28 = vector.broadcast %cst_22 : f32 to vector<1x8xf32>
    %29 = arith.addf %28, %27 : vector<1x8xf32>
    %30 = arith.divf %28, %29 : vector<1x8xf32>
    %31 = vector.broadcast %30 : vector<1x8xf32> to vector<256x8xf32>
    %32 = arith.mulf %7, %31 : vector<256x8xf32>
    %cst_23 = arith.constant 0.000000e+00 : f32
    %33 = vector.broadcast %cst_23 : f32 to vector<256x8xf32>
    %34 = arith.maximumf %32, %33 : vector<256x8xf32>
    %cst_24 = arith.constant 0.000000e+00 : f32
    %35 = vector.broadcast %cst_24 : f32 to vector<64x8xf32>
    %c0_25 = arith.constant 0 : index
    %c0_26 = arith.constant 0 : index
    %c0_27 = arith.constant 0 : index
    %c0_28 = arith.constant 0 : index
    %36 = vector.load %arg3[%c0_25, %c0_26, %c0_27, %c0_28] : memref<5x9x64x256xf32, #tpu.memory_space<vmem>>, vector<1x1x64x256xf32>
    %37 = vector.shape_cast %36 : vector<1x1x64x256xf32> to vector<64x256xf32>
    %c0_29 = arith.constant 0 : index
    %c0_30 = arith.constant 0 : index
    %c0_31 = arith.constant 0 : index
    %c0_32 = arith.constant 0 : index
    %38 = vector.load %arg4[%c0_29, %c0_30, %c0_31, %c0_32] : memref<8x9x16x32xf32, #tpu.memory_space<vmem>>, vector<1x1x8x8xf32>
    %39 = vector.shape_cast %38 : vector<1x1x8x8xf32> to vector<8x8xf32>
    %cst_33 = arith.constant dense<0.000000e+00> : vector<64x8xf32>
    %40 = tpu.matmul %37, %34, %cst_33 {dimension_numbers = #tpu.dot_dimension_numbers<[1], [0], [0], [1], [0, 0, 1, 1], [], []>} : vector<64x256xf32>, vector<256x8xf32>, vector<64x8xf32> -> vector<64x8xf32>
    %cst_34 = arith.constant dense<0.000000e+00> : vector<64x8xf32>
    %41 = tpu.matmul %40, %39, %cst_34 {dimension_numbers = #tpu.dot_dimension_numbers<[1], [0], [0], [1], [0, 0, 1, 1], [], []>} : vector<64x8xf32>, vector<8x8xf32>, vector<64x8xf32> -> vector<64x8xf32>
    %42 = arith.addf %35, %41 : vector<64x8xf32>
    %c0_35 = arith.constant 0 : index
    %c1_36 = arith.constant 1 : index
    %c0_37 = arith.constant 0 : index
    %c0_38 = arith.constant 0 : index
    %43 = vector.load %arg3[%c0_35, %c1_36, %c0_37, %c0_38] : memref<5x9x64x256xf32, #tpu.memory_space<vmem>>, vector<1x1x64x256xf32>
    %44 = vector.shape_cast %43 : vector<1x1x64x256xf32> to vector<64x256xf32>
    %c0_39 = arith.constant 0 : index
    %c1_40 = arith.constant 1 : index
    %c0_41 = arith.constant 0 : index
    %c0_42 = arith.constant 0 : index
    %45 = vector.load %arg4[%c0_39, %c1_40, %c0_41, %c0_42] : memref<8x9x16x32xf32, #tpu.memory_space<vmem>>, vector<1x1x8x8xf32>
    %46 = vector.shape_cast %45 : vector<1x1x8x8xf32> to vector<8x8xf32>
    %cst_43 = arith.constant dense<0.000000e+00> : vector<64x8xf32>
    %47 = tpu.matmul %44, %34, %cst_43 {dimension_numbers = #tpu.dot_dimension_numbers<[1], [0], [0], [1], [0, 0, 1, 1], [], []>} : vector<64x256xf32>, vector<256x8xf32>, vector<64x8xf32> -> vector<64x8xf32>
    %cst_44 = arith.constant dense<0.000000e+00> : vector<64x8xf32>
    %48 = tpu.matmul %47, %46, %cst_44 {dimension_numbers = #tpu.dot_dimension_numbers<[1], [0], [0], [1], [0, 0, 1, 1], [], []>} : vector<64x8xf32>, vector<8x8xf32>, vector<64x8xf32> -> vector<64x8xf32>
    %49 = arith.addf %42, %48 : vector<64x8xf32>
    %c0_45 = arith.constant 0 : index
    %c2_46 = arith.constant 2 : index
    %c0_47 = arith.constant 0 : index
    %c0_48 = arith.constant 0 : index
    %50 = vector.load %arg3[%c0_45, %c2_46, %c0_47, %c0_48] : memref<5x9x64x256xf32, #tpu.memory_space<vmem>>, vector<1x1x64x256xf32>
    %51 = vector.shape_cast %50 : vector<1x1x64x256xf32> to vector<64x256xf32>
    %c0_49 = arith.constant 0 : index
    %c2_50 = arith.constant 2 : index
    %c0_51 = arith.constant 0 : index
    %c0_52 = arith.constant 0 : index
    %52 = vector.load %arg4[%c0_49, %c2_50, %c0_51, %c0_52] : memref<8x9x16x32xf32, #tpu.memory_space<vmem>>, vector<1x1x8x8xf32>
    %53 = vector.shape_cast %52 : vector<1x1x8x8xf32> to vector<8x8xf32>
    %cst_53 = arith.constant dense<0.000000e+00> : vector<64x8xf32>
    %54 = tpu.matmul %51, %34, %cst_53 {dimension_numbers = #tpu.dot_dimension_numbers<[1], [0], [0], [1], [0, 0, 1, 1], [], []>} : vector<64x256xf32>, vector<256x8xf32>, vector<64x8xf32> -> vector<64x8xf32>
    %cst_54 = arith.constant dense<0.000000e+00> : vector<64x8xf32>
    %55 = tpu.matmul %54, %53, %cst_54 {dimension_numbers = #tpu.dot_dimension_numbers<[1], [0], [0], [1], [0, 0, 1, 1], [], []>} : vector<64x8xf32>, vector<8x8xf32>, vector<64x8xf32> -> vector<64x8xf32>
    %56 = arith.addf %49, %55 : vector<64x8xf32>
    %c0_55 = arith.constant 0 : index
    %c3 = arith.constant 3 : index
    %c0_56 = arith.constant 0 : index
    %c0_57 = arith.constant 0 : index
    %57 = vector.load %arg3[%c0_55, %c3, %c0_56, %c0_57] : memref<5x9x64x256xf32, #tpu.memory_space<vmem>>, vector<1x1x64x256xf32>
    %58 = vector.shape_cast %57 : vector<1x1x64x256xf32> to vector<64x256xf32>
    %c0_58 = arith.constant 0 : index
    %c3_59 = arith.constant 3 : index
    %c0_60 = arith.constant 0 : index
    %c0_61 = arith.constant 0 : index
    %59 = vector.load %arg4[%c0_58, %c3_59, %c0_60, %c0_61] : memref<8x9x16x32xf32, #tpu.memory_space<vmem>>, vector<1x1x8x8xf32>
    %60 = vector.shape_cast %59 : vector<1x1x8x8xf32> to vector<8x8xf32>
    %cst_62 = arith.constant dense<0.000000e+00> : vector<64x8xf32>
    %61 = tpu.matmul %58, %34, %cst_62 {dimension_numbers = #tpu.dot_dimension_numbers<[1], [0], [0], [1], [0, 0, 1, 1], [], []>} : vector<64x256xf32>, vector<256x8xf32>, vector<64x8xf32> -> vector<64x8xf32>
    %cst_63 = arith.constant dense<0.000000e+00> : vector<64x8xf32>
    %62 = tpu.matmul %61, %60, %cst_63 {dimension_numbers = #tpu.dot_dimension_numbers<[1], [0], [0], [1], [0, 0, 1, 1], [], []>} : vector<64x8xf32>, vector<8x8xf32>, vector<64x8xf32> -> vector<64x8xf32>
    %63 = arith.addf %56, %62 : vector<64x8xf32>
    %c0_64 = arith.constant 0 : index
    %c4 = arith.constant 4 : index
    %c0_65 = arith.constant 0 : index
    %c0_66 = arith.constant 0 : index
    %64 = vector.load %arg3[%c0_64, %c4, %c0_65, %c0_66] : memref<5x9x64x256xf32, #tpu.memory_space<vmem>>, vector<1x1x64x256xf32>
    %65 = vector.shape_cast %64 : vector<1x1x64x256xf32> to vector<64x256xf32>
    %c0_67 = arith.constant 0 : index
    %c4_68 = arith.constant 4 : index
    %c0_69 = arith.constant 0 : index
    %c0_70 = arith.constant 0 : index
    %66 = vector.load %arg4[%c0_67, %c4_68, %c0_69, %c0_70] : memref<8x9x16x32xf32, #tpu.memory_space<vmem>>, vector<1x1x8x8xf32>
    %67 = vector.shape_cast %66 : vector<1x1x8x8xf32> to vector<8x8xf32>
    %cst_71 = arith.constant dense<0.000000e+00> : vector<64x8xf32>
    %68 = tpu.matmul %65, %34, %cst_71 {dimension_numbers = #tpu.dot_dimension_numbers<[1], [0], [0], [1], [0, 0, 1, 1], [], []>} : vector<64x256xf32>, vector<256x8xf32>, vector<64x8xf32> -> vector<64x8xf32>
    %cst_72 = arith.constant dense<0.000000e+00> : vector<64x8xf32>
    %69 = tpu.matmul %68, %67, %cst_72 {dimension_numbers = #tpu.dot_dimension_numbers<[1], [0], [0], [1], [0, 0, 1, 1], [], []>} : vector<64x8xf32>, vector<8x8xf32>, vector<64x8xf32> -> vector<64x8xf32>
    %70 = arith.addf %63, %69 : vector<64x8xf32>
    %c0_73 = arith.constant 0 : index
    %c5 = arith.constant 5 : index
    %c0_74 = arith.constant 0 : index
    %c0_75 = arith.constant 0 : index
    %71 = vector.load %arg3[%c0_73, %c5, %c0_74, %c0_75] : memref<5x9x64x256xf32, #tpu.memory_space<vmem>>, vector<1x1x64x256xf32>
    %72 = vector.shape_cast %71 : vector<1x1x64x256xf32> to vector<64x256xf32>
    %c0_76 = arith.constant 0 : index
    %c5_77 = arith.constant 5 : index
    %c0_78 = arith.constant 0 : index
    %c0_79 = arith.constant 0 : index
    %73 = vector.load %arg4[%c0_76, %c5_77, %c0_78, %c0_79] : memref<8x9x16x32xf32, #tpu.memory_space<vmem>>, vector<1x1x8x8xf32>
    %74 = vector.shape_cast %73 : vector<1x1x8x8xf32> to vector<8x8xf32>
    %cst_80 = arith.constant dense<0.000000e+00> : vector<64x8xf32>
    %75 = tpu.matmul %72, %34, %cst_80 {dimension_numbers = #tpu.dot_dimension_numbers<[1], [0], [0], [1], [0, 0, 1, 1], [], []>} : vector<64x256xf32>, vector<256x8xf32>, vector<64x8xf32> -> vector<64x8xf32>
    %cst_81 = arith.constant dense<0.000000e+00> : vector<64x8xf32>
    %76 = tpu.matmul %75, %74, %cst_81 {dimension_numbers = #tpu.dot_dimension_numbers<[1], [0], [0], [1], [0, 0, 1, 1], [], []>} : vector<64x8xf32>, vector<8x8xf32>, vector<64x8xf32> -> vector<64x8xf32>
    %77 = arith.addf %70, %76 : vector<64x8xf32>
    %c0_82 = arith.constant 0 : index
    %c6 = arith.constant 6 : index
    %c0_83 = arith.constant 0 : index
    %c0_84 = arith.constant 0 : index
    %78 = vector.load %arg3[%c0_82, %c6, %c0_83, %c0_84] : memref<5x9x64x256xf32, #tpu.memory_space<vmem>>, vector<1x1x64x256xf32>
    %79 = vector.shape_cast %78 : vector<1x1x64x256xf32> to vector<64x256xf32>
    %c0_85 = arith.constant 0 : index
    %c6_86 = arith.constant 6 : index
    %c0_87 = arith.constant 0 : index
    %c0_88 = arith.constant 0 : index
    %80 = vector.load %arg4[%c0_85, %c6_86, %c0_87, %c0_88] : memref<8x9x16x32xf32, #tpu.memory_space<vmem>>, vector<1x1x8x8xf32>
    %81 = vector.shape_cast %80 : vector<1x1x8x8xf32> to vector<8x8xf32>
    %cst_89 = arith.constant dense<0.000000e+00> : vector<64x8xf32>
    %82 = tpu.matmul %79, %34, %cst_89 {dimension_numbers = #tpu.dot_dimension_numbers<[1], [0], [0], [1], [0, 0, 1, 1], [], []>} : vector<64x256xf32>, vector<256x8xf32>, vector<64x8xf32> -> vector<64x8xf32>
    %cst_90 = arith.constant dense<0.000000e+00> : vector<64x8xf32>
    %83 = tpu.matmul %82, %81, %cst_90 {dimension_numbers = #tpu.dot_dimension_numbers<[1], [0], [0], [1], [0, 0, 1, 1], [], []>} : vector<64x8xf32>, vector<8x8xf32>, vector<64x8xf32> -> vector<64x8xf32>
    %84 = arith.addf %77, %83 : vector<64x8xf32>
    %c0_91 = arith.constant 0 : index
    %c7 = arith.constant 7 : index
    %c0_92 = arith.constant 0 : index
    %c0_93 = arith.constant 0 : index
    %85 = vector.load %arg3[%c0_91, %c7, %c0_92, %c0_93] : memref<5x9x64x256xf32, #tpu.memory_space<vmem>>, vector<1x1x64x256xf32>
    %86 = vector.shape_cast %85 : vector<1x1x64x256xf32> to vector<64x256xf32>
    %c0_94 = arith.constant 0 : index
    %c7_95 = arith.constant 7 : index
    %c0_96 = arith.constant 0 : index
    %c0_97 = arith.constant 0 : index
    %87 = vector.load %arg4[%c0_94, %c7_95, %c0_96, %c0_97] : memref<8x9x16x32xf32, #tpu.memory_space<vmem>>, vector<1x1x8x8xf32>
    %88 = vector.shape_cast %87 : vector<1x1x8x8xf32> to vector<8x8xf32>
    %cst_98 = arith.constant dense<0.000000e+00> : vector<64x8xf32>
    %89 = tpu.matmul %86, %34, %cst_98 {dimension_numbers = #tpu.dot_dimension_numbers<[1], [0], [0], [1], [0, 0, 1, 1], [], []>} : vector<64x256xf32>, vector<256x8xf32>, vector<64x8xf32> -> vector<64x8xf32>
    %cst_99 = arith.constant dense<0.000000e+00> : vector<64x8xf32>
    %90 = tpu.matmul %89, %88, %cst_99 {dimension_numbers = #tpu.dot_dimension_numbers<[1], [0], [0], [1], [0, 0, 1, 1], [], []>} : vector<64x8xf32>, vector<8x8xf32>, vector<64x8xf32> -> vector<64x8xf32>
    %91 = arith.addf %84, %90 : vector<64x8xf32>
    %c0_100 = arith.constant 0 : index
    %c8 = arith.constant 8 : index
    %c0_101 = arith.constant 0 : index
    %c0_102 = arith.constant 0 : index
    %92 = vector.load %arg3[%c0_100, %c8, %c0_101, %c0_102] : memref<5x9x64x256xf32, #tpu.memory_space<vmem>>, vector<1x1x64x256xf32>
    %93 = vector.shape_cast %92 : vector<1x1x64x256xf32> to vector<64x256xf32>
    %c0_103 = arith.constant 0 : index
    %c8_104 = arith.constant 8 : index
    %c0_105 = arith.constant 0 : index
    %c0_106 = arith.constant 0 : index
    %94 = vector.load %arg4[%c0_103, %c8_104, %c0_105, %c0_106] : memref<8x9x16x32xf32, #tpu.memory_space<vmem>>, vector<1x1x8x8xf32>
    %95 = vector.shape_cast %94 : vector<1x1x8x8xf32> to vector<8x8xf32>
    %cst_107 = arith.constant dense<0.000000e+00> : vector<64x8xf32>
    %96 = tpu.matmul %93, %34, %cst_107 {dimension_numbers = #tpu.dot_dimension_numbers<[1], [0], [0], [1], [0, 0, 1, 1], [], []>} : vector<64x256xf32>, vector<256x8xf32>, vector<64x8xf32> -> vector<64x8xf32>
    %cst_108 = arith.constant dense<0.000000e+00> : vector<64x8xf32>
    %97 = tpu.matmul %96, %95, %cst_108 {dimension_numbers = #tpu.dot_dimension_numbers<[1], [0], [0], [1], [0, 0, 1, 1], [], []>} : vector<64x8xf32>, vector<8x8xf32>, vector<64x8xf32> -> vector<64x8xf32>
    %98 = arith.addf %91, %97 : vector<64x8xf32>
    %c1_109 = arith.constant 1 : index
    %c0_110 = arith.constant 0 : index
    %c0_111 = arith.constant 0 : index
    %99 = vector.load %arg7[%c1_109, %c0_110, %c0_111] : memref<8x3x32xf32, #tpu.memory_space<vmem>>, vector<1x1x8xf32>
    %100 = vector.shape_cast %99 : vector<1x1x8xf32> to vector<1x8xf32>
    %101 = vector.broadcast %100 : vector<1x8xf32> to vector<64x8xf32>
    %102 = arith.addf %98, %101 : vector<64x8xf32>
    %cst_112 = arith.constant dense<0.000000e+00> : vector<8xf32>
    %103 = vector.multi_reduction <add>, %102, %cst_112 [0] : vector<64x8xf32> to vector<8xf32>
    %104 = vector.shape_cast %103 : vector<8xf32> to vector<1x8xf32>
    %cst_113 = arith.constant 6.400000e+01 : f32
    %105 = vector.broadcast %cst_113 : f32 to vector<1x8xf32>
    %106 = arith.divf %104, %105 : vector<1x8xf32>
    %c1_114 = arith.constant 1 : index
    %c0_115 = arith.constant 0 : index
    %c0_116 = arith.constant 0 : index
    %107 = vector.load %arg5[%c1_114, %c0_115, %c0_116] : memref<8x32x8xf32, #tpu.memory_space<vmem>>, vector<1x8x2xf32>
    %108 = vector.shape_cast %107 : vector<1x8x2xf32> to vector<8x2xf32>
    %cst_117 = arith.constant dense<0.000000e+00> : vector<1x2xf32>
    %109 = tpu.matmul %106, %108, %cst_117 {dimension_numbers = #tpu.dot_dimension_numbers<[1], [0], [0], [1], [0, 0, 1, 1], [], []>} : vector<1x8xf32>, vector<8x2xf32>, vector<1x2xf32> -> vector<1x2xf32>
    %c1_118 = arith.constant 1 : index
    %c1_119 = arith.constant 1 : index
    %c0_120 = arith.constant 0 : index
    %110 = vector.load %arg7[%c1_118, %c1_119, %c0_120] : memref<8x3x32xf32, #tpu.memory_space<vmem>>, vector<1x1x2xf32>
    %111 = vector.shape_cast %110 : vector<1x1x2xf32> to vector<1x2xf32>
    %112 = arith.addf %109, %111 : vector<1x2xf32>
    %cst_121 = arith.constant 0.000000e+00 : f32
    %113 = vector.broadcast %cst_121 : f32 to vector<1x2xf32>
    %114 = arith.maximumf %112, %113 : vector<1x2xf32>
    %c1_122 = arith.constant 1 : index
    %c0_123 = arith.constant 0 : index
    %c0_124 = arith.constant 0 : index
    %115 = vector.load %arg6[%c1_122, %c0_123, %c0_124] : memref<8x8x32xf32, #tpu.memory_space<vmem>>, vector<1x2x8xf32>
    %116 = vector.shape_cast %115 : vector<1x2x8xf32> to vector<2x8xf32>
    %cst_125 = arith.constant dense<0.000000e+00> : vector<1x8xf32>
    %117 = tpu.matmul %114, %116, %cst_125 {dimension_numbers = #tpu.dot_dimension_numbers<[1], [0], [0], [1], [0, 0, 1, 1], [], []>} : vector<1x2xf32>, vector<2x8xf32>, vector<1x8xf32> -> vector<1x8xf32>
    %c1_126 = arith.constant 1 : index
    %c2_127 = arith.constant 2 : index
    %c0_128 = arith.constant 0 : index
    %118 = vector.load %arg7[%c1_126, %c2_127, %c0_128] : memref<8x3x32xf32, #tpu.memory_space<vmem>>, vector<1x1x8xf32>
    %119 = vector.shape_cast %118 : vector<1x1x8xf32> to vector<1x8xf32>
    %120 = arith.addf %117, %119 : vector<1x8xf32>
    %121 = arith.negf %120 : vector<1x8xf32>
    %122 = math.exp %121 : vector<1x8xf32>
    %cst_129 = arith.constant 1.000000e+00 : f32
    %123 = vector.broadcast %cst_129 : f32 to vector<1x8xf32>
    %124 = arith.addf %123, %122 : vector<1x8xf32>
    %125 = arith.divf %123, %124 : vector<1x8xf32>
    %126 = vector.broadcast %125 : vector<1x8xf32> to vector<64x8xf32>
    %127 = arith.mulf %102, %126 : vector<64x8xf32>
    %cst_130 = arith.constant 0.000000e+00 : f32
    %128 = vector.broadcast %cst_130 : f32 to vector<64x8xf32>
    %129 = arith.maximumf %127, %128 : vector<64x8xf32>
    %cst_131 = arith.constant 0.000000e+00 : f32
    %130 = vector.broadcast %cst_131 : f32 to vector<16x16xf32>
    %c1_132 = arith.constant 1 : index
    %c0_133 = arith.constant 0 : index
    %c0_134 = arith.constant 0 : index
    %c0_135 = arith.constant 0 : index
    %131 = vector.load %arg3[%c1_132, %c0_133, %c0_134, %c0_135] : memref<5x9x64x256xf32, #tpu.memory_space<vmem>>, vector<1x1x16x64xf32>
    %132 = vector.shape_cast %131 : vector<1x1x16x64xf32> to vector<16x64xf32>
    %c1_136 = arith.constant 1 : index
    %c0_137 = arith.constant 0 : index
    %c0_138 = arith.constant 0 : index
    %c0_139 = arith.constant 0 : index
    %133 = vector.load %arg4[%c1_136, %c0_137, %c0_138, %c0_139] : memref<8x9x16x32xf32, #tpu.memory_space<vmem>>, vector<1x1x8x16xf32>
    %134 = vector.shape_cast %133 : vector<1x1x8x16xf32> to vector<8x16xf32>
    %cst_140 = arith.constant dense<0.000000e+00> : vector<16x8xf32>
    %135 = tpu.matmul %132, %129, %cst_140 {dimension_numbers = #tpu.dot_dimension_numbers<[1], [0], [0], [1], [0, 0, 1, 1], [], []>} : vector<16x64xf32>, vector<64x8xf32>, vector<16x8xf32> -> vector<16x8xf32>
    %cst_141 = arith.constant dense<0.000000e+00> : vector<16x16xf32>
    %136 = tpu.matmul %135, %134, %cst_141 {dimension_numbers = #tpu.dot_dimension_numbers<[1], [0], [0], [1], [0, 0, 1, 1], [], []>} : vector<16x8xf32>, vector<8x16xf32>, vector<16x16xf32> -> vector<16x16xf32>
    %137 = arith.addf %130, %136 : vector<16x16xf32>
    %c1_142 = arith.constant 1 : index
    %c1_143 = arith.constant 1 : index
    %c0_144 = arith.constant 0 : index
    %c0_145 = arith.constant 0 : index
    %138 = vector.load %arg3[%c1_142, %c1_143, %c0_144, %c0_145] : memref<5x9x64x256xf32, #tpu.memory_space<vmem>>, vector<1x1x16x64xf32>
    %139 = vector.shape_cast %138 : vector<1x1x16x64xf32> to vector<16x64xf32>
    %c1_146 = arith.constant 1 : index
    %c1_147 = arith.constant 1 : index
    %c0_148 = arith.constant 0 : index
    %c0_149 = arith.constant 0 : index
    %140 = vector.load %arg4[%c1_146, %c1_147, %c0_148, %c0_149] : memref<8x9x16x32xf32, #tpu.memory_space<vmem>>, vector<1x1x8x16xf32>
    %141 = vector.shape_cast %140 : vector<1x1x8x16xf32> to vector<8x16xf32>
    %cst_150 = arith.constant dense<0.000000e+00> : vector<16x8xf32>
    %142 = tpu.matmul %139, %129, %cst_150 {dimension_numbers = #tpu.dot_dimension_numbers<[1], [0], [0], [1], [0, 0, 1, 1], [], []>} : vector<16x64xf32>, vector<64x8xf32>, vector<16x8xf32> -> vector<16x8xf32>
    %cst_151 = arith.constant dense<0.000000e+00> : vector<16x16xf32>
    %143 = tpu.matmul %142, %141, %cst_151 {dimension_numbers = #tpu.dot_dimension_numbers<[1], [0], [0], [1], [0, 0, 1, 1], [], []>} : vector<16x8xf32>, vector<8x16xf32>, vector<16x16xf32> -> vector<16x16xf32>
    %144 = arith.addf %137, %143 : vector<16x16xf32>
    %c1_152 = arith.constant 1 : index
    %c2_153 = arith.constant 2 : index
    %c0_154 = arith.constant 0 : index
    %c0_155 = arith.constant 0 : index
    %145 = vector.load %arg3[%c1_152, %c2_153, %c0_154, %c0_155] : memref<5x9x64x256xf32, #tpu.memory_space<vmem>>, vector<1x1x16x64xf32>
    %146 = vector.shape_cast %145 : vector<1x1x16x64xf32> to vector<16x64xf32>
    %c1_156 = arith.constant 1 : index
    %c2_157 = arith.constant 2 : index
    %c0_158 = arith.constant 0 : index
    %c0_159 = arith.constant 0 : index
    %147 = vector.load %arg4[%c1_156, %c2_157, %c0_158, %c0_159] : memref<8x9x16x32xf32, #tpu.memory_space<vmem>>, vector<1x1x8x16xf32>
    %148 = vector.shape_cast %147 : vector<1x1x8x16xf32> to vector<8x16xf32>
    %cst_160 = arith.constant dense<0.000000e+00> : vector<16x8xf32>
    %149 = tpu.matmul %146, %129, %cst_160 {dimension_numbers = #tpu.dot_dimension_numbers<[1], [0], [0], [1], [0, 0, 1, 1], [], []>} : vector<16x64xf32>, vector<64x8xf32>, vector<16x8xf32> -> vector<16x8xf32>
    %cst_161 = arith.constant dense<0.000000e+00> : vector<16x16xf32>
    %150 = tpu.matmul %149, %148, %cst_161 {dimension_numbers = #tpu.dot_dimension_numbers<[1], [0], [0], [1], [0, 0, 1, 1], [], []>} : vector<16x8xf32>, vector<8x16xf32>, vector<16x16xf32> -> vector<16x16xf32>
    %151 = arith.addf %144, %150 : vector<16x16xf32>
    %c1_162 = arith.constant 1 : index
    %c3_163 = arith.constant 3 : index
    %c0_164 = arith.constant 0 : index
    %c0_165 = arith.constant 0 : index
    %152 = vector.load %arg3[%c1_162, %c3_163, %c0_164, %c0_165] : memref<5x9x64x256xf32, #tpu.memory_space<vmem>>, vector<1x1x16x64xf32>
    %153 = vector.shape_cast %152 : vector<1x1x16x64xf32> to vector<16x64xf32>
    %c1_166 = arith.constant 1 : index
    %c3_167 = arith.constant 3 : index
    %c0_168 = arith.constant 0 : index
    %c0_169 = arith.constant 0 : index
    %154 = vector.load %arg4[%c1_166, %c3_167, %c0_168, %c0_169] : memref<8x9x16x32xf32, #tpu.memory_space<vmem>>, vector<1x1x8x16xf32>
    %155 = vector.shape_cast %154 : vector<1x1x8x16xf32> to vector<8x16xf32>
    %cst_170 = arith.constant dense<0.000000e+00> : vector<16x8xf32>
    %156 = tpu.matmul %153, %129, %cst_170 {dimension_numbers = #tpu.dot_dimension_numbers<[1], [0], [0], [1], [0, 0, 1, 1], [], []>} : vector<16x64xf32>, vector<64x8xf32>, vector<16x8xf32> -> vector<16x8xf32>
    %cst_171 = arith.constant dense<0.000000e+00> : vector<16x16xf32>
    %157 = tpu.matmul %156, %155, %cst_171 {dimension_numbers = #tpu.dot_dimension_numbers<[1], [0], [0], [1], [0, 0, 1, 1], [], []>} : vector<16x8xf32>, vector<8x16xf32>, vector<16x16xf32> -> vector<16x16xf32>
    %158 = arith.addf %151, %157 : vector<16x16xf32>
    %c1_172 = arith.constant 1 : index
    %c4_173 = arith.constant 4 : index
    %c0_174 = arith.constant 0 : index
    %c0_175 = arith.constant 0 : index
    %159 = vector.load %arg3[%c1_172, %c4_173, %c0_174, %c0_175] : memref<5x9x64x256xf32, #tpu.memory_space<vmem>>, vector<1x1x16x64xf32>
    %160 = vector.shape_cast %159 : vector<1x1x16x64xf32> to vector<16x64xf32>
    %c1_176 = arith.constant 1 : index
    %c4_177 = arith.constant 4 : index
    %c0_178 = arith.constant 0 : index
    %c0_179 = arith.constant 0 : index
    %161 = vector.load %arg4[%c1_176, %c4_177, %c0_178, %c0_179] : memref<8x9x16x32xf32, #tpu.memory_space<vmem>>, vector<1x1x8x16xf32>
    %162 = vector.shape_cast %161 : vector<1x1x8x16xf32> to vector<8x16xf32>
    %cst_180 = arith.constant dense<0.000000e+00> : vector<16x8xf32>
    %163 = tpu.matmul %160, %129, %cst_180 {dimension_numbers = #tpu.dot_dimension_numbers<[1], [0], [0], [1], [0, 0, 1, 1], [], []>} : vector<16x64xf32>, vector<64x8xf32>, vector<16x8xf32> -> vector<16x8xf32>
    %cst_181 = arith.constant dense<0.000000e+00> : vector<16x16xf32>
    %164 = tpu.matmul %163, %162, %cst_181 {dimension_numbers = #tpu.dot_dimension_numbers<[1], [0], [0], [1], [0, 0, 1, 1], [], []>} : vector<16x8xf32>, vector<8x16xf32>, vector<16x16xf32> -> vector<16x16xf32>
    %165 = arith.addf %158, %164 : vector<16x16xf32>
    %c1_182 = arith.constant 1 : index
    %c5_183 = arith.constant 5 : index
    %c0_184 = arith.constant 0 : index
    %c0_185 = arith.constant 0 : index
    %166 = vector.load %arg3[%c1_182, %c5_183, %c0_184, %c0_185] : memref<5x9x64x256xf32, #tpu.memory_space<vmem>>, vector<1x1x16x64xf32>
    %167 = vector.shape_cast %166 : vector<1x1x16x64xf32> to vector<16x64xf32>
    %c1_186 = arith.constant 1 : index
    %c5_187 = arith.constant 5 : index
    %c0_188 = arith.constant 0 : index
    %c0_189 = arith.constant 0 : index
    %168 = vector.load %arg4[%c1_186, %c5_187, %c0_188, %c0_189] : memref<8x9x16x32xf32, #tpu.memory_space<vmem>>, vector<1x1x8x16xf32>
    %169 = vector.shape_cast %168 : vector<1x1x8x16xf32> to vector<8x16xf32>
    %cst_190 = arith.constant dense<0.000000e+00> : vector<16x8xf32>
    %170 = tpu.matmul %167, %129, %cst_190 {dimension_numbers = #tpu.dot_dimension_numbers<[1], [0], [0], [1], [0, 0, 1, 1], [], []>} : vector<16x64xf32>, vector<64x8xf32>, vector<16x8xf32> -> vector<16x8xf32>
    %cst_191 = arith.constant dense<0.000000e+00> : vector<16x16xf32>
    %171 = tpu.matmul %170, %169, %cst_191 {dimension_numbers = #tpu.dot_dimension_numbers<[1], [0], [0], [1], [0, 0, 1, 1], [], []>} : vector<16x8xf32>, vector<8x16xf32>, vector<16x16xf32> -> vector<16x16xf32>
    %172 = arith.addf %165, %171 : vector<16x16xf32>
    %c1_192 = arith.constant 1 : index
    %c6_193 = arith.constant 6 : index
    %c0_194 = arith.constant 0 : index
    %c0_195 = arith.constant 0 : index
    %173 = vector.load %arg3[%c1_192, %c6_193, %c0_194, %c0_195] : memref<5x9x64x256xf32, #tpu.memory_space<vmem>>, vector<1x1x16x64xf32>
    %174 = vector.shape_cast %173 : vector<1x1x16x64xf32> to vector<16x64xf32>
    %c1_196 = arith.constant 1 : index
    %c6_197 = arith.constant 6 : index
    %c0_198 = arith.constant 0 : index
    %c0_199 = arith.constant 0 : index
    %175 = vector.load %arg4[%c1_196, %c6_197, %c0_198, %c0_199] : memref<8x9x16x32xf32, #tpu.memory_space<vmem>>, vector<1x1x8x16xf32>
    %176 = vector.shape_cast %175 : vector<1x1x8x16xf32> to vector<8x16xf32>
    %cst_200 = arith.constant dense<0.000000e+00> : vector<16x8xf32>
    %177 = tpu.matmul %174, %129, %cst_200 {dimension_numbers = #tpu.dot_dimension_numbers<[1], [0], [0], [1], [0, 0, 1, 1], [], []>} : vector<16x64xf32>, vector<64x8xf32>, vector<16x8xf32> -> vector<16x8xf32>
    %cst_201 = arith.constant dense<0.000000e+00> : vector<16x16xf32>
    %178 = tpu.matmul %177, %176, %cst_201 {dimension_numbers = #tpu.dot_dimension_numbers<[1], [0], [0], [1], [0, 0, 1, 1], [], []>} : vector<16x8xf32>, vector<8x16xf32>, vector<16x16xf32> -> vector<16x16xf32>
    %179 = arith.addf %172, %178 : vector<16x16xf32>
    %c1_202 = arith.constant 1 : index
    %c7_203 = arith.constant 7 : index
    %c0_204 = arith.constant 0 : index
    %c0_205 = arith.constant 0 : index
    %180 = vector.load %arg3[%c1_202, %c7_203, %c0_204, %c0_205] : memref<5x9x64x256xf32, #tpu.memory_space<vmem>>, vector<1x1x16x64xf32>
    %181 = vector.shape_cast %180 : vector<1x1x16x64xf32> to vector<16x64xf32>
    %c1_206 = arith.constant 1 : index
    %c7_207 = arith.constant 7 : index
    %c0_208 = arith.constant 0 : index
    %c0_209 = arith.constant 0 : index
    %182 = vector.load %arg4[%c1_206, %c7_207, %c0_208, %c0_209] : memref<8x9x16x32xf32, #tpu.memory_space<vmem>>, vector<1x1x8x16xf32>
    %183 = vector.shape_cast %182 : vector<1x1x8x16xf32> to vector<8x16xf32>
    %cst_210 = arith.constant dense<0.000000e+00> : vector<16x8xf32>
    %184 = tpu.matmul %181, %129, %cst_210 {dimension_numbers = #tpu.dot_dimension_numbers<[1], [0], [0], [1], [0, 0, 1, 1], [], []>} : vector<16x64xf32>, vector<64x8xf32>, vector<16x8xf32> -> vector<16x8xf32>
    %cst_211 = arith.constant dense<0.000000e+00> : vector<16x16xf32>
    %185 = tpu.matmul %184, %183, %cst_211 {dimension_numbers = #tpu.dot_dimension_numbers<[1], [0], [0], [1], [0, 0, 1, 1], [], []>} : vector<16x8xf32>, vector<8x16xf32>, vector<16x16xf32> -> vector<16x16xf32>
    %186 = arith.addf %179, %185 : vector<16x16xf32>
    %c1_212 = arith.constant 1 : index
    %c8_213 = arith.constant 8 : index
    %c0_214 = arith.constant 0 : index
    %c0_215 = arith.constant 0 : index
    %187 = vector.load %arg3[%c1_212, %c8_213, %c0_214, %c0_215] : memref<5x9x64x256xf32, #tpu.memory_space<vmem>>, vector<1x1x16x64xf32>
    %188 = vector.shape_cast %187 : vector<1x1x16x64xf32> to vector<16x64xf32>
    %c1_216 = arith.constant 1 : index
    %c8_217 = arith.constant 8 : index
    %c0_218 = arith.constant 0 : index
    %c0_219 = arith.constant 0 : index
    %189 = vector.load %arg4[%c1_216, %c8_217, %c0_218, %c0_219] : memref<8x9x16x32xf32, #tpu.memory_space<vmem>>, vector<1x1x8x16xf32>
    %190 = vector.shape_cast %189 : vector<1x1x8x16xf32> to vector<8x16xf32>
    %cst_220 = arith.constant dense<0.000000e+00> : vector<16x8xf32>
    %191 = tpu.matmul %188, %129, %cst_220 {dimension_numbers = #tpu.dot_dimension_numbers<[1], [0], [0], [1], [0, 0, 1, 1], [], []>} : vector<16x64xf32>, vector<64x8xf32>, vector<16x8xf32> -> vector<16x8xf32>
    %cst_221 = arith.constant dense<0.000000e+00> : vector<16x16xf32>
    %192 = tpu.matmul %191, %190, %cst_221 {dimension_numbers = #tpu.dot_dimension_numbers<[1], [0], [0], [1], [0, 0, 1, 1], [], []>} : vector<16x8xf32>, vector<8x16xf32>, vector<16x16xf32> -> vector<16x16xf32>
    %193 = arith.addf %186, %192 : vector<16x16xf32>
    %c2_222 = arith.constant 2 : index
    %c0_223 = arith.constant 0 : index
    %c0_224 = arith.constant 0 : index
    %194 = vector.load %arg7[%c2_222, %c0_223, %c0_224] : memref<8x3x32xf32, #tpu.memory_space<vmem>>, vector<1x1x16xf32>
    %195 = vector.shape_cast %194 : vector<1x1x16xf32> to vector<1x16xf32>
    %196 = vector.broadcast %195 : vector<1x16xf32> to vector<16x16xf32>
    %197 = arith.addf %193, %196 : vector<16x16xf32>
    %cst_225 = arith.constant dense<0.000000e+00> : vector<16xf32>
    %198 = vector.multi_reduction <add>, %197, %cst_225 [0] : vector<16x16xf32> to vector<16xf32>
    %199 = vector.shape_cast %198 : vector<16xf32> to vector<1x16xf32>
    %cst_226 = arith.constant 1.600000e+01 : f32
    %200 = vector.broadcast %cst_226 : f32 to vector<1x16xf32>
    %201 = arith.divf %199, %200 : vector<1x16xf32>
    %c2_227 = arith.constant 2 : index
    %c0_228 = arith.constant 0 : index
    %c0_229 = arith.constant 0 : index
    %202 = vector.load %arg5[%c2_227, %c0_228, %c0_229] : memref<8x32x8xf32, #tpu.memory_space<vmem>>, vector<1x16x4xf32>
    %203 = vector.shape_cast %202 : vector<1x16x4xf32> to vector<16x4xf32>
    %cst_230 = arith.constant dense<0.000000e+00> : vector<1x4xf32>
    %204 = tpu.matmul %201, %203, %cst_230 {dimension_numbers = #tpu.dot_dimension_numbers<[1], [0], [0], [1], [0, 0, 1, 1], [], []>} : vector<1x16xf32>, vector<16x4xf32>, vector<1x4xf32> -> vector<1x4xf32>
    %c2_231 = arith.constant 2 : index
    %c1_232 = arith.constant 1 : index
    %c0_233 = arith.constant 0 : index
    %205 = vector.load %arg7[%c2_231, %c1_232, %c0_233] : memref<8x3x32xf32, #tpu.memory_space<vmem>>, vector<1x1x4xf32>
    %206 = vector.shape_cast %205 : vector<1x1x4xf32> to vector<1x4xf32>
    %207 = arith.addf %204, %206 : vector<1x4xf32>
    %cst_234 = arith.constant 0.000000e+00 : f32
    %208 = vector.broadcast %cst_234 : f32 to vector<1x4xf32>
    %209 = arith.maximumf %207, %208 : vector<1x4xf32>
    %c2_235 = arith.constant 2 : index
    %c0_236 = arith.constant 0 : index
    %c0_237 = arith.constant 0 : index
    %210 = vector.load %arg6[%c2_235, %c0_236, %c0_237] : memref<8x8x32xf32, #tpu.memory_space<vmem>>, vector<1x4x16xf32>
    %211 = vector.shape_cast %210 : vector<1x4x16xf32> to vector<4x16xf32>
    %cst_238 = arith.constant dense<0.000000e+00> : vector<1x16xf32>
    %212 = tpu.matmul %209, %211, %cst_238 {dimension_numbers = #tpu.dot_dimension_numbers<[1], [0], [0], [1], [0, 0, 1, 1], [], []>} : vector<1x4xf32>, vector<4x16xf32>, vector<1x16xf32> -> vector<1x16xf32>
    %c2_239 = arith.constant 2 : index
    %c2_240 = arith.constant 2 : index
    %c0_241 = arith.constant 0 : index
    %213 = vector.load %arg7[%c2_239, %c2_240, %c0_241] : memref<8x3x32xf32, #tpu.memory_space<vmem>>, vector<1x1x16xf32>
    %214 = vector.shape_cast %213 : vector<1x1x16xf32> to vector<1x16xf32>
    %215 = arith.addf %212, %214 : vector<1x16xf32>
    %216 = arith.negf %215 : vector<1x16xf32>
    %217 = math.exp %216 : vector<1x16xf32>
    %cst_242 = arith.constant 1.000000e+00 : f32
    %218 = vector.broadcast %cst_242 : f32 to vector<1x16xf32>
    %219 = arith.addf %218, %217 : vector<1x16xf32>
    %220 = arith.divf %218, %219 : vector<1x16xf32>
    %221 = vector.broadcast %220 : vector<1x16xf32> to vector<16x16xf32>
    %222 = arith.mulf %197, %221 : vector<16x16xf32>
    %cst_243 = arith.constant 0.000000e+00 : f32
    %223 = vector.broadcast %cst_243 : f32 to vector<16x16xf32>
    %224 = arith.maximumf %222, %223 : vector<16x16xf32>
    %cst_244 = arith.constant 0.000000e+00 : f32
    %225 = vector.broadcast %cst_244 : f32 to vector<64x8xf32>
    %c2_245 = arith.constant 2 : index
    %c0_246 = arith.constant 0 : index
    %c0_247 = arith.constant 0 : index
    %c0_248 = arith.constant 0 : index
    %226 = vector.load %arg3[%c2_245, %c0_246, %c0_247, %c0_248] : memref<5x9x64x256xf32, #tpu.memory_space<vmem>>, vector<1x1x64x64xf32>
    %227 = vector.shape_cast %226 : vector<1x1x64x64xf32> to vector<64x64xf32>
    %c2_249 = arith.constant 2 : index
    %c0_250 = arith.constant 0 : index
    %c0_251 = arith.constant 0 : index
    %c0_252 = arith.constant 0 : index
    %228 = vector.load %arg4[%c2_249, %c0_250, %c0_251, %c0_252] : memref<8x9x16x32xf32, #tpu.memory_space<vmem>>, vector<1x1x8x8xf32>
    %229 = vector.shape_cast %228 : vector<1x1x8x8xf32> to vector<8x8xf32>
    %cst_253 = arith.constant dense<0.000000e+00> : vector<64x8xf32>
    %230 = tpu.matmul %227, %129, %cst_253 {dimension_numbers = #tpu.dot_dimension_numbers<[1], [0], [0], [1], [0, 0, 1, 1], [], []>} : vector<64x64xf32>, vector<64x8xf32>, vector<64x8xf32> -> vector<64x8xf32>
    %cst_254 = arith.constant dense<0.000000e+00> : vector<64x8xf32>
    %231 = tpu.matmul %230, %229, %cst_254 {dimension_numbers = #tpu.dot_dimension_numbers<[1], [0], [0], [1], [0, 0, 1, 1], [], []>} : vector<64x8xf32>, vector<8x8xf32>, vector<64x8xf32> -> vector<64x8xf32>
    %232 = arith.addf %225, %231 : vector<64x8xf32>
    %c2_255 = arith.constant 2 : index
    %c1_256 = arith.constant 1 : index
    %c0_257 = arith.constant 0 : index
    %c0_258 = arith.constant 0 : index
    %233 = vector.load %arg3[%c2_255, %c1_256, %c0_257, %c0_258] : memref<5x9x64x256xf32, #tpu.memory_space<vmem>>, vector<1x1x64x64xf32>
    %234 = vector.shape_cast %233 : vector<1x1x64x64xf32> to vector<64x64xf32>
    %c2_259 = arith.constant 2 : index
    %c1_260 = arith.constant 1 : index
    %c0_261 = arith.constant 0 : index
    %c0_262 = arith.constant 0 : index
    %235 = vector.load %arg4[%c2_259, %c1_260, %c0_261, %c0_262] : memref<8x9x16x32xf32, #tpu.memory_space<vmem>>, vector<1x1x8x8xf32>
    %236 = vector.shape_cast %235 : vector<1x1x8x8xf32> to vector<8x8xf32>
    %cst_263 = arith.constant dense<0.000000e+00> : vector<64x8xf32>
    %237 = tpu.matmul %234, %129, %cst_263 {dimension_numbers = #tpu.dot_dimension_numbers<[1], [0], [0], [1], [0, 0, 1, 1], [], []>} : vector<64x64xf32>, vector<64x8xf32>, vector<64x8xf32> -> vector<64x8xf32>
    %cst_264 = arith.constant dense<0.000000e+00> : vector<64x8xf32>
    %238 = tpu.matmul %237, %236, %cst_264 {dimension_numbers = #tpu.dot_dimension_numbers<[1], [0], [0], [1], [0, 0, 1, 1], [], []>} : vector<64x8xf32>, vector<8x8xf32>, vector<64x8xf32> -> vector<64x8xf32>
    %239 = arith.addf %232, %238 : vector<64x8xf32>
    %c2_265 = arith.constant 2 : index
    %c2_266 = arith.constant 2 : index
    %c0_267 = arith.constant 0 : index
    %c0_268 = arith.constant 0 : index
    %240 = vector.load %arg3[%c2_265, %c2_266, %c0_267, %c0_268] : memref<5x9x64x256xf32, #tpu.memory_space<vmem>>, vector<1x1x64x64xf32>
    %241 = vector.shape_cast %240 : vector<1x1x64x64xf32> to vector<64x64xf32>
    %c2_269 = arith.constant 2 : index
    %c2_270 = arith.constant 2 : index
    %c0_271 = arith.constant 0 : index
    %c0_272 = arith.constant 0 : index
    %242 = vector.load %arg4[%c2_269, %c2_270, %c0_271, %c0_272] : memref<8x9x16x32xf32, #tpu.memory_space<vmem>>, vector<1x1x8x8xf32>
    %243 = vector.shape_cast %242 : vector<1x1x8x8xf32> to vector<8x8xf32>
    %cst_273 = arith.constant dense<0.000000e+00> : vector<64x8xf32>
    %244 = tpu.matmul %241, %129, %cst_273 {dimension_numbers = #tpu.dot_dimension_numbers<[1], [0], [0], [1], [0, 0, 1, 1], [], []>} : vector<64x64xf32>, vector<64x8xf32>, vector<64x8xf32> -> vector<64x8xf32>
    %cst_274 = arith.constant dense<0.000000e+00> : vector<64x8xf32>
    %245 = tpu.matmul %244, %243, %cst_274 {dimension_numbers = #tpu.dot_dimension_numbers<[1], [0], [0], [1], [0, 0, 1, 1], [], []>} : vector<64x8xf32>, vector<8x8xf32>, vector<64x8xf32> -> vector<64x8xf32>
    %246 = arith.addf %239, %245 : vector<64x8xf32>
    %c2_275 = arith.constant 2 : index
    %c3_276 = arith.constant 3 : index
    %c0_277 = arith.constant 0 : index
    %c0_278 = arith.constant 0 : index
    %247 = vector.load %arg3[%c2_275, %c3_276, %c0_277, %c0_278] : memref<5x9x64x256xf32, #tpu.memory_space<vmem>>, vector<1x1x64x64xf32>
    %248 = vector.shape_cast %247 : vector<1x1x64x64xf32> to vector<64x64xf32>
    %c2_279 = arith.constant 2 : index
    %c3_280 = arith.constant 3 : index
    %c0_281 = arith.constant 0 : index
    %c0_282 = arith.constant 0 : index
    %249 = vector.load %arg4[%c2_279, %c3_280, %c0_281, %c0_282] : memref<8x9x16x32xf32, #tpu.memory_space<vmem>>, vector<1x1x8x8xf32>
    %250 = vector.shape_cast %249 : vector<1x1x8x8xf32> to vector<8x8xf32>
    %cst_283 = arith.constant dense<0.000000e+00> : vector<64x8xf32>
    %251 = tpu.matmul %248, %129, %cst_283 {dimension_numbers = #tpu.dot_dimension_numbers<[1], [0], [0], [1], [0, 0, 1, 1], [], []>} : vector<64x64xf32>, vector<64x8xf32>, vector<64x8xf32> -> vector<64x8xf32>
    %cst_284 = arith.constant dense<0.000000e+00> : vector<64x8xf32>
    %252 = tpu.matmul %251, %250, %cst_284 {dimension_numbers = #tpu.dot_dimension_numbers<[1], [0], [0], [1], [0, 0, 1, 1], [], []>} : vector<64x8xf32>, vector<8x8xf32>, vector<64x8xf32> -> vector<64x8xf32>
    %253 = arith.addf %246, %252 : vector<64x8xf32>
    %c2_285 = arith.constant 2 : index
    %c4_286 = arith.constant 4 : index
    %c0_287 = arith.constant 0 : index
    %c0_288 = arith.constant 0 : index
    %254 = vector.load %arg3[%c2_285, %c4_286, %c0_287, %c0_288] : memref<5x9x64x256xf32, #tpu.memory_space<vmem>>, vector<1x1x64x64xf32>
    %255 = vector.shape_cast %254 : vector<1x1x64x64xf32> to vector<64x64xf32>
    %c2_289 = arith.constant 2 : index
    %c4_290 = arith.constant 4 : index
    %c0_291 = arith.constant 0 : index
    %c0_292 = arith.constant 0 : index
    %256 = vector.load %arg4[%c2_289, %c4_290, %c0_291, %c0_292] : memref<8x9x16x32xf32, #tpu.memory_space<vmem>>, vector<1x1x8x8xf32>
    %257 = vector.shape_cast %256 : vector<1x1x8x8xf32> to vector<8x8xf32>
    %cst_293 = arith.constant dense<0.000000e+00> : vector<64x8xf32>
    %258 = tpu.matmul %255, %129, %cst_293 {dimension_numbers = #tpu.dot_dimension_numbers<[1], [0], [0], [1], [0, 0, 1, 1], [], []>} : vector<64x64xf32>, vector<64x8xf32>, vector<64x8xf32> -> vector<64x8xf32>
    %cst_294 = arith.constant dense<0.000000e+00> : vector<64x8xf32>
    %259 = tpu.matmul %258, %257, %cst_294 {dimension_numbers = #tpu.dot_dimension_numbers<[1], [0], [0], [1], [0, 0, 1, 1], [], []>} : vector<64x8xf32>, vector<8x8xf32>, vector<64x8xf32> -> vector<64x8xf32>
    %260 = arith.addf %253, %259 : vector<64x8xf32>
    %c2_295 = arith.constant 2 : index
    %c5_296 = arith.constant 5 : index
    %c0_297 = arith.constant 0 : index
    %c0_298 = arith.constant 0 : index
    %261 = vector.load %arg3[%c2_295, %c5_296, %c0_297, %c0_298] : memref<5x9x64x256xf32, #tpu.memory_space<vmem>>, vector<1x1x64x64xf32>
    %262 = vector.shape_cast %261 : vector<1x1x64x64xf32> to vector<64x64xf32>
    %c2_299 = arith.constant 2 : index
    %c5_300 = arith.constant 5 : index
    %c0_301 = arith.constant 0 : index
    %c0_302 = arith.constant 0 : index
    %263 = vector.load %arg4[%c2_299, %c5_300, %c0_301, %c0_302] : memref<8x9x16x32xf32, #tpu.memory_space<vmem>>, vector<1x1x8x8xf32>
    %264 = vector.shape_cast %263 : vector<1x1x8x8xf32> to vector<8x8xf32>
    %cst_303 = arith.constant dense<0.000000e+00> : vector<64x8xf32>
    %265 = tpu.matmul %262, %129, %cst_303 {dimension_numbers = #tpu.dot_dimension_numbers<[1], [0], [0], [1], [0, 0, 1, 1], [], []>} : vector<64x64xf32>, vector<64x8xf32>, vector<64x8xf32> -> vector<64x8xf32>
    %cst_304 = arith.constant dense<0.000000e+00> : vector<64x8xf32>
    %266 = tpu.matmul %265, %264, %cst_304 {dimension_numbers = #tpu.dot_dimension_numbers<[1], [0], [0], [1], [0, 0, 1, 1], [], []>} : vector<64x8xf32>, vector<8x8xf32>, vector<64x8xf32> -> vector<64x8xf32>
    %267 = arith.addf %260, %266 : vector<64x8xf32>
    %c2_305 = arith.constant 2 : index
    %c6_306 = arith.constant 6 : index
    %c0_307 = arith.constant 0 : index
    %c0_308 = arith.constant 0 : index
    %268 = vector.load %arg3[%c2_305, %c6_306, %c0_307, %c0_308] : memref<5x9x64x256xf32, #tpu.memory_space<vmem>>, vector<1x1x64x64xf32>
    %269 = vector.shape_cast %268 : vector<1x1x64x64xf32> to vector<64x64xf32>
    %c2_309 = arith.constant 2 : index
    %c6_310 = arith.constant 6 : index
    %c0_311 = arith.constant 0 : index
    %c0_312 = arith.constant 0 : index
    %270 = vector.load %arg4[%c2_309, %c6_310, %c0_311, %c0_312] : memref<8x9x16x32xf32, #tpu.memory_space<vmem>>, vector<1x1x8x8xf32>
    %271 = vector.shape_cast %270 : vector<1x1x8x8xf32> to vector<8x8xf32>
    %cst_313 = arith.constant dense<0.000000e+00> : vector<64x8xf32>
    %272 = tpu.matmul %269, %129, %cst_313 {dimension_numbers = #tpu.dot_dimension_numbers<[1], [0], [0], [1], [0, 0, 1, 1], [], []>} : vector<64x64xf32>, vector<64x8xf32>, vector<64x8xf32> -> vector<64x8xf32>
    %cst_314 = arith.constant dense<0.000000e+00> : vector<64x8xf32>
    %273 = tpu.matmul %272, %271, %cst_314 {dimension_numbers = #tpu.dot_dimension_numbers<[1], [0], [0], [1], [0, 0, 1, 1], [], []>} : vector<64x8xf32>, vector<8x8xf32>, vector<64x8xf32> -> vector<64x8xf32>
    %274 = arith.addf %267, %273 : vector<64x8xf32>
    %c2_315 = arith.constant 2 : index
    %c7_316 = arith.constant 7 : index
    %c0_317 = arith.constant 0 : index
    %c0_318 = arith.constant 0 : index
    %275 = vector.load %arg3[%c2_315, %c7_316, %c0_317, %c0_318] : memref<5x9x64x256xf32, #tpu.memory_space<vmem>>, vector<1x1x64x64xf32>
    %276 = vector.shape_cast %275 : vector<1x1x64x64xf32> to vector<64x64xf32>
    %c2_319 = arith.constant 2 : index
    %c7_320 = arith.constant 7 : index
    %c0_321 = arith.constant 0 : index
    %c0_322 = arith.constant 0 : index
    %277 = vector.load %arg4[%c2_319, %c7_320, %c0_321, %c0_322] : memref<8x9x16x32xf32, #tpu.memory_space<vmem>>, vector<1x1x8x8xf32>
    %278 = vector.shape_cast %277 : vector<1x1x8x8xf32> to vector<8x8xf32>
    %cst_323 = arith.constant dense<0.000000e+00> : vector<64x8xf32>
    %279 = tpu.matmul %276, %129, %cst_323 {dimension_numbers = #tpu.dot_dimension_numbers<[1], [0], [0], [1], [0, 0, 1, 1], [], []>} : vector<64x64xf32>, vector<64x8xf32>, vector<64x8xf32> -> vector<64x8xf32>
    %cst_324 = arith.constant dense<0.000000e+00> : vector<64x8xf32>
    %280 = tpu.matmul %279, %278, %cst_324 {dimension_numbers = #tpu.dot_dimension_numbers<[1], [0], [0], [1], [0, 0, 1, 1], [], []>} : vector<64x8xf32>, vector<8x8xf32>, vector<64x8xf32> -> vector<64x8xf32>
    %281 = arith.addf %274, %280 : vector<64x8xf32>
    %c2_325 = arith.constant 2 : index
    %c8_326 = arith.constant 8 : index
    %c0_327 = arith.constant 0 : index
    %c0_328 = arith.constant 0 : index
    %282 = vector.load %arg3[%c2_325, %c8_326, %c0_327, %c0_328] : memref<5x9x64x256xf32, #tpu.memory_space<vmem>>, vector<1x1x64x64xf32>
    %283 = vector.shape_cast %282 : vector<1x1x64x64xf32> to vector<64x64xf32>
    %c2_329 = arith.constant 2 : index
    %c8_330 = arith.constant 8 : index
    %c0_331 = arith.constant 0 : index
    %c0_332 = arith.constant 0 : index
    %284 = vector.load %arg4[%c2_329, %c8_330, %c0_331, %c0_332] : memref<8x9x16x32xf32, #tpu.memory_space<vmem>>, vector<1x1x8x8xf32>
    %285 = vector.shape_cast %284 : vector<1x1x8x8xf32> to vector<8x8xf32>
    %cst_333 = arith.constant dense<0.000000e+00> : vector<64x8xf32>
    %286 = tpu.matmul %283, %129, %cst_333 {dimension_numbers = #tpu.dot_dimension_numbers<[1], [0], [0], [1], [0, 0, 1, 1], [], []>} : vector<64x64xf32>, vector<64x8xf32>, vector<64x8xf32> -> vector<64x8xf32>
    %cst_334 = arith.constant dense<0.000000e+00> : vector<64x8xf32>
    %287 = tpu.matmul %286, %285, %cst_334 {dimension_numbers = #tpu.dot_dimension_numbers<[1], [0], [0], [1], [0, 0, 1, 1], [], []>} : vector<64x8xf32>, vector<8x8xf32>, vector<64x8xf32> -> vector<64x8xf32>
    %288 = arith.addf %281, %287 : vector<64x8xf32>
    %c3_335 = arith.constant 3 : index
    %c0_336 = arith.constant 0 : index
    %c0_337 = arith.constant 0 : index
    %289 = vector.load %arg7[%c3_335, %c0_336, %c0_337] : memref<8x3x32xf32, #tpu.memory_space<vmem>>, vector<1x1x8xf32>
    %290 = vector.shape_cast %289 : vector<1x1x8xf32> to vector<1x8xf32>
    %291 = vector.broadcast %290 : vector<1x8xf32> to vector<64x8xf32>
    %292 = arith.addf %288, %291 : vector<64x8xf32>
    %cst_338 = arith.constant dense<0.000000e+00> : vector<8xf32>
    %293 = vector.multi_reduction <add>, %292, %cst_338 [0] : vector<64x8xf32> to vector<8xf32>
    %294 = vector.shape_cast %293 : vector<8xf32> to vector<1x8xf32>
    %cst_339 = arith.constant 6.400000e+01 : f32
    %295 = vector.broadcast %cst_339 : f32 to vector<1x8xf32>
    %296 = arith.divf %294, %295 : vector<1x8xf32>
    %c3_340 = arith.constant 3 : index
    %c0_341 = arith.constant 0 : index
    %c0_342 = arith.constant 0 : index
    %297 = vector.load %arg5[%c3_340, %c0_341, %c0_342] : memref<8x32x8xf32, #tpu.memory_space<vmem>>, vector<1x8x2xf32>
    %298 = vector.shape_cast %297 : vector<1x8x2xf32> to vector<8x2xf32>
    %cst_343 = arith.constant dense<0.000000e+00> : vector<1x2xf32>
    %299 = tpu.matmul %296, %298, %cst_343 {dimension_numbers = #tpu.dot_dimension_numbers<[1], [0], [0], [1], [0, 0, 1, 1], [], []>} : vector<1x8xf32>, vector<8x2xf32>, vector<1x2xf32> -> vector<1x2xf32>
    %c3_344 = arith.constant 3 : index
    %c1_345 = arith.constant 1 : index
    %c0_346 = arith.constant 0 : index
    %300 = vector.load %arg7[%c3_344, %c1_345, %c0_346] : memref<8x3x32xf32, #tpu.memory_space<vmem>>, vector<1x1x2xf32>
    %301 = vector.shape_cast %300 : vector<1x1x2xf32> to vector<1x2xf32>
    %302 = arith.addf %299, %301 : vector<1x2xf32>
    %cst_347 = arith.constant 0.000000e+00 : f32
    %303 = vector.broadcast %cst_347 : f32 to vector<1x2xf32>
    %304 = arith.maximumf %302, %303 : vector<1x2xf32>
    %c3_348 = arith.constant 3 : index
    %c0_349 = arith.constant 0 : index
    %c0_350 = arith.constant 0 : index
    %305 = vector.load %arg6[%c3_348, %c0_349, %c0_350] : memref<8x8x32xf32, #tpu.memory_space<vmem>>, vector<1x2x8xf32>
    %306 = vector.shape_cast %305 : vector<1x2x8xf32> to vector<2x8xf32>
    %cst_351 = arith.constant dense<0.000000e+00> : vector<1x8xf32>
    %307 = tpu.matmul %304, %306, %cst_351 {dimension_numbers = #tpu.dot_dimension_numbers<[1], [0], [0], [1], [0, 0, 1, 1], [], []>} : vector<1x2xf32>, vector<2x8xf32>, vector<1x8xf32> -> vector<1x8xf32>
    %c3_352 = arith.constant 3 : index
    %c2_353 = arith.constant 2 : index
    %c0_354 = arith.constant 0 : index
    %308 = vector.load %arg7[%c3_352, %c2_353, %c0_354] : memref<8x3x32xf32, #tpu.memory_space<vmem>>, vector<1x1x8xf32>
    %309 = vector.shape_cast %308 : vector<1x1x8xf32> to vector<1x8xf32>
    %310 = arith.addf %307, %309 : vector<1x8xf32>
    %311 = arith.negf %310 : vector<1x8xf32>
    %312 = math.exp %311 : vector<1x8xf32>
    %cst_355 = arith.constant 1.000000e+00 : f32
    %313 = vector.broadcast %cst_355 : f32 to vector<1x8xf32>
    %314 = arith.addf %313, %312 : vector<1x8xf32>
    %315 = arith.divf %313, %314 : vector<1x8xf32>
    %316 = vector.broadcast %315 : vector<1x8xf32> to vector<64x8xf32>
    %317 = arith.mulf %292, %316 : vector<64x8xf32>
    %cst_356 = arith.constant 0.000000e+00 : f32
    %318 = vector.broadcast %cst_356 : f32 to vector<64x8xf32>
    %319 = arith.maximumf %317, %318 : vector<64x8xf32>
    %cst_357 = arith.constant 0.000000e+00 : f32
    %320 = vector.broadcast %cst_357 : f32 to vector<16x16xf32>
    %c1_358 = arith.constant 1 : index
    %c0_359 = arith.constant 0 : index
    %c0_360 = arith.constant 0 : index
    %c0_361 = arith.constant 0 : index
    %321 = vector.load %arg3[%c1_358, %c0_359, %c0_360, %c0_361] : memref<5x9x64x256xf32, #tpu.memory_space<vmem>>, vector<1x1x16x64xf32>
    %322 = vector.shape_cast %321 : vector<1x1x16x64xf32> to vector<16x64xf32>
    %c4_362 = arith.constant 4 : index
    %c0_363 = arith.constant 0 : index
    %c0_364 = arith.constant 0 : index
    %c0_365 = arith.constant 0 : index
    %323 = vector.load %arg4[%c4_362, %c0_363, %c0_364, %c0_365] : memref<8x9x16x32xf32, #tpu.memory_space<vmem>>, vector<1x1x8x16xf32>
    %324 = vector.shape_cast %323 : vector<1x1x8x16xf32> to vector<8x16xf32>
    %cst_366 = arith.constant dense<0.000000e+00> : vector<16x8xf32>
    %325 = tpu.matmul %322, %319, %cst_366 {dimension_numbers = #tpu.dot_dimension_numbers<[1], [0], [0], [1], [0, 0, 1, 1], [], []>} : vector<16x64xf32>, vector<64x8xf32>, vector<16x8xf32> -> vector<16x8xf32>
    %cst_367 = arith.constant dense<0.000000e+00> : vector<16x16xf32>
    %326 = tpu.matmul %325, %324, %cst_367 {dimension_numbers = #tpu.dot_dimension_numbers<[1], [0], [0], [1], [0, 0, 1, 1], [], []>} : vector<16x8xf32>, vector<8x16xf32>, vector<16x16xf32> -> vector<16x16xf32>
    %327 = arith.addf %320, %326 : vector<16x16xf32>
    %c1_368 = arith.constant 1 : index
    %c1_369 = arith.constant 1 : index
    %c0_370 = arith.constant 0 : index
    %c0_371 = arith.constant 0 : index
    %328 = vector.load %arg3[%c1_368, %c1_369, %c0_370, %c0_371] : memref<5x9x64x256xf32, #tpu.memory_space<vmem>>, vector<1x1x16x64xf32>
    %329 = vector.shape_cast %328 : vector<1x1x16x64xf32> to vector<16x64xf32>
    %c4_372 = arith.constant 4 : index
    %c1_373 = arith.constant 1 : index
    %c0_374 = arith.constant 0 : index
    %c0_375 = arith.constant 0 : index
    %330 = vector.load %arg4[%c4_372, %c1_373, %c0_374, %c0_375] : memref<8x9x16x32xf32, #tpu.memory_space<vmem>>, vector<1x1x8x16xf32>
    %331 = vector.shape_cast %330 : vector<1x1x8x16xf32> to vector<8x16xf32>
    %cst_376 = arith.constant dense<0.000000e+00> : vector<16x8xf32>
    %332 = tpu.matmul %329, %319, %cst_376 {dimension_numbers = #tpu.dot_dimension_numbers<[1], [0], [0], [1], [0, 0, 1, 1], [], []>} : vector<16x64xf32>, vector<64x8xf32>, vector<16x8xf32> -> vector<16x8xf32>
    %cst_377 = arith.constant dense<0.000000e+00> : vector<16x16xf32>
    %333 = tpu.matmul %332, %331, %cst_377 {dimension_numbers = #tpu.dot_dimension_numbers<[1], [0], [0], [1], [0, 0, 1, 1], [], []>} : vector<16x8xf32>, vector<8x16xf32>, vector<16x16xf32> -> vector<16x16xf32>
    %334 = arith.addf %327, %333 : vector<16x16xf32>
    %c1_378 = arith.constant 1 : index
    %c2_379 = arith.constant 2 : index
    %c0_380 = arith.constant 0 : index
    %c0_381 = arith.constant 0 : index
    %335 = vector.load %arg3[%c1_378, %c2_379, %c0_380, %c0_381] : memref<5x9x64x256xf32, #tpu.memory_space<vmem>>, vector<1x1x16x64xf32>
    %336 = vector.shape_cast %335 : vector<1x1x16x64xf32> to vector<16x64xf32>
    %c4_382 = arith.constant 4 : index
    %c2_383 = arith.constant 2 : index
    %c0_384 = arith.constant 0 : index
    %c0_385 = arith.constant 0 : index
    %337 = vector.load %arg4[%c4_382, %c2_383, %c0_384, %c0_385] : memref<8x9x16x32xf32, #tpu.memory_space<vmem>>, vector<1x1x8x16xf32>
    %338 = vector.shape_cast %337 : vector<1x1x8x16xf32> to vector<8x16xf32>
    %cst_386 = arith.constant dense<0.000000e+00> : vector<16x8xf32>
    %339 = tpu.matmul %336, %319, %cst_386 {dimension_numbers = #tpu.dot_dimension_numbers<[1], [0], [0], [1], [0, 0, 1, 1], [], []>} : vector<16x64xf32>, vector<64x8xf32>, vector<16x8xf32> -> vector<16x8xf32>
    %cst_387 = arith.constant dense<0.000000e+00> : vector<16x16xf32>
    %340 = tpu.matmul %339, %338, %cst_387 {dimension_numbers = #tpu.dot_dimension_numbers<[1], [0], [0], [1], [0, 0, 1, 1], [], []>} : vector<16x8xf32>, vector<8x16xf32>, vector<16x16xf32> -> vector<16x16xf32>
    %341 = arith.addf %334, %340 : vector<16x16xf32>
    %c1_388 = arith.constant 1 : index
    %c3_389 = arith.constant 3 : index
    %c0_390 = arith.constant 0 : index
    %c0_391 = arith.constant 0 : index
    %342 = vector.load %arg3[%c1_388, %c3_389, %c0_390, %c0_391] : memref<5x9x64x256xf32, #tpu.memory_space<vmem>>, vector<1x1x16x64xf32>
    %343 = vector.shape_cast %342 : vector<1x1x16x64xf32> to vector<16x64xf32>
    %c4_392 = arith.constant 4 : index
    %c3_393 = arith.constant 3 : index
    %c0_394 = arith.constant 0 : index
    %c0_395 = arith.constant 0 : index
    %344 = vector.load %arg4[%c4_392, %c3_393, %c0_394, %c0_395] : memref<8x9x16x32xf32, #tpu.memory_space<vmem>>, vector<1x1x8x16xf32>
    %345 = vector.shape_cast %344 : vector<1x1x8x16xf32> to vector<8x16xf32>
    %cst_396 = arith.constant dense<0.000000e+00> : vector<16x8xf32>
    %346 = tpu.matmul %343, %319, %cst_396 {dimension_numbers = #tpu.dot_dimension_numbers<[1], [0], [0], [1], [0, 0, 1, 1], [], []>} : vector<16x64xf32>, vector<64x8xf32>, vector<16x8xf32> -> vector<16x8xf32>
    %cst_397 = arith.constant dense<0.000000e+00> : vector<16x16xf32>
    %347 = tpu.matmul %346, %345, %cst_397 {dimension_numbers = #tpu.dot_dimension_numbers<[1], [0], [0], [1], [0, 0, 1, 1], [], []>} : vector<16x8xf32>, vector<8x16xf32>, vector<16x16xf32> -> vector<16x16xf32>
    %348 = arith.addf %341, %347 : vector<16x16xf32>
    %c1_398 = arith.constant 1 : index
    %c4_399 = arith.constant 4 : index
    %c0_400 = arith.constant 0 : index
    %c0_401 = arith.constant 0 : index
    %349 = vector.load %arg3[%c1_398, %c4_399, %c0_400, %c0_401] : memref<5x9x64x256xf32, #tpu.memory_space<vmem>>, vector<1x1x16x64xf32>
    %350 = vector.shape_cast %349 : vector<1x1x16x64xf32> to vector<16x64xf32>
    %c4_402 = arith.constant 4 : index
    %c4_403 = arith.constant 4 : index
    %c0_404 = arith.constant 0 : index
    %c0_405 = arith.constant 0 : index
    %351 = vector.load %arg4[%c4_402, %c4_403, %c0_404, %c0_405] : memref<8x9x16x32xf32, #tpu.memory_space<vmem>>, vector<1x1x8x16xf32>
    %352 = vector.shape_cast %351 : vector<1x1x8x16xf32> to vector<8x16xf32>
    %cst_406 = arith.constant dense<0.000000e+00> : vector<16x8xf32>
    %353 = tpu.matmul %350, %319, %cst_406 {dimension_numbers = #tpu.dot_dimension_numbers<[1], [0], [0], [1], [0, 0, 1, 1], [], []>} : vector<16x64xf32>, vector<64x8xf32>, vector<16x8xf32> -> vector<16x8xf32>
    %cst_407 = arith.constant dense<0.000000e+00> : vector<16x16xf32>
    %354 = tpu.matmul %353, %352, %cst_407 {dimension_numbers = #tpu.dot_dimension_numbers<[1], [0], [0], [1], [0, 0, 1, 1], [], []>} : vector<16x8xf32>, vector<8x16xf32>, vector<16x16xf32> -> vector<16x16xf32>
    %355 = arith.addf %348, %354 : vector<16x16xf32>
    %c1_408 = arith.constant 1 : index
    %c5_409 = arith.constant 5 : index
    %c0_410 = arith.constant 0 : index
    %c0_411 = arith.constant 0 : index
    %356 = vector.load %arg3[%c1_408, %c5_409, %c0_410, %c0_411] : memref<5x9x64x256xf32, #tpu.memory_space<vmem>>, vector<1x1x16x64xf32>
    %357 = vector.shape_cast %356 : vector<1x1x16x64xf32> to vector<16x64xf32>
    %c4_412 = arith.constant 4 : index
    %c5_413 = arith.constant 5 : index
    %c0_414 = arith.constant 0 : index
    %c0_415 = arith.constant 0 : index
    %358 = vector.load %arg4[%c4_412, %c5_413, %c0_414, %c0_415] : memref<8x9x16x32xf32, #tpu.memory_space<vmem>>, vector<1x1x8x16xf32>
    %359 = vector.shape_cast %358 : vector<1x1x8x16xf32> to vector<8x16xf32>
    %cst_416 = arith.constant dense<0.000000e+00> : vector<16x8xf32>
    %360 = tpu.matmul %357, %319, %cst_416 {dimension_numbers = #tpu.dot_dimension_numbers<[1], [0], [0], [1], [0, 0, 1, 1], [], []>} : vector<16x64xf32>, vector<64x8xf32>, vector<16x8xf32> -> vector<16x8xf32>
    %cst_417 = arith.constant dense<0.000000e+00> : vector<16x16xf32>
    %361 = tpu.matmul %360, %359, %cst_417 {dimension_numbers = #tpu.dot_dimension_numbers<[1], [0], [0], [1], [0, 0, 1, 1], [], []>} : vector<16x8xf32>, vector<8x16xf32>, vector<16x16xf32> -> vector<16x16xf32>
    %362 = arith.addf %355, %361 : vector<16x16xf32>
    %c1_418 = arith.constant 1 : index
    %c6_419 = arith.constant 6 : index
    %c0_420 = arith.constant 0 : index
    %c0_421 = arith.constant 0 : index
    %363 = vector.load %arg3[%c1_418, %c6_419, %c0_420, %c0_421] : memref<5x9x64x256xf32, #tpu.memory_space<vmem>>, vector<1x1x16x64xf32>
    %364 = vector.shape_cast %363 : vector<1x1x16x64xf32> to vector<16x64xf32>
    %c4_422 = arith.constant 4 : index
    %c6_423 = arith.constant 6 : index
    %c0_424 = arith.constant 0 : index
    %c0_425 = arith.constant 0 : index
    %365 = vector.load %arg4[%c4_422, %c6_423, %c0_424, %c0_425] : memref<8x9x16x32xf32, #tpu.memory_space<vmem>>, vector<1x1x8x16xf32>
    %366 = vector.shape_cast %365 : vector<1x1x8x16xf32> to vector<8x16xf32>
    %cst_426 = arith.constant dense<0.000000e+00> : vector<16x8xf32>
    %367 = tpu.matmul %364, %319, %cst_426 {dimension_numbers = #tpu.dot_dimension_numbers<[1], [0], [0], [1], [0, 0, 1, 1], [], []>} : vector<16x64xf32>, vector<64x8xf32>, vector<16x8xf32> -> vector<16x8xf32>
    %cst_427 = arith.constant dense<0.000000e+00> : vector<16x16xf32>
    %368 = tpu.matmul %367, %366, %cst_427 {dimension_numbers = #tpu.dot_dimension_numbers<[1], [0], [0], [1], [0, 0, 1, 1], [], []>} : vector<16x8xf32>, vector<8x16xf32>, vector<16x16xf32> -> vector<16x16xf32>
    %369 = arith.addf %362, %368 : vector<16x16xf32>
    %c1_428 = arith.constant 1 : index
    %c7_429 = arith.constant 7 : index
    %c0_430 = arith.constant 0 : index
    %c0_431 = arith.constant 0 : index
    %370 = vector.load %arg3[%c1_428, %c7_429, %c0_430, %c0_431] : memref<5x9x64x256xf32, #tpu.memory_space<vmem>>, vector<1x1x16x64xf32>
    %371 = vector.shape_cast %370 : vector<1x1x16x64xf32> to vector<16x64xf32>
    %c4_432 = arith.constant 4 : index
    %c7_433 = arith.constant 7 : index
    %c0_434 = arith.constant 0 : index
    %c0_435 = arith.constant 0 : index
    %372 = vector.load %arg4[%c4_432, %c7_433, %c0_434, %c0_435] : memref<8x9x16x32xf32, #tpu.memory_space<vmem>>, vector<1x1x8x16xf32>
    %373 = vector.shape_cast %372 : vector<1x1x8x16xf32> to vector<8x16xf32>
    %cst_436 = arith.constant dense<0.000000e+00> : vector<16x8xf32>
    %374 = tpu.matmul %371, %319, %cst_436 {dimension_numbers = #tpu.dot_dimension_numbers<[1], [0], [0], [1], [0, 0, 1, 1], [], []>} : vector<16x64xf32>, vector<64x8xf32>, vector<16x8xf32> -> vector<16x8xf32>
    %cst_437 = arith.constant dense<0.000000e+00> : vector<16x16xf32>
    %375 = tpu.matmul %374, %373, %cst_437 {dimension_numbers = #tpu.dot_dimension_numbers<[1], [0], [0], [1], [0, 0, 1, 1], [], []>} : vector<16x8xf32>, vector<8x16xf32>, vector<16x16xf32> -> vector<16x16xf32>
    %376 = arith.addf %369, %375 : vector<16x16xf32>
    %c1_438 = arith.constant 1 : index
    %c8_439 = arith.constant 8 : index
    %c0_440 = arith.constant 0 : index
    %c0_441 = arith.constant 0 : index
    %377 = vector.load %arg3[%c1_438, %c8_439, %c0_440, %c0_441] : memref<5x9x64x256xf32, #tpu.memory_space<vmem>>, vector<1x1x16x64xf32>
    %378 = vector.shape_cast %377 : vector<1x1x16x64xf32> to vector<16x64xf32>
    %c4_442 = arith.constant 4 : index
    %c8_443 = arith.constant 8 : index
    %c0_444 = arith.constant 0 : index
    %c0_445 = arith.constant 0 : index
    %379 = vector.load %arg4[%c4_442, %c8_443, %c0_444, %c0_445] : memref<8x9x16x32xf32, #tpu.memory_space<vmem>>, vector<1x1x8x16xf32>
    %380 = vector.shape_cast %379 : vector<1x1x8x16xf32> to vector<8x16xf32>
    %cst_446 = arith.constant dense<0.000000e+00> : vector<16x8xf32>
    %381 = tpu.matmul %378, %319, %cst_446 {dimension_numbers = #tpu.dot_dimension_numbers<[1], [0], [0], [1], [0, 0, 1, 1], [], []>} : vector<16x64xf32>, vector<64x8xf32>, vector<16x8xf32> -> vector<16x8xf32>
    %cst_447 = arith.constant dense<0.000000e+00> : vector<16x16xf32>
    %382 = tpu.matmul %381, %380, %cst_447 {dimension_numbers = #tpu.dot_dimension_numbers<[1], [0], [0], [1], [0, 0, 1, 1], [], []>} : vector<16x8xf32>, vector<8x16xf32>, vector<16x16xf32> -> vector<16x16xf32>
    %383 = arith.addf %376, %382 : vector<16x16xf32>
    %c5_448 = arith.constant 5 : index
    %c0_449 = arith.constant 0 : index
    %c0_450 = arith.constant 0 : index
    %384 = vector.load %arg7[%c5_448, %c0_449, %c0_450] : memref<8x3x32xf32, #tpu.memory_space<vmem>>, vector<1x1x16xf32>
    %385 = vector.shape_cast %384 : vector<1x1x16xf32> to vector<1x16xf32>
    %386 = vector.broadcast %385 : vector<1x16xf32> to vector<16x16xf32>
    %387 = arith.addf %383, %386 : vector<16x16xf32>
    %cst_451 = arith.constant dense<0.000000e+00> : vector<16xf32>
    %388 = vector.multi_reduction <add>, %387, %cst_451 [0] : vector<16x16xf32> to vector<16xf32>
    %389 = vector.shape_cast %388 : vector<16xf32> to vector<1x16xf32>
    %cst_452 = arith.constant 1.600000e+01 : f32
    %390 = vector.broadcast %cst_452 : f32 to vector<1x16xf32>
    %391 = arith.divf %389, %390 : vector<1x16xf32>
    %c5_453 = arith.constant 5 : index
    %c0_454 = arith.constant 0 : index
    %c0_455 = arith.constant 0 : index
    %392 = vector.load %arg5[%c5_453, %c0_454, %c0_455] : memref<8x32x8xf32, #tpu.memory_space<vmem>>, vector<1x16x4xf32>
    %393 = vector.shape_cast %392 : vector<1x16x4xf32> to vector<16x4xf32>
    %cst_456 = arith.constant dense<0.000000e+00> : vector<1x4xf32>
    %394 = tpu.matmul %391, %393, %cst_456 {dimension_numbers = #tpu.dot_dimension_numbers<[1], [0], [0], [1], [0, 0, 1, 1], [], []>} : vector<1x16xf32>, vector<16x4xf32>, vector<1x4xf32> -> vector<1x4xf32>
    %c5_457 = arith.constant 5 : index
    %c1_458 = arith.constant 1 : index
    %c0_459 = arith.constant 0 : index
    %395 = vector.load %arg7[%c5_457, %c1_458, %c0_459] : memref<8x3x32xf32, #tpu.memory_space<vmem>>, vector<1x1x4xf32>
    %396 = vector.shape_cast %395 : vector<1x1x4xf32> to vector<1x4xf32>
    %397 = arith.addf %394, %396 : vector<1x4xf32>
    %cst_460 = arith.constant 0.000000e+00 : f32
    %398 = vector.broadcast %cst_460 : f32 to vector<1x4xf32>
    %399 = arith.maximumf %397, %398 : vector<1x4xf32>
    %c5_461 = arith.constant 5 : index
    %c0_462 = arith.constant 0 : index
    %c0_463 = arith.constant 0 : index
    %400 = vector.load %arg6[%c5_461, %c0_462, %c0_463] : memref<8x8x32xf32, #tpu.memory_space<vmem>>, vector<1x4x16xf32>
    %401 = vector.shape_cast %400 : vector<1x4x16xf32> to vector<4x16xf32>
    %cst_464 = arith.constant dense<0.000000e+00> : vector<1x16xf32>
    %402 = tpu.matmul %399, %401, %cst_464 {dimension_numbers = #tpu.dot_dimension_numbers<[1], [0], [0], [1], [0, 0, 1, 1], [], []>} : vector<1x4xf32>, vector<4x16xf32>, vector<1x16xf32> -> vector<1x16xf32>
    %c5_465 = arith.constant 5 : index
    %c2_466 = arith.constant 2 : index
    %c0_467 = arith.constant 0 : index
    %403 = vector.load %arg7[%c5_465, %c2_466, %c0_467] : memref<8x3x32xf32, #tpu.memory_space<vmem>>, vector<1x1x16xf32>
    %404 = vector.shape_cast %403 : vector<1x1x16xf32> to vector<1x16xf32>
    %405 = arith.addf %402, %404 : vector<1x16xf32>
    %406 = arith.negf %405 : vector<1x16xf32>
    %407 = math.exp %406 : vector<1x16xf32>
    %cst_468 = arith.constant 1.000000e+00 : f32
    %408 = vector.broadcast %cst_468 : f32 to vector<1x16xf32>
    %409 = arith.addf %408, %407 : vector<1x16xf32>
    %410 = arith.divf %408, %409 : vector<1x16xf32>
    %411 = vector.broadcast %410 : vector<1x16xf32> to vector<16x16xf32>
    %412 = arith.mulf %387, %411 : vector<16x16xf32>
    %cst_469 = arith.constant 0.000000e+00 : f32
    %413 = vector.broadcast %cst_469 : f32 to vector<16x16xf32>
    %414 = arith.maximumf %412, %413 : vector<16x16xf32>
    %cst_470 = arith.constant 0.000000e+00 : f32
    %415 = vector.broadcast %cst_470 : f32 to vector<16x16xf32>
    %c3_471 = arith.constant 3 : index
    %c0_472 = arith.constant 0 : index
    %c0_473 = arith.constant 0 : index
    %c0_474 = arith.constant 0 : index
    %416 = vector.load %arg3[%c3_471, %c0_472, %c0_473, %c0_474] : memref<5x9x64x256xf32, #tpu.memory_space<vmem>>, vector<1x1x16x16xf32>
    %417 = vector.shape_cast %416 : vector<1x1x16x16xf32> to vector<16x16xf32>
    %c3_475 = arith.constant 3 : index
    %c0_476 = arith.constant 0 : index
    %c0_477 = arith.constant 0 : index
    %c0_478 = arith.constant 0 : index
    %418 = vector.load %arg4[%c3_475, %c0_476, %c0_477, %c0_478] : memref<8x9x16x32xf32, #tpu.memory_space<vmem>>, vector<1x1x16x16xf32>
    %419 = vector.shape_cast %418 : vector<1x1x16x16xf32> to vector<16x16xf32>
    %cst_479 = arith.constant dense<0.000000e+00> : vector<16x16xf32>
    %420 = tpu.matmul %417, %224, %cst_479 {dimension_numbers = #tpu.dot_dimension_numbers<[1], [0], [0], [1], [0, 0, 1, 1], [], []>} : vector<16x16xf32>, vector<16x16xf32>, vector<16x16xf32> -> vector<16x16xf32>
    %cst_480 = arith.constant dense<0.000000e+00> : vector<16x16xf32>
    %421 = tpu.matmul %420, %419, %cst_480 {dimension_numbers = #tpu.dot_dimension_numbers<[1], [0], [0], [1], [0, 0, 1, 1], [], []>} : vector<16x16xf32>, vector<16x16xf32>, vector<16x16xf32> -> vector<16x16xf32>
    %422 = arith.addf %415, %421 : vector<16x16xf32>
    %c3_481 = arith.constant 3 : index
    %c1_482 = arith.constant 1 : index
    %c0_483 = arith.constant 0 : index
    %c0_484 = arith.constant 0 : index
    %423 = vector.load %arg3[%c3_481, %c1_482, %c0_483, %c0_484] : memref<5x9x64x256xf32, #tpu.memory_space<vmem>>, vector<1x1x16x16xf32>
    %424 = vector.shape_cast %423 : vector<1x1x16x16xf32> to vector<16x16xf32>
    %c3_485 = arith.constant 3 : index
    %c1_486 = arith.constant 1 : index
    %c0_487 = arith.constant 0 : index
    %c0_488 = arith.constant 0 : index
    %425 = vector.load %arg4[%c3_485, %c1_486, %c0_487, %c0_488] : memref<8x9x16x32xf32, #tpu.memory_space<vmem>>, vector<1x1x16x16xf32>
    %426 = vector.shape_cast %425 : vector<1x1x16x16xf32> to vector<16x16xf32>
    %cst_489 = arith.constant dense<0.000000e+00> : vector<16x16xf32>
    %427 = tpu.matmul %424, %224, %cst_489 {dimension_numbers = #tpu.dot_dimension_numbers<[1], [0], [0], [1], [0, 0, 1, 1], [], []>} : vector<16x16xf32>, vector<16x16xf32>, vector<16x16xf32> -> vector<16x16xf32>
    %cst_490 = arith.constant dense<0.000000e+00> : vector<16x16xf32>
    %428 = tpu.matmul %427, %426, %cst_490 {dimension_numbers = #tpu.dot_dimension_numbers<[1], [0], [0], [1], [0, 0, 1, 1], [], []>} : vector<16x16xf32>, vector<16x16xf32>, vector<16x16xf32> -> vector<16x16xf32>
    %429 = arith.addf %422, %428 : vector<16x16xf32>
    %c3_491 = arith.constant 3 : index
    %c2_492 = arith.constant 2 : index
    %c0_493 = arith.constant 0 : index
    %c0_494 = arith.constant 0 : index
    %430 = vector.load %arg3[%c3_491, %c2_492, %c0_493, %c0_494] : memref<5x9x64x256xf32, #tpu.memory_space<vmem>>, vector<1x1x16x16xf32>
    %431 = vector.shape_cast %430 : vector<1x1x16x16xf32> to vector<16x16xf32>
    %c3_495 = arith.constant 3 : index
    %c2_496 = arith.constant 2 : index
    %c0_497 = arith.constant 0 : index
    %c0_498 = arith.constant 0 : index
    %432 = vector.load %arg4[%c3_495, %c2_496, %c0_497, %c0_498] : memref<8x9x16x32xf32, #tpu.memory_space<vmem>>, vector<1x1x16x16xf32>
    %433 = vector.shape_cast %432 : vector<1x1x16x16xf32> to vector<16x16xf32>
    %cst_499 = arith.constant dense<0.000000e+00> : vector<16x16xf32>
    %434 = tpu.matmul %431, %224, %cst_499 {dimension_numbers = #tpu.dot_dimension_numbers<[1], [0], [0], [1], [0, 0, 1, 1], [], []>} : vector<16x16xf32>, vector<16x16xf32>, vector<16x16xf32> -> vector<16x16xf32>
    %cst_500 = arith.constant dense<0.000000e+00> : vector<16x16xf32>
    %435 = tpu.matmul %434, %433, %cst_500 {dimension_numbers = #tpu.dot_dimension_numbers<[1], [0], [0], [1], [0, 0, 1, 1], [], []>} : vector<16x16xf32>, vector<16x16xf32>, vector<16x16xf32> -> vector<16x16xf32>
    %436 = arith.addf %429, %435 : vector<16x16xf32>
    %c3_501 = arith.constant 3 : index
    %c3_502 = arith.constant 3 : index
    %c0_503 = arith.constant 0 : index
    %c0_504 = arith.constant 0 : index
    %437 = vector.load %arg3[%c3_501, %c3_502, %c0_503, %c0_504] : memref<5x9x64x256xf32, #tpu.memory_space<vmem>>, vector<1x1x16x16xf32>
    %438 = vector.shape_cast %437 : vector<1x1x16x16xf32> to vector<16x16xf32>
    %c3_505 = arith.constant 3 : index
    %c3_506 = arith.constant 3 : index
    %c0_507 = arith.constant 0 : index
    %c0_508 = arith.constant 0 : index
    %439 = vector.load %arg4[%c3_505, %c3_506, %c0_507, %c0_508] : memref<8x9x16x32xf32, #tpu.memory_space<vmem>>, vector<1x1x16x16xf32>
    %440 = vector.shape_cast %439 : vector<1x1x16x16xf32> to vector<16x16xf32>
    %cst_509 = arith.constant dense<0.000000e+00> : vector<16x16xf32>
    %441 = tpu.matmul %438, %224, %cst_509 {dimension_numbers = #tpu.dot_dimension_numbers<[1], [0], [0], [1], [0, 0, 1, 1], [], []>} : vector<16x16xf32>, vector<16x16xf32>, vector<16x16xf32> -> vector<16x16xf32>
    %cst_510 = arith.constant dense<0.000000e+00> : vector<16x16xf32>
    %442 = tpu.matmul %441, %440, %cst_510 {dimension_numbers = #tpu.dot_dimension_numbers<[1], [0], [0], [1], [0, 0, 1, 1], [], []>} : vector<16x16xf32>, vector<16x16xf32>, vector<16x16xf32> -> vector<16x16xf32>
    %443 = arith.addf %436, %442 : vector<16x16xf32>
    %c3_511 = arith.constant 3 : index
    %c4_512 = arith.constant 4 : index
    %c0_513 = arith.constant 0 : index
    %c0_514 = arith.constant 0 : index
    %444 = vector.load %arg3[%c3_511, %c4_512, %c0_513, %c0_514] : memref<5x9x64x256xf32, #tpu.memory_space<vmem>>, vector<1x1x16x16xf32>
    %445 = vector.shape_cast %444 : vector<1x1x16x16xf32> to vector<16x16xf32>
    %c3_515 = arith.constant 3 : index
    %c4_516 = arith.constant 4 : index
    %c0_517 = arith.constant 0 : index
    %c0_518 = arith.constant 0 : index
    %446 = vector.load %arg4[%c3_515, %c4_516, %c0_517, %c0_518] : memref<8x9x16x32xf32, #tpu.memory_space<vmem>>, vector<1x1x16x16xf32>
    %447 = vector.shape_cast %446 : vector<1x1x16x16xf32> to vector<16x16xf32>
    %cst_519 = arith.constant dense<0.000000e+00> : vector<16x16xf32>
    %448 = tpu.matmul %445, %224, %cst_519 {dimension_numbers = #tpu.dot_dimension_numbers<[1], [0], [0], [1], [0, 0, 1, 1], [], []>} : vector<16x16xf32>, vector<16x16xf32>, vector<16x16xf32> -> vector<16x16xf32>
    %cst_520 = arith.constant dense<0.000000e+00> : vector<16x16xf32>
    %449 = tpu.matmul %448, %447, %cst_520 {dimension_numbers = #tpu.dot_dimension_numbers<[1], [0], [0], [1], [0, 0, 1, 1], [], []>} : vector<16x16xf32>, vector<16x16xf32>, vector<16x16xf32> -> vector<16x16xf32>
    %450 = arith.addf %443, %449 : vector<16x16xf32>
    %c3_521 = arith.constant 3 : index
    %c5_522 = arith.constant 5 : index
    %c0_523 = arith.constant 0 : index
    %c0_524 = arith.constant 0 : index
    %451 = vector.load %arg3[%c3_521, %c5_522, %c0_523, %c0_524] : memref<5x9x64x256xf32, #tpu.memory_space<vmem>>, vector<1x1x16x16xf32>
    %452 = vector.shape_cast %451 : vector<1x1x16x16xf32> to vector<16x16xf32>
    %c3_525 = arith.constant 3 : index
    %c5_526 = arith.constant 5 : index
    %c0_527 = arith.constant 0 : index
    %c0_528 = arith.constant 0 : index
    %453 = vector.load %arg4[%c3_525, %c5_526, %c0_527, %c0_528] : memref<8x9x16x32xf32, #tpu.memory_space<vmem>>, vector<1x1x16x16xf32>
    %454 = vector.shape_cast %453 : vector<1x1x16x16xf32> to vector<16x16xf32>
    %cst_529 = arith.constant dense<0.000000e+00> : vector<16x16xf32>
    %455 = tpu.matmul %452, %224, %cst_529 {dimension_numbers = #tpu.dot_dimension_numbers<[1], [0], [0], [1], [0, 0, 1, 1], [], []>} : vector<16x16xf32>, vector<16x16xf32>, vector<16x16xf32> -> vector<16x16xf32>
    %cst_530 = arith.constant dense<0.000000e+00> : vector<16x16xf32>
    %456 = tpu.matmul %455, %454, %cst_530 {dimension_numbers = #tpu.dot_dimension_numbers<[1], [0], [0], [1], [0, 0, 1, 1], [], []>} : vector<16x16xf32>, vector<16x16xf32>, vector<16x16xf32> -> vector<16x16xf32>
    %457 = arith.addf %450, %456 : vector<16x16xf32>
    %c3_531 = arith.constant 3 : index
    %c6_532 = arith.constant 6 : index
    %c0_533 = arith.constant 0 : index
    %c0_534 = arith.constant 0 : index
    %458 = vector.load %arg3[%c3_531, %c6_532, %c0_533, %c0_534] : memref<5x9x64x256xf32, #tpu.memory_space<vmem>>, vector<1x1x16x16xf32>
    %459 = vector.shape_cast %458 : vector<1x1x16x16xf32> to vector<16x16xf32>
    %c3_535 = arith.constant 3 : index
    %c6_536 = arith.constant 6 : index
    %c0_537 = arith.constant 0 : index
    %c0_538 = arith.constant 0 : index
    %460 = vector.load %arg4[%c3_535, %c6_536, %c0_537, %c0_538] : memref<8x9x16x32xf32, #tpu.memory_space<vmem>>, vector<1x1x16x16xf32>
    %461 = vector.shape_cast %460 : vector<1x1x16x16xf32> to vector<16x16xf32>
    %cst_539 = arith.constant dense<0.000000e+00> : vector<16x16xf32>
    %462 = tpu.matmul %459, %224, %cst_539 {dimension_numbers = #tpu.dot_dimension_numbers<[1], [0], [0], [1], [0, 0, 1, 1], [], []>} : vector<16x16xf32>, vector<16x16xf32>, vector<16x16xf32> -> vector<16x16xf32>
    %cst_540 = arith.constant dense<0.000000e+00> : vector<16x16xf32>
    %463 = tpu.matmul %462, %461, %cst_540 {dimension_numbers = #tpu.dot_dimension_numbers<[1], [0], [0], [1], [0, 0, 1, 1], [], []>} : vector<16x16xf32>, vector<16x16xf32>, vector<16x16xf32> -> vector<16x16xf32>
    %464 = arith.addf %457, %463 : vector<16x16xf32>
    %c3_541 = arith.constant 3 : index
    %c7_542 = arith.constant 7 : index
    %c0_543 = arith.constant 0 : index
    %c0_544 = arith.constant 0 : index
    %465 = vector.load %arg3[%c3_541, %c7_542, %c0_543, %c0_544] : memref<5x9x64x256xf32, #tpu.memory_space<vmem>>, vector<1x1x16x16xf32>
    %466 = vector.shape_cast %465 : vector<1x1x16x16xf32> to vector<16x16xf32>
    %c3_545 = arith.constant 3 : index
    %c7_546 = arith.constant 7 : index
    %c0_547 = arith.constant 0 : index
    %c0_548 = arith.constant 0 : index
    %467 = vector.load %arg4[%c3_545, %c7_546, %c0_547, %c0_548] : memref<8x9x16x32xf32, #tpu.memory_space<vmem>>, vector<1x1x16x16xf32>
    %468 = vector.shape_cast %467 : vector<1x1x16x16xf32> to vector<16x16xf32>
    %cst_549 = arith.constant dense<0.000000e+00> : vector<16x16xf32>
    %469 = tpu.matmul %466, %224, %cst_549 {dimension_numbers = #tpu.dot_dimension_numbers<[1], [0], [0], [1], [0, 0, 1, 1], [], []>} : vector<16x16xf32>, vector<16x16xf32>, vector<16x16xf32> -> vector<16x16xf32>
    %cst_550 = arith.constant dense<0.000000e+00> : vector<16x16xf32>
    %470 = tpu.matmul %469, %468, %cst_550 {dimension_numbers = #tpu.dot_dimension_numbers<[1], [0], [0], [1], [0, 0, 1, 1], [], []>} : vector<16x16xf32>, vector<16x16xf32>, vector<16x16xf32> -> vector<16x16xf32>
    %471 = arith.addf %464, %470 : vector<16x16xf32>
    %c3_551 = arith.constant 3 : index
    %c8_552 = arith.constant 8 : index
    %c0_553 = arith.constant 0 : index
    %c0_554 = arith.constant 0 : index
    %472 = vector.load %arg3[%c3_551, %c8_552, %c0_553, %c0_554] : memref<5x9x64x256xf32, #tpu.memory_space<vmem>>, vector<1x1x16x16xf32>
    %473 = vector.shape_cast %472 : vector<1x1x16x16xf32> to vector<16x16xf32>
    %c3_555 = arith.constant 3 : index
    %c8_556 = arith.constant 8 : index
    %c0_557 = arith.constant 0 : index
    %c0_558 = arith.constant 0 : index
    %474 = vector.load %arg4[%c3_555, %c8_556, %c0_557, %c0_558] : memref<8x9x16x32xf32, #tpu.memory_space<vmem>>, vector<1x1x16x16xf32>
    %475 = vector.shape_cast %474 : vector<1x1x16x16xf32> to vector<16x16xf32>
    %cst_559 = arith.constant dense<0.000000e+00> : vector<16x16xf32>
    %476 = tpu.matmul %473, %224, %cst_559 {dimension_numbers = #tpu.dot_dimension_numbers<[1], [0], [0], [1], [0, 0, 1, 1], [], []>} : vector<16x16xf32>, vector<16x16xf32>, vector<16x16xf32> -> vector<16x16xf32>
    %cst_560 = arith.constant dense<0.000000e+00> : vector<16x16xf32>
    %477 = tpu.matmul %476, %475, %cst_560 {dimension_numbers = #tpu.dot_dimension_numbers<[1], [0], [0], [1], [0, 0, 1, 1], [], []>} : vector<16x16xf32>, vector<16x16xf32>, vector<16x16xf32> -> vector<16x16xf32>
    %478 = arith.addf %471, %477 : vector<16x16xf32>
    %c4_561 = arith.constant 4 : index
    %c0_562 = arith.constant 0 : index
    %c0_563 = arith.constant 0 : index
    %479 = vector.load %arg7[%c4_561, %c0_562, %c0_563] : memref<8x3x32xf32, #tpu.memory_space<vmem>>, vector<1x1x16xf32>
    %480 = vector.shape_cast %479 : vector<1x1x16xf32> to vector<1x16xf32>
    %481 = vector.broadcast %480 : vector<1x16xf32> to vector<16x16xf32>
    %482 = arith.addf %478, %481 : vector<16x16xf32>
    %cst_564 = arith.constant dense<0.000000e+00> : vector<16xf32>
    %483 = vector.multi_reduction <add>, %482, %cst_564 [0] : vector<16x16xf32> to vector<16xf32>
    %484 = vector.shape_cast %483 : vector<16xf32> to vector<1x16xf32>
    %cst_565 = arith.constant 1.600000e+01 : f32
    %485 = vector.broadcast %cst_565 : f32 to vector<1x16xf32>
    %486 = arith.divf %484, %485 : vector<1x16xf32>
    %c4_566 = arith.constant 4 : index
    %c0_567 = arith.constant 0 : index
    %c0_568 = arith.constant 0 : index
    %487 = vector.load %arg5[%c4_566, %c0_567, %c0_568] : memref<8x32x8xf32, #tpu.memory_space<vmem>>, vector<1x16x4xf32>
    %488 = vector.shape_cast %487 : vector<1x16x4xf32> to vector<16x4xf32>
    %cst_569 = arith.constant dense<0.000000e+00> : vector<1x4xf32>
    %489 = tpu.matmul %486, %488, %cst_569 {dimension_numbers = #tpu.dot_dimension_numbers<[1], [0], [0], [1], [0, 0, 1, 1], [], []>} : vector<1x16xf32>, vector<16x4xf32>, vector<1x4xf32> -> vector<1x4xf32>
    %c4_570 = arith.constant 4 : index
    %c1_571 = arith.constant 1 : index
    %c0_572 = arith.constant 0 : index
    %490 = vector.load %arg7[%c4_570, %c1_571, %c0_572] : memref<8x3x32xf32, #tpu.memory_space<vmem>>, vector<1x1x4xf32>
    %491 = vector.shape_cast %490 : vector<1x1x4xf32> to vector<1x4xf32>
    %492 = arith.addf %489, %491 : vector<1x4xf32>
    %cst_573 = arith.constant 0.000000e+00 : f32
    %493 = vector.broadcast %cst_573 : f32 to vector<1x4xf32>
    %494 = arith.maximumf %492, %493 : vector<1x4xf32>
    %c4_574 = arith.constant 4 : index
    %c0_575 = arith.constant 0 : index
    %c0_576 = arith.constant 0 : index
    %495 = vector.load %arg6[%c4_574, %c0_575, %c0_576] : memref<8x8x32xf32, #tpu.memory_space<vmem>>, vector<1x4x16xf32>
    %496 = vector.shape_cast %495 : vector<1x4x16xf32> to vector<4x16xf32>
    %cst_577 = arith.constant dense<0.000000e+00> : vector<1x16xf32>
    %497 = tpu.matmul %494, %496, %cst_577 {dimension_numbers = #tpu.dot_dimension_numbers<[1], [0], [0], [1], [0, 0, 1, 1], [], []>} : vector<1x4xf32>, vector<4x16xf32>, vector<1x16xf32> -> vector<1x16xf32>
    %c4_578 = arith.constant 4 : index
    %c2_579 = arith.constant 2 : index
    %c0_580 = arith.constant 0 : index
    %498 = vector.load %arg7[%c4_578, %c2_579, %c0_580] : memref<8x3x32xf32, #tpu.memory_space<vmem>>, vector<1x1x16xf32>
    %499 = vector.shape_cast %498 : vector<1x1x16xf32> to vector<1x16xf32>
    %500 = arith.addf %497, %499 : vector<1x16xf32>
    %501 = arith.negf %500 : vector<1x16xf32>
    %502 = math.exp %501 : vector<1x16xf32>
    %cst_581 = arith.constant 1.000000e+00 : f32
    %503 = vector.broadcast %cst_581 : f32 to vector<1x16xf32>
    %504 = arith.addf %503, %502 : vector<1x16xf32>
    %505 = arith.divf %503, %504 : vector<1x16xf32>
    %506 = vector.broadcast %505 : vector<1x16xf32> to vector<16x16xf32>
    %507 = arith.mulf %482, %506 : vector<16x16xf32>
    %cst_582 = arith.constant 0.000000e+00 : f32
    %508 = vector.broadcast %cst_582 : f32 to vector<16x16xf32>
    %509 = arith.maximumf %507, %508 : vector<16x16xf32>
    %cst_583 = arith.constant 0.000000e+00 : f32
    %510 = vector.broadcast %cst_583 : f32 to vector<16x16xf32>
    %c0_584 = arith.constant 0 : index
    %c0_585 = arith.constant 0 : index
    %c0_586 = arith.constant 0 : index
    %511 = vector.load %arg8[%c0_584, %c0_585, %c0_586] : memref<2x2x16xf32, #tpu.memory_space<vmem>>, vector<1x1x16xf32>
    %512 = vector.shape_cast %511 : vector<1x1x16xf32> to vector<1x16xf32>
    %513 = vector.broadcast %512 : vector<1x16xf32> to vector<16x16xf32>
    %514 = arith.mulf %509, %513 : vector<16x16xf32>
    %c0_587 = arith.constant 0 : index
    %c1_588 = arith.constant 1 : index
    %c0_589 = arith.constant 0 : index
    %515 = vector.load %arg8[%c0_587, %c1_588, %c0_589] : memref<2x2x16xf32, #tpu.memory_space<vmem>>, vector<1x1x16xf32>
    %516 = vector.shape_cast %515 : vector<1x1x16xf32> to vector<1x16xf32>
    %517 = vector.broadcast %516 : vector<1x16xf32> to vector<16x16xf32>
    %518 = arith.addf %514, %517 : vector<16x16xf32>
    %c1_590 = arith.constant 1 : index
    %c0_591 = arith.constant 0 : index
    %c0_592 = arith.constant 0 : index
    %519 = vector.load %arg8[%c1_590, %c0_591, %c0_592] : memref<2x2x16xf32, #tpu.memory_space<vmem>>, vector<1x1x16xf32>
    %520 = vector.shape_cast %519 : vector<1x1x16xf32> to vector<1x16xf32>
    %521 = vector.broadcast %520 : vector<1x16xf32> to vector<16x16xf32>
    %522 = arith.mulf %414, %521 : vector<16x16xf32>
    %c1_593 = arith.constant 1 : index
    %c1_594 = arith.constant 1 : index
    %c0_595 = arith.constant 0 : index
    %523 = vector.load %arg8[%c1_593, %c1_594, %c0_595] : memref<2x2x16xf32, #tpu.memory_space<vmem>>, vector<1x1x16xf32>
    %524 = vector.shape_cast %523 : vector<1x1x16xf32> to vector<1x16xf32>
    %525 = vector.broadcast %524 : vector<1x16xf32> to vector<16x16xf32>
    %526 = arith.addf %522, %525 : vector<16x16xf32>
    %c3_596 = arith.constant 3 : index
    %c0_597 = arith.constant 0 : index
    %c0_598 = arith.constant 0 : index
    %c0_599 = arith.constant 0 : index
    %527 = vector.load %arg3[%c3_596, %c0_597, %c0_598, %c0_599] : memref<5x9x64x256xf32, #tpu.memory_space<vmem>>, vector<1x1x16x16xf32>
    %528 = vector.shape_cast %527 : vector<1x1x16x16xf32> to vector<16x16xf32>
    %c5_600 = arith.constant 5 : index
    %c0_601 = arith.constant 0 : index
    %c0_602 = arith.constant 0 : index
    %c0_603 = arith.constant 0 : index
    %529 = vector.load %arg4[%c5_600, %c0_601, %c0_602, %c0_603] : memref<8x9x16x32xf32, #tpu.memory_space<vmem>>, vector<1x1x16x16xf32>
    %530 = vector.shape_cast %529 : vector<1x1x16x16xf32> to vector<16x16xf32>
    %c6_604 = arith.constant 6 : index
    %c0_605 = arith.constant 0 : index
    %c0_606 = arith.constant 0 : index
    %c0_607 = arith.constant 0 : index
    %531 = vector.load %arg4[%c6_604, %c0_605, %c0_606, %c0_607] : memref<8x9x16x32xf32, #tpu.memory_space<vmem>>, vector<1x1x16x16xf32>
    %532 = vector.shape_cast %531 : vector<1x1x16x16xf32> to vector<16x16xf32>
    %cst_608 = arith.constant dense<0.000000e+00> : vector<16x16xf32>
    %533 = tpu.matmul %518, %530, %cst_608 {dimension_numbers = #tpu.dot_dimension_numbers<[1], [0], [0], [1], [0, 0, 1, 1], [], []>} : vector<16x16xf32>, vector<16x16xf32>, vector<16x16xf32> -> vector<16x16xf32>
    %cst_609 = arith.constant dense<0.000000e+00> : vector<16x16xf32>
    %534 = tpu.matmul %526, %532, %cst_609 {dimension_numbers = #tpu.dot_dimension_numbers<[1], [0], [0], [1], [0, 0, 1, 1], [], []>} : vector<16x16xf32>, vector<16x16xf32>, vector<16x16xf32> -> vector<16x16xf32>
    %535 = arith.addf %533, %534 : vector<16x16xf32>
    %cst_610 = arith.constant dense<0.000000e+00> : vector<16x16xf32>
    %536 = tpu.matmul %528, %535, %cst_610 {dimension_numbers = #tpu.dot_dimension_numbers<[1], [0], [0], [1], [0, 0, 1, 1], [], []>} : vector<16x16xf32>, vector<16x16xf32>, vector<16x16xf32> -> vector<16x16xf32>
    %537 = arith.addf %510, %536 : vector<16x16xf32>
    %c3_611 = arith.constant 3 : index
    %c1_612 = arith.constant 1 : index
    %c0_613 = arith.constant 0 : index
    %c0_614 = arith.constant 0 : index
    %538 = vector.load %arg3[%c3_611, %c1_612, %c0_613, %c0_614] : memref<5x9x64x256xf32, #tpu.memory_space<vmem>>, vector<1x1x16x16xf32>
    %539 = vector.shape_cast %538 : vector<1x1x16x16xf32> to vector<16x16xf32>
    %c5_615 = arith.constant 5 : index
    %c1_616 = arith.constant 1 : index
    %c0_617 = arith.constant 0 : index
    %c0_618 = arith.constant 0 : index
    %540 = vector.load %arg4[%c5_615, %c1_616, %c0_617, %c0_618] : memref<8x9x16x32xf32, #tpu.memory_space<vmem>>, vector<1x1x16x16xf32>
    %541 = vector.shape_cast %540 : vector<1x1x16x16xf32> to vector<16x16xf32>
    %c6_619 = arith.constant 6 : index
    %c1_620 = arith.constant 1 : index
    %c0_621 = arith.constant 0 : index
    %c0_622 = arith.constant 0 : index
    %542 = vector.load %arg4[%c6_619, %c1_620, %c0_621, %c0_622] : memref<8x9x16x32xf32, #tpu.memory_space<vmem>>, vector<1x1x16x16xf32>
    %543 = vector.shape_cast %542 : vector<1x1x16x16xf32> to vector<16x16xf32>
    %cst_623 = arith.constant dense<0.000000e+00> : vector<16x16xf32>
    %544 = tpu.matmul %518, %541, %cst_623 {dimension_numbers = #tpu.dot_dimension_numbers<[1], [0], [0], [1], [0, 0, 1, 1], [], []>} : vector<16x16xf32>, vector<16x16xf32>, vector<16x16xf32> -> vector<16x16xf32>
    %cst_624 = arith.constant dense<0.000000e+00> : vector<16x16xf32>
    %545 = tpu.matmul %526, %543, %cst_624 {dimension_numbers = #tpu.dot_dimension_numbers<[1], [0], [0], [1], [0, 0, 1, 1], [], []>} : vector<16x16xf32>, vector<16x16xf32>, vector<16x16xf32> -> vector<16x16xf32>
    %546 = arith.addf %544, %545 : vector<16x16xf32>
    %cst_625 = arith.constant dense<0.000000e+00> : vector<16x16xf32>
    %547 = tpu.matmul %539, %546, %cst_625 {dimension_numbers = #tpu.dot_dimension_numbers<[1], [0], [0], [1], [0, 0, 1, 1], [], []>} : vector<16x16xf32>, vector<16x16xf32>, vector<16x16xf32> -> vector<16x16xf32>
    %548 = arith.addf %537, %547 : vector<16x16xf32>
    %c3_626 = arith.constant 3 : index
    %c2_627 = arith.constant 2 : index
    %c0_628 = arith.constant 0 : index
    %c0_629 = arith.constant 0 : index
    %549 = vector.load %arg3[%c3_626, %c2_627, %c0_628, %c0_629] : memref<5x9x64x256xf32, #tpu.memory_space<vmem>>, vector<1x1x16x16xf32>
    %550 = vector.shape_cast %549 : vector<1x1x16x16xf32> to vector<16x16xf32>
    %c5_630 = arith.constant 5 : index
    %c2_631 = arith.constant 2 : index
    %c0_632 = arith.constant 0 : index
    %c0_633 = arith.constant 0 : index
    %551 = vector.load %arg4[%c5_630, %c2_631, %c0_632, %c0_633] : memref<8x9x16x32xf32, #tpu.memory_space<vmem>>, vector<1x1x16x16xf32>
    %552 = vector.shape_cast %551 : vector<1x1x16x16xf32> to vector<16x16xf32>
    %c6_634 = arith.constant 6 : index
    %c2_635 = arith.constant 2 : index
    %c0_636 = arith.constant 0 : index
    %c0_637 = arith.constant 0 : index
    %553 = vector.load %arg4[%c6_634, %c2_635, %c0_636, %c0_637] : memref<8x9x16x32xf32, #tpu.memory_space<vmem>>, vector<1x1x16x16xf32>
    %554 = vector.shape_cast %553 : vector<1x1x16x16xf32> to vector<16x16xf32>
    %cst_638 = arith.constant dense<0.000000e+00> : vector<16x16xf32>
    %555 = tpu.matmul %518, %552, %cst_638 {dimension_numbers = #tpu.dot_dimension_numbers<[1], [0], [0], [1], [0, 0, 1, 1], [], []>} : vector<16x16xf32>, vector<16x16xf32>, vector<16x16xf32> -> vector<16x16xf32>
    %cst_639 = arith.constant dense<0.000000e+00> : vector<16x16xf32>
    %556 = tpu.matmul %526, %554, %cst_639 {dimension_numbers = #tpu.dot_dimension_numbers<[1], [0], [0], [1], [0, 0, 1, 1], [], []>} : vector<16x16xf32>, vector<16x16xf32>, vector<16x16xf32> -> vector<16x16xf32>
    %557 = arith.addf %555, %556 : vector<16x16xf32>
    %cst_640 = arith.constant dense<0.000000e+00> : vector<16x16xf32>
    %558 = tpu.matmul %550, %557, %cst_640 {dimension_numbers = #tpu.dot_dimension_numbers<[1], [0], [0], [1], [0, 0, 1, 1], [], []>} : vector<16x16xf32>, vector<16x16xf32>, vector<16x16xf32> -> vector<16x16xf32>
    %559 = arith.addf %548, %558 : vector<16x16xf32>
    %c3_641 = arith.constant 3 : index
    %c3_642 = arith.constant 3 : index
    %c0_643 = arith.constant 0 : index
    %c0_644 = arith.constant 0 : index
    %560 = vector.load %arg3[%c3_641, %c3_642, %c0_643, %c0_644] : memref<5x9x64x256xf32, #tpu.memory_space<vmem>>, vector<1x1x16x16xf32>
    %561 = vector.shape_cast %560 : vector<1x1x16x16xf32> to vector<16x16xf32>
    %c5_645 = arith.constant 5 : index
    %c3_646 = arith.constant 3 : index
    %c0_647 = arith.constant 0 : index
    %c0_648 = arith.constant 0 : index
    %562 = vector.load %arg4[%c5_645, %c3_646, %c0_647, %c0_648] : memref<8x9x16x32xf32, #tpu.memory_space<vmem>>, vector<1x1x16x16xf32>
    %563 = vector.shape_cast %562 : vector<1x1x16x16xf32> to vector<16x16xf32>
    %c6_649 = arith.constant 6 : index
    %c3_650 = arith.constant 3 : index
    %c0_651 = arith.constant 0 : index
    %c0_652 = arith.constant 0 : index
    %564 = vector.load %arg4[%c6_649, %c3_650, %c0_651, %c0_652] : memref<8x9x16x32xf32, #tpu.memory_space<vmem>>, vector<1x1x16x16xf32>
    %565 = vector.shape_cast %564 : vector<1x1x16x16xf32> to vector<16x16xf32>
    %cst_653 = arith.constant dense<0.000000e+00> : vector<16x16xf32>
    %566 = tpu.matmul %518, %563, %cst_653 {dimension_numbers = #tpu.dot_dimension_numbers<[1], [0], [0], [1], [0, 0, 1, 1], [], []>} : vector<16x16xf32>, vector<16x16xf32>, vector<16x16xf32> -> vector<16x16xf32>
    %cst_654 = arith.constant dense<0.000000e+00> : vector<16x16xf32>
    %567 = tpu.matmul %526, %565, %cst_654 {dimension_numbers = #tpu.dot_dimension_numbers<[1], [0], [0], [1], [0, 0, 1, 1], [], []>} : vector<16x16xf32>, vector<16x16xf32>, vector<16x16xf32> -> vector<16x16xf32>
    %568 = arith.addf %566, %567 : vector<16x16xf32>
    %cst_655 = arith.constant dense<0.000000e+00> : vector<16x16xf32>
    %569 = tpu.matmul %561, %568, %cst_655 {dimension_numbers = #tpu.dot_dimension_numbers<[1], [0], [0], [1], [0, 0, 1, 1], [], []>} : vector<16x16xf32>, vector<16x16xf32>, vector<16x16xf32> -> vector<16x16xf32>
    %570 = arith.addf %559, %569 : vector<16x16xf32>
    %c3_656 = arith.constant 3 : index
    %c4_657 = arith.constant 4 : index
    %c0_658 = arith.constant 0 : index
    %c0_659 = arith.constant 0 : index
    %571 = vector.load %arg3[%c3_656, %c4_657, %c0_658, %c0_659] : memref<5x9x64x256xf32, #tpu.memory_space<vmem>>, vector<1x1x16x16xf32>
    %572 = vector.shape_cast %571 : vector<1x1x16x16xf32> to vector<16x16xf32>
    %c5_660 = arith.constant 5 : index
    %c4_661 = arith.constant 4 : index
    %c0_662 = arith.constant 0 : index
    %c0_663 = arith.constant 0 : index
    %573 = vector.load %arg4[%c5_660, %c4_661, %c0_662, %c0_663] : memref<8x9x16x32xf32, #tpu.memory_space<vmem>>, vector<1x1x16x16xf32>
    %574 = vector.shape_cast %573 : vector<1x1x16x16xf32> to vector<16x16xf32>
    %c6_664 = arith.constant 6 : index
    %c4_665 = arith.constant 4 : index
    %c0_666 = arith.constant 0 : index
    %c0_667 = arith.constant 0 : index
    %575 = vector.load %arg4[%c6_664, %c4_665, %c0_666, %c0_667] : memref<8x9x16x32xf32, #tpu.memory_space<vmem>>, vector<1x1x16x16xf32>
    %576 = vector.shape_cast %575 : vector<1x1x16x16xf32> to vector<16x16xf32>
    %cst_668 = arith.constant dense<0.000000e+00> : vector<16x16xf32>
    %577 = tpu.matmul %518, %574, %cst_668 {dimension_numbers = #tpu.dot_dimension_numbers<[1], [0], [0], [1], [0, 0, 1, 1], [], []>} : vector<16x16xf32>, vector<16x16xf32>, vector<16x16xf32> -> vector<16x16xf32>
    %cst_669 = arith.constant dense<0.000000e+00> : vector<16x16xf32>
    %578 = tpu.matmul %526, %576, %cst_669 {dimension_numbers = #tpu.dot_dimension_numbers<[1], [0], [0], [1], [0, 0, 1, 1], [], []>} : vector<16x16xf32>, vector<16x16xf32>, vector<16x16xf32> -> vector<16x16xf32>
    %579 = arith.addf %577, %578 : vector<16x16xf32>
    %cst_670 = arith.constant dense<0.000000e+00> : vector<16x16xf32>
    %580 = tpu.matmul %572, %579, %cst_670 {dimension_numbers = #tpu.dot_dimension_numbers<[1], [0], [0], [1], [0, 0, 1, 1], [], []>} : vector<16x16xf32>, vector<16x16xf32>, vector<16x16xf32> -> vector<16x16xf32>
    %581 = arith.addf %570, %580 : vector<16x16xf32>
    %c3_671 = arith.constant 3 : index
    %c5_672 = arith.constant 5 : index
    %c0_673 = arith.constant 0 : index
    %c0_674 = arith.constant 0 : index
    %582 = vector.load %arg3[%c3_671, %c5_672, %c0_673, %c0_674] : memref<5x9x64x256xf32, #tpu.memory_space<vmem>>, vector<1x1x16x16xf32>
    %583 = vector.shape_cast %582 : vector<1x1x16x16xf32> to vector<16x16xf32>
    %c5_675 = arith.constant 5 : index
    %c5_676 = arith.constant 5 : index
    %c0_677 = arith.constant 0 : index
    %c0_678 = arith.constant 0 : index
    %584 = vector.load %arg4[%c5_675, %c5_676, %c0_677, %c0_678] : memref<8x9x16x32xf32, #tpu.memory_space<vmem>>, vector<1x1x16x16xf32>
    %585 = vector.shape_cast %584 : vector<1x1x16x16xf32> to vector<16x16xf32>
    %c6_679 = arith.constant 6 : index
    %c5_680 = arith.constant 5 : index
    %c0_681 = arith.constant 0 : index
    %c0_682 = arith.constant 0 : index
    %586 = vector.load %arg4[%c6_679, %c5_680, %c0_681, %c0_682] : memref<8x9x16x32xf32, #tpu.memory_space<vmem>>, vector<1x1x16x16xf32>
    %587 = vector.shape_cast %586 : vector<1x1x16x16xf32> to vector<16x16xf32>
    %cst_683 = arith.constant dense<0.000000e+00> : vector<16x16xf32>
    %588 = tpu.matmul %518, %585, %cst_683 {dimension_numbers = #tpu.dot_dimension_numbers<[1], [0], [0], [1], [0, 0, 1, 1], [], []>} : vector<16x16xf32>, vector<16x16xf32>, vector<16x16xf32> -> vector<16x16xf32>
    %cst_684 = arith.constant dense<0.000000e+00> : vector<16x16xf32>
    %589 = tpu.matmul %526, %587, %cst_684 {dimension_numbers = #tpu.dot_dimension_numbers<[1], [0], [0], [1], [0, 0, 1, 1], [], []>} : vector<16x16xf32>, vector<16x16xf32>, vector<16x16xf32> -> vector<16x16xf32>
    %590 = arith.addf %588, %589 : vector<16x16xf32>
    %cst_685 = arith.constant dense<0.000000e+00> : vector<16x16xf32>
    %591 = tpu.matmul %583, %590, %cst_685 {dimension_numbers = #tpu.dot_dimension_numbers<[1], [0], [0], [1], [0, 0, 1, 1], [], []>} : vector<16x16xf32>, vector<16x16xf32>, vector<16x16xf32> -> vector<16x16xf32>
    %592 = arith.addf %581, %591 : vector<16x16xf32>
    %c3_686 = arith.constant 3 : index
    %c6_687 = arith.constant 6 : index
    %c0_688 = arith.constant 0 : index
    %c0_689 = arith.constant 0 : index
    %593 = vector.load %arg3[%c3_686, %c6_687, %c0_688, %c0_689] : memref<5x9x64x256xf32, #tpu.memory_space<vmem>>, vector<1x1x16x16xf32>
    %594 = vector.shape_cast %593 : vector<1x1x16x16xf32> to vector<16x16xf32>
    %c5_690 = arith.constant 5 : index
    %c6_691 = arith.constant 6 : index
    %c0_692 = arith.constant 0 : index
    %c0_693 = arith.constant 0 : index
    %595 = vector.load %arg4[%c5_690, %c6_691, %c0_692, %c0_693] : memref<8x9x16x32xf32, #tpu.memory_space<vmem>>, vector<1x1x16x16xf32>
    %596 = vector.shape_cast %595 : vector<1x1x16x16xf32> to vector<16x16xf32>
    %c6_694 = arith.constant 6 : index
    %c6_695 = arith.constant 6 : index
    %c0_696 = arith.constant 0 : index
    %c0_697 = arith.constant 0 : index
    %597 = vector.load %arg4[%c6_694, %c6_695, %c0_696, %c0_697] : memref<8x9x16x32xf32, #tpu.memory_space<vmem>>, vector<1x1x16x16xf32>
    %598 = vector.shape_cast %597 : vector<1x1x16x16xf32> to vector<16x16xf32>
    %cst_698 = arith.constant dense<0.000000e+00> : vector<16x16xf32>
    %599 = tpu.matmul %518, %596, %cst_698 {dimension_numbers = #tpu.dot_dimension_numbers<[1], [0], [0], [1], [0, 0, 1, 1], [], []>} : vector<16x16xf32>, vector<16x16xf32>, vector<16x16xf32> -> vector<16x16xf32>
    %cst_699 = arith.constant dense<0.000000e+00> : vector<16x16xf32>
    %600 = tpu.matmul %526, %598, %cst_699 {dimension_numbers = #tpu.dot_dimension_numbers<[1], [0], [0], [1], [0, 0, 1, 1], [], []>} : vector<16x16xf32>, vector<16x16xf32>, vector<16x16xf32> -> vector<16x16xf32>
    %601 = arith.addf %599, %600 : vector<16x16xf32>
    %cst_700 = arith.constant dense<0.000000e+00> : vector<16x16xf32>
    %602 = tpu.matmul %594, %601, %cst_700 {dimension_numbers = #tpu.dot_dimension_numbers<[1], [0], [0], [1], [0, 0, 1, 1], [], []>} : vector<16x16xf32>, vector<16x16xf32>, vector<16x16xf32> -> vector<16x16xf32>
    %603 = arith.addf %592, %602 : vector<16x16xf32>
    %c3_701 = arith.constant 3 : index
    %c7_702 = arith.constant 7 : index
    %c0_703 = arith.constant 0 : index
    %c0_704 = arith.constant 0 : index
    %604 = vector.load %arg3[%c3_701, %c7_702, %c0_703, %c0_704] : memref<5x9x64x256xf32, #tpu.memory_space<vmem>>, vector<1x1x16x16xf32>
    %605 = vector.shape_cast %604 : vector<1x1x16x16xf32> to vector<16x16xf32>
    %c5_705 = arith.constant 5 : index
    %c7_706 = arith.constant 7 : index
    %c0_707 = arith.constant 0 : index
    %c0_708 = arith.constant 0 : index
    %606 = vector.load %arg4[%c5_705, %c7_706, %c0_707, %c0_708] : memref<8x9x16x32xf32, #tpu.memory_space<vmem>>, vector<1x1x16x16xf32>
    %607 = vector.shape_cast %606 : vector<1x1x16x16xf32> to vector<16x16xf32>
    %c6_709 = arith.constant 6 : index
    %c7_710 = arith.constant 7 : index
    %c0_711 = arith.constant 0 : index
    %c0_712 = arith.constant 0 : index
    %608 = vector.load %arg4[%c6_709, %c7_710, %c0_711, %c0_712] : memref<8x9x16x32xf32, #tpu.memory_space<vmem>>, vector<1x1x16x16xf32>
    %609 = vector.shape_cast %608 : vector<1x1x16x16xf32> to vector<16x16xf32>
    %cst_713 = arith.constant dense<0.000000e+00> : vector<16x16xf32>
    %610 = tpu.matmul %518, %607, %cst_713 {dimension_numbers = #tpu.dot_dimension_numbers<[1], [0], [0], [1], [0, 0, 1, 1], [], []>} : vector<16x16xf32>, vector<16x16xf32>, vector<16x16xf32> -> vector<16x16xf32>
    %cst_714 = arith.constant dense<0.000000e+00> : vector<16x16xf32>
    %611 = tpu.matmul %526, %609, %cst_714 {dimension_numbers = #tpu.dot_dimension_numbers<[1], [0], [0], [1], [0, 0, 1, 1], [], []>} : vector<16x16xf32>, vector<16x16xf32>, vector<16x16xf32> -> vector<16x16xf32>
    %612 = arith.addf %610, %611 : vector<16x16xf32>
    %cst_715 = arith.constant dense<0.000000e+00> : vector<16x16xf32>
    %613 = tpu.matmul %605, %612, %cst_715 {dimension_numbers = #tpu.dot_dimension_numbers<[1], [0], [0], [1], [0, 0, 1, 1], [], []>} : vector<16x16xf32>, vector<16x16xf32>, vector<16x16xf32> -> vector<16x16xf32>
    %614 = arith.addf %603, %613 : vector<16x16xf32>
    %c3_716 = arith.constant 3 : index
    %c8_717 = arith.constant 8 : index
    %c0_718 = arith.constant 0 : index
    %c0_719 = arith.constant 0 : index
    %615 = vector.load %arg3[%c3_716, %c8_717, %c0_718, %c0_719] : memref<5x9x64x256xf32, #tpu.memory_space<vmem>>, vector<1x1x16x16xf32>
    %616 = vector.shape_cast %615 : vector<1x1x16x16xf32> to vector<16x16xf32>
    %c5_720 = arith.constant 5 : index
    %c8_721 = arith.constant 8 : index
    %c0_722 = arith.constant 0 : index
    %c0_723 = arith.constant 0 : index
    %617 = vector.load %arg4[%c5_720, %c8_721, %c0_722, %c0_723] : memref<8x9x16x32xf32, #tpu.memory_space<vmem>>, vector<1x1x16x16xf32>
    %618 = vector.shape_cast %617 : vector<1x1x16x16xf32> to vector<16x16xf32>
    %c6_724 = arith.constant 6 : index
    %c8_725 = arith.constant 8 : index
    %c0_726 = arith.constant 0 : index
    %c0_727 = arith.constant 0 : index
    %619 = vector.load %arg4[%c6_724, %c8_725, %c0_726, %c0_727] : memref<8x9x16x32xf32, #tpu.memory_space<vmem>>, vector<1x1x16x16xf32>
    %620 = vector.shape_cast %619 : vector<1x1x16x16xf32> to vector<16x16xf32>
    %cst_728 = arith.constant dense<0.000000e+00> : vector<16x16xf32>
    %621 = tpu.matmul %518, %618, %cst_728 {dimension_numbers = #tpu.dot_dimension_numbers<[1], [0], [0], [1], [0, 0, 1, 1], [], []>} : vector<16x16xf32>, vector<16x16xf32>, vector<16x16xf32> -> vector<16x16xf32>
    %cst_729 = arith.constant dense<0.000000e+00> : vector<16x16xf32>
    %622 = tpu.matmul %526, %620, %cst_729 {dimension_numbers = #tpu.dot_dimension_numbers<[1], [0], [0], [1], [0, 0, 1, 1], [], []>} : vector<16x16xf32>, vector<16x16xf32>, vector<16x16xf32> -> vector<16x16xf32>
    %623 = arith.addf %621, %622 : vector<16x16xf32>
    %cst_730 = arith.constant dense<0.000000e+00> : vector<16x16xf32>
    %624 = tpu.matmul %616, %623, %cst_730 {dimension_numbers = #tpu.dot_dimension_numbers<[1], [0], [0], [1], [0, 0, 1, 1], [], []>} : vector<16x16xf32>, vector<16x16xf32>, vector<16x16xf32> -> vector<16x16xf32>
    %625 = arith.addf %614, %624 : vector<16x16xf32>
    %c6_731 = arith.constant 6 : index
    %c0_732 = arith.constant 0 : index
    %c0_733 = arith.constant 0 : index
    %626 = vector.load %arg7[%c6_731, %c0_732, %c0_733] : memref<8x3x32xf32, #tpu.memory_space<vmem>>, vector<1x1x16xf32>
    %627 = vector.shape_cast %626 : vector<1x1x16xf32> to vector<1x16xf32>
    %628 = vector.broadcast %627 : vector<1x16xf32> to vector<16x16xf32>
    %629 = arith.addf %625, %628 : vector<16x16xf32>
    %cst_734 = arith.constant dense<0.000000e+00> : vector<16xf32>
    %630 = vector.multi_reduction <add>, %629, %cst_734 [0] : vector<16x16xf32> to vector<16xf32>
    %631 = vector.shape_cast %630 : vector<16xf32> to vector<1x16xf32>
    %cst_735 = arith.constant 1.600000e+01 : f32
    %632 = vector.broadcast %cst_735 : f32 to vector<1x16xf32>
    %633 = arith.divf %631, %632 : vector<1x16xf32>
    %c6_736 = arith.constant 6 : index
    %c0_737 = arith.constant 0 : index
    %c0_738 = arith.constant 0 : index
    %634 = vector.load %arg5[%c6_736, %c0_737, %c0_738] : memref<8x32x8xf32, #tpu.memory_space<vmem>>, vector<1x16x4xf32>
    %635 = vector.shape_cast %634 : vector<1x16x4xf32> to vector<16x4xf32>
    %cst_739 = arith.constant dense<0.000000e+00> : vector<1x4xf32>
    %636 = tpu.matmul %633, %635, %cst_739 {dimension_numbers = #tpu.dot_dimension_numbers<[1], [0], [0], [1], [0, 0, 1, 1], [], []>} : vector<1x16xf32>, vector<16x4xf32>, vector<1x4xf32> -> vector<1x4xf32>
    %c6_740 = arith.constant 6 : index
    %c1_741 = arith.constant 1 : index
    %c0_742 = arith.constant 0 : index
    %637 = vector.load %arg7[%c6_740, %c1_741, %c0_742] : memref<8x3x32xf32, #tpu.memory_space<vmem>>, vector<1x1x4xf32>
    %638 = vector.shape_cast %637 : vector<1x1x4xf32> to vector<1x4xf32>
    %639 = arith.addf %636, %638 : vector<1x4xf32>
    %cst_743 = arith.constant 0.000000e+00 : f32
    %640 = vector.broadcast %cst_743 : f32 to vector<1x4xf32>
    %641 = arith.maximumf %639, %640 : vector<1x4xf32>
    %c6_744 = arith.constant 6 : index
    %c0_745 = arith.constant 0 : index
    %c0_746 = arith.constant 0 : index
    %642 = vector.load %arg6[%c6_744, %c0_745, %c0_746] : memref<8x8x32xf32, #tpu.memory_space<vmem>>, vector<1x4x16xf32>
    %643 = vector.shape_cast %642 : vector<1x4x16xf32> to vector<4x16xf32>
    %cst_747 = arith.constant dense<0.000000e+00> : vector<1x16xf32>
    %644 = tpu.matmul %641, %643, %cst_747 {dimension_numbers = #tpu.dot_dimension_numbers<[1], [0], [0], [1], [0, 0, 1, 1], [], []>} : vector<1x4xf32>, vector<4x16xf32>, vector<1x16xf32> -> vector<1x16xf32>
    %c6_748 = arith.constant 6 : index
    %c2_749 = arith.constant 2 : index
    %c0_750 = arith.constant 0 : index
    %645 = vector.load %arg7[%c6_748, %c2_749, %c0_750] : memref<8x3x32xf32, #tpu.memory_space<vmem>>, vector<1x1x16xf32>
    %646 = vector.shape_cast %645 : vector<1x1x16xf32> to vector<1x16xf32>
    %647 = arith.addf %644, %646 : vector<1x16xf32>
    %648 = arith.negf %647 : vector<1x16xf32>
    %649 = math.exp %648 : vector<1x16xf32>
    %cst_751 = arith.constant 1.000000e+00 : f32
    %650 = vector.broadcast %cst_751 : f32 to vector<1x16xf32>
    %651 = arith.addf %650, %649 : vector<1x16xf32>
    %652 = arith.divf %650, %651 : vector<1x16xf32>
    %653 = vector.broadcast %652 : vector<1x16xf32> to vector<16x16xf32>
    %654 = arith.mulf %629, %653 : vector<16x16xf32>
    %cst_752 = arith.constant 0.000000e+00 : f32
    %655 = vector.broadcast %cst_752 : f32 to vector<16x16xf32>
    %656 = arith.maximumf %654, %655 : vector<16x16xf32>
    %cst_753 = arith.constant 0.000000e+00 : f32
    %657 = vector.broadcast %cst_753 : f32 to vector<4x32xf32>
    %c4_754 = arith.constant 4 : index
    %c0_755 = arith.constant 0 : index
    %c0_756 = arith.constant 0 : index
    %c0_757 = arith.constant 0 : index
    %658 = vector.load %arg3[%c4_754, %c0_755, %c0_756, %c0_757] : memref<5x9x64x256xf32, #tpu.memory_space<vmem>>, vector<1x1x4x16xf32>
    %659 = vector.shape_cast %658 : vector<1x1x4x16xf32> to vector<4x16xf32>
    %c7_758 = arith.constant 7 : index
    %c0_759 = arith.constant 0 : index
    %c0_760 = arith.constant 0 : index
    %c0_761 = arith.constant 0 : index
    %660 = vector.load %arg4[%c7_758, %c0_759, %c0_760, %c0_761] : memref<8x9x16x32xf32, #tpu.memory_space<vmem>>, vector<1x1x16x32xf32>
    %661 = vector.shape_cast %660 : vector<1x1x16x32xf32> to vector<16x32xf32>
    %cst_762 = arith.constant dense<0.000000e+00> : vector<4x16xf32>
    %662 = tpu.matmul %659, %656, %cst_762 {dimension_numbers = #tpu.dot_dimension_numbers<[1], [0], [0], [1], [0, 0, 1, 1], [], []>} : vector<4x16xf32>, vector<16x16xf32>, vector<4x16xf32> -> vector<4x16xf32>
    %cst_763 = arith.constant dense<0.000000e+00> : vector<4x32xf32>
    %663 = tpu.matmul %662, %661, %cst_763 {dimension_numbers = #tpu.dot_dimension_numbers<[1], [0], [0], [1], [0, 0, 1, 1], [], []>} : vector<4x16xf32>, vector<16x32xf32>, vector<4x32xf32> -> vector<4x32xf32>
    %664 = arith.addf %657, %663 : vector<4x32xf32>
    %c4_764 = arith.constant 4 : index
    %c1_765 = arith.constant 1 : index
    %c0_766 = arith.constant 0 : index
    %c0_767 = arith.constant 0 : index
    %665 = vector.load %arg3[%c4_764, %c1_765, %c0_766, %c0_767] : memref<5x9x64x256xf32, #tpu.memory_space<vmem>>, vector<1x1x4x16xf32>
    %666 = vector.shape_cast %665 : vector<1x1x4x16xf32> to vector<4x16xf32>
    %c7_768 = arith.constant 7 : index
    %c1_769 = arith.constant 1 : index
    %c0_770 = arith.constant 0 : index
    %c0_771 = arith.constant 0 : index
    %667 = vector.load %arg4[%c7_768, %c1_769, %c0_770, %c0_771] : memref<8x9x16x32xf32, #tpu.memory_space<vmem>>, vector<1x1x16x32xf32>
    %668 = vector.shape_cast %667 : vector<1x1x16x32xf32> to vector<16x32xf32>
    %cst_772 = arith.constant dense<0.000000e+00> : vector<4x16xf32>
    %669 = tpu.matmul %666, %656, %cst_772 {dimension_numbers = #tpu.dot_dimension_numbers<[1], [0], [0], [1], [0, 0, 1, 1], [], []>} : vector<4x16xf32>, vector<16x16xf32>, vector<4x16xf32> -> vector<4x16xf32>
    %cst_773 = arith.constant dense<0.000000e+00> : vector<4x32xf32>
    %670 = tpu.matmul %669, %668, %cst_773 {dimension_numbers = #tpu.dot_dimension_numbers<[1], [0], [0], [1], [0, 0, 1, 1], [], []>} : vector<4x16xf32>, vector<16x32xf32>, vector<4x32xf32> -> vector<4x32xf32>
    %671 = arith.addf %664, %670 : vector<4x32xf32>
    %c4_774 = arith.constant 4 : index
    %c2_775 = arith.constant 2 : index
    %c0_776 = arith.constant 0 : index
    %c0_777 = arith.constant 0 : index
    %672 = vector.load %arg3[%c4_774, %c2_775, %c0_776, %c0_777] : memref<5x9x64x256xf32, #tpu.memory_space<vmem>>, vector<1x1x4x16xf32>
    %673 = vector.shape_cast %672 : vector<1x1x4x16xf32> to vector<4x16xf32>
    %c7_778 = arith.constant 7 : index
    %c2_779 = arith.constant 2 : index
    %c0_780 = arith.constant 0 : index
    %c0_781 = arith.constant 0 : index
    %674 = vector.load %arg4[%c7_778, %c2_779, %c0_780, %c0_781] : memref<8x9x16x32xf32, #tpu.memory_space<vmem>>, vector<1x1x16x32xf32>
    %675 = vector.shape_cast %674 : vector<1x1x16x32xf32> to vector<16x32xf32>
    %cst_782 = arith.constant dense<0.000000e+00> : vector<4x16xf32>
    %676 = tpu.matmul %673, %656, %cst_782 {dimension_numbers = #tpu.dot_dimension_numbers<[1], [0], [0], [1], [0, 0, 1, 1], [], []>} : vector<4x16xf32>, vector<16x16xf32>, vector<4x16xf32> -> vector<4x16xf32>
    %cst_783 = arith.constant dense<0.000000e+00> : vector<4x32xf32>
    %677 = tpu.matmul %676, %675, %cst_783 {dimension_numbers = #tpu.dot_dimension_numbers<[1], [0], [0], [1], [0, 0, 1, 1], [], []>} : vector<4x16xf32>, vector<16x32xf32>, vector<4x32xf32> -> vector<4x32xf32>
    %678 = arith.addf %671, %677 : vector<4x32xf32>
    %c4_784 = arith.constant 4 : index
    %c3_785 = arith.constant 3 : index
    %c0_786 = arith.constant 0 : index
    %c0_787 = arith.constant 0 : index
    %679 = vector.load %arg3[%c4_784, %c3_785, %c0_786, %c0_787] : memref<5x9x64x256xf32, #tpu.memory_space<vmem>>, vector<1x1x4x16xf32>
    %680 = vector.shape_cast %679 : vector<1x1x4x16xf32> to vector<4x16xf32>
    %c7_788 = arith.constant 7 : index
    %c3_789 = arith.constant 3 : index
    %c0_790 = arith.constant 0 : index
    %c0_791 = arith.constant 0 : index
    %681 = vector.load %arg4[%c7_788, %c3_789, %c0_790, %c0_791] : memref<8x9x16x32xf32, #tpu.memory_space<vmem>>, vector<1x1x16x32xf32>
    %682 = vector.shape_cast %681 : vector<1x1x16x32xf32> to vector<16x32xf32>
    %cst_792 = arith.constant dense<0.000000e+00> : vector<4x16xf32>
    %683 = tpu.matmul %680, %656, %cst_792 {dimension_numbers = #tpu.dot_dimension_numbers<[1], [0], [0], [1], [0, 0, 1, 1], [], []>} : vector<4x16xf32>, vector<16x16xf32>, vector<4x16xf32> -> vector<4x16xf32>
    %cst_793 = arith.constant dense<0.000000e+00> : vector<4x32xf32>
    %684 = tpu.matmul %683, %682, %cst_793 {dimension_numbers = #tpu.dot_dimension_numbers<[1], [0], [0], [1], [0, 0, 1, 1], [], []>} : vector<4x16xf32>, vector<16x32xf32>, vector<4x32xf32> -> vector<4x32xf32>
    %685 = arith.addf %678, %684 : vector<4x32xf32>
    %c4_794 = arith.constant 4 : index
    %c4_795 = arith.constant 4 : index
    %c0_796 = arith.constant 0 : index
    %c0_797 = arith.constant 0 : index
    %686 = vector.load %arg3[%c4_794, %c4_795, %c0_796, %c0_797] : memref<5x9x64x256xf32, #tpu.memory_space<vmem>>, vector<1x1x4x16xf32>
    %687 = vector.shape_cast %686 : vector<1x1x4x16xf32> to vector<4x16xf32>
    %c7_798 = arith.constant 7 : index
    %c4_799 = arith.constant 4 : index
    %c0_800 = arith.constant 0 : index
    %c0_801 = arith.constant 0 : index
    %688 = vector.load %arg4[%c7_798, %c4_799, %c0_800, %c0_801] : memref<8x9x16x32xf32, #tpu.memory_space<vmem>>, vector<1x1x16x32xf32>
    %689 = vector.shape_cast %688 : vector<1x1x16x32xf32> to vector<16x32xf32>
    %cst_802 = arith.constant dense<0.000000e+00> : vector<4x16xf32>
    %690 = tpu.matmul %687, %656, %cst_802 {dimension_numbers = #tpu.dot_dimension_numbers<[1], [0], [0], [1], [0, 0, 1, 1], [], []>} : vector<4x16xf32>, vector<16x16xf32>, vector<4x16xf32> -> vector<4x16xf32>
    %cst_803 = arith.constant dense<0.000000e+00> : vector<4x32xf32>
    %691 = tpu.matmul %690, %689, %cst_803 {dimension_numbers = #tpu.dot_dimension_numbers<[1], [0], [0], [1], [0, 0, 1, 1], [], []>} : vector<4x16xf32>, vector<16x32xf32>, vector<4x32xf32> -> vector<4x32xf32>
    %692 = arith.addf %685, %691 : vector<4x32xf32>
    %c4_804 = arith.constant 4 : index
    %c5_805 = arith.constant 5 : index
    %c0_806 = arith.constant 0 : index
    %c0_807 = arith.constant 0 : index
    %693 = vector.load %arg3[%c4_804, %c5_805, %c0_806, %c0_807] : memref<5x9x64x256xf32, #tpu.memory_space<vmem>>, vector<1x1x4x16xf32>
    %694 = vector.shape_cast %693 : vector<1x1x4x16xf32> to vector<4x16xf32>
    %c7_808 = arith.constant 7 : index
    %c5_809 = arith.constant 5 : index
    %c0_810 = arith.constant 0 : index
    %c0_811 = arith.constant 0 : index
    %695 = vector.load %arg4[%c7_808, %c5_809, %c0_810, %c0_811] : memref<8x9x16x32xf32, #tpu.memory_space<vmem>>, vector<1x1x16x32xf32>
    %696 = vector.shape_cast %695 : vector<1x1x16x32xf32> to vector<16x32xf32>
    %cst_812 = arith.constant dense<0.000000e+00> : vector<4x16xf32>
    %697 = tpu.matmul %694, %656, %cst_812 {dimension_numbers = #tpu.dot_dimension_numbers<[1], [0], [0], [1], [0, 0, 1, 1], [], []>} : vector<4x16xf32>, vector<16x16xf32>, vector<4x16xf32> -> vector<4x16xf32>
    %cst_813 = arith.constant dense<0.000000e+00> : vector<4x32xf32>
    %698 = tpu.matmul %697, %696, %cst_813 {dimension_numbers = #tpu.dot_dimension_numbers<[1], [0], [0], [1], [0, 0, 1, 1], [], []>} : vector<4x16xf32>, vector<16x32xf32>, vector<4x32xf32> -> vector<4x32xf32>
    %699 = arith.addf %692, %698 : vector<4x32xf32>
    %c4_814 = arith.constant 4 : index
    %c6_815 = arith.constant 6 : index
    %c0_816 = arith.constant 0 : index
    %c0_817 = arith.constant 0 : index
    %700 = vector.load %arg3[%c4_814, %c6_815, %c0_816, %c0_817] : memref<5x9x64x256xf32, #tpu.memory_space<vmem>>, vector<1x1x4x16xf32>
    %701 = vector.shape_cast %700 : vector<1x1x4x16xf32> to vector<4x16xf32>
    %c7_818 = arith.constant 7 : index
    %c6_819 = arith.constant 6 : index
    %c0_820 = arith.constant 0 : index
    %c0_821 = arith.constant 0 : index
    %702 = vector.load %arg4[%c7_818, %c6_819, %c0_820, %c0_821] : memref<8x9x16x32xf32, #tpu.memory_space<vmem>>, vector<1x1x16x32xf32>
    %703 = vector.shape_cast %702 : vector<1x1x16x32xf32> to vector<16x32xf32>
    %cst_822 = arith.constant dense<0.000000e+00> : vector<4x16xf32>
    %704 = tpu.matmul %701, %656, %cst_822 {dimension_numbers = #tpu.dot_dimension_numbers<[1], [0], [0], [1], [0, 0, 1, 1], [], []>} : vector<4x16xf32>, vector<16x16xf32>, vector<4x16xf32> -> vector<4x16xf32>
    %cst_823 = arith.constant dense<0.000000e+00> : vector<4x32xf32>
    %705 = tpu.matmul %704, %703, %cst_823 {dimension_numbers = #tpu.dot_dimension_numbers<[1], [0], [0], [1], [0, 0, 1, 1], [], []>} : vector<4x16xf32>, vector<16x32xf32>, vector<4x32xf32> -> vector<4x32xf32>
    %706 = arith.addf %699, %705 : vector<4x32xf32>
    %c4_824 = arith.constant 4 : index
    %c7_825 = arith.constant 7 : index
    %c0_826 = arith.constant 0 : index
    %c0_827 = arith.constant 0 : index
    %707 = vector.load %arg3[%c4_824, %c7_825, %c0_826, %c0_827] : memref<5x9x64x256xf32, #tpu.memory_space<vmem>>, vector<1x1x4x16xf32>
    %708 = vector.shape_cast %707 : vector<1x1x4x16xf32> to vector<4x16xf32>
    %c7_828 = arith.constant 7 : index
    %c7_829 = arith.constant 7 : index
    %c0_830 = arith.constant 0 : index
    %c0_831 = arith.constant 0 : index
    %709 = vector.load %arg4[%c7_828, %c7_829, %c0_830, %c0_831] : memref<8x9x16x32xf32, #tpu.memory_space<vmem>>, vector<1x1x16x32xf32>
    %710 = vector.shape_cast %709 : vector<1x1x16x32xf32> to vector<16x32xf32>
    %cst_832 = arith.constant dense<0.000000e+00> : vector<4x16xf32>
    %711 = tpu.matmul %708, %656, %cst_832 {dimension_numbers = #tpu.dot_dimension_numbers<[1], [0], [0], [1], [0, 0, 1, 1], [], []>} : vector<4x16xf32>, vector<16x16xf32>, vector<4x16xf32> -> vector<4x16xf32>
    %cst_833 = arith.constant dense<0.000000e+00> : vector<4x32xf32>
    %712 = tpu.matmul %711, %710, %cst_833 {dimension_numbers = #tpu.dot_dimension_numbers<[1], [0], [0], [1], [0, 0, 1, 1], [], []>} : vector<4x16xf32>, vector<16x32xf32>, vector<4x32xf32> -> vector<4x32xf32>
    %713 = arith.addf %706, %712 : vector<4x32xf32>
    %c4_834 = arith.constant 4 : index
    %c8_835 = arith.constant 8 : index
    %c0_836 = arith.constant 0 : index
    %c0_837 = arith.constant 0 : index
    %714 = vector.load %arg3[%c4_834, %c8_835, %c0_836, %c0_837] : memref<5x9x64x256xf32, #tpu.memory_space<vmem>>, vector<1x1x4x16xf32>
    %715 = vector.shape_cast %714 : vector<1x1x4x16xf32> to vector<4x16xf32>
    %c7_838 = arith.constant 7 : index
    %c8_839 = arith.constant 8 : index
    %c0_840 = arith.constant 0 : index
    %c0_841 = arith.constant 0 : index
    %716 = vector.load %arg4[%c7_838, %c8_839, %c0_840, %c0_841] : memref<8x9x16x32xf32, #tpu.memory_space<vmem>>, vector<1x1x16x32xf32>
    %717 = vector.shape_cast %716 : vector<1x1x16x32xf32> to vector<16x32xf32>
    %cst_842 = arith.constant dense<0.000000e+00> : vector<4x16xf32>
    %718 = tpu.matmul %715, %656, %cst_842 {dimension_numbers = #tpu.dot_dimension_numbers<[1], [0], [0], [1], [0, 0, 1, 1], [], []>} : vector<4x16xf32>, vector<16x16xf32>, vector<4x16xf32> -> vector<4x16xf32>
    %cst_843 = arith.constant dense<0.000000e+00> : vector<4x32xf32>
    %719 = tpu.matmul %718, %717, %cst_843 {dimension_numbers = #tpu.dot_dimension_numbers<[1], [0], [0], [1], [0, 0, 1, 1], [], []>} : vector<4x16xf32>, vector<16x32xf32>, vector<4x32xf32> -> vector<4x32xf32>
    %720 = arith.addf %713, %719 : vector<4x32xf32>
    %c7_844 = arith.constant 7 : index
    %c0_845 = arith.constant 0 : index
    %c0_846 = arith.constant 0 : index
    %721 = vector.load %arg7[%c7_844, %c0_845, %c0_846] : memref<8x3x32xf32, #tpu.memory_space<vmem>>, vector<1x1x32xf32>
    %722 = vector.shape_cast %721 : vector<1x1x32xf32> to vector<1x32xf32>
    %723 = vector.broadcast %722 : vector<1x32xf32> to vector<4x32xf32>
    %724 = arith.addf %720, %723 : vector<4x32xf32>
    %cst_847 = arith.constant dense<0.000000e+00> : vector<32xf32>
    %725 = vector.multi_reduction <add>, %724, %cst_847 [0] : vector<4x32xf32> to vector<32xf32>
    %726 = vector.shape_cast %725 : vector<32xf32> to vector<1x32xf32>
    %cst_848 = arith.constant 4.000000e+00 : f32
    %727 = vector.broadcast %cst_848 : f32 to vector<1x32xf32>
    %728 = arith.divf %726, %727 : vector<1x32xf32>
    %c7_849 = arith.constant 7 : index
    %c0_850 = arith.constant 0 : index
    %c0_851 = arith.constant 0 : index
    %729 = vector.load %arg5[%c7_849, %c0_850, %c0_851] : memref<8x32x8xf32, #tpu.memory_space<vmem>>, vector<1x32x8xf32>
    %730 = vector.shape_cast %729 : vector<1x32x8xf32> to vector<32x8xf32>
    %cst_852 = arith.constant dense<0.000000e+00> : vector<1x8xf32>
    %731 = tpu.matmul %728, %730, %cst_852 {dimension_numbers = #tpu.dot_dimension_numbers<[1], [0], [0], [1], [0, 0, 1, 1], [], []>} : vector<1x32xf32>, vector<32x8xf32>, vector<1x8xf32> -> vector<1x8xf32>
    %c7_853 = arith.constant 7 : index
    %c1_854 = arith.constant 1 : index
    %c0_855 = arith.constant 0 : index
    %732 = vector.load %arg7[%c7_853, %c1_854, %c0_855] : memref<8x3x32xf32, #tpu.memory_space<vmem>>, vector<1x1x8xf32>
    %733 = vector.shape_cast %732 : vector<1x1x8xf32> to vector<1x8xf32>
    %734 = arith.addf %731, %733 : vector<1x8xf32>
    %cst_856 = arith.constant 0.000000e+00 : f32
    %735 = vector.broadcast %cst_856 : f32 to vector<1x8xf32>
    %736 = arith.maximumf %734, %735 : vector<1x8xf32>
    %c7_857 = arith.constant 7 : index
    %c0_858 = arith.constant 0 : index
    %c0_859 = arith.constant 0 : index
    %737 = vector.load %arg6[%c7_857, %c0_858, %c0_859] : memref<8x8x32xf32, #tpu.memory_space<vmem>>, vector<1x8x32xf32>
    %738 = vector.shape_cast %737 : vector<1x8x32xf32> to vector<8x32xf32>
    %cst_860 = arith.constant dense<0.000000e+00> : vector<1x32xf32>
    %739 = tpu.matmul %736, %738, %cst_860 {dimension_numbers = #tpu.dot_dimension_numbers<[1], [0], [0], [1], [0, 0, 1, 1], [], []>} : vector<1x8xf32>, vector<8x32xf32>, vector<1x32xf32> -> vector<1x32xf32>
    %c7_861 = arith.constant 7 : index
    %c2_862 = arith.constant 2 : index
    %c0_863 = arith.constant 0 : index
    %740 = vector.load %arg7[%c7_861, %c2_862, %c0_863] : memref<8x3x32xf32, #tpu.memory_space<vmem>>, vector<1x1x32xf32>
    %741 = vector.shape_cast %740 : vector<1x1x32xf32> to vector<1x32xf32>
    %742 = arith.addf %739, %741 : vector<1x32xf32>
    %743 = arith.negf %742 : vector<1x32xf32>
    %744 = math.exp %743 : vector<1x32xf32>
    %cst_864 = arith.constant 1.000000e+00 : f32
    %745 = vector.broadcast %cst_864 : f32 to vector<1x32xf32>
    %746 = arith.addf %745, %744 : vector<1x32xf32>
    %747 = arith.divf %745, %746 : vector<1x32xf32>
    %748 = vector.broadcast %747 : vector<1x32xf32> to vector<4x32xf32>
    %749 = arith.mulf %724, %748 : vector<4x32xf32>
    %cst_865 = arith.constant 0.000000e+00 : f32
    %750 = vector.broadcast %cst_865 : f32 to vector<4x32xf32>
    %751 = arith.maximumf %749, %750 : vector<4x32xf32>
    %cst_866 = arith.constant dense<0.000000e+00> : vector<32xf32>
    %752 = vector.multi_reduction <add>, %751, %cst_866 [0] : vector<4x32xf32> to vector<32xf32>
    %753 = vector.shape_cast %752 : vector<32xf32> to vector<1x32xf32>
    %cst_867 = arith.constant 4.000000e+00 : f32
    %754 = vector.broadcast %cst_867 : f32 to vector<1x32xf32>
    %755 = arith.divf %753, %754 : vector<1x32xf32>
    %c0_868 = arith.constant 0 : index
    %c0_869 = arith.constant 0 : index
    %756 = vector.load %arg9[%c0_868, %c0_869] : memref<33x1024xf32, #tpu.memory_space<vmem>>, vector<32x1024xf32>
    %cst_870 = arith.constant dense<0.000000e+00> : vector<1x1024xf32>
    %757 = tpu.matmul %755, %756, %cst_870 {dimension_numbers = #tpu.dot_dimension_numbers<[1], [0], [0], [1], [0, 0, 1, 1], [], []>} : vector<1x32xf32>, vector<32x1024xf32>, vector<1x1024xf32> -> vector<1x1024xf32>
    %c32 = arith.constant 32 : index
    %c0_871 = arith.constant 0 : index
    %758 = vector.load %arg9[%c32, %c0_871] : memref<33x1024xf32, #tpu.memory_space<vmem>>, vector<1x1024xf32>
    %759 = arith.addf %757, %758 : vector<1x1024xf32>
    %c0_872 = arith.constant 0 : index
    %c0_873 = arith.constant 0 : index
    %c0_874 = arith.constant 0 : index
    %760 = vector.load %arg10[%c0_872, %c0_873, %c0_874] : memref<1x1x1024xf32, #tpu.memory_space<vmem>>, vector<1x1x1024xf32>
    %761 = vector.shape_cast %760 : vector<1x1x1024xf32> to vector<1x1024xf32>
    %762 = vector.shape_cast %759 : vector<1x1024xf32> to vector<1x1x1024xf32>
    tpu.vector_store %arg10[%c0_872, %c0_873, %c0_874], %762 {strides = array<i32>} : memref<1x1x1024xf32, #tpu.memory_space<vmem>>, vector<1x1x1024xf32>,
    return
  }
  func.func @transform_0(%arg0: i32) -> (i32, i32, i32) {
    %c0_i32 = arith.constant 0 : i32
    %c0_i32_0 = arith.constant 0 : i32
    %c0_i32_1 = arith.constant 0 : i32
    return %arg0, %c0_i32, %c0_i32_0 : i32, i32, i32
  }
  func.func @transform_1(%arg0: i32) -> (i32, i32) {
    %c0_i32 = arith.constant 0 : i32
    %c0_i32_0 = arith.constant 0 : i32
    %c0_i32_1 = arith.constant 0 : i32
    return %c0_i32, %c0_i32_0 : i32, i32
  }
  func.func @transform_2(%arg0: i32) -> (i32, i32, i32, i32) {
    %c0_i32 = arith.constant 0 : i32
    %c0_i32_0 = arith.constant 0 : i32
    %c0_i32_1 = arith.constant 0 : i32
    %c0_i32_2 = arith.constant 0 : i32
    %c0_i32_3 = arith.constant 0 : i32
    return %c0_i32, %c0_i32_0, %c0_i32_1, %c0_i32_2 : i32, i32, i32, i32
  }
  func.func @transform_3(%arg0: i32) -> (i32, i32, i32, i32) {
    %c0_i32 = arith.constant 0 : i32
    %c0_i32_0 = arith.constant 0 : i32
    %c0_i32_1 = arith.constant 0 : i32
    %c0_i32_2 = arith.constant 0 : i32
    %c0_i32_3 = arith.constant 0 : i32
    return %c0_i32, %c0_i32_0, %c0_i32_1, %c0_i32_2 : i32, i32, i32, i32
  }
  func.func @transform_4(%arg0: i32) -> (i32, i32, i32) {
    %c0_i32 = arith.constant 0 : i32
    %c0_i32_0 = arith.constant 0 : i32
    %c0_i32_1 = arith.constant 0 : i32
    %c0_i32_2 = arith.constant 0 : i32
    return %c0_i32, %c0_i32_0, %c0_i32_1 : i32, i32, i32
  }
  func.func @transform_5(%arg0: i32) -> (i32, i32, i32) {
    %c0_i32 = arith.constant 0 : i32
    %c0_i32_0 = arith.constant 0 : i32
    %c0_i32_1 = arith.constant 0 : i32
    %c0_i32_2 = arith.constant 0 : i32
    return %c0_i32, %c0_i32_0, %c0_i32_1 : i32, i32, i32
  }
  func.func @transform_6(%arg0: i32) -> (i32, i32, i32) {
    %c0_i32 = arith.constant 0 : i32
    %c0_i32_0 = arith.constant 0 : i32
    %c0_i32_1 = arith.constant 0 : i32
    %c0_i32_2 = arith.constant 0 : i32
    return %c0_i32, %c0_i32_0, %c0_i32_1 : i32, i32, i32
  }
  func.func @transform_7(%arg0: i32) -> (i32, i32, i32) {
    %c0_i32 = arith.constant 0 : i32
    %c0_i32_0 = arith.constant 0 : i32
    %c0_i32_1 = arith.constant 0 : i32
    %c0_i32_2 = arith.constant 0 : i32
    return %c0_i32, %c0_i32_0, %c0_i32_1 : i32, i32, i32
  }
  func.func @transform_8(%arg0: i32) -> (i32, i32) {
    %c0_i32 = arith.constant 0 : i32
    %c0_i32_0 = arith.constant 0 : i32
    %c0_i32_1 = arith.constant 0 : i32
    return %c0_i32, %c0_i32_0 : i32, i32
  }
  func.func @transform_9(%arg0: i32) -> (i32, i32, i32) {
    %c0_i32 = arith.constant 0 : i32
    %c0_i32_0 = arith.constant 0 : i32
    %c0_i32_1 = arith.constant 0 : i32
    return %arg0, %c0_i32, %c0_i32_0 : i32, i32, i32
  }
}

</mosaic_0001>

<llo_original>
// kernel: forward.1
$region0: #{forward.1}
  #allocation0 [shape = 'u32[]', space=smem, size = 0x4, offset = 0x4, fixed_abs, tag = 'smem constant byte address 0x4 - core index']
  #allocation1 [shape = 'u32[72,128]{1,0:T(1,128)}', space=vmem, size = 0x9000, scoped, tag = 'internal scratch']
  %s0 = inlined_call_operand.vmem [shape: f32[2,256,27], index: 0, kind: input, shape index: {}]
  %s1 = inlined_call_operand.vmem [shape: f32[27,8], index: 1, kind: input, shape index: {}]
  %s2 = inlined_call_operand.hbm [shape: f32[5,9,64,256], index: 2, kind: input, shape index: {}]
  %s3 = inlined_call_operand.hbm [shape: f32[8,9,16,32], index: 3, kind: input, shape index: {}]
  %s4 = inlined_call_operand.vmem [shape: f32[8,32,8], index: 4, kind: input, shape index: {}]
  %s5 = inlined_call_operand.hbm [shape: f32[8,8,32], index: 5, kind: input, shape index: {}]
  %s6 = inlined_call_operand.vmem [shape: f32[8,3,32], index: 6, kind: input, shape index: {}]
  %s7 = inlined_call_operand.hbm [shape: f32[2,2,16], index: 7, kind: input, shape index: {}]
  %s8 = inlined_call_operand.hbm [shape: f32[33,1024], index: 8, kind: input, shape index: {}]
  %s9 = inlined_call_operand.vmem [shape: f32[2,1,1024], index: 9, kind: output, shape index: {}]
  %s10 = sld [smem:[#allocation0]]
  $region89: #{forward.1} parent=0
    _
  %s12 = ssub.s32 1, %s10
  %s13 = scalar_select 0, %s12, %s10
  $region1: #{forward.1} parent=0
    #allocation2 [shape = 'u8[2949120]{0}', space=vmem, size = 0x2d0000, scoped, tag = 'input window, operand 2, single buffered']
    #allocation3 [shape = 's32[2]{0}', space=sflag, size = 0x8, scoped, tag = 'scoped memory for forward.1']
    #allocation4 [shape = 'u8[589824]{0}', space=vmem, size = 0x90000, scoped, tag = 'input window, operand 3, single buffered']
    #allocation5 [shape = 's32[1]{0}', space=sflag, size = 0x4, scoped, tag = 'scoped memory for forward.1']
    #allocation6 [shape = 'u8[32768]{0}', space=vmem, size = 0x8000, scoped, tag = 'input window, operand 5, single buffered']
    #allocation7 [shape = 'u8[2048]{0}', space=vmem, size = 0x800, scoped, tag = 'input window, operand 7, single buffered']
    #allocation8 [shape = 's32[1]{0}', space=sflag, size = 0x4, scoped, tag = 'scoped memory for forward.1']
    #allocation9 [shape = 'u8[163840]{0}', space=vmem, size = 0x28000, scoped, tag = 'input window, operand 8, single buffered']
    %14 = vsyncpa [#allocation3], 0
    %15 = vsyncpa [#allocation5], 0
    %16 = vsyncpa [#allocation8], 0
    loop: start=0, step=1, limit=4
    $region2: #{forward.1} parent=1 // loop_pre_header
      _
    $region3: #{forward.1} parent=1 // loop_header
      %s18 = sphi 0, %s22
      %p19 = scmp.ge.s32.totalorder %s18, 4
      %s28 = sphi 0, %s30
      %s31 = sphi 0, %s28
      %s32 = sphi 0, %s31
      %s48 = sphi 0, %s32
      %s52 = sphi 0, %s52
      %s54 = sphi 0, %s52
      %s55 = sphi 0, %s54
      %s69 = sphi 0, %s55
      %s73 = sphi 0, %s73
      %s75 = sphi 0, %s73
      %s76 = sphi 0, %s75
      %s90 = sphi 0, %s76
      %s94 = sphi 0, %s94
      %s96 = sphi 0, %s94
      %s97 = sphi 0, %s96
      %s111 = sphi 0, %s97
      %s115 = sphi 0, %s115
      %s117 = sphi 0, %s115
      %s118 = sphi 0, %s117
      %s132 = sphi 0, %s118
      %s136 = sphi 0, %s136
      %s138 = sphi 0, %s136
      %s139 = sphi 0, %s138
      %s153 = sphi 0, %s139
      %s157 = sphi 0, %s157
      %s159 = sphi 0, %s157
      %s160 = sphi 0, %s159
      %s174 = sphi 0, %s160
      %s178 = sphi 0, %s178
      %s180 = sphi 0, %s178
      %s181 = sphi 0, %s180
      %s195 = sphi 0, %s181
      %s199 = sphi 0, %s199
      %s201 = sphi 0, %s199
      %s202 = sphi 0, %s201
      %s216 = sphi 0, %s202
      %s222 = sphi 0, %s224
      %s225 = sphi 0, %s222
      %s226 = sphi 0, %s225
      %s242 = sphi 0, %s226
    $region4: #{forward.1} parent=1 // loop_header_branch
      %21 = sbr.rel (%p19) target = $region8
    $region5: #{forward.1} parent=1 // loop_body
      %s23 = ssub.s32 %s18, 1
      %s24 = ssub.s32 %s18, 2
      %s25 = sadd.s32 %s18, 1
      %s26 = ssub.s32 %s18, %s25
      %p27 = scmp.eq.s32.totalorder %s26, 0
      %s29 = sadd.s32 %s28, 1
      %s30 = scalar_select %p27, %s28, %s29
      %p33 = pneg %p27
      %p34 = scmp.eq.s32.totalorder %s18, 1
      %p35 = por %p33, %p34
      %p36 = scmp.ne.s32.totalorder %s28, %s31
      %p37 = scmp.eq.s32.totalorder %s18, 0
      %p38 = por %p36, %p37
      %p39 = scmp.ne.s32.totalorder %s28, %s31
      %p40 = scmp.eq.s32.totalorder %s23, 1
      %p41 = por %p39, %p40
      %p42 = scmp.ne.s32.totalorder %s31, %s32
      %p43 = scmp.eq.s32.totalorder %s23, 0
      %p44 = por %p42, %p43
      %p45 = scmp.ne.s32.totalorder %s31, %s32
      %p46 = scmp.eq.s32.totalorder %s24, 1
      %p47 = por %p45, %p46
      %p49 = scmp.ne.s32.totalorder %s32, %s48
      %p50 = scmp.eq.s32.totalorder %s24, 0
      %p51 = por %p49, %p50
      %s53 = sadd.s32 %s52, 1
      %p56 = scmp.eq.s32.totalorder %s18, 1
      %p57 = scmp.ne.s32.totalorder %s52, %s54
      %p58 = scmp.eq.s32.totalorder %s18, 0
      %p59 = por %p57, %p58
      %p60 = scmp.ne.s32.totalorder %s52, %s54
      %p61 = scmp.eq.s32.totalorder %s23, 1
      %p62 = por %p60, %p61
      %p63 = scmp.ne.s32.totalorder %s54, %s55
      %p64 = scmp.eq.s32.totalorder %s23, 0
      %p65 = por %p63, %p64
      %p66 = scmp.ne.s32.totalorder %s54, %s55
      %p67 = scmp.eq.s32.totalorder %s24, 1
      %p68 = por %p66, %p67
      %p70 = scmp.ne.s32.totalorder %s55, %s69
      %p71 = scmp.eq.s32.totalorder %s24, 0
      %p72 = por %p70, %p71
      %s74 = sadd.s32 %s73, 1
      %p77 = scmp.eq.s32.totalorder %s18, 1
      %p78 = scmp.ne.s32.totalorder %s73, %s75
      %p79 = scmp.eq.s32.totalorder %s18, 0
      %p80 = por %p78, %p79
      %p81 = scmp.ne.s32.totalorder %s73, %s75
      %p82 = scmp.eq.s32.totalorder %s23, 1
      %p83 = por %p81, %p82
      %p84 = scmp.ne.s32.totalorder %s75, %s76
      %p85 = scmp.eq.s32.totalorder %s23, 0
      %p86 = por %p84, %p85
      %p87 = scmp.ne.s32.totalorder %s75, %s76
      %p88 = scmp.eq.s32.totalorder %s24, 1
      %p89 = por %p87, %p88
      %p91 = scmp.ne.s32.totalorder %s76, %s90
      %p92 = scmp.eq.s32.totalorder %s24, 0
      %p93 = por %p91, %p92
      %s95 = sadd.s32 %s94, 1
      %p98 = scmp.eq.s32.totalorder %s18, 1
      %p99 = scmp.ne.s32.totalorder %s94, %s96
      %p100 = scmp.eq.s32.totalorder %s18, 0
      %p101 = por %p99, %p100
      %p102 = scmp.ne.s32.totalorder %s94, %s96
      %p103 = scmp.eq.s32.totalorder %s23, 1
      %p104 = por %p102, %p103
      %p105 = scmp.ne.s32.totalorder %s96, %s97
      %p106 = scmp.eq.s32.totalorder %s23, 0
      %p107 = por %p105, %p106
      %p108 = scmp.ne.s32.totalorder %s96, %s97
      %p109 = scmp.eq.s32.totalorder %s24, 1
      %p110 = por %p108, %p109
      %p112 = scmp.ne.s32.totalorder %s97, %s111
      %p113 = scmp.eq.s32.totalorder %s24, 0
      %p114 = por %p112, %p113
      %s116 = sadd.s32 %s115, 1
      %p119 = scmp.eq.s32.totalorder %s18, 1
      %p120 = scmp.ne.s32.totalorder %s115, %s117
      %p121 = scmp.eq.s32.totalorder %s18, 0
      %p122 = por %p120, %p121
      %p123 = scmp.ne.s32.totalorder %s115, %s117
      %p124 = scmp.eq.s32.totalorder %s23, 1
      %p125 = por %p123, %p124
      %p126 = scmp.ne.s32.totalorder %s117, %s118
      %p127 = scmp.eq.s32.totalorder %s23, 0
      %p128 = por %p126, %p127
      %p129 = scmp.ne.s32.totalorder %s117, %s118
      %p130 = scmp.eq.s32.totalorder %s24, 1
      %p131 = por %p129, %p130
      %p133 = scmp.ne.s32.totalorder %s118, %s132
      %p134 = scmp.eq.s32.totalorder %s24, 0
      %p135 = por %p133, %p134
      %s137 = sadd.s32 %s136, 1
      %p140 = scmp.eq.s32.totalorder %s18, 1
      %p141 = scmp.ne.s32.totalorder %s136, %s138
      %p142 = scmp.eq.s32.totalorder %s18, 0
      %p143 = por %p141, %p142
      %p144 = scmp.ne.s32.totalorder %s136, %s138
      %p145 = scmp.eq.s32.totalorder %s23, 1
      %p146 = por %p144, %p145
      %p147 = scmp.ne.s32.totalorder %s138, %s139
      %p148 = scmp.eq.s32.totalorder %s23, 0
      %p149 = por %p147, %p148
      %p150 = scmp.ne.s32.totalorder %s138, %s139
      %p151 = scmp.eq.s32.totalorder %s24, 1
      %p152 = por %p150, %p151
      %p154 = scmp.ne.s32.totalorder %s139, %s153
      %p155 = scmp.eq.s32.totalorder %s24, 0
      %p156 = por %p154, %p155
      %s158 = sadd.s32 %s157, 1
      %p161 = scmp.eq.s32.totalorder %s18, 1
      %p162 = scmp.ne.s32.totalorder %s157, %s159
      %p163 = scmp.eq.s32.totalorder %s18, 0
      %p164 = por %p162, %p163
      %p165 = scmp.ne.s32.totalorder %s157, %s159
      %p166 = scmp.eq.s32.totalorder %s23, 1
      %p167 = por %p165, %p166
      %p168 = scmp.ne.s32.totalorder %s159, %s160
      %p169 = scmp.eq.s32.totalorder %s23, 0
      %p170 = por %p168, %p169
      %p171 = scmp.ne.s32.totalorder %s159, %s160
      %p172 = scmp.eq.s32.totalorder %s24, 1
      %p173 = por %p171, %p172
      %p175 = scmp.ne.s32.totalorder %s160, %s174
      %p176 = scmp.eq.s32.totalorder %s24, 0
      %p177 = por %p175, %p176
      %s179 = sadd.s32 %s178, 1
      %p182 = scmp.eq.s32.totalorder %s18, 1
      %p183 = scmp.ne.s32.totalorder %s178, %s180
      %p184 = scmp.eq.s32.totalorder %s18, 0
      %p185 = por %p183, %p184
      %p186 = scmp.ne.s32.totalorder %s178, %s180
      %p187 = scmp.eq.s32.totalorder %s23, 1
      %p188 = por %p186, %p187
      %p189 = scmp.ne.s32.totalorder %s180, %s181
      %p190 = scmp.eq.s32.totalorder %s23, 0
      %p191 = por %p189, %p190
      %p192 = scmp.ne.s32.totalorder %s180, %s181
      %p193 = scmp.eq.s32.totalorder %s24, 1
      %p194 = por %p192, %p193
      %p196 = scmp.ne.s32.totalorder %s181, %s195
      %p197 = scmp.eq.s32.totalorder %s24, 0
      %p198 = por %p196, %p197
      %s200 = sadd.s32 %s199, 1
      %p203 = scmp.eq.s32.totalorder %s18, 1
      %p204 = scmp.ne.s32.totalorder %s199, %s201
      %p205 = scmp.eq.s32.totalorder %s18, 0
      %p206 = por %p204, %p205
      %p207 = scmp.ne.s32.totalorder %s199, %s201
      %p208 = scmp.eq.s32.totalorder %s23, 1
      %p209 = por %p207, %p208
      %p210 = scmp.ne.s32.totalorder %s201, %s202
      %p211 = scmp.eq.s32.totalorder %s23, 0
      %p212 = por %p210, %p211
      %p213 = scmp.ne.s32.totalorder %s201, %s202
      %p214 = scmp.eq.s32.totalorder %s24, 1
      %p215 = por %p213, %p214
      %p217 = scmp.ne.s32.totalorder %s202, %s216
      %p218 = scmp.eq.s32.totalorder %s24, 0
      %p219 = por %p217, %p218
      %s220 = ssub.s32 %s18, %s25
      %p221 = scmp.eq.s32.totalorder %s220, 0
      %s223 = sadd.s32 %s222, 1
      %s224 = scalar_select %p221, %s222, %s223
      %p227 = pneg %p221
      %p228 = scmp.eq.s32.totalorder %s18, 1
      %p229 = por %p227, %p228
      %p230 = scmp.ne.s32.totalorder %s222, %s225
      %p231 = scmp.eq.s32.totalorder %s18, 0
      %p232 = por %p230, %p231
      %p233 = scmp.ne.s32.totalorder %s222, %s225
      %p234 = scmp.eq.s32.totalorder %s23, 1
      %p235 = por %p233, %p234
      %p236 = scmp.ne.s32.totalorder %s225, %s226
      %p237 = scmp.eq.s32.totalorder %s23, 0
      %p238 = por %p236, %p237
      %p239 = scmp.ne.s32.totalorder %s225, %s226
      %p240 = scmp.eq.s32.totalorder %s24, 1
      %p241 = por %p239, %p240
      %p243 = scmp.ne.s32.totalorder %s226, %s242
      %p244 = scmp.eq.s32.totalorder %s24, 0
      %p245 = por %p243, %p244
      %p246 = scmp.le.s32.totalorder 1, %s18
      %p247 = scmp.lt.s32.totalorder %s18, 3
      %p248 = pnand %p246, %p247
      %p249 = pneg %p248
      // Predicated region
      $region9: #{forward.1} parent=5 // pred_check
        _
      $region10: #{forward.1} parent=5 // pred_check_branch
        %251 = sbr.rel (%p248) target = $region12
      $region11: #{forward.1} parent=5 // pred_region
        %s252 = ssub.s32 %s18, 1
        // Predicated region
        $region13: #{forward.1} parent=11 // pred_check
          %p253 = pneg %p65
        $region14: #{forward.1} parent=11 // pred_check_branch
          %255 = sbr.rel (%p253) target = $region16
        $region15: #{forward.1} parent=11 // pred_region
          _
        $region16: #{forward.1} parent=11 // pred_fallthru
          _
        // Predicated region
        $region17: #{forward.1} parent=11 // pred_check
          %p256 = pneg %p86
        $region18: #{forward.1} parent=11 // pred_check_branch
          %258 = sbr.rel (%p256) target = $region20
        $region19: #{forward.1} parent=11 // pred_region
          %260 = vsyncadd [#allocation3], 0
          %s261 = sshll.u32 %s2, 4
          %s262 = int_to_ptr.hbm [resolvable:$true] %s261
          %s263 = sshll.u32 [#allocation2], 4
          %s264 = int_to_ptr.vmem [resolvable:$true] %s263
          %269 = dma.hbm_to_vmem [thread:$0]  %s262, 92160, %s264, [#allocation3], 256, 256, 16
        $region20: #{forward.1} parent=11 // pred_fallthru
          _
        // Predicated region
        $region21: #{forward.1} parent=11 // pred_check
          %p270 = pneg %p107
        $region22: #{forward.1} parent=11 // pred_check_branch
          %272 = sbr.rel (%p270) target = $region24
        $region23: #{forward.1} parent=11 // pred_region
          %274 = vsyncadd [#allocation5], 0
          %s275 = sshll.u32 %s3, 4
          %s276 = int_to_ptr.hbm [resolvable:$true] %s275
          %s277 = sshll.u32 [#allocation4], 4
          %s278 = int_to_ptr.vmem [resolvable:$true] %s277
          %283 = dma.hbm_to_vmem [thread:$0]  %s276, 18432, %s278, [#allocation5], 128, 128, 8
        $region24: #{forward.1} parent=11 // pred_fallthru
          _
        // Predicated region
        $region25: #{forward.1} parent=11 // pred_check
          %p284 = pneg %p128
        $region26: #{forward.1} parent=11 // pred_check_branch
          %286 = sbr.rel (%p284) target = $region28
        $region27: #{forward.1} parent=11 // pred_region
          _
        $region28: #{forward.1} parent=11 // pred_fallthru
          _
        // Predicated region
        $region29: #{forward.1} parent=11 // pred_check
          %p287 = pneg %p149
        $region30: #{forward.1} parent=11 // pred_check_branch
          %289 = sbr.rel (%p287) target = $region32
        $region31: #{forward.1} parent=11 // pred_region
          %291 = vsyncadd [#allocation5], 0
          %s292 = sshll.u32 %s5, 4
          %s293 = int_to_ptr.hbm [resolvable:$true] %s292
          %s294 = sshll.u32 [#allocation6], 4
          %s295 = int_to_ptr.vmem [resolvable:$true] %s294
          %300 = dma.hbm_to_vmem [thread:$0]  %s293, 1024, %s295, [#allocation5], 128, 128, 8
        $region32: #{forward.1} parent=11 // pred_fallthru
          _
        // Predicated region
        $region33: #{forward.1} parent=11 // pred_check
          %p301 = pneg %p170
        $region34: #{forward.1} parent=11 // pred_check_branch
          %303 = sbr.rel (%p301) target = $region36
        $region35: #{forward.1} parent=11 // pred_region
          _
        $region36: #{forward.1} parent=11 // pred_fallthru
          _
        // Predicated region
        $region37: #{forward.1} parent=11 // pred_check
          %p304 = pneg %p191
        $region38: #{forward.1} parent=11 // pred_check_branch
          %306 = sbr.rel (%p304) target = $region40
        $region39: #{forward.1} parent=11 // pred_region
          %308 = vsyncadd [#allocation8], 0
          %s309 = sshll.u32 %s7, 4
          %s310 = int_to_ptr.hbm [resolvable:$true] %s309
          %s311 = sshll.u32 [#allocation7], 4
          %s312 = int_to_ptr.vmem [resolvable:$true] %s311
          %317 = dma.hbm_to_vmem [thread:$0]  %s310, 64, %s312, [#allocation8], 32, 32, 2
        $region40: #{forward.1} parent=11 // pred_fallthru
          _
        // Predicated region
        $region41: #{forward.1} parent=11 // pred_check
          %p318 = pneg %p212
        $region42: #{forward.1} parent=11 // pred_check_branch
          %320 = sbr.rel (%p318) target = $region44
        $region43: #{forward.1} parent=11 // pred_region
          %322 = vsyncadd [#allocation8], 0
          %s323 = sshll.u32 %s8, 4
          %s324 = int_to_ptr.hbm [resolvable:$true] %s323
          %s325 = sshll.u32 [#allocation9], 4
          %s326 = int_to_ptr.vmem [resolvable:$true] %s325
          %331 = dma.hbm_to_vmem [thread:$0]  %s324, 5120, %s326, [#allocation8], 1024, 1024, 64
        $region44: #{forward.1} parent=11 // pred_fallthru
          _
      $region12: #{forward.1} parent=5 // pred_fallthru
        _
      %p332 = scmp.lt.s32.totalorder %s18, 2
      // Predicated region
      $region45: #{forward.1} parent=5 // pred_check
        %p333 = pneg %p332
      $region46: #{forward.1} parent=5 // pred_check_branch
        %335 = sbr.rel (%p333) target = $region48
      $region47: #{forward.1} parent=5 // pred_region
        // Predicated region
        $region49: #{forward.1} parent=47 // pred_check
          %p336 = pneg %p38
        $region50: #{forward.1} parent=47 // pred_check_branch
          %338 = sbr.rel (%p336) target = $region52
        $region51: #{forward.1} parent=47 // pred_region
          %p339 = scmp.lt.s32.totalorder %s18, 1
          %s340 = scalar_select %p339, %s18, 1
          %s341 = smul.addr %s340, 32
          %s342 = smul.addr %s341, 8
          %s343 = scalar_lea.vmem %s0, %s342
        $region52: #{forward.1} parent=47 // pred_fallthru
          _
      $region48: #{forward.1} parent=5 // pred_fallthru
        _
      %p344 = scmp.le.s32.totalorder 1, %s18
      %p345 = scmp.lt.s32.totalorder %s18, 3
      %p346 = pnand %p344, %p345
      %p347 = pneg %p346
      // Predicated region
      $region53: #{forward.1} parent=5 // pred_check
        _
      $region54: #{forward.1} parent=5 // pred_check_branch
        %349 = sbr.rel (%p346) target = $region56
      $region55: #{forward.1} parent=5 // pred_region
        %s350 = ssub.s32 %s18, 1
        // Predicated region
        $region57: #{forward.1} parent=55 // pred_check
          %p351 = pneg %p86
        $region58: #{forward.1} parent=55 // pred_check_branch
          %353 = sbr.rel (%p351) target = $region60
        $region59: #{forward.1} parent=55 // pred_region
          %355 = dma.done [#allocation3], 92160
        $region60: #{forward.1} parent=55 // pred_fallthru
          _
        // Predicated region
        $region61: #{forward.1} parent=55 // pred_check
          %p356 = pneg %p107
        $region62: #{forward.1} parent=55 // pred_check_branch
          %358 = sbr.rel (%p356) target = $region64
        $region63: #{forward.1} parent=55 // pred_region
          %360 = dma.done [#allocation5], 18432
        $region64: #{forward.1} parent=55 // pred_fallthru
          _
        // Predicated region
        $region65: #{forward.1} parent=55 // pred_check
          %p361 = pneg %p149
        $region66: #{forward.1} parent=55 // pred_check_branch
          %363 = sbr.rel (%p361) target = $region68
        $region67: #{forward.1} parent=55 // pred_region
          %365 = dma.done [#allocation5], 1024
        $region68: #{forward.1} parent=55 // pred_fallthru
          _
        // Predicated region
        $region69: #{forward.1} parent=55 // pred_check
          %p366 = pneg %p191
        $region70: #{forward.1} parent=55 // pred_check_branch
          %368 = sbr.rel (%p366) target = $region72
        $region71: #{forward.1} parent=55 // pred_region
          %370 = dma.done [#allocation8], 64
        $region72: #{forward.1} parent=55 // pred_fallthru
          _
        // Predicated region
        $region73: #{forward.1} parent=55 // pred_check
          %p371 = pneg %p212
        $region74: #{forward.1} parent=55 // pred_check_branch
          %373 = sbr.rel (%p371) target = $region76
        $region75: #{forward.1} parent=55 // pred_region
          %375 = dma.done [#allocation8], 5120
        $region76: #{forward.1} parent=55 // pred_fallthru
          _
        %p376 = scmp.lt.s32.totalorder %s23, 1
        %s377 = scalar_select %p376, %s23, 1
        %s378 = smul.addr %s377, 32
        %s379 = smul.addr %s378, 8
        %s380 = scalar_lea.vmem %s0, %s379
        %p381 = pneg %p44
        %p382 = pneg %p41
        %p383 = pneg %p65
        %p384 = pneg %p62
        %p385 = pneg %p86
        %p386 = pneg %p83
        %p387 = pneg %p107
        %p388 = pneg %p104
        %p389 = pneg %p128
        %p390 = pneg %p125
        %p391 = pneg %p149
        %p392 = pneg %p146
        %p393 = pneg %p170
        %p394 = pneg %p167
        %p395 = pneg %p191
        %p396 = pneg %p188
        %p397 = pneg %p212
        %p398 = pneg %p209
        %p399 = pneg %p238
        %p400 = pneg %p235
        %p401 = scmp.lt.s32.totalorder %s23, 1
        %s402 = scalar_select %p401, %s23, 1
        %s403 = smul.addr %s402, 8
        %s404 = scalar_lea.vmem %s9, %s403
        %p405 = scmp.lt.s32.totalorder %s23, 1
        %s406 = scalar_select %p405, %s23, 1
        %s407 = smul.addr %s406, 32
        %s408 = smul.addr %s407, 8
        %s409 = scalar_lea.vmem %s0, %s408
        %p410 = scmp.lt.s32.totalorder %s23, 1
        %s411 = scalar_select %p410, %s23, 1
        %s412 = smul.addr %s411, 8
        %s413 = scalar_lea.vmem %s9, %s412
        %v414 = vld [vmem:[%s409] sm:$0xff]
        %v415 = vld [vmem:[%s409 + $0x8] sm:$0xff]
        %v416 = vld [vmem:[%s409 + $0x10] sm:$0xff]
        %v417 = vld [vmem:[%s409 + $0x18] sm:$0xff]
        %v418 = vld [vmem:[%s409 + $0x20] sm:$0xff]
        %v419 = vld [vmem:[%s409 + $0x28] sm:$0xff]
        %v420 = vld [vmem:[%s409 + $0x30] sm:$0xff]
        %v421 = vld [vmem:[%s409 + $0x38] sm:$0xff]
        %v422 = vld [vmem:[%s409 + $0x40] sm:$0xff]
        %v423 = vld [vmem:[%s409 + $0x48] sm:$0xff]
        %v424 = vld [vmem:[%s409 + $0x50] sm:$0xff]
        %v425 = vld [vmem:[%s409 + $0x58] sm:$0xff]
        %v426 = vld [vmem:[%s409 + $0x60] sm:$0xff]
        %v427 = vld [vmem:[%s409 + $0x68] sm:$0xff]
        %v428 = vld [vmem:[%s409 + $0x70] sm:$0xff]
        %v429 = vld [vmem:[%s409 + $0x78] sm:$0xff]
        %v430 = vld [vmem:[%s409 + $0x80] sm:$0xff]
        %v431 = vld [vmem:[%s409 + $0x88] sm:$0xff]
        %v432 = vld [vmem:[%s409 + $0x90] sm:$0xff]
        %v433 = vld [vmem:[%s409 + $0x98] sm:$0xff]
        %v434 = vld [vmem:[%s409 + $0xa0] sm:$0xff]
        %v435 = vld [vmem:[%s409 + $0xa8] sm:$0xff]
        %v436 = vld [vmem:[%s409 + $0xb0] sm:$0xff]
        %v437 = vld [vmem:[%s409 + $0xb8] sm:$0xff]
        %v438 = vld [vmem:[%s409 + $0xc0] sm:$0xff]
        %v439 = vld [vmem:[%s409 + $0xc8] sm:$0xff]
        %v440 = vld [vmem:[%s409 + $0xd0] sm:$0xff]
        %v441 = vld [vmem:[%s409 + $0xd8] sm:$0xff]
        %v442 = vld [vmem:[%s409 + $0xe0] sm:$0xff]
        %v443 = vld [vmem:[%s409 + $0xe8] sm:$0xff]
        %v444 = vld [vmem:[%s409 + $0xf0] sm:$0xff]
        %v445 = vld [vmem:[%s409 + $0xf8] sm:$0xff]
        %v446 = vld [vmem:[%s1] sm:$0xff]
        %v447 = vld [vmem:[%s1 + $0x8] sm:$0xff]
        %v448 = vld [vmem:[%s1 + $0x10] sm:$0xff]
        %v449 = vld [vmem:[%s1 + $0x18] sm:$0x7]
        %v450 = vld [vmem:[%s6] sm:$0x1]
        %v451 = vperm.slane %v450, 0
        %vm452 = vcmask 220160
        %v454 = vsel %vm452, %v414, 0
        %v457 = vsel %vm452, %v415, 0
        %v460 = vsel %vm452, %v416, 0
        %v463 = vsel %vm452, %v417, 0
        %v466 = vsel %vm452, %v418, 0
        %v469 = vsel %vm452, %v419, 0
        %v472 = vsel %vm452, %v420, 0
        %v475 = vsel %vm452, %v421, 0
        %v478 = vsel %vm452, %v422, 0
        %v481 = vsel %vm452, %v423, 0
        %v484 = vsel %vm452, %v424, 0
        %v487 = vsel %vm452, %v425, 0
        %v490 = vsel %vm452, %v426, 0
        %v493 = vsel %vm452, %v427, 0
        %v496 = vsel %vm452, %v428, 0
        %v499 = vsel %vm452, %v429, 0
        %v502 = vsel %vm452, %v430, 0
        %v505 = vsel %vm452, %v431, 0
        %v508 = vsel %vm452, %v432, 0
        %v511 = vsel %vm452, %v433, 0
        %v514 = vsel %vm452, %v434, 0
        %v517 = vsel %vm452, %v435, 0
        %v520 = vsel %vm452, %v436, 0
        %v523 = vsel %vm452, %v437, 0
        %v526 = vsel %vm452, %v438, 0
        %v529 = vsel %vm452, %v439, 0
        %v532 = vsel %vm452, %v440, 0
        %v535 = vsel %vm452, %v441, 0
        %v538 = vsel %vm452, %v442, 0
        %v541 = vsel %vm452, %v443, 0
        %v544 = vsel %vm452, %v444, 0
        %v547 = vsel %vm452, %v445, 0
        %vm549 = vcmask 1042432
        %v551 = vsel %vm549, %v449, 0
        %553 = vmatpush.msra.mxu0 0.0
        %554 = vmatpush.msra.mxu0 0.0
        %555 = vmatpush.msra.mxu0 0.0
        %556 = vmatpush.msra.mxu0 0.0
        %557 = vmatpush.msra.mxu0 0.0
        %558 = vmatpush.msra.mxu0 0.0
        %559 = vmatpush.msra.mxu0 0.0
        %560 = vmatpush.msra.mxu0 0.0
        %561 = vmatpush.msra.mxu0 0.0
        %562 = vmatpush.msra.mxu0 0.0
        %563 = vmatpush.msra.mxu0 0.0
        %564 = vmatpush.msra.mxu0 0.0
        %565 = vmatpush.msra.mxu0 %v551
        %566 = vmatpush.msra.mxu0 %v448
        %567 = vmatpush.msra.mxu0 %v447
        %568 = vmatpush.msra.mxu0 %v446
        %569 = vmatmul.f32.gmra.mxu0 %v454
        %v570 = vpop.f32.mrf.mxu0
        %v571 = vadd.f32 %v451, %v570
        %572 = vmatmul.f32.gmra.mxu0 %v457
        %v573 = vpop.f32.mrf.mxu0
        %v574 = vadd.f32 %v451, %v573
        %575 = vmatmul.f32.gmra.mxu0 %v460
        %v576 = vpop.f32.mrf.mxu0
        %v577 = vadd.f32 %v451, %v576
        %578 = vmatmul.f32.gmra.mxu0 %v463
        %v579 = vpop.f32.mrf.mxu0
        %v580 = vadd.f32 %v451, %v579
        %581 = vmatmul.f32.gmra.mxu0 %v466
        %v582 = vpop.f32.mrf.mxu0
        %v583 = vadd.f32 %v451, %v582
        %584 = vmatmul.f32.gmra.mxu0 %v469
        %v585 = vpop.f32.mrf.mxu0
        %v586 = vadd.f32 %v451, %v585
        %587 = vmatmul.f32.gmra.mxu0 %v472
        %v588 = vpop.f32.mrf.mxu0
        %v589 = vadd.f32 %v451, %v588
        %590 = vmatmul.f32.gmra.mxu0 %v475
        %v591 = vpop.f32.mrf.mxu0
        %v592 = vadd.f32 %v451, %v591
        %593 = vmatmul.f32.gmra.mxu0 %v478
        %v594 = vpop.f32.mrf.mxu0
        %v595 = vadd.f32 %v451, %v594
        %596 = vmatmul.f32.gmra.mxu0 %v481
        %v597 = vpop.f32.mrf.mxu0
        %v598 = vadd.f32 %v451, %v597
        %599 = vmatmul.f32.gmra.mxu0 %v484
        %v600 = vpop.f32.mrf.mxu0
        %v601 = vadd.f32 %v451, %v600
        %602 = vmatmul.f32.gmra.mxu0 %v487
        %v603 = vpop.f32.mrf.mxu0
        %v604 = vadd.f32 %v451, %v603
        %605 = vmatmul.f32.gmra.mxu0 %v490
        %v606 = vpop.f32.mrf.mxu0
        %v607 = vadd.f32 %v451, %v606
        %608 = vmatmul.f32.gmra.mxu0 %v493
        %v609 = vpop.f32.mrf.mxu0
        %v610 = vadd.f32 %v451, %v609
        %611 = vmatmul.f32.gmra.mxu0 %v496
        %v612 = vpop.f32.mrf.mxu0
        %v613 = vadd.f32 %v451, %v612
        %614 = vmatmul.f32.gmra.mxu0 %v499
        %v615 = vpop.f32.mrf.mxu0
        %v616 = vadd.f32 %v451, %v615
        %617 = vmatmul.f32.gmra.mxu0 %v502
        %v618 = vpop.f32.mrf.mxu0
        %v619 = vadd.f32 %v451, %v618
        %620 = vmatmul.f32.gmra.mxu0 %v505
        %v621 = vpop.f32.mrf.mxu0
        %v622 = vadd.f32 %v451, %v621
        %623 = vmatmul.f32.gmra.mxu0 %v508
        %v624 = vpop.f32.mrf.mxu0
        %v625 = vadd.f32 %v451, %v624
        %626 = vmatmul.f32.gmra.mxu0 %v511
        %v627 = vpop.f32.mrf.mxu0
        %v628 = vadd.f32 %v451, %v627
        %629 = vmatmul.f32.gmra.mxu0 %v514
        %v630 = vpop.f32.mrf.mxu0
        %v631 = vadd.f32 %v451, %v630
        %632 = vmatmul.f32.gmra.mxu0 %v517
        %v633 = vpop.f32.mrf.mxu0
        %v634 = vadd.f32 %v451, %v633
        %635 = vmatmul.f32.gmra.mxu0 %v520
        %v636 = vpop.f32.mrf.mxu0
        %v637 = vadd.f32 %v451, %v636
        %638 = vmatmul.f32.gmra.mxu0 %v523
        %v639 = vpop.f32.mrf.mxu0
        %v640 = vadd.f32 %v451, %v639
        %641 = vmatmul.f32.gmra.mxu0 %v526
        %v642 = vpop.f32.mrf.mxu0
        %v643 = vadd.f32 %v451, %v642
        %644 = vmatmul.f32.gmra.mxu0 %v529
        %v645 = vpop.f32.mrf.mxu0
        %v646 = vadd.f32 %v451, %v645
        %647 = vmatmul.f32.gmra.mxu0 %v532
        %v648 = vpop.f32.mrf.mxu0
        %v649 = vadd.f32 %v451, %v648
        %650 = vmatmul.f32.gmra.mxu0 %v535
        %v651 = vpop.f32.mrf.mxu0
        %v652 = vadd.f32 %v451, %v651
        %653 = vmatmul.f32.gmra.mxu0 %v538
        %v654 = vpop.f32.mrf.mxu0
        %v655 = vadd.f32 %v451, %v654
        %656 = vmatmul.f32.gmra.mxu0 %v541
        %v657 = vpop.f32.mrf.mxu0
        %v658 = vadd.f32 %v451, %v657
        %659 = vmatmul.f32.gmra.mxu0 %v544
        %v660 = vpop.f32.mrf.mxu0
        %v661 = vadd.f32 %v451, %v660
        %662 = vmatmul.f32.gmra.mxu0 %v547
        %v663 = vpop.f32.mrf.mxu0
        %v664 = vadd.f32 %v451, %v663
        %665 = vdwg.mxu0
        %vm666 = vcmask 64512
        %v667 = vsel %vm666, %v571, 0.0
        %v668 = vsel %vm666, %v574, 0.0
        %v669 = vadd.f32 %v667, %v668
        %v670 = vsel %vm666, %v577, 0.0
        %v671 = vadd.f32 %v669, %v670
        %v672 = vsel %vm666, %v580, 0.0
        %v673 = vadd.f32 %v671, %v672
        %v674 = vsel %vm666, %v583, 0.0
        %v675 = vadd.f32 %v673, %v674
        %v676 = vsel %vm666, %v586, 0.0
        %v677 = vadd.f32 %v675, %v676
        %v678 = vsel %vm666, %v589, 0.0
        %v679 = vadd.f32 %v677, %v678
        %v680 = vsel %vm666, %v592, 0.0
        %v681 = vadd.f32 %v679, %v680
        %v682 = vsel %vm666, %v595, 0.0
        %v683 = vadd.f32 %v681, %v682
        %v684 = vsel %vm666, %v598, 0.0
        %v685 = vadd.f32 %v683, %v684
        %v686 = vsel %vm666, %v601, 0.0
        %v687 = vadd.f32 %v685, %v686
        %v688 = vsel %vm666, %v604, 0.0
        %v689 = vadd.f32 %v687, %v688
        %v690 = vsel %vm666, %v607, 0.0
        %v691 = vadd.f32 %v689, %v690
        %v692 = vsel %vm666, %v610, 0.0
        %v693 = vadd.f32 %v691, %v692
        %v694 = vsel %vm666, %v613, 0.0
        %v695 = vadd.f32 %v693, %v694
        %v696 = vsel %vm666, %v616, 0.0
        %v697 = vadd.f32 %v695, %v696
        %v698 = vsel %vm666, %v619, 0.0
        %v699 = vadd.f32 %v697, %v698
        %v700 = vsel %vm666, %v622, 0.0
        %v701 = vadd.f32 %v699, %v700
        %v702 = vsel %vm666, %v625, 0.0
        %v703 = vadd.f32 %v701, %v702
        %v704 = vsel %vm666, %v628, 0.0
        %v705 = vadd.f32 %v703, %v704
        %v706 = vsel %vm666, %v631, 0.0
        %v707 = vadd.f32 %v705, %v706
        %v708 = vsel %vm666, %v634, 0.0
        %v709 = vadd.f32 %v707, %v708
        %v710 = vsel %vm666, %v637, 0.0
        %v711 = vadd.f32 %v709, %v710
        %v712 = vsel %vm666, %v640, 0.0
        %v713 = vadd.f32 %v711, %v712
        %v714 = vsel %vm666, %v643, 0.0
        %v715 = vadd.f32 %v713, %v714
        %v716 = vsel %vm666, %v646, 0.0
        %v717 = vadd.f32 %v715, %v716
        %v718 = vsel %vm666, %v649, 0.0
        %v719 = vadd.f32 %v717, %v718
        %v720 = vsel %vm666, %v652, 0.0
        %v721 = vadd.f32 %v719, %v720
        %v722 = vsel %vm666, %v655, 0.0
        %v723 = vadd.f32 %v721, %v722
        %v724 = vsel %vm666, %v658, 0.0
        %v725 = vadd.f32 %v723, %v724
        %v726 = vsel %vm666, %v661, 0.0
        %v727 = vadd.f32 %v725, %v726
        %v728 = vsel %vm666, %v664, 0.0
        %v729 = vadd.f32 %v727, %v728
        %v730 = vrot.slane %v729, 4
        %v731 = vadd.f32 %v729, %v730
        %v732 = vrot.slane %v731, 2
        %v733 = vadd.f32 %v731, %v732
        %v734 = vrot.slane %v733, 1
        %v735 = vadd.f32 %v733, %v734
        %v736 = vrcp.pop 256.0
        %v737 = vmul.f32 256.0, %v736
        %v738 = vsub.f32 1.0, %v737
        %v739 = vmul.f32 %v736, %v738
        %v740 = vadd.f32 %v736, %v739
        %vm741 = vweird.f32 %v736
        %v742 = vsel %vm741, %v736, %v740
        %v743 = vmul.f32 %v735, %v742
        %v744 = vld [vmem:[%s4] sm:$0xff]
        %v745 = vld [vmem:[%s6 + $0x1] sm:$0x1]
        %v747 = vsel %vm666, %v743, 0
        %749 = vmatpush.msra.mxu0 0.0
        %750 = vmatpush.msra.mxu0 0.0
        %751 = vmatpush.msra.mxu0 0.0
        %752 = vmatpush.msra.mxu0 0.0
        %753 = vmatpush.msra.mxu0 0.0
        %754 = vmatpush.msra.mxu0 0.0
        %755 = vmatpush.msra.mxu0 0.0
        %756 = vmatpush.msra.mxu0 0.0
        %757 = vmatpush.msra.mxu0 0.0
        %758 = vmatpush.msra.mxu0 0.0
        %759 = vmatpush.msra.mxu0 0.0
        %760 = vmatpush.msra.mxu0 0.0
        %761 = vmatpush.msra.mxu0 0.0
        %762 = vmatpush.msra.mxu0 0.0
        %763 = vmatpush.msra.mxu0 0.0
        %764 = vmatpush.msra.mxu0 %v744
        %765 = vmatmul.f32.gmra.mxu0 %v747
        %v766 = vpop.f32.mrf.mxu0
        %v767 = vadd.f32 %v745, %v766
        %768 = vdwg.mxu0
        %v769 = vmax.f32 %v767, 0.0
        %v770 = vld [vmem:[#allocation6] sm:$0x3]
        %v771 = vld [vmem:[%s6 + $0x2] sm:$0x1]
        %vm772 = vcmask 15360
        %v774 = vsel %vm772, %v769, 0
        %vm776 = vcmask 1041408
        %v778 = vsel %vm776, %v770, 0
        %780 = vmatpush.msra.mxu0 0.0
        %781 = vmatpush.msra.mxu0 0.0
        %782 = vmatpush.msra.mxu0 0.0
        %783 = vmatpush.msra.mxu0 0.0
        %784 = vmatpush.msra.mxu0 0.0
        %785 = vmatpush.msra.mxu0 0.0
        %786 = vmatpush.msra.mxu0 0.0
        %787 = vmatpush.msra.mxu0 0.0
        %788 = vmatpush.msra.mxu0 0.0
        %789 = vmatpush.msra.mxu0 0.0
        %790 = vmatpush.msra.mxu0 0.0
        %791 = vmatpush.msra.mxu0 0.0
        %792 = vmatpush.msra.mxu0 0.0
        %793 = vmatpush.msra.mxu0 0.0
        %794 = vmatpush.msra.mxu0 0.0
        %795 = vmatpush.msra.mxu0 %v778
        %796 = vmatmul.f32.gmra.mxu0 %v774
        %v797 = vpop.f32.mrf.mxu0
        %v798 = vadd.f32 %v771, %v797
        %799 = vdwg.mxu0
        %v800 = vxor.u32 %v798, 2147483648
        %v801 = vmul.f32 %v800, 1.442695
        %v802 = vpow.pop %v801
        %v803 = vadd.f32 %v802, 1.0
        %v804 = vrcp.pop %v803
        %v805 = vmul.f32 %v803, %v804
        %v806 = vsub.f32 1.0, %v805
        %v807 = vmul.f32 %v804, %v806
        %v808 = vadd.f32 %v804, %v807
        %vm809 = vweird.f32 %v803
        %vm810 = vweird.f32 %v804
        %vm811 = vmor %vm809, %vm810
        %v812 = vsel %vm811, %v804, %v808
        %v813 = vand.u32 2147483647, %v803
        %vm814 = vcmp.eq.f32.partialorder %v813, 8.507059e+37
        %v815 = vand.u32 %v803, 2147483648
        %v816 = vor.u32 1.1754944e-38, %v815
        %v817 = vsel %vm814, %v816, %v812
        %v818 = vmul.f32 1.0, %v817
        %v819 = vperm.slane %v818, 0
        %v820 = vmul.f32 %v571, %v819
        %v821 = vmul.f32 %v574, %v819
        %v822 = vmul.f32 %v577, %v819
        %v823 = vmul.f32 %v580, %v819
        %v824 = vmul.f32 %v583, %v819
        %v825 = vmul.f32 %v586, %v819
        %v826 = vmul.f32 %v589, %v819
        %v827 = vmul.f32 %v592, %v819
        %v828 = vmul.f32 %v595, %v819
        %v829 = vmul.f32 %v598, %v819
        %v830 = vmul.f32 %v601, %v819
        %v831 = vmul.f32 %v604, %v819
        %v832 = vmul.f32 %v607, %v819
        %v833 = vmul.f32 %v610, %v819
        %v834 = vmul.f32 %v613, %v819
        %v835 = vmul.f32 %v616, %v819
        %v836 = vmul.f32 %v619, %v819
        %v837 = vmul.f32 %v622, %v819
        %v838 = vmul.f32 %v625, %v819
        %v839 = vmul.f32 %v628, %v819
        %v840 = vmul.f32 %v631, %v819
        %v841 = vmul.f32 %v634, %v819
        %v842 = vmul.f32 %v637, %v819
        %v843 = vmul.f32 %v640, %v819
        %v844 = vmul.f32 %v643, %v819
        %v845 = vmul.f32 %v646, %v819
        %v846 = vmul.f32 %v649, %v819
        %v847 = vmul.f32 %v652, %v819
        %v848 = vmul.f32 %v655, %v819
        %v849 = vmul.f32 %v658, %v819
        %v850 = vmul.f32 %v661, %v819
        %v851 = vmul.f32 %v664, %v819
        %v852 = vmax.f32 %v820, 0.0
        %v853 = vmax.f32 %v821, 0.0
        %v854 = vmax.f32 %v822, 0.0
        %v855 = vmax.f32 %v823, 0.0
        %v856 = vmax.f32 %v824, 0.0
        %v857 = vmax.f32 %v825, 0.0
        %v858 = vmax.f32 %v826, 0.0
        %v859 = vmax.f32 %v827, 0.0
        %v860 = vmax.f32 %v828, 0.0
        %v861 = vmax.f32 %v829, 0.0
        %v862 = vmax.f32 %v830, 0.0
        %v863 = vmax.f32 %v831, 0.0
        %v864 = vmax.f32 %v832, 0.0
        %v865 = vmax.f32 %v833, 0.0
        %v866 = vmax.f32 %v834, 0.0
        %v867 = vmax.f32 %v835, 0.0
        %v868 = vmax.f32 %v836, 0.0
        %v869 = vmax.f32 %v837, 0.0
        %v870 = vmax.f32 %v838, 0.0
        %v871 = vmax.f32 %v839, 0.0
        %v872 = vmax.f32 %v840, 0.0
        %v873 = vmax.f32 %v841, 0.0
        %v874 = vmax.f32 %v842, 0.0
        %v875 = vmax.f32 %v843, 0.0
        %v876 = vmax.f32 %v844, 0.0
        %v877 = vmax.f32 %v845, 0.0
        %v878 = vmax.f32 %v846, 0.0
        %v879 = vmax.f32 %v847, 0.0
        %v880 = vmax.f32 %v848, 0.0
        %v881 = vmax.f32 %v849, 0.0
        %v882 = vmax.f32 %v850, 0.0
        %v883 = vmax.f32 %v851, 0.0
        %v884 = vld [vmem:[#allocation2] sm:$0xff]
        %v885 = vld [vmem:[#allocation2 + $0x8] sm:$0xff]
        %v886 = vld [vmem:[#allocation2 + $0x10] sm:$0xff]
        %v887 = vld [vmem:[#allocation2 + $0x18] sm:$0xff]
        %v888 = vld [vmem:[#allocation2 + $0x20] sm:$0xff]
        %v889 = vld [vmem:[#allocation2 + $0x28] sm:$0xff]
        %v890 = vld [vmem:[#allocation2 + $0x30] sm:$0xff]
        %v891 = vld [vmem:[#allocation2 + $0x38] sm:$0xff]
        %v892 = vld [vmem:[#allocation2 + $0x40] sm:$0xff]
        %v893 = vld [vmem:[#allocation2 + $0x48] sm:$0xff]
        %v894 = vld [vmem:[#allocation2 + $0x50] sm:$0xff]
        %v895 = vld [vmem:[#allocation2 + $0x58] sm:$0xff]
        %v896 = vld [vmem:[#allocation2 + $0x60] sm:$0xff]
        %v897 = vld [vmem:[#allocation2 + $0x68] sm:$0xff]
        %v898 = vld [vmem:[#allocation2 + $0x70] sm:$0xff]
        %v899 = vld [vmem:[#allocation2 + $0x78] sm:$0xff]
        %v900 = vld [vmem:[#allocation4] sm:$0xff]
        %901 = vmatpush.msra.mxu0 %v867
        %902 = vmatpush.msra.mxu0 %v866
        %903 = vmatpush.msra.mxu0 %v865
        %904 = vmatpush.msra.mxu0 %v864
        %905 = vmatpush.msra.mxu0 %v863
        %906 = vmatpush.msra.mxu0 %v862
        %907 = vmatpush.msra.mxu0 %v861
        %908 = vmatpush.msra.mxu0 %v860
        %909 = vmatpush.msra.mxu0 %v859
        %910 = vmatpush.msra.mxu0 %v858
        %911 = vmatpush.msra.mxu0 %v857
        %912 = vmatpush.msra.mxu0 %v856
        %913 = vmatpush.msra.mxu0 %v855
        %914 = vmatpush.msra.mxu0 %v854
        %915 = vmatpush.msra.mxu0 %v853
        %916 = vmatpush.msra.mxu0 %v852
        %917 = vmatmul.f32.gmra.mxu0 %v884
        %v918 = vpop.f32.mrf.mxu0
        %v919 = vadd.f32 0.0, %v918
        %920 = vmatmul.f32.gmra.mxu0 %v886
        %v921 = vpop.f32.mrf.mxu0
        %v922 = vadd.f32 0.0, %v921
        %923 = vmatmul.f32.gmra.mxu0 %v888
        %v924 = vpop.f32.mrf.mxu0
        %v925 = vadd.f32 0.0, %v924
        %926 = vmatmul.f32.gmra.mxu0 %v890
        %v927 = vpop.f32.mrf.mxu0
        %v928 = vadd.f32 0.0, %v927
        %929 = vmatmul.f32.gmra.mxu0 %v892
        %v930 = vpop.f32.mrf.mxu0
        %v931 = vadd.f32 0.0, %v930
        %932 = vmatmul.f32.gmra.mxu0 %v894
        %v933 = vpop.f32.mrf.mxu0
        %v934 = vadd.f32 0.0, %v933
        %935 = vmatmul.f32.gmra.mxu0 %v896
        %v936 = vpop.f32.mrf.mxu0
        %v937 = vadd.f32 0.0, %v936
        %938 = vmatmul.f32.gmra.mxu0 %v898
        %v939 = vpop.f32.mrf.mxu0
        %v940 = vadd.f32 0.0, %v939
        %941 = vdwg.mxu0
        %942 = vmatpush.msra.mxu0 %v883
        %943 = vmatpush.msra.mxu0 %v882
        %944 = vmatpush.msra.mxu0 %v881
        %945 = vmatpush.msra.mxu0 %v880
        %946 = vmatpush.msra.mxu0 %v879
        %947 = vmatpush.msra.mxu0 %v878
        %948 = vmatpush.msra.mxu0 %v877
        %949 = vmatpush.msra.mxu0 %v876
        %950 = vmatpush.msra.mxu0 %v875
        %951 = vmatpush.msra.mxu0 %v874
        %952 = vmatpush.msra.mxu0 %v873
        %953 = vmatpush.msra.mxu0 %v872
        %954 = vmatpush.msra.mxu0 %v871
        %955 = vmatpush.msra.mxu0 %v870
        %956 = vmatpush.msra.mxu0 %v869
        %957 = vmatpush.msra.mxu0 %v868
        %958 = vmatmul.f32.gmra.mxu0 %v885
        %v959 = vpop.f32.mrf.mxu0
        %v960 = vadd.f32 %v919, %v959
        %961 = vmatmul.f32.gmra.mxu0 %v887
        %v962 = vpop.f32.mrf.mxu0
        %v963 = vadd.f32 %v922, %v962
        %964 = vmatmul.f32.gmra.mxu0 %v889
        %v965 = vpop.f32.mrf.mxu0
        %v966 = vadd.f32 %v925, %v965
        %967 = vmatmul.f32.gmra.mxu0 %v891
        %v968 = vpop.f32.mrf.mxu0
        %v969 = vadd.f32 %v928, %v968
        %970 = vmatmul.f32.gmra.mxu0 %v893
        %v971 = vpop.f32.mrf.mxu0
        %v972 = vadd.f32 %v931, %v971
        %973 = vmatmul.f32.gmra.mxu0 %v895
        %v974 = vpop.f32.mrf.mxu0
        %v975 = vadd.f32 %v934, %v974
        %976 = vmatmul.f32.gmra.mxu0 %v897
        %v977 = vpop.f32.mrf.mxu0
        %v978 = vadd.f32 %v937, %v977
        %979 = vmatmul.f32.gmra.mxu0 %v899
        %v980 = vpop.f32.mrf.mxu0
        %v981 = vadd.f32 %v940, %v980
        %982 = vdwg.mxu0
        %s983 = scalar_lea.vmem [#allocation2], 128
        %v984 = vld [vmem:[%s983] sm:$0xff]
        %v985 = vld [vmem:[%s983 + $0x8] sm:$0xff]
        %v986 = vld [vmem:[%s983 + $0x10] sm:$0xff]
        %v987 = vld [vmem:[%s983 + $0x18] sm:$0xff]
        %v988 = vld [vmem:[%s983 + $0x20] sm:$0xff]
        %v989 = vld [vmem:[%s983 + $0x28] sm:$0xff]
        %v990 = vld [vmem:[%s983 + $0x30] sm:$0xff]
        %v991 = vld [vmem:[%s983 + $0x38] sm:$0xff]
        %v992 = vld [vmem:[%s983 + $0x40] sm:$0xff]
        %v993 = vld [vmem:[%s983 + $0x48] sm:$0xff]
        %v994 = vld [vmem:[%s983 + $0x50] sm:$0xff]
        %v995 = vld [vmem:[%s983 + $0x58] sm:$0xff]
        %v996 = vld [vmem:[%s983 + $0x60] sm:$0xff]
        %v997 = vld [vmem:[%s983 + $0x68] sm:$0xff]
        %v998 = vld [vmem:[%s983 + $0x70] sm:$0xff]
        %v999 = vld [vmem:[%s983 + $0x78] sm:$0xff]
        %s1000 = scalar_lea.vmem [#allocation4], 16
        %v1001 = vld [vmem:[%s1000] sm:$0xff]
        %1002 = vmatpush.msra.mxu0 %v867
        %1003 = vmatpush.msra.mxu0 %v866
        %1004 = vmatpush.msra.mxu0 %v865
        %1005 = vmatpush.msra.mxu0 %v864
        %1006 = vmatpush.msra.mxu0 %v863
        %1007 = vmatpush.msra.mxu0 %v862
        %1008 = vmatpush.msra.mxu0 %v861
        %1009 = vmatpush.msra.mxu0 %v860
        %1010 = vmatpush.msra.mxu0 %v859
        %1011 = vmatpush.msra.mxu0 %v858
        %1012 = vmatpush.msra.mxu0 %v857
        %1013 = vmatpush.msra.mxu0 %v856
        %1014 = vmatpush.msra.mxu0 %v855
        %1015 = vmatpush.msra.mxu0 %v854
        %1016 = vmatpush.msra.mxu0 %v853
        %1017 = vmatpush.msra.mxu0 %v852
        %1018 = vmatmul.f32.gmra.mxu0 %v984
        %v1019 = vpop.f32.mrf.mxu0
        %v1020 = vadd.f32 0.0, %v1019
        %1021 = vmatmul.f32.gmra.mxu0 %v986
        %v1022 = vpop.f32.mrf.mxu0
        %v1023 = vadd.f32 0.0, %v1022
        %1024 = vmatmul.f32.gmra.mxu0 %v988
        %v1025 = vpop.f32.mrf.mxu0
        %v1026 = vadd.f32 0.0, %v1025
        %1027 = vmatmul.f32.gmra.mxu0 %v990
        %v1028 = vpop.f32.mrf.mxu0
        %v1029 = vadd.f32 0.0, %v1028
        %1030 = vmatmul.f32.gmra.mxu0 %v992
        %v1031 = vpop.f32.mrf.mxu0
        %v1032 = vadd.f32 0.0, %v1031
        %1033 = vmatmul.f32.gmra.mxu0 %v994
        %v1034 = vpop.f32.mrf.mxu0
        %v1035 = vadd.f32 0.0, %v1034
        %1036 = vmatmul.f32.gmra.mxu0 %v996
        %v1037 = vpop.f32.mrf.mxu0
        %v1038 = vadd.f32 0.0, %v1037
        %1039 = vmatmul.f32.gmra.mxu0 %v998
        %v1040 = vpop.f32.mrf.mxu0
        %v1041 = vadd.f32 0.0, %v1040
        %1042 = vdwg.mxu0
        %1043 = vmatpush.msra.mxu0 %v883
        %1044 = vmatpush.msra.mxu0 %v882
        %1045 = vmatpush.msra.mxu0 %v881
        %1046 = vmatpush.msra.mxu0 %v880
        %1047 = vmatpush.msra.mxu0 %v879
        %1048 = vmatpush.msra.mxu0 %v878
        %1049 = vmatpush.msra.mxu0 %v877
        %1050 = vmatpush.msra.mxu0 %v876
        %1051 = vmatpush.msra.mxu0 %v875
        %1052 = vmatpush.msra.mxu0 %v874
        %1053 = vmatpush.msra.mxu0 %v873
        %1054 = vmatpush.msra.mxu0 %v872
        %1055 = vmatpush.msra.mxu0 %v871
        %1056 = vmatpush.msra.mxu0 %v870
        %1057 = vmatpush.msra.mxu0 %v869
        %1058 = vmatpush.msra.mxu0 %v868
        %1059 = vmatmul.f32.gmra.mxu0 %v985
        %v1060 = vpop.f32.mrf.mxu0
        %v1061 = vadd.f32 %v1020, %v1060
        %1062 = vmatmul.f32.gmra.mxu0 %v987
        %v1063 = vpop.f32.mrf.mxu0
        %v1064 = vadd.f32 %v1023, %v1063
        %1065 = vmatmul.f32.gmra.mxu0 %v989
        %v1066 = vpop.f32.mrf.mxu0
        %v1067 = vadd.f32 %v1026, %v1066
        %1068 = vmatmul.f32.gmra.mxu0 %v991
        %v1069 = vpop.f32.mrf.mxu0
        %v1070 = vadd.f32 %v1029, %v1069
        %1071 = vmatmul.f32.gmra.mxu0 %v993
        %v1072 = vpop.f32.mrf.mxu0
        %v1073 = vadd.f32 %v1032, %v1072
        %1074 = vmatmul.f32.gmra.mxu0 %v995
        %v1075 = vpop.f32.mrf.mxu0
        %v1076 = vadd.f32 %v1035, %v1075
        %1077 = vmatmul.f32.gmra.mxu0 %v997
        %v1078 = vpop.f32.mrf.mxu0
        %v1079 = vadd.f32 %v1038, %v1078
        %1080 = vmatmul.f32.gmra.mxu0 %v999
        %v1081 = vpop.f32.mrf.mxu0
        %v1082 = vadd.f32 %v1041, %v1081
        %1083 = vdwg.mxu0
        %v1085 = vsel %vm666, %v1061, 0
        %v1088 = vsel %vm666, %v1064, 0
        %v1091 = vsel %vm666, %v1067, 0
        %v1094 = vsel %vm666, %v1070, 0
        %v1097 = vsel %vm666, %v1073, 0
        %v1100 = vsel %vm666, %v1076, 0
        %v1103 = vsel %vm666, %v1079, 0
        %v1106 = vsel %vm666, %v1082, 0
        %1108 = vmatpush.msra.mxu0 0.0
        %1109 = vmatpush.msra.mxu0 0.0
        %1110 = vmatpush.msra.mxu0 0.0
        %1111 = vmatpush.msra.mxu0 0.0
        %1112 = vmatpush.msra.mxu0 0.0
        %1113 = vmatpush.msra.mxu0 0.0
        %1114 = vmatpush.msra.mxu0 0.0
        %1115 = vmatpush.msra.mxu0 0.0
        %1116 = vmatpush.msra.mxu0 0.0
        %1117 = vmatpush.msra.mxu0 0.0
        %1118 = vmatpush.msra.mxu0 0.0
        %1119 = vmatpush.msra.mxu0 0.0
        %1120 = vmatpush.msra.mxu0 0.0
        %1121 = vmatpush.msra.mxu0 0.0
        %1122 = vmatpush.msra.mxu0 0.0
        %1123 = vmatpush.msra.mxu0 %v1001
        %1124 = vmatmul.f32.gmra.mxu0 %v1085
        %v1125 = vpop.f32.mrf.mxu0
        %v1126 = vadd.f32 0.0, %v1125
        %1127 = vmatmul.f32.gmra.mxu0 %v1088
        %v1128 = vpop.f32.mrf.mxu0
        %v1129 = vadd.f32 0.0, %v1128
        %1130 = vmatmul.f32.gmra.mxu0 %v1091
        %v1131 = vpop.f32.mrf.mxu0
        %v1132 = vadd.f32 0.0, %v1131
        %1133 = vmatmul.f32.gmra.mxu0 %v1094
        %v1134 = vpop.f32.mrf.mxu0
        %v1135 = vadd.f32 0.0, %v1134
        %1136 = vmatmul.f32.gmra.mxu0 %v1097
        %v1137 = vpop.f32.mrf.mxu0
        %v1138 = vadd.f32 0.0, %v1137
        %1139 = vmatmul.f32.gmra.mxu0 %v1100
        %v1140 = vpop.f32.mrf.mxu0
        %v1141 = vadd.f32 0.0, %v1140
        %1142 = vmatmul.f32.gmra.mxu0 %v1103
        %v1143 = vpop.f32.mrf.mxu0
        %v1144 = vadd.f32 0.0, %v1143
        %1145 = vmatmul.f32.gmra.mxu0 %v1106
        %v1146 = vpop.f32.mrf.mxu0
        %v1147 = vadd.f32 0.0, %v1146
        %1148 = vdwg.mxu0
        %v1150 = vsel %vm666, %v960, 0
        %v1153 = vsel %vm666, %v963, 0
        %v1156 = vsel %vm666, %v966, 0
        %v1159 = vsel %vm666, %v969, 0
        %v1162 = vsel %vm666, %v972, 0
        %v1165 = vsel %vm666, %v975, 0
        %v1168 = vsel %vm666, %v978, 0
        %v1171 = vsel %vm666, %v981, 0
        %1173 = vmatpush.msra.mxu0 0.0
        %1174 = vmatpush.msra.mxu0 0.0
        %1175 = vmatpush.msra.mxu0 0.0
        %1176 = vmatpush.msra.mxu0 0.0
        %1177 = vmatpush.msra.mxu0 0.0
        %1178 = vmatpush.msra.mxu0 0.0
        %1179 = vmatpush.msra.mxu0 0.0
        %1180 = vmatpush.msra.mxu0 0.0
        %1181 = vmatpush.msra.mxu0 0.0
        %1182 = vmatpush.msra.mxu0 0.0
        %1183 = vmatpush.msra.mxu0 0.0
        %1184 = vmatpush.msra.mxu0 0.0
        %1185 = vmatpush.msra.mxu0 0.0
        %1186 = vmatpush.msra.mxu0 0.0
        %1187 = vmatpush.msra.mxu0 0.0
        %1188 = vmatpush.msra.mxu0 %v900
        %1189 = vmatmul.f32.gmra.mxu0 %v1150
        %v1190 = vpop.f32.mrf.mxu0
        %v1191 = vadd.f32 %v1126, %v1190
        %1192 = vmatmul.f32.gmra.mxu0 %v1153
        %v1193 = vpop.f32.mrf.mxu0
        %v1194 = vadd.f32 %v1129, %v1193
        %1195 = vmatmul.f32.gmra.mxu0 %v1156
        %v1196 = vpop.f32.mrf.mxu0
        %v1197 = vadd.f32 %v1132, %v1196
        %1198 = vmatmul.f32.gmra.mxu0 %v1159
        %v1199 = vpop.f32.mrf.mxu0
        %v1200 = vadd.f32 %v1135, %v1199
        %1201 = vmatmul.f32.gmra.mxu0 %v1162
        %v1202 = vpop.f32.mrf.mxu0
        %v1203 = vadd.f32 %v1138, %v1202
        %1204 = vmatmul.f32.gmra.mxu0 %v1165
        %v1205 = vpop.f32.mrf.mxu0
        %v1206 = vadd.f32 %v1141, %v1205
        %1207 = vmatmul.f32.gmra.mxu0 %v1168
        %v1208 = vpop.f32.mrf.mxu0
        %v1209 = vadd.f32 %v1144, %v1208
        %1210 = vmatmul.f32.gmra.mxu0 %v1171
        %v1211 = vpop.f32.mrf.mxu0
        %v1212 = vadd.f32 %v1147, %v1211
        %1213 = vdwg.mxu0
        %s1214 = scalar_lea.vmem [#allocation2], 256
        %v1215 = vld [vmem:[%s1214] sm:$0xff]
        %v1216 = vld [vmem:[%s1214 + $0x8] sm:$0xff]
        %v1217 = vld [vmem:[%s1214 + $0x10] sm:$0xff]
        %v1218 = vld [vmem:[%s1214 + $0x18] sm:$0xff]
        %v1219 = vld [vmem:[%s1214 + $0x20] sm:$0xff]
        %v1220 = vld [vmem:[%s1214 + $0x28] sm:$0xff]
        %v1221 = vld [vmem:[%s1214 + $0x30] sm:$0xff]
        %v1222 = vld [vmem:[%s1214 + $0x38] sm:$0xff]
        %v1223 = vld [vmem:[%s1214 + $0x40] sm:$0xff]
        %v1224 = vld [vmem:[%s1214 + $0x48] sm:$0xff]
        %v1225 = vld [vmem:[%s1214 + $0x50] sm:$0xff]
        %v1226 = vld [vmem:[%s1214 + $0x58] sm:$0xff]
        %v1227 = vld [vmem:[%s1214 + $0x60] sm:$0xff]
        %v1228 = vld [vmem:[%s1214 + $0x68] sm:$0xff]
        %v1229 = vld [vmem:[%s1214 + $0x70] sm:$0xff]
        %v1230 = vld [vmem:[%s1214 + $0x78] sm:$0xff]
        %s1231 = scalar_lea.vmem [#allocation4], 32
        %v1232 = vld [vmem:[%s1231] sm:$0xff]
        %1233 = vmatpush.msra.mxu0 %v867
        %1234 = vmatpush.msra.mxu0 %v866
        %1235 = vmatpush.msra.mxu0 %v865
        %1236 = vmatpush.msra.mxu0 %v864
        %1237 = vmatpush.msra.mxu0 %v863
        %1238 = vmatpush.msra.mxu0 %v862
        %1239 = vmatpush.msra.mxu0 %v861
        %1240 = vmatpush.msra.mxu0 %v860
        %1241 = vmatpush.msra.mxu0 %v859
        %1242 = vmatpush.msra.mxu0 %v858
        %1243 = vmatpush.msra.mxu0 %v857
        %1244 = vmatpush.msra.mxu0 %v856
        %1245 = vmatpush.msra.mxu0 %v855
        %1246 = vmatpush.msra.mxu0 %v854
        %1247 = vmatpush.msra.mxu0 %v853
        %1248 = vmatpush.msra.mxu0 %v852
        %1249 = vmatmul.f32.gmra.mxu0 %v1215
        %v1250 = vpop.f32.mrf.mxu0
        %v1251 = vadd.f32 0.0, %v1250
        %1252 = vmatmul.f32.gmra.mxu0 %v1217
        %v1253 = vpop.f32.mrf.mxu0
        %v1254 = vadd.f32 0.0, %v1253
        %1255 = vmatmul.f32.gmra.mxu0 %v1219
        %v1256 = vpop.f32.mrf.mxu0
        %v1257 = vadd.f32 0.0, %v1256
        %1258 = vmatmul.f32.gmra.mxu0 %v1221
        %v1259 = vpop.f32.mrf.mxu0
        %v1260 = vadd.f32 0.0, %v1259
        %1261 = vmatmul.f32.gmra.mxu0 %v1223
        %v1262 = vpop.f32.mrf.mxu0
        %v1263 = vadd.f32 0.0, %v1262
        %1264 = vmatmul.f32.gmra.mxu0 %v1225
        %v1265 = vpop.f32.mrf.mxu0
        %v1266 = vadd.f32 0.0, %v1265
        %1267 = vmatmul.f32.gmra.mxu0 %v1227
        %v1268 = vpop.f32.mrf.mxu0
        %v1269 = vadd.f32 0.0, %v1268
        %1270 = vmatmul.f32.gmra.mxu0 %v1229
        %v1271 = vpop.f32.mrf.mxu0
        %v1272 = vadd.f32 0.0, %v1271
        %1273 = vdwg.mxu0
        %1274 = vmatpush.msra.mxu0 %v883
        %1275 = vmatpush.msra.mxu0 %v882
        %1276 = vmatpush.msra.mxu0 %v881
        %1277 = vmatpush.msra.mxu0 %v880
        %1278 = vmatpush.msra.mxu0 %v879
        %1279 = vmatpush.msra.mxu0 %v878
        %1280 = vmatpush.msra.mxu0 %v877
        %1281 = vmatpush.msra.mxu0 %v876
        %1282 = vmatpush.msra.mxu0 %v875
        %1283 = vmatpush.msra.mxu0 %v874
        %1284 = vmatpush.msra.mxu0 %v873
        %1285 = vmatpush.msra.mxu0 %v872
        %1286 = vmatpush.msra.mxu0 %v871
        %1287 = vmatpush.msra.mxu0 %v870
        %1288 = vmatpush.msra.mxu0 %v869
        %1289 = vmatpush.msra.mxu0 %v868
        %1290 = vmatmul.f32.gmra.mxu0 %v1216
        %v1291 = vpop.f32.mrf.mxu0
        %v1292 = vadd.f32 %v1251, %v1291
        %1293 = vmatmul.f32.gmra.mxu0 %v1218
        %v1294 = vpop.f32.mrf.mxu0
        %v1295 = vadd.f32 %v1254, %v1294
        %1296 = vmatmul.f32.gmra.mxu0 %v1220
        %v1297 = vpop.f32.mrf.mxu0
        %v1298 = vadd.f32 %v1257, %v1297
        %1299 = vmatmul.f32.gmra.mxu0 %v1222
        %v1300 = vpop.f32.mrf.mxu0
        %v1301 = vadd.f32 %v1260, %v1300
        %1302 = vmatmul.f32.gmra.mxu0 %v1224
        %v1303 = vpop.f32.mrf.mxu0
        %v1304 = vadd.f32 %v1263, %v1303
        %1305 = vmatmul.f32.gmra.mxu0 %v1226
        %v1306 = vpop.f32.mrf.mxu0
        %v1307 = vadd.f32 %v1266, %v1306
        %1308 = vmatmul.f32.gmra.mxu0 %v1228
        %v1309 = vpop.f32.mrf.mxu0
        %v1310 = vadd.f32 %v1269, %v1309
        %1311 = vmatmul.f32.gmra.mxu0 %v1230
        %v1312 = vpop.f32.mrf.mxu0
        %v1313 = vadd.f32 %v1272, %v1312
        %1314 = vdwg.mxu0
        %v1316 = vsel %vm666, %v1292, 0
        %v1319 = vsel %vm666, %v1295, 0
        %v1322 = vsel %vm666, %v1298, 0
        %v1325 = vsel %vm666, %v1301, 0
        %v1328 = vsel %vm666, %v1304, 0
        %v1331 = vsel %vm666, %v1307, 0
        %v1334 = vsel %vm666, %v1310, 0
        %v1337 = vsel %vm666, %v1313, 0
        %1339 = vmatpush.msra.mxu0 0.0
        %1340 = vmatpush.msra.mxu0 0.0
        %1341 = vmatpush.msra.mxu0 0.0
        %1342 = vmatpush.msra.mxu0 0.0
        %1343 = vmatpush.msra.mxu0 0.0
        %1344 = vmatpush.msra.mxu0 0.0
        %1345 = vmatpush.msra.mxu0 0.0
        %1346 = vmatpush.msra.mxu0 0.0
        %1347 = vmatpush.msra.mxu0 0.0
        %1348 = vmatpush.msra.mxu0 0.0
        %1349 = vmatpush.msra.mxu0 0.0
        %1350 = vmatpush.msra.mxu0 0.0
        %1351 = vmatpush.msra.mxu0 0.0
        %1352 = vmatpush.msra.mxu0 0.0
        %1353 = vmatpush.msra.mxu0 0.0
        %1354 = vmatpush.msra.mxu0 %v1232
        %1355 = vmatmul.f32.gmra.mxu0 %v1316
        %v1356 = vpop.f32.mrf.mxu0
        %v1357 = vadd.f32 0.0, %v1356
        %1358 = vmatmul.f32.gmra.mxu0 %v1319
        %v1359 = vpop.f32.mrf.mxu0
        %v1360 = vadd.f32 0.0, %v1359
        %1361 = vmatmul.f32.gmra.mxu0 %v1322
        %v1362 = vpop.f32.mrf.mxu0
        %v1363 = vadd.f32 0.0, %v1362
        %1364 = vmatmul.f32.gmra.mxu0 %v1325
        %v1365 = vpop.f32.mrf.mxu0
        %v1366 = vadd.f32 0.0, %v1365
        %1367 = vmatmul.f32.gmra.mxu0 %v1328
        %v1368 = vpop.f32.mrf.mxu0
        %v1369 = vadd.f32 0.0, %v1368
        %1370 = vmatmul.f32.gmra.mxu0 %v1331
        %v1371 = vpop.f32.mrf.mxu0
        %v1372 = vadd.f32 0.0, %v1371
        %1373 = vmatmul.f32.gmra.mxu0 %v1334
        %v1374 = vpop.f32.mrf.mxu0
        %v1375 = vadd.f32 0.0, %v1374
        %1376 = vmatmul.f32.gmra.mxu0 %v1337
        %v1377 = vpop.f32.mrf.mxu0
        %v1378 = vadd.f32 0.0, %v1377
        %1379 = vdwg.mxu0
        %v1380 = vadd.f32 %v1191, %v1357
        %v1381 = vadd.f32 %v1194, %v1360
        %v1382 = vadd.f32 %v1197, %v1363
        %v1383 = vadd.f32 %v1200, %v1366
        %v1384 = vadd.f32 %v1203, %v1369
        %v1385 = vadd.f32 %v1206, %v1372
        %v1386 = vadd.f32 %v1209, %v1375
        %v1387 = vadd.f32 %v1212, %v1378
        %s1388 = scalar_lea.vmem [#allocation2], 384
        %v1389 = vld [vmem:[%s1388] sm:$0xff]
        %v1390 = vld [vmem:[%s1388 + $0x8] sm:$0xff]
        %v1391 = vld [vmem:[%s1388 + $0x10] sm:$0xff]
        %v1392 = vld [vmem:[%s1388 + $0x18] sm:$0xff]
        %v1393 = vld [vmem:[%s1388 + $0x20] sm:$0xff]
        %v1394 = vld [vmem:[%s1388 + $0x28] sm:$0xff]
        %v1395 = vld [vmem:[%s1388 + $0x30] sm:$0xff]
        %v1396 = vld [vmem:[%s1388 + $0x38] sm:$0xff]
        %v1397 = vld [vmem:[%s1388 + $0x40] sm:$0xff]
        %v1398 = vld [vmem:[%s1388 + $0x48] sm:$0xff]
        %v1399 = vld [vmem:[%s1388 + $0x50] sm:$0xff]
        %v1400 = vld [vmem:[%s1388 + $0x58] sm:$0xff]
        %v1401 = vld [vmem:[%s1388 + $0x60] sm:$0xff]
        %v1402 = vld [vmem:[%s1388 + $0x68] sm:$0xff]
        %v1403 = vld [vmem:[%s1388 + $0x70] sm:$0xff]
        %v1404 = vld [vmem:[%s1388 + $0x78] sm:$0xff]
        %s1405 = scalar_lea.vmem [#allocation4], 48
        %v1406 = vld [vmem:[%s1405] sm:$0xff]
        %1407 = vmatpush.msra.mxu0 %v867
        %1408 = vmatpush.msra.mxu0 %v866
        %1409 = vmatpush.msra.mxu0 %v865
        %1410 = vmatpush.msra.mxu0 %v864
        %1411 = vmatpush.msra.mxu0 %v863
        %1412 = vmatpush.msra.mxu0 %v862
        %1413 = vmatpush.msra.mxu0 %v861
        %1414 = vmatpush.msra.mxu0 %v860
        %1415 = vmatpush.msra.mxu0 %v859
        %1416 = vmatpush.msra.mxu0 %v858
        %1417 = vmatpush.msra.mxu0 %v857
        %1418 = vmatpush.msra.mxu0 %v856
        %1419 = vmatpush.msra.mxu0 %v855
        %1420 = vmatpush.msra.mxu0 %v854
        %1421 = vmatpush.msra.mxu0 %v853
        %1422 = vmatpush.msra.mxu0 %v852
        %1423 = vmatmul.f32.gmra.mxu0 %v1389
        %v1424 = vpop.f32.mrf.mxu0
        %v1425 = vadd.f32 0.0, %v1424
        %1426 = vmatmul.f32.gmra.mxu0 %v1391
        %v1427 = vpop.f32.mrf.mxu0
        %v1428 = vadd.f32 0.0, %v1427
        %1429 = vmatmul.f32.gmra.mxu0 %v1393
        %v1430 = vpop.f32.mrf.mxu0
        %v1431 = vadd.f32 0.0, %v1430
        %1432 = vmatmul.f32.gmra.mxu0 %v1395
        %v1433 = vpop.f32.mrf.mxu0
        %v1434 = vadd.f32 0.0, %v1433
        %1435 = vmatmul.f32.gmra.mxu0 %v1397
        %v1436 = vpop.f32.mrf.mxu0
        %v1437 = vadd.f32 0.0, %v1436
        %1438 = vmatmul.f32.gmra.mxu0 %v1399
        %v1439 = vpop.f32.mrf.mxu0
        %v1440 = vadd.f32 0.0, %v1439
        %1441 = vmatmul.f32.gmra.mxu0 %v1401
        %v1442 = vpop.f32.mrf.mxu0
        %v1443 = vadd.f32 0.0, %v1442
        %1444 = vmatmul.f32.gmra.mxu0 %v1403
        %v1445 = vpop.f32.mrf.mxu0
        %v1446 = vadd.f32 0.0, %v1445
        %1447 = vdwg.mxu0
        %1448 = vmatpush.msra.mxu0 %v883
        %1449 = vmatpush.msra.mxu0 %v882
        %1450 = vmatpush.msra.mxu0 %v881
        %1451 = vmatpush.msra.mxu0 %v880
        %1452 = vmatpush.msra.mxu0 %v879
        %1453 = vmatpush.msra.mxu0 %v878
        %1454 = vmatpush.msra.mxu0 %v877
        %1455 = vmatpush.msra.mxu0 %v876
        %1456 = vmatpush.msra.mxu0 %v875
        %1457 = vmatpush.msra.mxu0 %v874
        %1458 = vmatpush.msra.mxu0 %v873
        %1459 = vmatpush.msra.mxu0 %v872
        %1460 = vmatpush.msra.mxu0 %v871
        %1461 = vmatpush.msra.mxu0 %v870
        %1462 = vmatpush.msra.mxu0 %v869
        %1463 = vmatpush.msra.mxu0 %v868
        %1464 = vmatmul.f32.gmra.mxu0 %v1390
        %v1465 = vpop.f32.mrf.mxu0
        %v1466 = vadd.f32 %v1425, %v1465
        %1467 = vmatmul.f32.gmra.mxu0 %v1392
        %v1468 = vpop.f32.mrf.mxu0
        %v1469 = vadd.f32 %v1428, %v1468
        %1470 = vmatmul.f32.gmra.mxu0 %v1394
        %v1471 = vpop.f32.mrf.mxu0
        %v1472 = vadd.f32 %v1431, %v1471
        %1473 = vmatmul.f32.gmra.mxu0 %v1396
        %v1474 = vpop.f32.mrf.mxu0
        %v1475 = vadd.f32 %v1434, %v1474
        %1476 = vmatmul.f32.gmra.mxu0 %v1398
        %v1477 = vpop.f32.mrf.mxu0
        %v1478 = vadd.f32 %v1437, %v1477
        %1479 = vmatmul.f32.gmra.mxu0 %v1400
        %v1480 = vpop.f32.mrf.mxu0
        %v1481 = vadd.f32 %v1440, %v1480
        %1482 = vmatmul.f32.gmra.mxu0 %v1402
        %v1483 = vpop.f32.mrf.mxu0
        %v1484 = vadd.f32 %v1443, %v1483
        %1485 = vmatmul.f32.gmra.mxu0 %v1404
        %v1486 = vpop.f32.mrf.mxu0
        %v1487 = vadd.f32 %v1446, %v1486
        %1488 = vdwg.mxu0
        %v1490 = vsel %vm666, %v1466, 0
        %v1493 = vsel %vm666, %v1469, 0
        %v1496 = vsel %vm666, %v1472, 0
        %v1499 = vsel %vm666, %v1475, 0
        %v1502 = vsel %vm666, %v1478, 0
        %v1505 = vsel %vm666, %v1481, 0
        %v1508 = vsel %vm666, %v1484, 0
        %v1511 = vsel %vm666, %v1487, 0
        %1513 = vmatpush.msra.mxu0 0.0
        %1514 = vmatpush.msra.mxu0 0.0
        %1515 = vmatpush.msra.mxu0 0.0
        %1516 = vmatpush.msra.mxu0 0.0
        %1517 = vmatpush.msra.mxu0 0.0
        %1518 = vmatpush.msra.mxu0 0.0
        %1519 = vmatpush.msra.mxu0 0.0
        %1520 = vmatpush.msra.mxu0 0.0
        %1521 = vmatpush.msra.mxu0 0.0
        %1522 = vmatpush.msra.mxu0 0.0
        %1523 = vmatpush.msra.mxu0 0.0
        %1524 = vmatpush.msra.mxu0 0.0
        %1525 = vmatpush.msra.mxu0 0.0
        %1526 = vmatpush.msra.mxu0 0.0
        %1527 = vmatpush.msra.mxu0 0.0
        %1528 = vmatpush.msra.mxu0 %v1406
        %1529 = vmatmul.f32.gmra.mxu0 %v1490
        %v1530 = vpop.f32.mrf.mxu0
        %v1531 = vadd.f32 0.0, %v1530
        %1532 = vmatmul.f32.gmra.mxu0 %v1493
        %v1533 = vpop.f32.mrf.mxu0
        %v1534 = vadd.f32 0.0, %v1533
        %1535 = vmatmul.f32.gmra.mxu0 %v1496
        %v1536 = vpop.f32.mrf.mxu0
        %v1537 = vadd.f32 0.0, %v1536
        %1538 = vmatmul.f32.gmra.mxu0 %v1499
        %v1539 = vpop.f32.mrf.mxu0
        %v1540 = vadd.f32 0.0, %v1539
        %1541 = vmatmul.f32.gmra.mxu0 %v1502
        %v1542 = vpop.f32.mrf.mxu0
        %v1543 = vadd.f32 0.0, %v1542
        %1544 = vmatmul.f32.gmra.mxu0 %v1505
        %v1545 = vpop.f32.mrf.mxu0
        %v1546 = vadd.f32 0.0, %v1545
        %1547 = vmatmul.f32.gmra.mxu0 %v1508
        %v1548 = vpop.f32.mrf.mxu0
        %v1549 = vadd.f32 0.0, %v1548
        %1550 = vmatmul.f32.gmra.mxu0 %v1511
        %v1551 = vpop.f32.mrf.mxu0
        %v1552 = vadd.f32 0.0, %v1551
        %1553 = vdwg.mxu0
        %v1554 = vadd.f32 %v1380, %v1531
        %v1555 = vadd.f32 %v1381, %v1534
        %v1556 = vadd.f32 %v1382, %v1537
        %v1557 = vadd.f32 %v1383, %v1540
        %v1558 = vadd.f32 %v1384, %v1543
        %v1559 = vadd.f32 %v1385, %v1546
        %v1560 = vadd.f32 %v1386, %v1549
        %v1561 = vadd.f32 %v1387, %v1552
        %s1562 = scalar_lea.vmem [#allocation2], 512
        %v1563 = vld [vmem:[%s1562] sm:$0xff]
        %v1564 = vld [vmem:[%s1562 + $0x8] sm:$0xff]
        %v1565 = vld [vmem:[%s1562 + $0x10] sm:$0xff]
        %v1566 = vld [vmem:[%s1562 + $0x18] sm:$0xff]
        %v1567 = vld [vmem:[%s1562 + $0x20] sm:$0xff]
        %v1568 = vld [vmem:[%s1562 + $0x28] sm:$0xff]
        %v1569 = vld [vmem:[%s1562 + $0x30] sm:$0xff]
        %v1570 = vld [vmem:[%s1562 + $0x38] sm:$0xff]
        %v1571 = vld [vmem:[%s1562 + $0x40] sm:$0xff]
        %v1572 = vld [vmem:[%s1562 + $0x48] sm:$0xff]
        %v1573 = vld [vmem:[%s1562 + $0x50] sm:$0xff]
        %v1574 = vld [vmem:[%s1562 + $0x58] sm:$0xff]
        %v1575 = vld [vmem:[%s1562 + $0x60] sm:$0xff]
        %v1576 = vld [vmem:[%s1562 + $0x68] sm:$0xff]
        %v1577 = vld [vmem:[%s1562 + $0x70] sm:$0xff]
        %v1578 = vld [vmem:[%s1562 + $0x78] sm:$0xff]
        %s1579 = scalar_lea.vmem [#allocation4], 64
        %v1580 = vld [vmem:[%s1579] sm:$0xff]
        %1581 = vmatpush.msra.mxu0 %v867
        %1582 = vmatpush.msra.mxu0 %v866
        %1583 = vmatpush.msra.mxu0 %v865
        %1584 = vmatpush.msra.mxu0 %v864
        %1585 = vmatpush.msra.mxu0 %v863
        %1586 = vmatpush.msra.mxu0 %v862
        %1587 = vmatpush.msra.mxu0 %v861
        %1588 = vmatpush.msra.mxu0 %v860
        %1589 = vmatpush.msra.mxu0 %v859
        %1590 = vmatpush.msra.mxu0 %v858
        %1591 = vmatpush.msra.mxu0 %v857
        %1592 = vmatpush.msra.mxu0 %v856
        %1593 = vmatpush.msra.mxu0 %v855
        %1594 = vmatpush.msra.mxu0 %v854
        %1595 = vmatpush.msra.mxu0 %v853
        %1596 = vmatpush.msra.mxu0 %v852
        %1597 = vmatmul.f32.gmra.mxu0 %v1563
        %v1598 = vpop.f32.mrf.mxu0
        %v1599 = vadd.f32 0.0, %v1598
        %1600 = vmatmul.f32.gmra.mxu0 %v1565
        %v1601 = vpop.f32.mrf.mxu0
        %v1602 = vadd.f32 0.0, %v1601
        %1603 = vmatmul.f32.gmra.mxu0 %v1567
        %v1604 = vpop.f32.mrf.mxu0
        %v1605 = vadd.f32 0.0, %v1604
        %1606 = vmatmul.f32.gmra.mxu0 %v1569
        %v1607 = vpop.f32.mrf.mxu0
        %v1608 = vadd.f32 0.0, %v1607
        %1609 = vmatmul.f32.gmra.mxu0 %v1571
        %v1610 = vpop.f32.mrf.mxu0
        %v1611 = vadd.f32 0.0, %v1610
        %1612 = vmatmul.f32.gmra.mxu0 %v1573
        %v1613 = vpop.f32.mrf.mxu0
        %v1614 = vadd.f32 0.0, %v1613
        %1615 = vmatmul.f32.gmra.mxu0 %v1575
        %v1616 = vpop.f32.mrf.mxu0
        %v1617 = vadd.f32 0.0, %v1616
        %1618 = vmatmul.f32.gmra.mxu0 %v1577
        %v1619 = vpop.f32.mrf.mxu0
        %v1620 = vadd.f32 0.0, %v1619
        %1621 = vdwg.mxu0
        %1622 = vmatpush.msra.mxu0 %v883
        %1623 = vmatpush.msra.mxu0 %v882
        %1624 = vmatpush.msra.mxu0 %v881
        %1625 = vmatpush.msra.mxu0 %v880
        %1626 = vmatpush.msra.mxu0 %v879
        %1627 = vmatpush.msra.mxu0 %v878
        %1628 = vmatpush.msra.mxu0 %v877
        %1629 = vmatpush.msra.mxu0 %v876
        %1630 = vmatpush.msra.mxu0 %v875
        %1631 = vmatpush.msra.mxu0 %v874
        %1632 = vmatpush.msra.mxu0 %v873
        %1633 = vmatpush.msra.mxu0 %v872
        %1634 = vmatpush.msra.mxu0 %v871
        %1635 = vmatpush.msra.mxu0 %v870
        %1636 = vmatpush.msra.mxu0 %v869
        %1637 = vmatpush.msra.mxu0 %v868
        %1638 = vmatmul.f32.gmra.mxu0 %v1564
        %v1639 = vpop.f32.mrf.mxu0
        %v1640 = vadd.f32 %v1599, %v1639
        %1641 = vmatmul.f32.gmra.mxu0 %v1566
        %v1642 = vpop.f32.mrf.mxu0
        %v1643 = vadd.f32 %v1602, %v1642
        %1644 = vmatmul.f32.gmra.mxu0 %v1568
        %v1645 = vpop.f32.mrf.mxu0
        %v1646 = vadd.f32 %v1605, %v1645
        %1647 = vmatmul.f32.gmra.mxu0 %v1570
        %v1648 = vpop.f32.mrf.mxu0
        %v1649 = vadd.f32 %v1608, %v1648
        %1650 = vmatmul.f32.gmra.mxu0 %v1572
        %v1651 = vpop.f32.mrf.mxu0
        %v1652 = vadd.f32 %v1611, %v1651
        %1653 = vmatmul.f32.gmra.mxu0 %v1574
        %v1654 = vpop.f32.mrf.mxu0
        %v1655 = vadd.f32 %v1614, %v1654
        %1656 = vmatmul.f32.gmra.mxu0 %v1576
        %v1657 = vpop.f32.mrf.mxu0
        %v1658 = vadd.f32 %v1617, %v1657
        %1659 = vmatmul.f32.gmra.mxu0 %v1578
        %v1660 = vpop.f32.mrf.mxu0
        %v1661 = vadd.f32 %v1620, %v1660
        %1662 = vdwg.mxu0
        %v1664 = vsel %vm666, %v1640, 0
        %v1667 = vsel %vm666, %v1643, 0
        %v1670 = vsel %vm666, %v1646, 0
        %v1673 = vsel %vm666, %v1649, 0
        %v1676 = vsel %vm666, %v1652, 0
        %v1679 = vsel %vm666, %v1655, 0
        %v1682 = vsel %vm666, %v1658, 0
        %v1685 = vsel %vm666, %v1661, 0
        %1687 = vmatpush.msra.mxu0 0.0
        %1688 = vmatpush.msra.mxu0 0.0
        %1689 = vmatpush.msra.mxu0 0.0
        %1690 = vmatpush.msra.mxu0 0.0
        %1691 = vmatpush.msra.mxu0 0.0
        %1692 = vmatpush.msra.mxu0 0.0
        %1693 = vmatpush.msra.mxu0 0.0
        %1694 = vmatpush.msra.mxu0 0.0
        %1695 = vmatpush.msra.mxu0 0.0
        %1696 = vmatpush.msra.mxu0 0.0
        %1697 = vmatpush.msra.mxu0 0.0
        %1698 = vmatpush.msra.mxu0 0.0
        %1699 = vmatpush.msra.mxu0 0.0
        %1700 = vmatpush.msra.mxu0 0.0
        %1701 = vmatpush.msra.mxu0 0.0
        %1702 = vmatpush.msra.mxu0 %v1580
        %1703 = vmatmul.f32.gmra.mxu0 %v1664
        %v1704 = vpop.f32.mrf.mxu0
        %v1705 = vadd.f32 0.0, %v1704
        %1706 = vmatmul.f32.gmra.mxu0 %v1667
        %v1707 = vpop.f32.mrf.mxu0
        %v1708 = vadd.f32 0.0, %v1707
        %1709 = vmatmul.f32.gmra.mxu0 %v1670
        %v1710 = vpop.f32.mrf.mxu0
        %v1711 = vadd.f32 0.0, %v1710
        %1712 = vmatmul.f32.gmra.mxu0 %v1673
        %v1713 = vpop.f32.mrf.mxu0
        %v1714 = vadd.f32 0.0, %v1713
        %1715 = vmatmul.f32.gmra.mxu0 %v1676
        %v1716 = vpop.f32.mrf.mxu0
        %v1717 = vadd.f32 0.0, %v1716
        %1718 = vmatmul.f32.gmra.mxu0 %v1679
        %v1719 = vpop.f32.mrf.mxu0
        %v1720 = vadd.f32 0.0, %v1719
        %1721 = vmatmul.f32.gmra.mxu0 %v1682
        %v1722 = vpop.f32.mrf.mxu0
        %v1723 = vadd.f32 0.0, %v1722
        %1724 = vmatmul.f32.gmra.mxu0 %v1685
        %v1725 = vpop.f32.mrf.mxu0
        %v1726 = vadd.f32 0.0, %v1725
        %1727 = vdwg.mxu0
        %v1728 = vadd.f32 %v1554, %v1705
        %v1729 = vadd.f32 %v1555, %v1708
        %v1730 = vadd.f32 %v1556, %v1711
        %v1731 = vadd.f32 %v1557, %v1714
        %v1732 = vadd.f32 %v1558, %v1717
        %v1733 = vadd.f32 %v1559, %v1720
        %v1734 = vadd.f32 %v1560, %v1723
        %v1735 = vadd.f32 %v1561, %v1726
        %s1736 = scalar_lea.vmem [#allocation2], 640
        %v1737 = vld [vmem:[%s1736] sm:$0xff]
        %v1738 = vld [vmem:[%s1736 + $0x8] sm:$0xff]
        %v1739 = vld [vmem:[%s1736 + $0x10] sm:$0xff]
        %v1740 = vld [vmem:[%s1736 + $0x18] sm:$0xff]
        %v1741 = vld [vmem:[%s1736 + $0x20] sm:$0xff]
        %v1742 = vld [vmem:[%s1736 + $0x28] sm:$0xff]
        %v1743 = vld [vmem:[%s1736 + $0x30] sm:$0xff]
        %v1744 = vld [vmem:[%s1736 + $0x38] sm:$0xff]
        %v1745 = vld [vmem:[%s1736 + $0x40] sm:$0xff]
        %v1746 = vld [vmem:[%s1736 + $0x48] sm:$0xff]
        %v1747 = vld [vmem:[%s1736 + $0x50] sm:$0xff]
        %v1748 = vld [vmem:[%s1736 + $0x58] sm:$0xff]
        %v1749 = vld [vmem:[%s1736 + $0x60] sm:$0xff]
        %v1750 = vld [vmem:[%s1736 + $0x68] sm:$0xff]
        %v1751 = vld [vmem:[%s1736 + $0x70] sm:$0xff]
        %v1752 = vld [vmem:[%s1736 + $0x78] sm:$0xff]
        %s1753 = scalar_lea.vmem [#allocation4], 80
        %v1754 = vld [vmem:[%s1753] sm:$0xff]
        %1755 = vmatpush.msra.mxu0 %v867
        %1756 = vmatpush.msra.mxu0 %v866
        %1757 = vmatpush.msra.mxu0 %v865
        %1758 = vmatpush.msra.mxu0 %v864
        %1759 = vmatpush.msra.mxu0 %v863
        %1760 = vmatpush.msra.mxu0 %v862
        %1761 = vmatpush.msra.mxu0 %v861
        %1762 = vmatpush.msra.mxu0 %v860
        %1763 = vmatpush.msra.mxu0 %v859
        %1764 = vmatpush.msra.mxu0 %v858
        %1765 = vmatpush.msra.mxu0 %v857
        %1766 = vmatpush.msra.mxu0 %v856
        %1767 = vmatpush.msra.mxu0 %v855
        %1768 = vmatpush.msra.mxu0 %v854
        %1769 = vmatpush.msra.mxu0 %v853
        %1770 = vmatpush.msra.mxu0 %v852
        %1771 = vmatmul.f32.gmra.mxu0 %v1737
        %v1772 = vpop.f32.mrf.mxu0
        %v1773 = vadd.f32 0.0, %v1772
        %1774 = vmatmul.f32.gmra.mxu0 %v1739
        %v1775 = vpop.f32.mrf.mxu0
        %v1776 = vadd.f32 0.0, %v1775
        %1777 = vmatmul.f32.gmra.mxu0 %v1741
        %v1778 = vpop.f32.mrf.mxu0
        %v1779 = vadd.f32 0.0, %v1778
        %1780 = vmatmul.f32.gmra.mxu0 %v1743
        %v1781 = vpop.f32.mrf.mxu0
        %v1782 = vadd.f32 0.0, %v1781
        %1783 = vmatmul.f32.gmra.mxu0 %v1745
        %v1784 = vpop.f32.mrf.mxu0
        %v1785 = vadd.f32 0.0, %v1784
        %1786 = vmatmul.f32.gmra.mxu0 %v1747
        %v1787 = vpop.f32.mrf.mxu0
        %v1788 = vadd.f32 0.0, %v1787
        %1789 = vmatmul.f32.gmra.mxu0 %v1749
        %v1790 = vpop.f32.mrf.mxu0
        %v1791 = vadd.f32 0.0, %v1790
        %1792 = vmatmul.f32.gmra.mxu0 %v1751
        %v1793 = vpop.f32.mrf.mxu0
        %v1794 = vadd.f32 0.0, %v1793
        %1795 = vdwg.mxu0
        %1796 = vmatpush.msra.mxu0 %v883
        %1797 = vmatpush.msra.mxu0 %v882
        %1798 = vmatpush.msra.mxu0 %v881
        %1799 = vmatpush.msra.mxu0 %v880
        %1800 = vmatpush.msra.mxu0 %v879
        %1801 = vmatpush.msra.mxu0 %v878
        %1802 = vmatpush.msra.mxu0 %v877
        %1803 = vmatpush.msra.mxu0 %v876
        %1804 = vmatpush.msra.mxu0 %v875
        %1805 = vmatpush.msra.mxu0 %v874
        %1806 = vmatpush.msra.mxu0 %v873
        %1807 = vmatpush.msra.mxu0 %v872
        %1808 = vmatpush.msra.mxu0 %v871
        %1809 = vmatpush.msra.mxu0 %v870
        %1810 = vmatpush.msra.mxu0 %v869
        %1811 = vmatpush.msra.mxu0 %v868
        %1812 = vmatmul.f32.gmra.mxu0 %v1738
        %v1813 = vpop.f32.mrf.mxu0
        %v1814 = vadd.f32 %v1773, %v1813
        %1815 = vmatmul.f32.gmra.mxu0 %v1740
        %v1816 = vpop.f32.mrf.mxu0
        %v1817 = vadd.f32 %v1776, %v1816
        %1818 = vmatmul.f32.gmra.mxu0 %v1742
        %v1819 = vpop.f32.mrf.mxu0
        %v1820 = vadd.f32 %v1779, %v1819
        %1821 = vmatmul.f32.gmra.mxu0 %v1744
        %v1822 = vpop.f32.mrf.mxu0
        %v1823 = vadd.f32 %v1782, %v1822
        %1824 = vmatmul.f32.gmra.mxu0 %v1746
        %v1825 = vpop.f32.mrf.mxu0
        %v1826 = vadd.f32 %v1785, %v1825
        %1827 = vmatmul.f32.gmra.mxu0 %v1748
        %v1828 = vpop.f32.mrf.mxu0
        %v1829 = vadd.f32 %v1788, %v1828
        %1830 = vmatmul.f32.gmra.mxu0 %v1750
        %v1831 = vpop.f32.mrf.mxu0
        %v1832 = vadd.f32 %v1791, %v1831
        %1833 = vmatmul.f32.gmra.mxu0 %v1752
        %v1834 = vpop.f32.mrf.mxu0
        %v1835 = vadd.f32 %v1794, %v1834
        %1836 = vdwg.mxu0
        %v1838 = vsel %vm666, %v1814, 0
        %v1841 = vsel %vm666, %v1817, 0
        %v1844 = vsel %vm666, %v1820, 0
        %v1847 = vsel %vm666, %v1823, 0
        %v1850 = vsel %vm666, %v1826, 0
        %v1853 = vsel %vm666, %v1829, 0
        %v1856 = vsel %vm666, %v1832, 0
        %v1859 = vsel %vm666, %v1835, 0
        %1861 = vmatpush.msra.mxu0 0.0
        %1862 = vmatpush.msra.mxu0 0.0
        %1863 = vmatpush.msra.mxu0 0.0
        %1864 = vmatpush.msra.mxu0 0.0
        %1865 = vmatpush.msra.mxu0 0.0
        %1866 = vmatpush.msra.mxu0 0.0
        %1867 = vmatpush.msra.mxu0 0.0
        %1868 = vmatpush.msra.mxu0 0.0
        %1869 = vmatpush.msra.mxu0 0.0
        %1870 = vmatpush.msra.mxu0 0.0
        %1871 = vmatpush.msra.mxu0 0.0
        %1872 = vmatpush.msra.mxu0 0.0
        %1873 = vmatpush.msra.mxu0 0.0
        %1874 = vmatpush.msra.mxu0 0.0
        %1875 = vmatpush.msra.mxu0 0.0
        %1876 = vmatpush.msra.mxu0 %v1754
        %1877 = vmatmul.f32.gmra.mxu0 %v1838
        %v1878 = vpop.f32.mrf.mxu0
        %v1879 = vadd.f32 0.0, %v1878
        %1880 = vmatmul.f32.gmra.mxu0 %v1841
        %v1881 = vpop.f32.mrf.mxu0
        %v1882 = vadd.f32 0.0, %v1881
        %1883 = vmatmul.f32.gmra.mxu0 %v1844
        %v1884 = vpop.f32.mrf.mxu0
        %v1885 = vadd.f32 0.0, %v1884
        %1886 = vmatmul.f32.gmra.mxu0 %v1847
        %v1887 = vpop.f32.mrf.mxu0
        %v1888 = vadd.f32 0.0, %v1887
        %1889 = vmatmul.f32.gmra.mxu0 %v1850
        %v1890 = vpop.f32.mrf.mxu0
        %v1891 = vadd.f32 0.0, %v1890
        %1892 = vmatmul.f32.gmra.mxu0 %v1853
        %v1893 = vpop.f32.mrf.mxu0
        %v1894 = vadd.f32 0.0, %v1893
        %1895 = vmatmul.f32.gmra.mxu0 %v1856
        %v1896 = vpop.f32.mrf.mxu0
        %v1897 = vadd.f32 0.0, %v1896
        %1898 = vmatmul.f32.gmra.mxu0 %v1859
        %v1899 = vpop.f32.mrf.mxu0
        %v1900 = vadd.f32 0.0, %v1899
        %1901 = vdwg.mxu0
        %v1902 = vadd.f32 %v1728, %v1879
        %v1903 = vadd.f32 %v1729, %v1882
        %v1904 = vadd.f32 %v1730, %v1885
        %v1905 = vadd.f32 %v1731, %v1888
        %v1906 = vadd.f32 %v1732, %v1891
        %v1907 = vadd.f32 %v1733, %v1894
        %v1908 = vadd.f32 %v1734, %v1897
        %v1909 = vadd.f32 %v1735, %v1900
        %s1910 = scalar_lea.vmem [#allocation2], 768
        %v1911 = vld [vmem:[%s1910] sm:$0xff]
        %v1912 = vld [vmem:[%s1910 + $0x8] sm:$0xff]
        %v1913 = vld [vmem:[%s1910 + $0x10] sm:$0xff]
        %v1914 = vld [vmem:[%s1910 + $0x18] sm:$0xff]
        %v1915 = vld [vmem:[%s1910 + $0x20] sm:$0xff]
        %v1916 = vld [vmem:[%s1910 + $0x28] sm:$0xff]
        %v1917 = vld [vmem:[%s1910 + $0x30] sm:$0xff]
        %v1918 = vld [vmem:[%s1910 + $0x38] sm:$0xff]
        %v1919 = vld [vmem:[%s1910 + $0x40] sm:$0xff]
        %v1920 = vld [vmem:[%s1910 + $0x48] sm:$0xff]
        %v1921 = vld [vmem:[%s1910 + $0x50] sm:$0xff]
        %v1922 = vld [vmem:[%s1910 + $0x58] sm:$0xff]
        %v1923 = vld [vmem:[%s1910 + $0x60] sm:$0xff]
        %v1924 = vld [vmem:[%s1910 + $0x68] sm:$0xff]
        %v1925 = vld [vmem:[%s1910 + $0x70] sm:$0xff]
        %v1926 = vld [vmem:[%s1910 + $0x78] sm:$0xff]
        %s1927 = scalar_lea.vmem [#allocation4], 96
        %v1928 = vld [vmem:[%s1927] sm:$0xff]
        %1929 = vmatpush.msra.mxu0 %v867
        %1930 = vmatpush.msra.mxu0 %v866
        %1931 = vmatpush.msra.mxu0 %v865
        %1932 = vmatpush.msra.mxu0 %v864
        %1933 = vmatpush.msra.mxu0 %v863
        %1934 = vmatpush.msra.mxu0 %v862
        %1935 = vmatpush.msra.mxu0 %v861
        %1936 = vmatpush.msra.mxu0 %v860
        %1937 = vmatpush.msra.mxu0 %v859
        %1938 = vmatpush.msra.mxu0 %v858
        %1939 = vmatpush.msra.mxu0 %v857
        %1940 = vmatpush.msra.mxu0 %v856
        %1941 = vmatpush.msra.mxu0 %v855
        %1942 = vmatpush.msra.mxu0 %v854
        %1943 = vmatpush.msra.mxu0 %v853
        %1944 = vmatpush.msra.mxu0 %v852
        %1945 = vmatmul.f32.gmra.mxu0 %v1911
        %v1946 = vpop.f32.mrf.mxu0
        %v1947 = vadd.f32 0.0, %v1946
        %1948 = vmatmul.f32.gmra.mxu0 %v1913
        %v1949 = vpop.f32.mrf.mxu0
        %v1950 = vadd.f32 0.0, %v1949
        %1951 = vmatmul.f32.gmra.mxu0 %v1915
        %v1952 = vpop.f32.mrf.mxu0
        %v1953 = vadd.f32 0.0, %v1952
        %1954 = vmatmul.f32.gmra.mxu0 %v1917
        %v1955 = vpop.f32.mrf.mxu0
        %v1956 = vadd.f32 0.0, %v1955
        %1957 = vmatmul.f32.gmra.mxu0 %v1919
        %v1958 = vpop.f32.mrf.mxu0
        %v1959 = vadd.f32 0.0, %v1958
        %1960 = vmatmul.f32.gmra.mxu0 %v1921
        %v1961 = vpop.f32.mrf.mxu0
        %v1962 = vadd.f32 0.0, %v1961
        %1963 = vmatmul.f32.gmra.mxu0 %v1923
        %v1964 = vpop.f32.mrf.mxu0
        %v1965 = vadd.f32 0.0, %v1964
        %1966 = vmatmul.f32.gmra.mxu0 %v1925
        %v1967 = vpop.f32.mrf.mxu0
        %v1968 = vadd.f32 0.0, %v1967
        %1969 = vdwg.mxu0
        %1970 = vmatpush.msra.mxu0 %v883
        %1971 = vmatpush.msra.mxu0 %v882
        %1972 = vmatpush.msra.mxu0 %v881
        %1973 = vmatpush.msra.mxu0 %v880
        %1974 = vmatpush.msra.mxu0 %v879
        %1975 = vmatpush.msra.mxu0 %v878
        %1976 = vmatpush.msra.mxu0 %v877
        %1977 = vmatpush.msra.mxu0 %v876
        %1978 = vmatpush.msra.mxu0 %v875
        %1979 = vmatpush.msra.mxu0 %v874
        %1980 = vmatpush.msra.mxu0 %v873
        %1981 = vmatpush.msra.mxu0 %v872
        %1982 = vmatpush.msra.mxu0 %v871
        %1983 = vmatpush.msra.mxu0 %v870
        %1984 = vmatpush.msra.mxu0 %v869
        %1985 = vmatpush.msra.mxu0 %v868
        %1986 = vmatmul.f32.gmra.mxu0 %v1912
        %v1987 = vpop.f32.mrf.mxu0
        %v1988 = vadd.f32 %v1947, %v1987
        %1989 = vmatmul.f32.gmra.mxu0 %v1914
        %v1990 = vpop.f32.mrf.mxu0
        %v1991 = vadd.f32 %v1950, %v1990
        %1992 = vmatmul.f32.gmra.mxu0 %v1916
        %v1993 = vpop.f32.mrf.mxu0
        %v1994 = vadd.f32 %v1953, %v1993
        %1995 = vmatmul.f32.gmra.mxu0 %v1918
        %v1996 = vpop.f32.mrf.mxu0
        %v1997 = vadd.f32 %v1956, %v1996
        %1998 = vmatmul.f32.gmra.mxu0 %v1920
        %v1999 = vpop.f32.mrf.mxu0
        %v2000 = vadd.f32 %v1959, %v1999
        %2001 = vmatmul.f32.gmra.mxu0 %v1922
        %v2002 = vpop.f32.mrf.mxu0
        %v2003 = vadd.f32 %v1962, %v2002
        %2004 = vmatmul.f32.gmra.mxu0 %v1924
        %v2005 = vpop.f32.mrf.mxu0
        %v2006 = vadd.f32 %v1965, %v2005
        %2007 = vmatmul.f32.gmra.mxu0 %v1926
        %v2008 = vpop.f32.mrf.mxu0
        %v2009 = vadd.f32 %v1968, %v2008
        %2010 = vdwg.mxu0
        %v2012 = vsel %vm666, %v1988, 0
        %v2015 = vsel %vm666, %v1991, 0
        %v2018 = vsel %vm666, %v1994, 0
        %v2021 = vsel %vm666, %v1997, 0
        %v2024 = vsel %vm666, %v2000, 0
        %v2027 = vsel %vm666, %v2003, 0
        %v2030 = vsel %vm666, %v2006, 0
        %v2033 = vsel %vm666, %v2009, 0
        %2035 = vmatpush.msra.mxu0 0.0
        %2036 = vmatpush.msra.mxu0 0.0
        %2037 = vmatpush.msra.mxu0 0.0
        %2038 = vmatpush.msra.mxu0 0.0
        %2039 = vmatpush.msra.mxu0 0.0
        %2040 = vmatpush.msra.mxu0 0.0
        %2041 = vmatpush.msra.mxu0 0.0
        %2042 = vmatpush.msra.mxu0 0.0
        %2043 = vmatpush.msra.mxu0 0.0
        %2044 = vmatpush.msra.mxu0 0.0
        %2045 = vmatpush.msra.mxu0 0.0
        %2046 = vmatpush.msra.mxu0 0.0
        %2047 = vmatpush.msra.mxu0 0.0
        %2048 = vmatpush.msra.mxu0 0.0
        %2049 = vmatpush.msra.mxu0 0.0
        %2050 = vmatpush.msra.mxu0 %v1928
        %2051 = vmatmul.f32.gmra.mxu0 %v2012
        %v2052 = vpop.f32.mrf.mxu0
        %v2053 = vadd.f32 0.0, %v2052
        %2054 = vmatmul.f32.gmra.mxu0 %v2015
        %v2055 = vpop.f32.mrf.mxu0
        %v2056 = vadd.f32 0.0, %v2055
        %2057 = vmatmul.f32.gmra.mxu0 %v2018
        %v2058 = vpop.f32.mrf.mxu0
        %v2059 = vadd.f32 0.0, %v2058
        %2060 = vmatmul.f32.gmra.mxu0 %v2021
        %v2061 = vpop.f32.mrf.mxu0
        %v2062 = vadd.f32 0.0, %v2061
        %2063 = vmatmul.f32.gmra.mxu0 %v2024
        %v2064 = vpop.f32.mrf.mxu0
        %v2065 = vadd.f32 0.0, %v2064
        %2066 = vmatmul.f32.gmra.mxu0 %v2027
        %v2067 = vpop.f32.mrf.mxu0
        %v2068 = vadd.f32 0.0, %v2067
        %2069 = vmatmul.f32.gmra.mxu0 %v2030
        %v2070 = vpop.f32.mrf.mxu0
        %v2071 = vadd.f32 0.0, %v2070
        %2072 = vmatmul.f32.gmra.mxu0 %v2033
        %v2073 = vpop.f32.mrf.mxu0
        %v2074 = vadd.f32 0.0, %v2073
        %2075 = vdwg.mxu0
        %v2076 = vadd.f32 %v1902, %v2053
        %v2077 = vadd.f32 %v1903, %v2056
        %v2078 = vadd.f32 %v1904, %v2059
        %v2079 = vadd.f32 %v1905, %v2062
        %v2080 = vadd.f32 %v1906, %v2065
        %v2081 = vadd.f32 %v1907, %v2068
        %v2082 = vadd.f32 %v1908, %v2071
        %v2083 = vadd.f32 %v1909, %v2074
        %s2084 = scalar_lea.vmem [#allocation2], 896
        %v2085 = vld [vmem:[%s2084] sm:$0xff]
        %v2086 = vld [vmem:[%s2084 + $0x8] sm:$0xff]
        %v2087 = vld [vmem:[%s2084 + $0x10] sm:$0xff]
        %v2088 = vld [vmem:[%s2084 + $0x18] sm:$0xff]
        %v2089 = vld [vmem:[%s2084 + $0x20] sm:$0xff]
        %v2090 = vld [vmem:[%s2084 + $0x28] sm:$0xff]
        %v2091 = vld [vmem:[%s2084 + $0x30] sm:$0xff]
        %v2092 = vld [vmem:[%s2084 + $0x38] sm:$0xff]
        %v2093 = vld [vmem:[%s2084 + $0x40] sm:$0xff]
        %v2094 = vld [vmem:[%s2084 + $0x48] sm:$0xff]
        %v2095 = vld [vmem:[%s2084 + $0x50] sm:$0xff]
        %v2096 = vld [vmem:[%s2084 + $0x58] sm:$0xff]
        %v2097 = vld [vmem:[%s2084 + $0x60] sm:$0xff]
        %v2098 = vld [vmem:[%s2084 + $0x68] sm:$0xff]
        %v2099 = vld [vmem:[%s2084 + $0x70] sm:$0xff]
        %v2100 = vld [vmem:[%s2084 + $0x78] sm:$0xff]
        %s2101 = scalar_lea.vmem [#allocation4], 112
        %v2102 = vld [vmem:[%s2101] sm:$0xff]
        %2103 = vmatpush.msra.mxu0 %v867
        %2104 = vmatpush.msra.mxu0 %v866
        %2105 = vmatpush.msra.mxu0 %v865
        %2106 = vmatpush.msra.mxu0 %v864
        %2107 = vmatpush.msra.mxu0 %v863
        %2108 = vmatpush.msra.mxu0 %v862
        %2109 = vmatpush.msra.mxu0 %v861
        %2110 = vmatpush.msra.mxu0 %v860
        %2111 = vmatpush.msra.mxu0 %v859
        %2112 = vmatpush.msra.mxu0 %v858
        %2113 = vmatpush.msra.mxu0 %v857
        %2114 = vmatpush.msra.mxu0 %v856
        %2115 = vmatpush.msra.mxu0 %v855
        %2116 = vmatpush.msra.mxu0 %v854
        %2117 = vmatpush.msra.mxu0 %v853
        %2118 = vmatpush.msra.mxu0 %v852
        %2119 = vmatmul.f32.gmra.mxu0 %v2085
        %v2120 = vpop.f32.mrf.mxu0
        %v2121 = vadd.f32 0.0, %v2120
        %2122 = vmatmul.f32.gmra.mxu0 %v2087
        %v2123 = vpop.f32.mrf.mxu0
        %v2124 = vadd.f32 0.0, %v2123
        %2125 = vmatmul.f32.gmra.mxu0 %v2089
        %v2126 = vpop.f32.mrf.mxu0
        %v2127 = vadd.f32 0.0, %v2126
        %2128 = vmatmul.f32.gmra.mxu0 %v2091
        %v2129 = vpop.f32.mrf.mxu0
        %v2130 = vadd.f32 0.0, %v2129
        %2131 = vmatmul.f32.gmra.mxu0 %v2093
        %v2132 = vpop.f32.mrf.mxu0
        %v2133 = vadd.f32 0.0, %v2132
        %2134 = vmatmul.f32.gmra.mxu0 %v2095
        %v2135 = vpop.f32.mrf.mxu0
        %v2136 = vadd.f32 0.0, %v2135
        %2137 = vmatmul.f32.gmra.mxu0 %v2097
        %v2138 = vpop.f32.mrf.mxu0
        %v2139 = vadd.f32 0.0, %v2138
        %2140 = vmatmul.f32.gmra.mxu0 %v2099
        %v2141 = vpop.f32.mrf.mxu0
        %v2142 = vadd.f32 0.0, %v2141
        %2143 = vdwg.mxu0
        %2144 = vmatpush.msra.mxu0 %v883
        %2145 = vmatpush.msra.mxu0 %v882
        %2146 = vmatpush.msra.mxu0 %v881
        %2147 = vmatpush.msra.mxu0 %v880
        %2148 = vmatpush.msra.mxu0 %v879
        %2149 = vmatpush.msra.mxu0 %v878
        %2150 = vmatpush.msra.mxu0 %v877
        %2151 = vmatpush.msra.mxu0 %v876
        %2152 = vmatpush.msra.mxu0 %v875
        %2153 = vmatpush.msra.mxu0 %v874
        %2154 = vmatpush.msra.mxu0 %v873
        %2155 = vmatpush.msra.mxu0 %v872
        %2156 = vmatpush.msra.mxu0 %v871
        %2157 = vmatpush.msra.mxu0 %v870
        %2158 = vmatpush.msra.mxu0 %v869
        %2159 = vmatpush.msra.mxu0 %v868
        %2160 = vmatmul.f32.gmra.mxu0 %v2086
        %v2161 = vpop.f32.mrf.mxu0
        %v2162 = vadd.f32 %v2121, %v2161
        %2163 = vmatmul.f32.gmra.mxu0 %v2088
        %v2164 = vpop.f32.mrf.mxu0
        %v2165 = vadd.f32 %v2124, %v2164
        %2166 = vmatmul.f32.gmra.mxu0 %v2090
        %v2167 = vpop.f32.mrf.mxu0
        %v2168 = vadd.f32 %v2127, %v2167
        %2169 = vmatmul.f32.gmra.mxu0 %v2092
        %v2170 = vpop.f32.mrf.mxu0
        %v2171 = vadd.f32 %v2130, %v2170
        %2172 = vmatmul.f32.gmra.mxu0 %v2094
        %v2173 = vpop.f32.mrf.mxu0
        %v2174 = vadd.f32 %v2133, %v2173
        %2175 = vmatmul.f32.gmra.mxu0 %v2096
        %v2176 = vpop.f32.mrf.mxu0
        %v2177 = vadd.f32 %v2136, %v2176
        %2178 = vmatmul.f32.gmra.mxu0 %v2098
        %v2179 = vpop.f32.mrf.mxu0
        %v2180 = vadd.f32 %v2139, %v2179
        %2181 = vmatmul.f32.gmra.mxu0 %v2100
        %v2182 = vpop.f32.mrf.mxu0
        %v2183 = vadd.f32 %v2142, %v2182
        %2184 = vdwg.mxu0
        %v2186 = vsel %vm666, %v2162, 0
        %v2189 = vsel %vm666, %v2165, 0
        %v2192 = vsel %vm666, %v2168, 0
        %v2195 = vsel %vm666, %v2171, 0
        %v2198 = vsel %vm666, %v2174, 0
        %v2201 = vsel %vm666, %v2177, 0
        %v2204 = vsel %vm666, %v2180, 0
        %v2207 = vsel %vm666, %v2183, 0
        %2209 = vmatpush.msra.mxu0 0.0
        %2210 = vmatpush.msra.mxu0 0.0
        %2211 = vmatpush.msra.mxu0 0.0
        %2212 = vmatpush.msra.mxu0 0.0
        %2213 = vmatpush.msra.mxu0 0.0
        %2214 = vmatpush.msra.mxu0 0.0
        %2215 = vmatpush.msra.mxu0 0.0
        %2216 = vmatpush.msra.mxu0 0.0
        %2217 = vmatpush.msra.mxu0 0.0
        %2218 = vmatpush.msra.mxu0 0.0
        %2219 = vmatpush.msra.mxu0 0.0
        %2220 = vmatpush.msra.mxu0 0.0
        %2221 = vmatpush.msra.mxu0 0.0
        %2222 = vmatpush.msra.mxu0 0.0
        %2223 = vmatpush.msra.mxu0 0.0
        %2224 = vmatpush.msra.mxu0 %v2102
        %2225 = vmatmul.f32.gmra.mxu0 %v2186
        %v2226 = vpop.f32.mrf.mxu0
        %v2227 = vadd.f32 0.0, %v2226
        %2228 = vmatmul.f32.gmra.mxu0 %v2189
        %v2229 = vpop.f32.mrf.mxu0
        %v2230 = vadd.f32 0.0, %v2229
        %2231 = vmatmul.f32.gmra.mxu0 %v2192
        %v2232 = vpop.f32.mrf.mxu0
        %v2233 = vadd.f32 0.0, %v2232
        %2234 = vmatmul.f32.gmra.mxu0 %v2195
        %v2235 = vpop.f32.mrf.mxu0
        %v2236 = vadd.f32 0.0, %v2235
        %2237 = vmatmul.f32.gmra.mxu0 %v2198
        %v2238 = vpop.f32.mrf.mxu0
        %v2239 = vadd.f32 0.0, %v2238
        %2240 = vmatmul.f32.gmra.mxu0 %v2201
        %v2241 = vpop.f32.mrf.mxu0
        %v2242 = vadd.f32 0.0, %v2241
        %2243 = vmatmul.f32.gmra.mxu0 %v2204
        %v2244 = vpop.f32.mrf.mxu0
        %v2245 = vadd.f32 0.0, %v2244
        %2246 = vmatmul.f32.gmra.mxu0 %v2207
        %v2247 = vpop.f32.mrf.mxu0
        %v2248 = vadd.f32 0.0, %v2247
        %2249 = vdwg.mxu0
        %v2250 = vadd.f32 %v2076, %v2227
        %v2251 = vadd.f32 %v2077, %v2230
        %v2252 = vadd.f32 %v2078, %v2233
        %v2253 = vadd.f32 %v2079, %v2236
        %v2254 = vadd.f32 %v2080, %v2239
        %v2255 = vadd.f32 %v2081, %v2242
        %v2256 = vadd.f32 %v2082, %v2245
        %v2257 = vadd.f32 %v2083, %v2248
        %s2258 = scalar_lea.vmem [#allocation2], 1024
        %v2259 = vld [vmem:[%s2258] sm:$0xff]
        %v2260 = vld [vmem:[%s2258 + $0x8] sm:$0xff]
        %v2261 = vld [vmem:[%s2258 + $0x10] sm:$0xff]
        %v2262 = vld [vmem:[%s2258 + $0x18] sm:$0xff]
        %v2263 = vld [vmem:[%s2258 + $0x20] sm:$0xff]
        %v2264 = vld [vmem:[%s2258 + $0x28] sm:$0xff]
        %v2265 = vld [vmem:[%s2258 + $0x30] sm:$0xff]
        %v2266 = vld [vmem:[%s2258 + $0x38] sm:$0xff]
        %v2267 = vld [vmem:[%s2258 + $0x40] sm:$0xff]
        %v2268 = vld [vmem:[%s2258 + $0x48] sm:$0xff]
        %v2269 = vld [vmem:[%s2258 + $0x50] sm:$0xff]
        %v2270 = vld [vmem:[%s2258 + $0x58] sm:$0xff]
        %v2271 = vld [vmem:[%s2258 + $0x60] sm:$0xff]
        %v2272 = vld [vmem:[%s2258 + $0x68] sm:$0xff]
        %v2273 = vld [vmem:[%s2258 + $0x70] sm:$0xff]
        %v2274 = vld [vmem:[%s2258 + $0x78] sm:$0xff]
        %s2275 = scalar_lea.vmem [#allocation4], 128
        %v2276 = vld [vmem:[%s2275] sm:$0xff]
        %2277 = vmatpush.msra.mxu0 %v867
        %2278 = vmatpush.msra.mxu0 %v866
        %2279 = vmatpush.msra.mxu0 %v865
        %2280 = vmatpush.msra.mxu0 %v864
        %2281 = vmatpush.msra.mxu0 %v863
        %2282 = vmatpush.msra.mxu0 %v862
        %2283 = vmatpush.msra.mxu0 %v861
        %2284 = vmatpush.msra.mxu0 %v860
        %2285 = vmatpush.msra.mxu0 %v859
        %2286 = vmatpush.msra.mxu0 %v858
        %2287 = vmatpush.msra.mxu0 %v857
        %2288 = vmatpush.msra.mxu0 %v856
        %2289 = vmatpush.msra.mxu0 %v855
        %2290 = vmatpush.msra.mxu0 %v854
        %2291 = vmatpush.msra.mxu0 %v853
        %2292 = vmatpush.msra.mxu0 %v852
        %2293 = vmatmul.f32.gmra.mxu0 %v2259
        %v2294 = vpop.f32.mrf.mxu0
        %v2295 = vadd.f32 0.0, %v2294
        %2296 = vmatmul.f32.gmra.mxu0 %v2261
        %v2297 = vpop.f32.mrf.mxu0
        %v2298 = vadd.f32 0.0, %v2297
        %2299 = vmatmul.f32.gmra.mxu0 %v2263
        %v2300 = vpop.f32.mrf.mxu0
        %v2301 = vadd.f32 0.0, %v2300
        %2302 = vmatmul.f32.gmra.mxu0 %v2265
        %v2303 = vpop.f32.mrf.mxu0
        %v2304 = vadd.f32 0.0, %v2303
        %2305 = vmatmul.f32.gmra.mxu0 %v2267
        %v2306 = vpop.f32.mrf.mxu0
        %v2307 = vadd.f32 0.0, %v2306
        %2308 = vmatmul.f32.gmra.mxu0 %v2269
        %v2309 = vpop.f32.mrf.mxu0
        %v2310 = vadd.f32 0.0, %v2309
        %2311 = vmatmul.f32.gmra.mxu0 %v2271
        %v2312 = vpop.f32.mrf.mxu0
        %v2313 = vadd.f32 0.0, %v2312
        %2314 = vmatmul.f32.gmra.mxu0 %v2273
        %v2315 = vpop.f32.mrf.mxu0
        %v2316 = vadd.f32 0.0, %v2315
        %2317 = vdwg.mxu0
        %2318 = vmatpush.msra.mxu0 %v883
        %2319 = vmatpush.msra.mxu0 %v882
        %2320 = vmatpush.msra.mxu0 %v881
        %2321 = vmatpush.msra.mxu0 %v880
        %2322 = vmatpush.msra.mxu0 %v879
        %2323 = vmatpush.msra.mxu0 %v878
        %2324 = vmatpush.msra.mxu0 %v877
        %2325 = vmatpush.msra.mxu0 %v876
        %2326 = vmatpush.msra.mxu0 %v875
        %2327 = vmatpush.msra.mxu0 %v874
        %2328 = vmatpush.msra.mxu0 %v873
        %2329 = vmatpush.msra.mxu0 %v872
        %2330 = vmatpush.msra.mxu0 %v871
        %2331 = vmatpush.msra.mxu0 %v870
        %2332 = vmatpush.msra.mxu0 %v869
        %2333 = vmatpush.msra.mxu0 %v868
        %2334 = vmatmul.f32.gmra.mxu0 %v2260
        %v2335 = vpop.f32.mrf.mxu0
        %v2336 = vadd.f32 %v2295, %v2335
        %2337 = vmatmul.f32.gmra.mxu0 %v2262
        %v2338 = vpop.f32.mrf.mxu0
        %v2339 = vadd.f32 %v2298, %v2338
        %2340 = vmatmul.f32.gmra.mxu0 %v2264
        %v2341 = vpop.f32.mrf.mxu0
        %v2342 = vadd.f32 %v2301, %v2341
        %2343 = vmatmul.f32.gmra.mxu0 %v2266
        %v2344 = vpop.f32.mrf.mxu0
        %v2345 = vadd.f32 %v2304, %v2344
        %2346 = vmatmul.f32.gmra.mxu0 %v2268
        %v2347 = vpop.f32.mrf.mxu0
        %v2348 = vadd.f32 %v2307, %v2347
        %2349 = vmatmul.f32.gmra.mxu0 %v2270
        %v2350 = vpop.f32.mrf.mxu0
        %v2351 = vadd.f32 %v2310, %v2350
        %2352 = vmatmul.f32.gmra.mxu0 %v2272
        %v2353 = vpop.f32.mrf.mxu0
        %v2354 = vadd.f32 %v2313, %v2353
        %2355 = vmatmul.f32.gmra.mxu0 %v2274
        %v2356 = vpop.f32.mrf.mxu0
        %v2357 = vadd.f32 %v2316, %v2356
        %2358 = vdwg.mxu0
        %v2360 = vsel %vm666, %v2336, 0
        %v2363 = vsel %vm666, %v2339, 0
        %v2366 = vsel %vm666, %v2342, 0
        %v2369 = vsel %vm666, %v2345, 0
        %v2372 = vsel %vm666, %v2348, 0
        %v2375 = vsel %vm666, %v2351, 0
        %v2378 = vsel %vm666, %v2354, 0
        %v2381 = vsel %vm666, %v2357, 0
        %2383 = vmatpush.msra.mxu0 0.0
        %2384 = vmatpush.msra.mxu0 0.0
        %2385 = vmatpush.msra.mxu0 0.0
        %2386 = vmatpush.msra.mxu0 0.0
        %2387 = vmatpush.msra.mxu0 0.0
        %2388 = vmatpush.msra.mxu0 0.0
        %2389 = vmatpush.msra.mxu0 0.0
        %2390 = vmatpush.msra.mxu0 0.0
        %2391 = vmatpush.msra.mxu0 0.0
        %2392 = vmatpush.msra.mxu0 0.0
        %2393 = vmatpush.msra.mxu0 0.0
        %2394 = vmatpush.msra.mxu0 0.0
        %2395 = vmatpush.msra.mxu0 0.0
        %2396 = vmatpush.msra.mxu0 0.0
        %2397 = vmatpush.msra.mxu0 0.0
        %2398 = vmatpush.msra.mxu0 %v2276
        %2399 = vmatmul.f32.gmra.mxu0 %v2360
        %v2400 = vpop.f32.mrf.mxu0
        %v2401 = vadd.f32 0.0, %v2400
        %2402 = vmatmul.f32.gmra.mxu0 %v2363
        %v2403 = vpop.f32.mrf.mxu0
        %v2404 = vadd.f32 0.0, %v2403
        %2405 = vmatmul.f32.gmra.mxu0 %v2366
        %v2406 = vpop.f32.mrf.mxu0
        %v2407 = vadd.f32 0.0, %v2406
        %2408 = vmatmul.f32.gmra.mxu0 %v2369
        %v2409 = vpop.f32.mrf.mxu0
        %v2410 = vadd.f32 0.0, %v2409
        %2411 = vmatmul.f32.gmra.mxu0 %v2372
        %v2412 = vpop.f32.mrf.mxu0
        %v2413 = vadd.f32 0.0, %v2412
        %2414 = vmatmul.f32.gmra.mxu0 %v2375
        %v2415 = vpop.f32.mrf.mxu0
        %v2416 = vadd.f32 0.0, %v2415
        %2417 = vmatmul.f32.gmra.mxu0 %v2378
        %v2418 = vpop.f32.mrf.mxu0
        %v2419 = vadd.f32 0.0, %v2418
        %2420 = vmatmul.f32.gmra.mxu0 %v2381
        %v2421 = vpop.f32.mrf.mxu0
        %v2422 = vadd.f32 0.0, %v2421
        %2423 = vdwg.mxu0
        %v2424 = vadd.f32 %v2250, %v2401
        %v2425 = vadd.f32 %v2251, %v2404
        %v2426 = vadd.f32 %v2252, %v2407
        %v2427 = vadd.f32 %v2253, %v2410
        %v2428 = vadd.f32 %v2254, %v2413
        %v2429 = vadd.f32 %v2255, %v2416
        %v2430 = vadd.f32 %v2256, %v2419
        %v2431 = vadd.f32 %v2257, %v2422
        %s2432 = scalar_lea.vmem %s6, 4
        %v2433 = vld [vmem:[%s2432] sm:$0x1]
        %v2434 = vperm.slane %v2433, 0
        %v2435 = vadd.f32 %v2424, %v2434
        %v2436 = vadd.f32 %v2425, %v2434
        %v2437 = vadd.f32 %v2426, %v2434
        %v2438 = vadd.f32 %v2427, %v2434
        %v2439 = vadd.f32 %v2428, %v2434
        %v2440 = vadd.f32 %v2429, %v2434
        %v2441 = vadd.f32 %v2430, %v2434
        %v2442 = vadd.f32 %v2431, %v2434
        %v2443 = vsel %vm666, %v2435, 0.0
        %v2444 = vsel %vm666, %v2436, 0.0
        %v2445 = vadd.f32 %v2443, %v2444
        %v2446 = vsel %vm666, %v2437, 0.0
        %v2447 = vadd.f32 %v2445, %v2446
        %v2448 = vsel %vm666, %v2438, 0.0
        %v2449 = vadd.f32 %v2447, %v2448
        %v2450 = vsel %vm666, %v2439, 0.0
        %v2451 = vadd.f32 %v2449, %v2450
        %v2452 = vsel %vm666, %v2440, 0.0
        %v2453 = vadd.f32 %v2451, %v2452
        %v2454 = vsel %vm666, %v2441, 0.0
        %v2455 = vadd.f32 %v2453, %v2454
        %v2456 = vsel %vm666, %v2442, 0.0
        %v2457 = vadd.f32 %v2455, %v2456
        %v2458 = vrot.slane %v2457, 4
        %v2459 = vadd.f32 %v2457, %v2458
        %v2460 = vrot.slane %v2459, 2
        %v2461 = vadd.f32 %v2459, %v2460
        %v2462 = vrot.slane %v2461, 1
        %v2463 = vadd.f32 %v2461, %v2462
        %v2464 = vrcp.pop 64.0
        %v2465 = vmul.f32 64.0, %v2464
        %v2466 = vsub.f32 1.0, %v2465
        %v2467 = vmul.f32 %v2464, %v2466
        %v2468 = vadd.f32 %v2464, %v2467
        %vm2469 = vweird.f32 %v2464
        %v2470 = vsel %vm2469, %v2464, %v2468
        %v2471 = vmul.f32 %v2463, %v2470
        %s2472 = scalar_lea.vmem %s4, 32
        %v2473 = vld [vmem:[%s2472] sm:$0xff]
        %v2474 = vld [vmem:[%s2432 + $0x1] sm:$0x1]
        %v2476 = vsel %vm666, %v2471, 0
        %2478 = vmatpush.msra.mxu0 0.0
        %2479 = vmatpush.msra.mxu0 0.0
        %2480 = vmatpush.msra.mxu0 0.0
        %2481 = vmatpush.msra.mxu0 0.0
        %2482 = vmatpush.msra.mxu0 0.0
        %2483 = vmatpush.msra.mxu0 0.0
        %2484 = vmatpush.msra.mxu0 0.0
        %2485 = vmatpush.msra.mxu0 0.0
        %2486 = vmatpush.msra.mxu0 0.0
        %2487 = vmatpush.msra.mxu0 0.0
        %2488 = vmatpush.msra.mxu0 0.0
        %2489 = vmatpush.msra.mxu0 0.0
        %2490 = vmatpush.msra.mxu0 0.0
        %2491 = vmatpush.msra.mxu0 0.0
        %2492 = vmatpush.msra.mxu0 0.0
        %2493 = vmatpush.msra.mxu0 %v2473
        %2494 = vmatmul.f32.gmra.mxu0 %v2476
        %v2495 = vpop.f32.mrf.mxu0
        %v2496 = vadd.f32 %v2474, %v2495
        %2497 = vdwg.mxu0
        %v2498 = vmax.f32 %v2496, 0.0
        %s2499 = scalar_lea.vmem [#allocation6], 8
        %v2500 = vld [vmem:[%s2499] sm:$0x3]
        %v2501 = vld [vmem:[%s2432 + $0x2] sm:$0x1]
        %v2503 = vsel %vm772, %v2498, 0
        %v2506 = vsel %vm776, %v2500, 0
        %2508 = vmatpush.msra.mxu0 0.0
        %2509 = vmatpush.msra.mxu0 0.0
        %2510 = vmatpush.msra.mxu0 0.0
        %2511 = vmatpush.msra.mxu0 0.0
        %2512 = vmatpush.msra.mxu0 0.0
        %2513 = vmatpush.msra.mxu0 0.0
        %2514 = vmatpush.msra.mxu0 0.0
        %2515 = vmatpush.msra.mxu0 0.0
        %2516 = vmatpush.msra.mxu0 0.0
        %2517 = vmatpush.msra.mxu0 0.0
        %2518 = vmatpush.msra.mxu0 0.0
        %2519 = vmatpush.msra.mxu0 0.0
        %2520 = vmatpush.msra.mxu0 0.0
        %2521 = vmatpush.msra.mxu0 0.0
        %2522 = vmatpush.msra.mxu0 0.0
        %2523 = vmatpush.msra.mxu0 %v2506
        %2524 = vmatmul.f32.gmra.mxu0 %v2503
        %v2525 = vpop.f32.mrf.mxu0
        %v2526 = vadd.f32 %v2501, %v2525
        %2527 = vdwg.mxu0
        %v2528 = vxor.u32 %v2526, 2147483648
        %v2529 = vmul.f32 %v2528, 1.442695
        %v2530 = vpow.pop %v2529
        %v2531 = vadd.f32 %v2530, 1.0
        %v2532 = vrcp.pop %v2531
        %v2533 = vmul.f32 %v2531, %v2532
        %v2534 = vsub.f32 1.0, %v2533
        %v2535 = vmul.f32 %v2532, %v2534
        %v2536 = vadd.f32 %v2532, %v2535
        %vm2537 = vweird.f32 %v2531
        %vm2538 = vweird.f32 %v2532
        %vm2539 = vmor %vm2537, %vm2538
        %v2540 = vsel %vm2539, %v2532, %v2536
        %v2541 = vand.u32 2147483647, %v2531
        %vm2542 = vcmp.eq.f32.partialorder %v2541, 8.507059e+37
        %v2543 = vand.u32 %v2531, 2147483648
        %v2544 = vor.u32 1.1754944e-38, %v2543
        %v2545 = vsel %vm2542, %v2544, %v2540
        %v2546 = vmul.f32 1.0, %v2545
        %v2547 = vperm.slane %v2546, 0
        %v2548 = vmul.f32 %v2435, %v2547
        %v2549 = vmul.f32 %v2436, %v2547
        %v2550 = vmul.f32 %v2437, %v2547
        %v2551 = vmul.f32 %v2438, %v2547
        %v2552 = vmul.f32 %v2439, %v2547
        %v2553 = vmul.f32 %v2440, %v2547
        %v2554 = vmul.f32 %v2441, %v2547
        %v2555 = vmul.f32 %v2442, %v2547
        %v2556 = vmax.f32 %v2548, 0.0
        %v2557 = vmax.f32 %v2549, 0.0
        %v2558 = vmax.f32 %v2550, 0.0
        %v2559 = vmax.f32 %v2551, 0.0
        %v2560 = vmax.f32 %v2552, 0.0
        %v2561 = vmax.f32 %v2553, 0.0
        %v2562 = vmax.f32 %v2554, 0.0
        %v2563 = vmax.f32 %v2555, 0.0
        %s2564 = scalar_lea.vmem [#allocation2], 1152
        %v2565 = vld [vmem:[%s2564] sm:$0xff]
        %v2566 = vld [vmem:[%s2564 + $0x10] sm:$0xff]
        %s2567 = scalar_lea.vmem [#allocation4], 144
        %v2568 = vld [vmem:[%s2567] sm:$0xff]
        %vm2569 = vcmask 523264
        %v2571 = vsel %vm2569, %v2565, 0
        %v2574 = vsel %vm2569, %v2566, 0
        %2576 = vmatpush.msra.mxu0 0.0
        %2577 = vmatpush.msra.mxu0 0.0
        %2578 = vmatpush.msra.mxu0 0.0
        %2579 = vmatpush.msra.mxu0 0.0
        %2580 = vmatpush.msra.mxu0 0.0
        %2581 = vmatpush.msra.mxu0 0.0
        %2582 = vmatpush.msra.mxu0 0.0
        %2583 = vmatpush.msra.mxu0 0.0
        %2584 = vmatpush.msra.mxu0 %v2563
        %2585 = vmatpush.msra.mxu0 %v2562
        %2586 = vmatpush.msra.mxu0 %v2561
        %2587 = vmatpush.msra.mxu0 %v2560
        %2588 = vmatpush.msra.mxu0 %v2559
        %2589 = vmatpush.msra.mxu0 %v2558
        %2590 = vmatpush.msra.mxu0 %v2557
        %2591 = vmatpush.msra.mxu0 %v2556
        %2592 = vmatmul.f32.gmra.mxu0 %v2571
        %v2593 = vpop.f32.mrf.mxu0
        %v2594 = vadd.f32 0.0, %v2593
        %2595 = vmatmul.f32.gmra.mxu0 %v2574
        %v2596 = vpop.f32.mrf.mxu0
        %v2597 = vadd.f32 0.0, %v2596
        %2598 = vdwg.mxu0
        %s2599 = scalar_lea.vmem [#allocation2], 1280
        %v2600 = vld [vmem:[%s2599] sm:$0xff]
        %v2601 = vld [vmem:[%s2599 + $0x10] sm:$0xff]
        %s2602 = scalar_lea.vmem [#allocation4], 160
        %v2603 = vld [vmem:[%s2602] sm:$0xff]
        %v2605 = vsel %vm2569, %v2600, 0
        %v2608 = vsel %vm2569, %v2601, 0
        %2610 = vmatpush.msra.mxu0 0.0
        %2611 = vmatpush.msra.mxu0 0.0
        %2612 = vmatpush.msra.mxu0 0.0
        %2613 = vmatpush.msra.mxu0 0.0
        %2614 = vmatpush.msra.mxu0 0.0
        %2615 = vmatpush.msra.mxu0 0.0
        %2616 = vmatpush.msra.mxu0 0.0
        %2617 = vmatpush.msra.mxu0 0.0
        %2618 = vmatpush.msra.mxu0 %v2563
        %2619 = vmatpush.msra.mxu0 %v2562
        %2620 = vmatpush.msra.mxu0 %v2561
        %2621 = vmatpush.msra.mxu0 %v2560
        %2622 = vmatpush.msra.mxu0 %v2559
        %2623 = vmatpush.msra.mxu0 %v2558
        %2624 = vmatpush.msra.mxu0 %v2557
        %2625 = vmatpush.msra.mxu0 %v2556
        %2626 = vmatmul.f32.gmra.mxu0 %v2605
        %v2627 = vpop.f32.mrf.mxu0
        %v2628 = vadd.f32 0.0, %v2627
        %2629 = vmatmul.f32.gmra.mxu0 %v2608
        %v2630 = vpop.f32.mrf.mxu0
        %v2631 = vadd.f32 0.0, %v2630
        %2632 = vdwg.mxu0
        %v2634 = vsel %vm666, %v2628, 0
        %v2637 = vsel %vm666, %v2631, 0
        %2639 = vmatpush.msra.mxu0 0.0
        %2640 = vmatpush.msra.mxu0 0.0
        %2641 = vmatpush.msra.mxu0 0.0
        %2642 = vmatpush.msra.mxu0 0.0
        %2643 = vmatpush.msra.mxu0 0.0
        %2644 = vmatpush.msra.mxu0 0.0
        %2645 = vmatpush.msra.mxu0 0.0
        %2646 = vmatpush.msra.mxu0 0.0
        %2647 = vmatpush.msra.mxu0 0.0
        %2648 = vmatpush.msra.mxu0 0.0
        %2649 = vmatpush.msra.mxu0 0.0
        %2650 = vmatpush.msra.mxu0 0.0
        %2651 = vmatpush.msra.mxu0 0.0
        %2652 = vmatpush.msra.mxu0 0.0
        %2653 = vmatpush.msra.mxu0 0.0
        %2654 = vmatpush.msra.mxu0 %v2603
        %2655 = vmatmul.f32.gmra.mxu0 %v2634
        %v2656 = vpop.f32.mrf.mxu0
        %v2657 = vadd.f32 0.0, %v2656
        %2658 = vmatmul.f32.gmra.mxu0 %v2637
        %v2659 = vpop.f32.mrf.mxu0
        %v2660 = vadd.f32 0.0, %v2659
        %2661 = vdwg.mxu0
        %v2663 = vsel %vm666, %v2594, 0
        %v2666 = vsel %vm666, %v2597, 0
        %2668 = vmatpush.msra.mxu0 0.0
        %2669 = vmatpush.msra.mxu0 0.0
        %2670 = vmatpush.msra.mxu0 0.0
        %2671 = vmatpush.msra.mxu0 0.0
        %2672 = vmatpush.msra.mxu0 0.0
        %2673 = vmatpush.msra.mxu0 0.0
        %2674 = vmatpush.msra.mxu0 0.0
        %2675 = vmatpush.msra.mxu0 0.0
        %2676 = vmatpush.msra.mxu0 0.0
        %2677 = vmatpush.msra.mxu0 0.0
        %2678 = vmatpush.msra.mxu0 0.0
        %2679 = vmatpush.msra.mxu0 0.0
        %2680 = vmatpush.msra.mxu0 0.0
        %2681 = vmatpush.msra.mxu0 0.0
        %2682 = vmatpush.msra.mxu0 0.0
        %2683 = vmatpush.msra.mxu0 %v2568
        %2684 = vmatmul.f32.gmra.mxu0 %v2663
        %v2685 = vpop.f32.mrf.mxu0
        %v2686 = vadd.f32 %v2657, %v2685
        %2687 = vmatmul.f32.gmra.mxu0 %v2666
        %v2688 = vpop.f32.mrf.mxu0
        %v2689 = vadd.f32 %v2660, %v2688
        %2690 = vdwg.mxu0
        %s2691 = scalar_lea.vmem [#allocation2], 1408
        %v2692 = vld [vmem:[%s2691] sm:$0xff]
        %v2693 = vld [vmem:[%s2691 + $0x10] sm:$0xff]
        %s2694 = scalar_lea.vmem [#allocation4], 176
        %v2695 = vld [vmem:[%s2694] sm:$0xff]
        %v2697 = vsel %vm2569, %v2692, 0
        %v2700 = vsel %vm2569, %v2693, 0
        %2702 = vmatpush.msra.mxu0 0.0
        %2703 = vmatpush.msra.mxu0 0.0
        %2704 = vmatpush.msra.mxu0 0.0
        %2705 = vmatpush.msra.mxu0 0.0
        %2706 = vmatpush.msra.mxu0 0.0
        %2707 = vmatpush.msra.mxu0 0.0
        %2708 = vmatpush.msra.mxu0 0.0
        %2709 = vmatpush.msra.mxu0 0.0
        %2710 = vmatpush.msra.mxu0 %v2563
        %2711 = vmatpush.msra.mxu0 %v2562
        %2712 = vmatpush.msra.mxu0 %v2561
        %2713 = vmatpush.msra.mxu0 %v2560
        %2714 = vmatpush.msra.mxu0 %v2559
        %2715 = vmatpush.msra.mxu0 %v2558
        %2716 = vmatpush.msra.mxu0 %v2557
        %2717 = vmatpush.msra.mxu0 %v2556
        %2718 = vmatmul.f32.gmra.mxu0 %v2697
        %v2719 = vpop.f32.mrf.mxu0
        %v2720 = vadd.f32 0.0, %v2719
        %2721 = vmatmul.f32.gmra.mxu0 %v2700
        %v2722 = vpop.f32.mrf.mxu0
        %v2723 = vadd.f32 0.0, %v2722
        %2724 = vdwg.mxu0
        %v2726 = vsel %vm666, %v2720, 0
        %v2729 = vsel %vm666, %v2723, 0
        %2731 = vmatpush.msra.mxu0 0.0
        %2732 = vmatpush.msra.mxu0 0.0
        %2733 = vmatpush.msra.mxu0 0.0
        %2734 = vmatpush.msra.mxu0 0.0
        %2735 = vmatpush.msra.mxu0 0.0
        %2736 = vmatpush.msra.mxu0 0.0
        %2737 = vmatpush.msra.mxu0 0.0
        %2738 = vmatpush.msra.mxu0 0.0
        %2739 = vmatpush.msra.mxu0 0.0
        %2740 = vmatpush.msra.mxu0 0.0
        %2741 = vmatpush.msra.mxu0 0.0
        %2742 = vmatpush.msra.mxu0 0.0
        %2743 = vmatpush.msra.mxu0 0.0
        %2744 = vmatpush.msra.mxu0 0.0
        %2745 = vmatpush.msra.mxu0 0.0
        %2746 = vmatpush.msra.mxu0 %v2695
        %2747 = vmatmul.f32.gmra.mxu0 %v2726
        %v2748 = vpop.f32.mrf.mxu0
        %v2749 = vadd.f32 0.0, %v2748
        %2750 = vmatmul.f32.gmra.mxu0 %v2729
        %v2751 = vpop.f32.mrf.mxu0
        %v2752 = vadd.f32 0.0, %v2751
        %2753 = vdwg.mxu0
        %v2754 = vadd.f32 %v2686, %v2749
        %v2755 = vadd.f32 %v2689, %v2752
        %s2756 = scalar_lea.vmem [#allocation2], 1536
        %v2757 = vld [vmem:[%s2756] sm:$0xff]
        %v2758 = vld [vmem:[%s2756 + $0x10] sm:$0xff]
        %s2759 = scalar_lea.vmem [#allocation4], 192
        %v2760 = vld [vmem:[%s2759] sm:$0xff]
        %v2762 = vsel %vm2569, %v2757, 0
        %v2765 = vsel %vm2569, %v2758, 0
        %2767 = vmatpush.msra.mxu0 0.0
        %2768 = vmatpush.msra.mxu0 0.0
        %2769 = vmatpush.msra.mxu0 0.0
        %2770 = vmatpush.msra.mxu0 0.0
        %2771 = vmatpush.msra.mxu0 0.0
        %2772 = vmatpush.msra.mxu0 0.0
        %2773 = vmatpush.msra.mxu0 0.0
        %2774 = vmatpush.msra.mxu0 0.0
        %2775 = vmatpush.msra.mxu0 %v2563
        %2776 = vmatpush.msra.mxu0 %v2562
        %2777 = vmatpush.msra.mxu0 %v2561
        %2778 = vmatpush.msra.mxu0 %v2560
        %2779 = vmatpush.msra.mxu0 %v2559
        %2780 = vmatpush.msra.mxu0 %v2558
        %2781 = vmatpush.msra.mxu0 %v2557
        %2782 = vmatpush.msra.mxu0 %v2556
        %2783 = vmatmul.f32.gmra.mxu0 %v2762
        %v2784 = vpop.f32.mrf.mxu0
        %v2785 = vadd.f32 0.0, %v2784
        %2786 = vmatmul.f32.gmra.mxu0 %v2765
        %v2787 = vpop.f32.mrf.mxu0
        %v2788 = vadd.f32 0.0, %v2787
        %2789 = vdwg.mxu0
        %v2791 = vsel %vm666, %v2785, 0
        %v2794 = vsel %vm666, %v2788, 0
        %2796 = vmatpush.msra.mxu0 0.0
        %2797 = vmatpush.msra.mxu0 0.0
        %2798 = vmatpush.msra.mxu0 0.0
        %2799 = vmatpush.msra.mxu0 0.0
        %2800 = vmatpush.msra.mxu0 0.0
        %2801 = vmatpush.msra.mxu0 0.0
        %2802 = vmatpush.msra.mxu0 0.0
        %2803 = vmatpush.msra.mxu0 0.0
        %2804 = vmatpush.msra.mxu0 0.0
        %2805 = vmatpush.msra.mxu0 0.0
        %2806 = vmatpush.msra.mxu0 0.0
        %2807 = vmatpush.msra.mxu0 0.0
        %2808 = vmatpush.msra.mxu0 0.0
        %2809 = vmatpush.msra.mxu0 0.0
        %2810 = vmatpush.msra.mxu0 0.0
        %2811 = vmatpush.msra.mxu0 %v2760
        %2812 = vmatmul.f32.gmra.mxu0 %v2791
        %v2813 = vpop.f32.mrf.mxu0
        %v2814 = vadd.f32 0.0, %v2813
        %2815 = vmatmul.f32.gmra.mxu0 %v2794
        %v2816 = vpop.f32.mrf.mxu0
        %v2817 = vadd.f32 0.0, %v2816
        %2818 = vdwg.mxu0
        %v2819 = vadd.f32 %v2754, %v2814
        %v2820 = vadd.f32 %v2755, %v2817
        %s2821 = scalar_lea.vmem [#allocation2], 1664
        %v2822 = vld [vmem:[%s2821] sm:$0xff]
        %v2823 = vld [vmem:[%s2821 + $0x10] sm:$0xff]
        %s2824 = scalar_lea.vmem [#allocation4], 208
        %v2825 = vld [vmem:[%s2824] sm:$0xff]
        %v2827 = vsel %vm2569, %v2822, 0
        %v2830 = vsel %vm2569, %v2823, 0
        %2832 = vmatpush.msra.mxu0 0.0
        %2833 = vmatpush.msra.mxu0 0.0
        %2834 = vmatpush.msra.mxu0 0.0
        %2835 = vmatpush.msra.mxu0 0.0
        %2836 = vmatpush.msra.mxu0 0.0
        %2837 = vmatpush.msra.mxu0 0.0
        %2838 = vmatpush.msra.mxu0 0.0
        %2839 = vmatpush.msra.mxu0 0.0
        %2840 = vmatpush.msra.mxu0 %v2563
        %2841 = vmatpush.msra.mxu0 %v2562
        %2842 = vmatpush.msra.mxu0 %v2561
        %2843 = vmatpush.msra.mxu0 %v2560
        %2844 = vmatpush.msra.mxu0 %v2559
        %2845 = vmatpush.msra.mxu0 %v2558
        %2846 = vmatpush.msra.mxu0 %v2557
        %2847 = vmatpush.msra.mxu0 %v2556
        %2848 = vmatmul.f32.gmra.mxu0 %v2827
        %v2849 = vpop.f32.mrf.mxu0
        %v2850 = vadd.f32 0.0, %v2849
        %2851 = vmatmul.f32.gmra.mxu0 %v2830
        %v2852 = vpop.f32.mrf.mxu0
        %v2853 = vadd.f32 0.0, %v2852
        %2854 = vdwg.mxu0
        %v2856 = vsel %vm666, %v2850, 0
        %v2859 = vsel %vm666, %v2853, 0
        %2861 = vmatpush.msra.mxu0 0.0
        %2862 = vmatpush.msra.mxu0 0.0
        %2863 = vmatpush.msra.mxu0 0.0
        %2864 = vmatpush.msra.mxu0 0.0
        %2865 = vmatpush.msra.mxu0 0.0
        %2866 = vmatpush.msra.mxu0 0.0
        %2867 = vmatpush.msra.mxu0 0.0
        %2868 = vmatpush.msra.mxu0 0.0
        %2869 = vmatpush.msra.mxu0 0.0
        %2870 = vmatpush.msra.mxu0 0.0
        %2871 = vmatpush.msra.mxu0 0.0
        %2872 = vmatpush.msra.mxu0 0.0
        %2873 = vmatpush.msra.mxu0 0.0
        %2874 = vmatpush.msra.mxu0 0.0
        %2875 = vmatpush.msra.mxu0 0.0
        %2876 = vmatpush.msra.mxu0 %v2825
        %2877 = vmatmul.f32.gmra.mxu0 %v2856
        %v2878 = vpop.f32.mrf.mxu0
        %v2879 = vadd.f32 0.0, %v2878
        %2880 = vmatmul.f32.gmra.mxu0 %v2859
        %v2881 = vpop.f32.mrf.mxu0
        %v2882 = vadd.f32 0.0, %v2881
        %2883 = vdwg.mxu0
        %v2884 = vadd.f32 %v2819, %v2879
        %v2885 = vadd.f32 %v2820, %v2882
        %s2886 = scalar_lea.vmem [#allocation2], 1792
        %v2887 = vld [vmem:[%s2886] sm:$0xff]
        %v2888 = vld [vmem:[%s2886 + $0x10] sm:$0xff]
        %s2889 = scalar_lea.vmem [#allocation4], 224
        %v2890 = vld [vmem:[%s2889] sm:$0xff]
        %v2892 = vsel %vm2569, %v2887, 0
        %v2895 = vsel %vm2569, %v2888, 0
        %2897 = vmatpush.msra.mxu0 0.0
        %2898 = vmatpush.msra.mxu0 0.0
        %2899 = vmatpush.msra.mxu0 0.0
        %2900 = vmatpush.msra.mxu0 0.0
        %2901 = vmatpush.msra.mxu0 0.0
        %2902 = vmatpush.msra.mxu0 0.0
        %2903 = vmatpush.msra.mxu0 0.0
        %2904 = vmatpush.msra.mxu0 0.0
        %2905 = vmatpush.msra.mxu0 %v2563
        %2906 = vmatpush.msra.mxu0 %v2562
        %2907 = vmatpush.msra.mxu0 %v2561
        %2908 = vmatpush.msra.mxu0 %v2560
        %2909 = vmatpush.msra.mxu0 %v2559
        %2910 = vmatpush.msra.mxu0 %v2558
        %2911 = vmatpush.msra.mxu0 %v2557
        %2912 = vmatpush.msra.mxu0 %v2556
        %2913 = vmatmul.f32.gmra.mxu0 %v2892
        %v2914 = vpop.f32.mrf.mxu0
        %v2915 = vadd.f32 0.0, %v2914
        %2916 = vmatmul.f32.gmra.mxu0 %v2895
        %v2917 = vpop.f32.mrf.mxu0
        %v2918 = vadd.f32 0.0, %v2917
        %2919 = vdwg.mxu0
        %v2921 = vsel %vm666, %v2915, 0
        %v2924 = vsel %vm666, %v2918, 0
        %2926 = vmatpush.msra.mxu0 0.0
        %2927 = vmatpush.msra.mxu0 0.0
        %2928 = vmatpush.msra.mxu0 0.0
        %2929 = vmatpush.msra.mxu0 0.0
        %2930 = vmatpush.msra.mxu0 0.0
        %2931 = vmatpush.msra.mxu0 0.0
        %2932 = vmatpush.msra.mxu0 0.0
        %2933 = vmatpush.msra.mxu0 0.0
        %2934 = vmatpush.msra.mxu0 0.0
        %2935 = vmatpush.msra.mxu0 0.0
        %2936 = vmatpush.msra.mxu0 0.0
        %2937 = vmatpush.msra.mxu0 0.0
        %2938 = vmatpush.msra.mxu0 0.0
        %2939 = vmatpush.msra.mxu0 0.0
        %2940 = vmatpush.msra.mxu0 0.0
        %2941 = vmatpush.msra.mxu0 %v2890
        %2942 = vmatmul.f32.gmra.mxu0 %v2921
        %v2943 = vpop.f32.mrf.mxu0
        %v2944 = vadd.f32 0.0, %v2943
        %2945 = vmatmul.f32.gmra.mxu0 %v2924
        %v2946 = vpop.f32.mrf.mxu0
        %v2947 = vadd.f32 0.0, %v2946
        %2948 = vdwg.mxu0
        %v2949 = vadd.f32 %v2884, %v2944
        %v2950 = vadd.f32 %v2885, %v2947
        %s2951 = scalar_lea.vmem [#allocation2], 1920
        %v2952 = vld [vmem:[%s2951] sm:$0xff]
        %v2953 = vld [vmem:[%s2951 + $0x10] sm:$0xff]
        %s2954 = scalar_lea.vmem [#allocation4], 240
        %v2955 = vld [vmem:[%s2954] sm:$0xff]
        %v2957 = vsel %vm2569, %v2952, 0
        %v2960 = vsel %vm2569, %v2953, 0
        %2962 = vmatpush.msra.mxu0 0.0
        %2963 = vmatpush.msra.mxu0 0.0
        %2964 = vmatpush.msra.mxu0 0.0
        %2965 = vmatpush.msra.mxu0 0.0
        %2966 = vmatpush.msra.mxu0 0.0
        %2967 = vmatpush.msra.mxu0 0.0
        %2968 = vmatpush.msra.mxu0 0.0
        %2969 = vmatpush.msra.mxu0 0.0
        %2970 = vmatpush.msra.mxu0 %v2563
        %2971 = vmatpush.msra.mxu0 %v2562
        %2972 = vmatpush.msra.mxu0 %v2561
        %2973 = vmatpush.msra.mxu0 %v2560
        %2974 = vmatpush.msra.mxu0 %v2559
        %2975 = vmatpush.msra.mxu0 %v2558
        %2976 = vmatpush.msra.mxu0 %v2557
        %2977 = vmatpush.msra.mxu0 %v2556
        %2978 = vmatmul.f32.gmra.mxu0 %v2957
        %v2979 = vpop.f32.mrf.mxu0
        %v2980 = vadd.f32 0.0, %v2979
        %2981 = vmatmul.f32.gmra.mxu0 %v2960
        %v2982 = vpop.f32.mrf.mxu0
        %v2983 = vadd.f32 0.0, %v2982
        %2984 = vdwg.mxu0
        %v2986 = vsel %vm666, %v2980, 0
        %v2989 = vsel %vm666, %v2983, 0
        %2991 = vmatpush.msra.mxu0 0.0
        %2992 = vmatpush.msra.mxu0 0.0
        %2993 = vmatpush.msra.mxu0 0.0
        %2994 = vmatpush.msra.mxu0 0.0
        %2995 = vmatpush.msra.mxu0 0.0
        %2996 = vmatpush.msra.mxu0 0.0
        %2997 = vmatpush.msra.mxu0 0.0
        %2998 = vmatpush.msra.mxu0 0.0
        %2999 = vmatpush.msra.mxu0 0.0
        %3000 = vmatpush.msra.mxu0 0.0
        %3001 = vmatpush.msra.mxu0 0.0
        %3002 = vmatpush.msra.mxu0 0.0
        %3003 = vmatpush.msra.mxu0 0.0
        %3004 = vmatpush.msra.mxu0 0.0
        %3005 = vmatpush.msra.mxu0 0.0
        %3006 = vmatpush.msra.mxu0 %v2955
        %3007 = vmatmul.f32.gmra.mxu0 %v2986
        %v3008 = vpop.f32.mrf.mxu0
        %v3009 = vadd.f32 0.0, %v3008
        %3010 = vmatmul.f32.gmra.mxu0 %v2989
        %v3011 = vpop.f32.mrf.mxu0
        %v3012 = vadd.f32 0.0, %v3011
        %3013 = vdwg.mxu0
        %v3014 = vadd.f32 %v2949, %v3009
        %v3015 = vadd.f32 %v2950, %v3012
        %s3016 = scalar_lea.vmem [#allocation2], 2048
        %v3017 = vld [vmem:[%s3016] sm:$0xff]
        %v3018 = vld [vmem:[%s3016 + $0x10] sm:$0xff]
        %s3019 = scalar_lea.vmem [#allocation4], 256
        %v3020 = vld [vmem:[%s3019] sm:$0xff]
        %v3022 = vsel %vm2569, %v3017, 0
        %v3025 = vsel %vm2569, %v3018, 0
        %3027 = vmatpush.msra.mxu0 0.0
        %3028 = vmatpush.msra.mxu0 0.0
        %3029 = vmatpush.msra.mxu0 0.0
        %3030 = vmatpush.msra.mxu0 0.0
        %3031 = vmatpush.msra.mxu0 0.0
        %3032 = vmatpush.msra.mxu0 0.0
        %3033 = vmatpush.msra.mxu0 0.0
        %3034 = vmatpush.msra.mxu0 0.0
        %3035 = vmatpush.msra.mxu0 %v2563
        %3036 = vmatpush.msra.mxu0 %v2562
        %3037 = vmatpush.msra.mxu0 %v2561
        %3038 = vmatpush.msra.mxu0 %v2560
        %3039 = vmatpush.msra.mxu0 %v2559
        %3040 = vmatpush.msra.mxu0 %v2558
        %3041 = vmatpush.msra.mxu0 %v2557
        %3042 = vmatpush.msra.mxu0 %v2556
        %3043 = vmatmul.f32.gmra.mxu0 %v3022
        %v3044 = vpop.f32.mrf.mxu0
        %v3045 = vadd.f32 0.0, %v3044
        %3046 = vmatmul.f32.gmra.mxu0 %v3025
        %v3047 = vpop.f32.mrf.mxu0
        %v3048 = vadd.f32 0.0, %v3047
        %3049 = vdwg.mxu0
        %v3051 = vsel %vm666, %v3045, 0
        %v3054 = vsel %vm666, %v3048, 0
        %3056 = vmatpush.msra.mxu0 0.0
        %3057 = vmatpush.msra.mxu0 0.0
        %3058 = vmatpush.msra.mxu0 0.0
        %3059 = vmatpush.msra.mxu0 0.0
        %3060 = vmatpush.msra.mxu0 0.0
        %3061 = vmatpush.msra.mxu0 0.0
        %3062 = vmatpush.msra.mxu0 0.0
        %3063 = vmatpush.msra.mxu0 0.0
        %3064 = vmatpush.msra.mxu0 0.0
        %3065 = vmatpush.msra.mxu0 0.0
        %3066 = vmatpush.msra.mxu0 0.0
        %3067 = vmatpush.msra.mxu0 0.0
        %3068 = vmatpush.msra.mxu0 0.0
        %3069 = vmatpush.msra.mxu0 0.0
        %3070 = vmatpush.msra.mxu0 0.0
        %3071 = vmatpush.msra.mxu0 %v3020
        %3072 = vmatmul.f32.gmra.mxu0 %v3051
        %v3073 = vpop.f32.mrf.mxu0
        %v3074 = vadd.f32 0.0, %v3073
        %3075 = vmatmul.f32.gmra.mxu0 %v3054
        %v3076 = vpop.f32.mrf.mxu0
        %v3077 = vadd.f32 0.0, %v3076
        %3078 = vdwg.mxu0
        %v3079 = vadd.f32 %v3014, %v3074
        %v3080 = vadd.f32 %v3015, %v3077
        %s3081 = scalar_lea.vmem [#allocation2], 2176
        %v3082 = vld [vmem:[%s3081] sm:$0xff]
        %v3083 = vld [vmem:[%s3081 + $0x10] sm:$0xff]
        %s3084 = scalar_lea.vmem [#allocation4], 272
        %v3085 = vld [vmem:[%s3084] sm:$0xff]
        %v3087 = vsel %vm2569, %v3082, 0
        %v3090 = vsel %vm2569, %v3083, 0
        %3092 = vmatpush.msra.mxu0 0.0
        %3093 = vmatpush.msra.mxu0 0.0
        %3094 = vmatpush.msra.mxu0 0.0
        %3095 = vmatpush.msra.mxu0 0.0
        %3096 = vmatpush.msra.mxu0 0.0
        %3097 = vmatpush.msra.mxu0 0.0
        %3098 = vmatpush.msra.mxu0 0.0
        %3099 = vmatpush.msra.mxu0 0.0
        %3100 = vmatpush.msra.mxu0 %v2563
        %3101 = vmatpush.msra.mxu0 %v2562
        %3102 = vmatpush.msra.mxu0 %v2561
        %3103 = vmatpush.msra.mxu0 %v2560
        %3104 = vmatpush.msra.mxu0 %v2559
        %3105 = vmatpush.msra.mxu0 %v2558
        %3106 = vmatpush.msra.mxu0 %v2557
        %3107 = vmatpush.msra.mxu0 %v2556
        %3108 = vmatmul.f32.gmra.mxu0 %v3087
        %v3109 = vpop.f32.mrf.mxu0
        %v3110 = vadd.f32 0.0, %v3109
        %3111 = vmatmul.f32.gmra.mxu0 %v3090
        %v3112 = vpop.f32.mrf.mxu0
        %v3113 = vadd.f32 0.0, %v3112
        %3114 = vdwg.mxu0
        %v3116 = vsel %vm666, %v3110, 0
        %v3119 = vsel %vm666, %v3113, 0
        %3121 = vmatpush.msra.mxu0 0.0
        %3122 = vmatpush.msra.mxu0 0.0
        %3123 = vmatpush.msra.mxu0 0.0
        %3124 = vmatpush.msra.mxu0 0.0
        %3125 = vmatpush.msra.mxu0 0.0
        %3126 = vmatpush.msra.mxu0 0.0
        %3127 = vmatpush.msra.mxu0 0.0
        %3128 = vmatpush.msra.mxu0 0.0
        %3129 = vmatpush.msra.mxu0 0.0
        %3130 = vmatpush.msra.mxu0 0.0
        %3131 = vmatpush.msra.mxu0 0.0
        %3132 = vmatpush.msra.mxu0 0.0
        %3133 = vmatpush.msra.mxu0 0.0
        %3134 = vmatpush.msra.mxu0 0.0
        %3135 = vmatpush.msra.mxu0 0.0
        %3136 = vmatpush.msra.mxu0 %v3085
        %3137 = vmatmul.f32.gmra.mxu0 %v3116
        %v3138 = vpop.f32.mrf.mxu0
        %v3139 = vadd.f32 0.0, %v3138
        %3140 = vmatmul.f32.gmra.mxu0 %v3119
        %v3141 = vpop.f32.mrf.mxu0
        %v3142 = vadd.f32 0.0, %v3141
        %3143 = vdwg.mxu0
        %v3144 = vadd.f32 %v3079, %v3139
        %v3145 = vadd.f32 %v3080, %v3142
        %s3146 = scalar_lea.vmem %s6, 8
        %v3147 = vld [vmem:[%s3146] sm:$0x1]
        %v3148 = vperm.slane %v3147, 0
        %v3149 = vadd.f32 %v3144, %v3148
        %v3150 = vadd.f32 %v3145, %v3148
        %vm3151 = vcmask 130048
        %v3152 = vsel %vm3151, %v3149, 0.0
        %v3153 = vsel %vm3151, %v3150, 0.0
        %v3154 = vadd.f32 %v3152, %v3153
        %v3155 = vrot.slane %v3154, 4
        %v3156 = vadd.f32 %v3154, %v3155
        %v3157 = vrot.slane %v3156, 2
        %v3158 = vadd.f32 %v3156, %v3157
        %v3159 = vrot.slane %v3158, 1
        %v3160 = vadd.f32 %v3158, %v3159
        %v3161 = vrcp.pop 16.0
        %v3162 = vmul.f32 16.0, %v3161
        %v3163 = vsub.f32 1.0, %v3162
        %v3164 = vmul.f32 %v3161, %v3163
        %v3165 = vadd.f32 %v3161, %v3164
        %vm3166 = vweird.f32 %v3161
        %v3167 = vsel %vm3166, %v3161, %v3165
        %v3168 = vmul.f32 %v3160, %v3167
        %s3169 = scalar_lea.vmem %s4, 64
        %v3170 = vld [vmem:[%s3169] sm:$0xff]
        %v3171 = vld [vmem:[%s3169 + $0x8] sm:$0xff]
        %v3172 = vld [vmem:[%s3146 + $0x1] sm:$0x1]
        %v3174 = vsel %vm3151, %v3168, 0
        %3176 = vmatpush.msra.mxu0 0.0
        %3177 = vmatpush.msra.mxu0 0.0
        %3178 = vmatpush.msra.mxu0 0.0
        %3179 = vmatpush.msra.mxu0 0.0
        %3180 = vmatpush.msra.mxu0 0.0
        %3181 = vmatpush.msra.mxu0 0.0
        %3182 = vmatpush.msra.mxu0 0.0
        %3183 = vmatpush.msra.mxu0 0.0
        %3184 = vmatpush.msra.mxu0 0.0
        %3185 = vmatpush.msra.mxu0 0.0
        %3186 = vmatpush.msra.mxu0 0.0
        %3187 = vmatpush.msra.mxu0 0.0
        %3188 = vmatpush.msra.mxu0 0.0
        %3189 = vmatpush.msra.mxu0 0.0
        %3190 = vmatpush.msra.mxu0 %v3171
        %3191 = vmatpush.msra.mxu0 %v3170
        %3192 = vmatmul.f32.gmra.mxu0 %v3174
        %v3193 = vpop.f32.mrf.mxu0
        %v3194 = vadd.f32 %v3172, %v3193
        %3195 = vdwg.mxu0
        %v3196 = vmax.f32 %v3194, 0.0
        %s3197 = scalar_lea.vmem [#allocation6], 16
        %v3198 = vld [vmem:[%s3197] sm:$0xf]
        %v3199 = vld [vmem:[%s3146 + $0x2] sm:$0x1]
        %vm3200 = vcmask 31744
        %v3202 = vsel %vm3200, %v3196, 0
        %vm3204 = vcmask 1043456
        %v3206 = vsel %vm3204, %v3198, 0
        %3208 = vmatpush.msra.mxu0 0.0
        %3209 = vmatpush.msra.mxu0 0.0
        %3210 = vmatpush.msra.mxu0 0.0
        %3211 = vmatpush.msra.mxu0 0.0
        %3212 = vmatpush.msra.mxu0 0.0
        %3213 = vmatpush.msra.mxu0 0.0
        %3214 = vmatpush.msra.mxu0 0.0
        %3215 = vmatpush.msra.mxu0 0.0
        %3216 = vmatpush.msra.mxu0 0.0
        %3217 = vmatpush.msra.mxu0 0.0
        %3218 = vmatpush.msra.mxu0 0.0
        %3219 = vmatpush.msra.mxu0 0.0
        %3220 = vmatpush.msra.mxu0 0.0
        %3221 = vmatpush.msra.mxu0 0.0
        %3222 = vmatpush.msra.mxu0 0.0
        %3223 = vmatpush.msra.mxu0 %v3206
        %3224 = vmatmul.f32.gmra.mxu0 %v3202
        %v3225 = vpop.f32.mrf.mxu0
        %v3226 = vadd.f32 %v3199, %v3225
        %3227 = vdwg.mxu0
        %v3228 = vxor.u32 %v3226, 2147483648
        %v3229 = vmul.f32 %v3228, 1.442695
        %v3230 = vpow.pop %v3229
        %v3231 = vadd.f32 %v3230, 1.0
        %v3232 = vrcp.pop %v3231
        %v3233 = vmul.f32 %v3231, %v3232
        %v3234 = vsub.f32 1.0, %v3233
        %v3235 = vmul.f32 %v3232, %v3234
        %v3236 = vadd.f32 %v3232, %v3235
        %vm3237 = vweird.f32 %v3231
        %vm3238 = vweird.f32 %v3232
        %vm3239 = vmor %vm3237, %vm3238
        %v3240 = vsel %vm3239, %v3232, %v3236
        %v3241 = vand.u32 2147483647, %v3231
        %vm3242 = vcmp.eq.f32.partialorder %v3241, 8.507059e+37
        %v3243 = vand.u32 %v3231, 2147483648
        %v3244 = vor.u32 1.1754944e-38, %v3243
        %v3245 = vsel %vm3242, %v3244, %v3240
        %v3246 = vmul.f32 1.0, %v3245
        %v3247 = vperm.slane %v3246, 0
        %v3248 = vmul.f32 %v3149, %v3247
        %v3249 = vmul.f32 %v3150, %v3247
        %v3250 = vmax.f32 %v3248, 0.0
        %v3251 = vmax.f32 %v3249, 0.0
        %s3252 = scalar_lea.vmem [#allocation2], 2304
        %v3253 = vld [vmem:[%s3252] sm:$0xff]
        %v3254 = vld [vmem:[%s3252 + $0x10] sm:$0xff]
        %v3255 = vld [vmem:[%s3252 + $0x20] sm:$0xff]
        %v3256 = vld [vmem:[%s3252 + $0x30] sm:$0xff]
        %v3257 = vld [vmem:[%s3252 + $0x40] sm:$0xff]
        %v3258 = vld [vmem:[%s3252 + $0x50] sm:$0xff]
        %v3259 = vld [vmem:[%s3252 + $0x60] sm:$0xff]
        %v3260 = vld [vmem:[%s3252 + $0x70] sm:$0xff]
        %s3261 = scalar_lea.vmem [#allocation4], 288
        %v3262 = vld [vmem:[%s3261] sm:$0xff]
        %v3264 = vsel %vm2569, %v3253, 0
        %v3267 = vsel %vm2569, %v3254, 0
        %v3270 = vsel %vm2569, %v3255, 0
        %v3273 = vsel %vm2569, %v3256, 0
        %v3276 = vsel %vm2569, %v3257, 0
        %v3279 = vsel %vm2569, %v3258, 0
        %v3282 = vsel %vm2569, %v3259, 0
        %v3285 = vsel %vm2569, %v3260, 0
        %3287 = vmatpush.msra.mxu0 0.0
        %3288 = vmatpush.msra.mxu0 0.0
        %3289 = vmatpush.msra.mxu0 0.0
        %3290 = vmatpush.msra.mxu0 0.0
        %3291 = vmatpush.msra.mxu0 0.0
        %3292 = vmatpush.msra.mxu0 0.0
        %3293 = vmatpush.msra.mxu0 0.0
        %3294 = vmatpush.msra.mxu0 0.0
        %3295 = vmatpush.msra.mxu0 %v2563
        %3296 = vmatpush.msra.mxu0 %v2562
        %3297 = vmatpush.msra.mxu0 %v2561
        %3298 = vmatpush.msra.mxu0 %v2560
        %3299 = vmatpush.msra.mxu0 %v2559
        %3300 = vmatpush.msra.mxu0 %v2558
        %3301 = vmatpush.msra.mxu0 %v2557
        %3302 = vmatpush.msra.mxu0 %v2556
        %3303 = vmatmul.f32.gmra.mxu0 %v3264
        %v3304 = vpop.f32.mrf.mxu0
        %v3305 = vadd.f32 0.0, %v3304
        %3306 = vmatmul.f32.gmra.mxu0 %v3267
        %v3307 = vpop.f32.mrf.mxu0
        %v3308 = vadd.f32 0.0, %v3307
        %3309 = vmatmul.f32.gmra.mxu0 %v3270
        %v3310 = vpop.f32.mrf.mxu0
        %v3311 = vadd.f32 0.0, %v3310
        %3312 = vmatmul.f32.gmra.mxu0 %v3273
        %v3313 = vpop.f32.mrf.mxu0
        %v3314 = vadd.f32 0.0, %v3313
        %3315 = vmatmul.f32.gmra.mxu0 %v3276
        %v3316 = vpop.f32.mrf.mxu0
        %v3317 = vadd.f32 0.0, %v3316
        %3318 = vmatmul.f32.gmra.mxu0 %v3279
        %v3319 = vpop.f32.mrf.mxu0
        %v3320 = vadd.f32 0.0, %v3319
        %3321 = vmatmul.f32.gmra.mxu0 %v3282
        %v3322 = vpop.f32.mrf.mxu0
        %v3323 = vadd.f32 0.0, %v3322
        %3324 = vmatmul.f32.gmra.mxu0 %v3285
        %v3325 = vpop.f32.mrf.mxu0
        %v3326 = vadd.f32 0.0, %v3325
        %3327 = vdwg.mxu0
        %s3328 = scalar_lea.vmem [#allocation2], 2432
        %v3329 = vld [vmem:[%s3328] sm:$0xff]
        %v3330 = vld [vmem:[%s3328 + $0x10] sm:$0xff]
        %v3331 = vld [vmem:[%s3328 + $0x20] sm:$0xff]
        %v3332 = vld [vmem:[%s3328 + $0x30] sm:$0xff]
        %v3333 = vld [vmem:[%s3328 + $0x40] sm:$0xff]
        %v3334 = vld [vmem:[%s3328 + $0x50] sm:$0xff]
        %v3335 = vld [vmem:[%s3328 + $0x60] sm:$0xff]
        %v3336 = vld [vmem:[%s3328 + $0x70] sm:$0xff]
        %s3337 = scalar_lea.vmem [#allocation4], 304
        %v3338 = vld [vmem:[%s3337] sm:$0xff]
        %v3340 = vsel %vm2569, %v3329, 0
        %v3343 = vsel %vm2569, %v3330, 0
        %v3346 = vsel %vm2569, %v3331, 0
        %v3349 = vsel %vm2569, %v3332, 0
        %v3352 = vsel %vm2569, %v3333, 0
        %v3355 = vsel %vm2569, %v3334, 0
        %v3358 = vsel %vm2569, %v3335, 0
        %v3361 = vsel %vm2569, %v3336, 0
        %3363 = vmatpush.msra.mxu0 0.0
        %3364 = vmatpush.msra.mxu0 0.0
        %3365 = vmatpush.msra.mxu0 0.0
        %3366 = vmatpush.msra.mxu0 0.0
        %3367 = vmatpush.msra.mxu0 0.0
        %3368 = vmatpush.msra.mxu0 0.0
        %3369 = vmatpush.msra.mxu0 0.0
        %3370 = vmatpush.msra.mxu0 0.0
        %3371 = vmatpush.msra.mxu0 %v2563
        %3372 = vmatpush.msra.mxu0 %v2562
        %3373 = vmatpush.msra.mxu0 %v2561
        %3374 = vmatpush.msra.mxu0 %v2560
        %3375 = vmatpush.msra.mxu0 %v2559
        %3376 = vmatpush.msra.mxu0 %v2558
        %3377 = vmatpush.msra.mxu0 %v2557
        %3378 = vmatpush.msra.mxu0 %v2556
        %3379 = vmatmul.f32.gmra.mxu0 %v3340
        %v3380 = vpop.f32.mrf.mxu0
        %v3381 = vadd.f32 0.0, %v3380
        %3382 = vmatmul.f32.gmra.mxu0 %v3343
        %v3383 = vpop.f32.mrf.mxu0
        %v3384 = vadd.f32 0.0, %v3383
        %3385 = vmatmul.f32.gmra.mxu0 %v3346
        %v3386 = vpop.f32.mrf.mxu0
        %v3387 = vadd.f32 0.0, %v3386
        %3388 = vmatmul.f32.gmra.mxu0 %v3349
        %v3389 = vpop.f32.mrf.mxu0
        %v3390 = vadd.f32 0.0, %v3389
        %3391 = vmatmul.f32.gmra.mxu0 %v3352
        %v3392 = vpop.f32.mrf.mxu0
        %v3393 = vadd.f32 0.0, %v3392
        %3394 = vmatmul.f32.gmra.mxu0 %v3355
        %v3395 = vpop.f32.mrf.mxu0
        %v3396 = vadd.f32 0.0, %v3395
        %3397 = vmatmul.f32.gmra.mxu0 %v3358
        %v3398 = vpop.f32.mrf.mxu0
        %v3399 = vadd.f32 0.0, %v3398
        %3400 = vmatmul.f32.gmra.mxu0 %v3361
        %v3401 = vpop.f32.mrf.mxu0
        %v3402 = vadd.f32 0.0, %v3401
        %3403 = vdwg.mxu0
        %v3405 = vsel %vm666, %v3381, 0
        %v3408 = vsel %vm666, %v3384, 0
        %v3411 = vsel %vm666, %v3387, 0
        %v3414 = vsel %vm666, %v3390, 0
        %v3417 = vsel %vm666, %v3393, 0
        %v3420 = vsel %vm666, %v3396, 0
        %v3423 = vsel %vm666, %v3399, 0
        %v3426 = vsel %vm666, %v3402, 0
        %3428 = vmatpush.msra.mxu0 0.0
        %3429 = vmatpush.msra.mxu0 0.0
        %3430 = vmatpush.msra.mxu0 0.0
        %3431 = vmatpush.msra.mxu0 0.0
        %3432 = vmatpush.msra.mxu0 0.0
        %3433 = vmatpush.msra.mxu0 0.0
        %3434 = vmatpush.msra.mxu0 0.0
        %3435 = vmatpush.msra.mxu0 0.0
        %3436 = vmatpush.msra.mxu0 0.0
        %3437 = vmatpush.msra.mxu0 0.0
        %3438 = vmatpush.msra.mxu0 0.0
        %3439 = vmatpush.msra.mxu0 0.0
        %3440 = vmatpush.msra.mxu0 0.0
        %3441 = vmatpush.msra.mxu0 0.0
        %3442 = vmatpush.msra.mxu0 0.0
        %3443 = vmatpush.msra.mxu0 %v3338
        %3444 = vmatmul.f32.gmra.mxu0 %v3405
        %v3445 = vpop.f32.mrf.mxu0
        %v3446 = vadd.f32 0.0, %v3445
        %3447 = vmatmul.f32.gmra.mxu0 %v3408
        %v3448 = vpop.f32.mrf.mxu0
        %v3449 = vadd.f32 0.0, %v3448
        %3450 = vmatmul.f32.gmra.mxu0 %v3411
        %v3451 = vpop.f32.mrf.mxu0
        %v3452 = vadd.f32 0.0, %v3451
        %3453 = vmatmul.f32.gmra.mxu0 %v3414
        %v3454 = vpop.f32.mrf.mxu0
        %v3455 = vadd.f32 0.0, %v3454
        %3456 = vmatmul.f32.gmra.mxu0 %v3417
        %v3457 = vpop.f32.mrf.mxu0
        %v3458 = vadd.f32 0.0, %v3457
        %3459 = vmatmul.f32.gmra.mxu0 %v3420
        %v3460 = vpop.f32.mrf.mxu0
        %v3461 = vadd.f32 0.0, %v3460
        %3462 = vmatmul.f32.gmra.mxu0 %v3423
        %v3463 = vpop.f32.mrf.mxu0
        %v3464 = vadd.f32 0.0, %v3463
        %3465 = vmatmul.f32.gmra.mxu0 %v3426
        %v3466 = vpop.f32.mrf.mxu0
        %v3467 = vadd.f32 0.0, %v3466
        %3468 = vdwg.mxu0
        %v3470 = vsel %vm666, %v3305, 0
        %v3473 = vsel %vm666, %v3308, 0
        %v3476 = vsel %vm666, %v3311, 0
        %v3479 = vsel %vm666, %v3314, 0
        %v3482 = vsel %vm666, %v3317, 0
        %v3485 = vsel %vm666, %v3320, 0
        %v3488 = vsel %vm666, %v3323, 0
        %v3491 = vsel %vm666, %v3326, 0
        %3493 = vmatpush.msra.mxu0 0.0
        %3494 = vmatpush.msra.mxu0 0.0
        %3495 = vmatpush.msra.mxu0 0.0
        %3496 = vmatpush.msra.mxu0 0.0
        %3497 = vmatpush.msra.mxu0 0.0
        %3498 = vmatpush.msra.mxu0 0.0
        %3499 = vmatpush.msra.mxu0 0.0
        %3500 = vmatpush.msra.mxu0 0.0
        %3501 = vmatpush.msra.mxu0 0.0
        %3502 = vmatpush.msra.mxu0 0.0
        %3503 = vmatpush.msra.mxu0 0.0
        %3504 = vmatpush.msra.mxu0 0.0
        %3505 = vmatpush.msra.mxu0 0.0
        %3506 = vmatpush.msra.mxu0 0.0
        %3507 = vmatpush.msra.mxu0 0.0
        %3508 = vmatpush.msra.mxu0 %v3262
        %3509 = vmatmul.f32.gmra.mxu0 %v3470
        %v3510 = vpop.f32.mrf.mxu0
        %v3511 = vadd.f32 %v3446, %v3510
        %3512 = vmatmul.f32.gmra.mxu0 %v3473
        %v3513 = vpop.f32.mrf.mxu0
        %v3514 = vadd.f32 %v3449, %v3513
        %3515 = vmatmul.f32.gmra.mxu0 %v3476
        %v3516 = vpop.f32.mrf.mxu0
        %v3517 = vadd.f32 %v3452, %v3516
        %3518 = vmatmul.f32.gmra.mxu0 %v3479
        %v3519 = vpop.f32.mrf.mxu0
        %v3520 = vadd.f32 %v3455, %v3519
        %3521 = vmatmul.f32.gmra.mxu0 %v3482
        %v3522 = vpop.f32.mrf.mxu0
        %v3523 = vadd.f32 %v3458, %v3522
        %3524 = vmatmul.f32.gmra.mxu0 %v3485
        %v3525 = vpop.f32.mrf.mxu0
        %v3526 = vadd.f32 %v3461, %v3525
        %3527 = vmatmul.f32.gmra.mxu0 %v3488
        %v3528 = vpop.f32.mrf.mxu0
        %v3529 = vadd.f32 %v3464, %v3528
        %3530 = vmatmul.f32.gmra.mxu0 %v3491
        %v3531 = vpop.f32.mrf.mxu0
        %v3532 = vadd.f32 %v3467, %v3531
        %3533 = vdwg.mxu0
        %s3534 = scalar_lea.vmem [#allocation2], 2560
        %v3535 = vld [vmem:[%s3534] sm:$0xff]
        %v3536 = vld [vmem:[%s3534 + $0x10] sm:$0xff]
        %v3537 = vld [vmem:[%s3534 + $0x20] sm:$0xff]
        %v3538 = vld [vmem:[%s3534 + $0x30] sm:$0xff]
        %v3539 = vld [vmem:[%s3534 + $0x40] sm:$0xff]
        %v3540 = vld [vmem:[%s3534 + $0x50] sm:$0xff]
        %v3541 = vld [vmem:[%s3534 + $0x60] sm:$0xff]
        %v3542 = vld [vmem:[%s3534 + $0x70] sm:$0xff]
        %s3543 = scalar_lea.vmem [#allocation4], 320
        %v3544 = vld [vmem:[%s3543] sm:$0xff]
        %v3546 = vsel %vm2569, %v3535, 0
        %v3549 = vsel %vm2569, %v3536, 0
        %v3552 = vsel %vm2569, %v3537, 0
        %v3555 = vsel %vm2569, %v3538, 0
        %v3558 = vsel %vm2569, %v3539, 0
        %v3561 = vsel %vm2569, %v3540, 0
        %v3564 = vsel %vm2569, %v3541, 0
        %v3567 = vsel %vm2569, %v3542, 0
        %3569 = vmatpush.msra.mxu0 0.0
        %3570 = vmatpush.msra.mxu0 0.0
        %3571 = vmatpush.msra.mxu0 0.0
        %3572 = vmatpush.msra.mxu0 0.0
        %3573 = vmatpush.msra.mxu0 0.0
        %3574 = vmatpush.msra.mxu0 0.0
        %3575 = vmatpush.msra.mxu0 0.0
        %3576 = vmatpush.msra.mxu0 0.0
        %3577 = vmatpush.msra.mxu0 %v2563
        %3578 = vmatpush.msra.mxu0 %v2562
        %3579 = vmatpush.msra.mxu0 %v2561
        %3580 = vmatpush.msra.mxu0 %v2560
        %3581 = vmatpush.msra.mxu0 %v2559
        %3582 = vmatpush.msra.mxu0 %v2558
        %3583 = vmatpush.msra.mxu0 %v2557
        %3584 = vmatpush.msra.mxu0 %v2556
        %3585 = vmatmul.f32.gmra.mxu0 %v3546
        %v3586 = vpop.f32.mrf.mxu0
        %v3587 = vadd.f32 0.0, %v3586
        %3588 = vmatmul.f32.gmra.mxu0 %v3549
        %v3589 = vpop.f32.mrf.mxu0
        %v3590 = vadd.f32 0.0, %v3589
        %3591 = vmatmul.f32.gmra.mxu0 %v3552
        %v3592 = vpop.f32.mrf.mxu0
        %v3593 = vadd.f32 0.0, %v3592
        %3594 = vmatmul.f32.gmra.mxu0 %v3555
        %v3595 = vpop.f32.mrf.mxu0
        %v3596 = vadd.f32 0.0, %v3595
        %3597 = vmatmul.f32.gmra.mxu0 %v3558
        %v3598 = vpop.f32.mrf.mxu0
        %v3599 = vadd.f32 0.0, %v3598
        %3600 = vmatmul.f32.gmra.mxu0 %v3561
        %v3601 = vpop.f32.mrf.mxu0
        %v3602 = vadd.f32 0.0, %v3601
        %3603 = vmatmul.f32.gmra.mxu0 %v3564
        %v3604 = vpop.f32.mrf.mxu0
        %v3605 = vadd.f32 0.0, %v3604
        %3606 = vmatmul.f32.gmra.mxu0 %v3567
        %v3607 = vpop.f32.mrf.mxu0
        %v3608 = vadd.f32 0.0, %v3607
        %3609 = vdwg.mxu0
        %v3611 = vsel %vm666, %v3587, 0
        %v3614 = vsel %vm666, %v3590, 0
        %v3617 = vsel %vm666, %v3593, 0
        %v3620 = vsel %vm666, %v3596, 0
        %v3623 = vsel %vm666, %v3599, 0
        %v3626 = vsel %vm666, %v3602, 0
        %v3629 = vsel %vm666, %v3605, 0
        %v3632 = vsel %vm666, %v3608, 0
        %3634 = vmatpush.msra.mxu0 0.0
        %3635 = vmatpush.msra.mxu0 0.0
        %3636 = vmatpush.msra.mxu0 0.0
        %3637 = vmatpush.msra.mxu0 0.0
        %3638 = vmatpush.msra.mxu0 0.0
        %3639 = vmatpush.msra.mxu0 0.0
        %3640 = vmatpush.msra.mxu0 0.0
        %3641 = vmatpush.msra.mxu0 0.0
        %3642 = vmatpush.msra.mxu0 0.0
        %3643 = vmatpush.msra.mxu0 0.0
        %3644 = vmatpush.msra.mxu0 0.0
        %3645 = vmatpush.msra.mxu0 0.0
        %3646 = vmatpush.msra.mxu0 0.0
        %3647 = vmatpush.msra.mxu0 0.0
        %3648 = vmatpush.msra.mxu0 0.0
        %3649 = vmatpush.msra.mxu0 %v3544
        %3650 = vmatmul.f32.gmra.mxu0 %v3611
        %v3651 = vpop.f32.mrf.mxu0
        %v3652 = vadd.f32 0.0, %v3651
        %3653 = vmatmul.f32.gmra.mxu0 %v3614
        %v3654 = vpop.f32.mrf.mxu0
        %v3655 = vadd.f32 0.0, %v3654
        %3656 = vmatmul.f32.gmra.mxu0 %v3617
        %v3657 = vpop.f32.mrf.mxu0
        %v3658 = vadd.f32 0.0, %v3657
        %3659 = vmatmul.f32.gmra.mxu0 %v3620
        %v3660 = vpop.f32.mrf.mxu0
        %v3661 = vadd.f32 0.0, %v3660
        %3662 = vmatmul.f32.gmra.mxu0 %v3623
        %v3663 = vpop.f32.mrf.mxu0
        %v3664 = vadd.f32 0.0, %v3663
        %3665 = vmatmul.f32.gmra.mxu0 %v3626
        %v3666 = vpop.f32.mrf.mxu0
        %v3667 = vadd.f32 0.0, %v3666
        %3668 = vmatmul.f32.gmra.mxu0 %v3629
        %v3669 = vpop.f32.mrf.mxu0
        %v3670 = vadd.f32 0.0, %v3669
        %3671 = vmatmul.f32.gmra.mxu0 %v3632
        %v3672 = vpop.f32.mrf.mxu0
        %v3673 = vadd.f32 0.0, %v3672
        %3674 = vdwg.mxu0
        %v3675 = vadd.f32 %v3511, %v3652
        %v3676 = vadd.f32 %v3514, %v3655
        %v3677 = vadd.f32 %v3517, %v3658
        %v3678 = vadd.f32 %v3520, %v3661
        %v3679 = vadd.f32 %v3523, %v3664
        %v3680 = vadd.f32 %v3526, %v3667
        %v3681 = vadd.f32 %v3529, %v3670
        %v3682 = vadd.f32 %v3532, %v3673
        %s3683 = scalar_lea.vmem [#allocation2], 2688
        %v3684 = vld [vmem:[%s3683] sm:$0xff]
        %v3685 = vld [vmem:[%s3683 + $0x10] sm:$0xff]
        %v3686 = vld [vmem:[%s3683 + $0x20] sm:$0xff]
        %v3687 = vld [vmem:[%s3683 + $0x30] sm:$0xff]
        %v3688 = vld [vmem:[%s3683 + $0x40] sm:$0xff]
        %v3689 = vld [vmem:[%s3683 + $0x50] sm:$0xff]
        %v3690 = vld [vmem:[%s3683 + $0x60] sm:$0xff]
        %v3691 = vld [vmem:[%s3683 + $0x70] sm:$0xff]
        %s3692 = scalar_lea.vmem [#allocation4], 336
        %v3693 = vld [vmem:[%s3692] sm:$0xff]
        %v3695 = vsel %vm2569, %v3684, 0
        %v3698 = vsel %vm2569, %v3685, 0
        %v3701 = vsel %vm2569, %v3686, 0
        %v3704 = vsel %vm2569, %v3687, 0
        %v3707 = vsel %vm2569, %v3688, 0
        %v3710 = vsel %vm2569, %v3689, 0
        %v3713 = vsel %vm2569, %v3690, 0
        %v3716 = vsel %vm2569, %v3691, 0
        %3718 = vmatpush.msra.mxu0 0.0
        %3719 = vmatpush.msra.mxu0 0.0
        %3720 = vmatpush.msra.mxu0 0.0
        %3721 = vmatpush.msra.mxu0 0.0
        %3722 = vmatpush.msra.mxu0 0.0
        %3723 = vmatpush.msra.mxu0 0.0
        %3724 = vmatpush.msra.mxu0 0.0
        %3725 = vmatpush.msra.mxu0 0.0
        %3726 = vmatpush.msra.mxu0 %v2563
        %3727 = vmatpush.msra.mxu0 %v2562
        %3728 = vmatpush.msra.mxu0 %v2561
        %3729 = vmatpush.msra.mxu0 %v2560
        %3730 = vmatpush.msra.mxu0 %v2559
        %3731 = vmatpush.msra.mxu0 %v2558
        %3732 = vmatpush.msra.mxu0 %v2557
        %3733 = vmatpush.msra.mxu0 %v2556
        %3734 = vmatmul.f32.gmra.mxu0 %v3695
        %v3735 = vpop.f32.mrf.mxu0
        %v3736 = vadd.f32 0.0, %v3735
        %3737 = vmatmul.f32.gmra.mxu0 %v3698
        %v3738 = vpop.f32.mrf.mxu0
        %v3739 = vadd.f32 0.0, %v3738
        %3740 = vmatmul.f32.gmra.mxu0 %v3701
        %v3741 = vpop.f32.mrf.mxu0
        %v3742 = vadd.f32 0.0, %v3741
        %3743 = vmatmul.f32.gmra.mxu0 %v3704
        %v3744 = vpop.f32.mrf.mxu0
        %v3745 = vadd.f32 0.0, %v3744
        %3746 = vmatmul.f32.gmra.mxu0 %v3707
        %v3747 = vpop.f32.mrf.mxu0
        %v3748 = vadd.f32 0.0, %v3747
        %3749 = vmatmul.f32.gmra.mxu0 %v3710
        %v3750 = vpop.f32.mrf.mxu0
        %v3751 = vadd.f32 0.0, %v3750
        %3752 = vmatmul.f32.gmra.mxu0 %v3713
        %v3753 = vpop.f32.mrf.mxu0
        %v3754 = vadd.f32 0.0, %v3753
        %3755 = vmatmul.f32.gmra.mxu0 %v3716
        %v3756 = vpop.f32.mrf.mxu0
        %v3757 = vadd.f32 0.0, %v3756
        %3758 = vdwg.mxu0
        %v3760 = vsel %vm666, %v3736, 0
        %v3763 = vsel %vm666, %v3739, 0
        %v3766 = vsel %vm666, %v3742, 0
        %v3769 = vsel %vm666, %v3745, 0
        %v3772 = vsel %vm666, %v3748, 0
        %v3775 = vsel %vm666, %v3751, 0
        %v3778 = vsel %vm666, %v3754, 0
        %v3781 = vsel %vm666, %v3757, 0
        %3783 = vmatpush.msra.mxu0 0.0
        %3784 = vmatpush.msra.mxu0 0.0
        %3785 = vmatpush.msra.mxu0 0.0
        %3786 = vmatpush.msra.mxu0 0.0
        %3787 = vmatpush.msra.mxu0 0.0
        %3788 = vmatpush.msra.mxu0 0.0
        %3789 = vmatpush.msra.mxu0 0.0
        %3790 = vmatpush.msra.mxu0 0.0
        %3791 = vmatpush.msra.mxu0 0.0
        %3792 = vmatpush.msra.mxu0 0.0
        %3793 = vmatpush.msra.mxu0 0.0
        %3794 = vmatpush.msra.mxu0 0.0
        %3795 = vmatpush.msra.mxu0 0.0
        %3796 = vmatpush.msra.mxu0 0.0
        %3797 = vmatpush.msra.mxu0 0.0
        %3798 = vmatpush.msra.mxu0 %v3693
        %3799 = vmatmul.f32.gmra.mxu0 %v3760
        %v3800 = vpop.f32.mrf.mxu0
        %v3801 = vadd.f32 0.0, %v3800
        %3802 = vmatmul.f32.gmra.mxu0 %v3763
        %v3803 = vpop.f32.mrf.mxu0
        %v3804 = vadd.f32 0.0, %v3803
        %3805 = vmatmul.f32.gmra.mxu0 %v3766
        %v3806 = vpop.f32.mrf.mxu0
        %v3807 = vadd.f32 0.0, %v3806
        %3808 = vmatmul.f32.gmra.mxu0 %v3769
        %v3809 = vpop.f32.mrf.mxu0
        %v3810 = vadd.f32 0.0, %v3809
        %3811 = vmatmul.f32.gmra.mxu0 %v3772
        %v3812 = vpop.f32.mrf.mxu0
        %v3813 = vadd.f32 0.0, %v3812
        %3814 = vmatmul.f32.gmra.mxu0 %v3775
        %v3815 = vpop.f32.mrf.mxu0
        %v3816 = vadd.f32 0.0, %v3815
        %3817 = vmatmul.f32.gmra.mxu0 %v3778
        %v3818 = vpop.f32.mrf.mxu0
        %v3819 = vadd.f32 0.0, %v3818
        %3820 = vmatmul.f32.gmra.mxu0 %v3781
        %v3821 = vpop.f32.mrf.mxu0
        %v3822 = vadd.f32 0.0, %v3821
        %3823 = vdwg.mxu0
        %v3824 = vadd.f32 %v3675, %v3801
        %v3825 = vadd.f32 %v3676, %v3804
        %v3826 = vadd.f32 %v3677, %v3807
        %v3827 = vadd.f32 %v3678, %v3810
        %v3828 = vadd.f32 %v3679, %v3813
        %v3829 = vadd.f32 %v3680, %v3816
        %v3830 = vadd.f32 %v3681, %v3819
        %v3831 = vadd.f32 %v3682, %v3822
        %s3832 = scalar_lea.vmem [#allocation2], 2816
        %v3833 = vld [vmem:[%s3832] sm:$0xff]
        %v3834 = vld [vmem:[%s3832 + $0x10] sm:$0xff]
        %v3835 = vld [vmem:[%s3832 + $0x20] sm:$0xff]
        %v3836 = vld [vmem:[%s3832 + $0x30] sm:$0xff]
        %v3837 = vld [vmem:[%s3832 + $0x40] sm:$0xff]
        %v3838 = vld [vmem:[%s3832 + $0x50] sm:$0xff]
        %v3839 = vld [vmem:[%s3832 + $0x60] sm:$0xff]
        %v3840 = vld [vmem:[%s3832 + $0x70] sm:$0xff]
        %s3841 = scalar_lea.vmem [#allocation4], 352
        %v3842 = vld [vmem:[%s3841] sm:$0xff]
        %v3844 = vsel %vm2569, %v3833, 0
        %v3847 = vsel %vm2569, %v3834, 0
        %v3850 = vsel %vm2569, %v3835, 0
        %v3853 = vsel %vm2569, %v3836, 0
        %v3856 = vsel %vm2569, %v3837, 0
        %v3859 = vsel %vm2569, %v3838, 0
        %v3862 = vsel %vm2569, %v3839, 0
        %v3865 = vsel %vm2569, %v3840, 0
        %3867 = vmatpush.msra.mxu0 0.0
        %3868 = vmatpush.msra.mxu0 0.0
        %3869 = vmatpush.msra.mxu0 0.0
        %3870 = vmatpush.msra.mxu0 0.0
        %3871 = vmatpush.msra.mxu0 0.0
        %3872 = vmatpush.msra.mxu0 0.0
        %3873 = vmatpush.msra.mxu0 0.0
        %3874 = vmatpush.msra.mxu0 0.0
        %3875 = vmatpush.msra.mxu0 %v2563
        %3876 = vmatpush.msra.mxu0 %v2562
        %3877 = vmatpush.msra.mxu0 %v2561
        %3878 = vmatpush.msra.mxu0 %v2560
        %3879 = vmatpush.msra.mxu0 %v2559
        %3880 = vmatpush.msra.mxu0 %v2558
        %3881 = vmatpush.msra.mxu0 %v2557
        %3882 = vmatpush.msra.mxu0 %v2556
        %3883 = vmatmul.f32.gmra.mxu0 %v3844
        %v3884 = vpop.f32.mrf.mxu0
        %v3885 = vadd.f32 0.0, %v3884
        %3886 = vmatmul.f32.gmra.mxu0 %v3847
        %v3887 = vpop.f32.mrf.mxu0
        %v3888 = vadd.f32 0.0, %v3887
        %3889 = vmatmul.f32.gmra.mxu0 %v3850
        %v3890 = vpop.f32.mrf.mxu0
        %v3891 = vadd.f32 0.0, %v3890
        %3892 = vmatmul.f32.gmra.mxu0 %v3853
        %v3893 = vpop.f32.mrf.mxu0
        %v3894 = vadd.f32 0.0, %v3893
        %3895 = vmatmul.f32.gmra.mxu0 %v3856
        %v3896 = vpop.f32.mrf.mxu0
        %v3897 = vadd.f32 0.0, %v3896
        %3898 = vmatmul.f32.gmra.mxu0 %v3859
        %v3899 = vpop.f32.mrf.mxu0
        %v3900 = vadd.f32 0.0, %v3899
        %3901 = vmatmul.f32.gmra.mxu0 %v3862
        %v3902 = vpop.f32.mrf.mxu0
        %v3903 = vadd.f32 0.0, %v3902
        %3904 = vmatmul.f32.gmra.mxu0 %v3865
        %v3905 = vpop.f32.mrf.mxu0
        %v3906 = vadd.f32 0.0, %v3905
        %3907 = vdwg.mxu0
        %v3909 = vsel %vm666, %v3885, 0
        %v3912 = vsel %vm666, %v3888, 0
        %v3915 = vsel %vm666, %v3891, 0
        %v3918 = vsel %vm666, %v3894, 0
        %v3921 = vsel %vm666, %v3897, 0
        %v3924 = vsel %vm666, %v3900, 0
        %v3927 = vsel %vm666, %v3903, 0
        %v3930 = vsel %vm666, %v3906, 0
        %3932 = vmatpush.msra.mxu0 0.0
        %3933 = vmatpush.msra.mxu0 0.0
        %3934 = vmatpush.msra.mxu0 0.0
        %3935 = vmatpush.msra.mxu0 0.0
        %3936 = vmatpush.msra.mxu0 0.0
        %3937 = vmatpush.msra.mxu0 0.0
        %3938 = vmatpush.msra.mxu0 0.0
        %3939 = vmatpush.msra.mxu0 0.0
        %3940 = vmatpush.msra.mxu0 0.0
        %3941 = vmatpush.msra.mxu0 0.0
        %3942 = vmatpush.msra.mxu0 0.0
        %3943 = vmatpush.msra.mxu0 0.0
        %3944 = vmatpush.msra.mxu0 0.0
        %3945 = vmatpush.msra.mxu0 0.0
        %3946 = vmatpush.msra.mxu0 0.0
        %3947 = vmatpush.msra.mxu0 %v3842
        %3948 = vmatmul.f32.gmra.mxu0 %v3909
        %v3949 = vpop.f32.mrf.mxu0
        %v3950 = vadd.f32 0.0, %v3949
        %3951 = vmatmul.f32.gmra.mxu0 %v3912
        %v3952 = vpop.f32.mrf.mxu0
        %v3953 = vadd.f32 0.0, %v3952
        %3954 = vmatmul.f32.gmra.mxu0 %v3915
        %v3955 = vpop.f32.mrf.mxu0
        %v3956 = vadd.f32 0.0, %v3955
        %3957 = vmatmul.f32.gmra.mxu0 %v3918
        %v3958 = vpop.f32.mrf.mxu0
        %v3959 = vadd.f32 0.0, %v3958
        %3960 = vmatmul.f32.gmra.mxu0 %v3921
        %v3961 = vpop.f32.mrf.mxu0
        %v3962 = vadd.f32 0.0, %v3961
        %3963 = vmatmul.f32.gmra.mxu0 %v3924
        %v3964 = vpop.f32.mrf.mxu0
        %v3965 = vadd.f32 0.0, %v3964
        %3966 = vmatmul.f32.gmra.mxu0 %v3927
        %v3967 = vpop.f32.mrf.mxu0
        %v3968 = vadd.f32 0.0, %v3967
        %3969 = vmatmul.f32.gmra.mxu0 %v3930
        %v3970 = vpop.f32.mrf.mxu0
        %v3971 = vadd.f32 0.0, %v3970
        %3972 = vdwg.mxu0
        %v3973 = vadd.f32 %v3824, %v3950
        %v3974 = vadd.f32 %v3825, %v3953
        %v3975 = vadd.f32 %v3826, %v3956
        %v3976 = vadd.f32 %v3827, %v3959
        %v3977 = vadd.f32 %v3828, %v3962
        %v3978 = vadd.f32 %v3829, %v3965
        %v3979 = vadd.f32 %v3830, %v3968
        %v3980 = vadd.f32 %v3831, %v3971
        %s3981 = scalar_lea.vmem [#allocation2], 2944
        %v3982 = vld [vmem:[%s3981] sm:$0xff]
        %v3983 = vld [vmem:[%s3981 + $0x10] sm:$0xff]
        %v3984 = vld [vmem:[%s3981 + $0x20] sm:$0xff]
        %v3985 = vld [vmem:[%s3981 + $0x30] sm:$0xff]
        %v3986 = vld [vmem:[%s3981 + $0x40] sm:$0xff]
        %v3987 = vld [vmem:[%s3981 + $0x50] sm:$0xff]
        %v3988 = vld [vmem:[%s3981 + $0x60] sm:$0xff]
        %v3989 = vld [vmem:[%s3981 + $0x70] sm:$0xff]
        %s3990 = scalar_lea.vmem [#allocation4], 368
        %v3991 = vld [vmem:[%s3990] sm:$0xff]
        %v3993 = vsel %vm2569, %v3982, 0
        %v3996 = vsel %vm2569, %v3983, 0
        %v3999 = vsel %vm2569, %v3984, 0
        %v4002 = vsel %vm2569, %v3985, 0
        %v4005 = vsel %vm2569, %v3986, 0
        %v4008 = vsel %vm2569, %v3987, 0
        %v4011 = vsel %vm2569, %v3988, 0
        %v4014 = vsel %vm2569, %v3989, 0
        %4016 = vmatpush.msra.mxu0 0.0
        %4017 = vmatpush.msra.mxu0 0.0
        %4018 = vmatpush.msra.mxu0 0.0
        %4019 = vmatpush.msra.mxu0 0.0
        %4020 = vmatpush.msra.mxu0 0.0
        %4021 = vmatpush.msra.mxu0 0.0
        %4022 = vmatpush.msra.mxu0 0.0
        %4023 = vmatpush.msra.mxu0 0.0
        %4024 = vmatpush.msra.mxu0 %v2563
        %4025 = vmatpush.msra.mxu0 %v2562
        %4026 = vmatpush.msra.mxu0 %v2561
        %4027 = vmatpush.msra.mxu0 %v2560
        %4028 = vmatpush.msra.mxu0 %v2559
        %4029 = vmatpush.msra.mxu0 %v2558
        %4030 = vmatpush.msra.mxu0 %v2557
        %4031 = vmatpush.msra.mxu0 %v2556
        %4032 = vmatmul.f32.gmra.mxu0 %v3993
        %v4033 = vpop.f32.mrf.mxu0
        %v4034 = vadd.f32 0.0, %v4033
        %4035 = vmatmul.f32.gmra.mxu0 %v3996
        %v4036 = vpop.f32.mrf.mxu0
        %v4037 = vadd.f32 0.0, %v4036
        %4038 = vmatmul.f32.gmra.mxu0 %v3999
        %v4039 = vpop.f32.mrf.mxu0
        %v4040 = vadd.f32 0.0, %v4039
        %4041 = vmatmul.f32.gmra.mxu0 %v4002
        %v4042 = vpop.f32.mrf.mxu0
        %v4043 = vadd.f32 0.0, %v4042
        %4044 = vmatmul.f32.gmra.mxu0 %v4005
        %v4045 = vpop.f32.mrf.mxu0
        %v4046 = vadd.f32 0.0, %v4045
        %4047 = vmatmul.f32.gmra.mxu0 %v4008
        %v4048 = vpop.f32.mrf.mxu0
        %v4049 = vadd.f32 0.0, %v4048
        %4050 = vmatmul.f32.gmra.mxu0 %v4011
        %v4051 = vpop.f32.mrf.mxu0
        %v4052 = vadd.f32 0.0, %v4051
        %4053 = vmatmul.f32.gmra.mxu0 %v4014
        %v4054 = vpop.f32.mrf.mxu0
        %v4055 = vadd.f32 0.0, %v4054
        %4056 = vdwg.mxu0
        %v4058 = vsel %vm666, %v4034, 0
        %v4061 = vsel %vm666, %v4037, 0
        %v4064 = vsel %vm666, %v4040, 0
        %v4067 = vsel %vm666, %v4043, 0
        %v4070 = vsel %vm666, %v4046, 0
        %v4073 = vsel %vm666, %v4049, 0
        %v4076 = vsel %vm666, %v4052, 0
        %v4079 = vsel %vm666, %v4055, 0
        %4081 = vmatpush.msra.mxu0 0.0
        %4082 = vmatpush.msra.mxu0 0.0
        %4083 = vmatpush.msra.mxu0 0.0
        %4084 = vmatpush.msra.mxu0 0.0
        %4085 = vmatpush.msra.mxu0 0.0
        %4086 = vmatpush.msra.mxu0 0.0
        %4087 = vmatpush.msra.mxu0 0.0
        %4088 = vmatpush.msra.mxu0 0.0
        %4089 = vmatpush.msra.mxu0 0.0
        %4090 = vmatpush.msra.mxu0 0.0
        %4091 = vmatpush.msra.mxu0 0.0
        %4092 = vmatpush.msra.mxu0 0.0
        %4093 = vmatpush.msra.mxu0 0.0
        %4094 = vmatpush.msra.mxu0 0.0
        %4095 = vmatpush.msra.mxu0 0.0
        %4096 = vmatpush.msra.mxu0 %v3991
        %4097 = vmatmul.f32.gmra.mxu0 %v4058
        %v4098 = vpop.f32.mrf.mxu0
        %v4099 = vadd.f32 0.0, %v4098
        %4100 = vmatmul.f32.gmra.mxu0 %v4061
        %v4101 = vpop.f32.mrf.mxu0
        %v4102 = vadd.f32 0.0, %v4101
        %4103 = vmatmul.f32.gmra.mxu0 %v4064
        %v4104 = vpop.f32.mrf.mxu0
        %v4105 = vadd.f32 0.0, %v4104
        %4106 = vmatmul.f32.gmra.mxu0 %v4067
        %v4107 = vpop.f32.mrf.mxu0
        %v4108 = vadd.f32 0.0, %v4107
        %4109 = vmatmul.f32.gmra.mxu0 %v4070
        %v4110 = vpop.f32.mrf.mxu0
        %v4111 = vadd.f32 0.0, %v4110
        %4112 = vmatmul.f32.gmra.mxu0 %v4073
        %v4113 = vpop.f32.mrf.mxu0
        %v4114 = vadd.f32 0.0, %v4113
        %4115 = vmatmul.f32.gmra.mxu0 %v4076
        %v4116 = vpop.f32.mrf.mxu0
        %v4117 = vadd.f32 0.0, %v4116
        %4118 = vmatmul.f32.gmra.mxu0 %v4079
        %v4119 = vpop.f32.mrf.mxu0
        %v4120 = vadd.f32 0.0, %v4119
        %4121 = vdwg.mxu0
        %v4122 = vadd.f32 %v3973, %v4099
        %v4123 = vadd.f32 %v3974, %v4102
        %v4124 = vadd.f32 %v3975, %v4105
        %v4125 = vadd.f32 %v3976, %v4108
        %v4126 = vadd.f32 %v3977, %v4111
        %v4127 = vadd.f32 %v3978, %v4114
        %v4128 = vadd.f32 %v3979, %v4117
        %v4129 = vadd.f32 %v3980, %v4120
        %s4130 = scalar_lea.vmem [#allocation2], 3072
        %v4131 = vld [vmem:[%s4130] sm:$0xff]
        %v4132 = vld [vmem:[%s4130 + $0x10] sm:$0xff]
        %v4133 = vld [vmem:[%s4130 + $0x20] sm:$0xff]
        %v4134 = vld [vmem:[%s4130 + $0x30] sm:$0xff]
        %v4135 = vld [vmem:[%s4130 + $0x40] sm:$0xff]
        %v4136 = vld [vmem:[%s4130 + $0x50] sm:$0xff]
        %v4137 = vld [vmem:[%s4130 + $0x60] sm:$0xff]
        %v4138 = vld [vmem:[%s4130 + $0x70] sm:$0xff]
        %s4139 = scalar_lea.vmem [#allocation4], 384
        %v4140 = vld [vmem:[%s4139] sm:$0xff]
        %v4142 = vsel %vm2569, %v4131, 0
        %v4145 = vsel %vm2569, %v4132, 0
        %v4148 = vsel %vm2569, %v4133, 0
        %v4151 = vsel %vm2569, %v4134, 0
        %v4154 = vsel %vm2569, %v4135, 0
        %v4157 = vsel %vm2569, %v4136, 0
        %v4160 = vsel %vm2569, %v4137, 0
        %v4163 = vsel %vm2569, %v4138, 0
        %4165 = vmatpush.msra.mxu0 0.0
        %4166 = vmatpush.msra.mxu0 0.0
        %4167 = vmatpush.msra.mxu0 0.0
        %4168 = vmatpush.msra.mxu0 0.0
        %4169 = vmatpush.msra.mxu0 0.0
        %4170 = vmatpush.msra.mxu0 0.0
        %4171 = vmatpush.msra.mxu0 0.0
        %4172 = vmatpush.msra.mxu0 0.0
        %4173 = vmatpush.msra.mxu0 %v2563
        %4174 = vmatpush.msra.mxu0 %v2562
        %4175 = vmatpush.msra.mxu0 %v2561
        %4176 = vmatpush.msra.mxu0 %v2560
        %4177 = vmatpush.msra.mxu0 %v2559
        %4178 = vmatpush.msra.mxu0 %v2558
        %4179 = vmatpush.msra.mxu0 %v2557
        %4180 = vmatpush.msra.mxu0 %v2556
        %4181 = vmatmul.f32.gmra.mxu0 %v4142
        %v4182 = vpop.f32.mrf.mxu0
        %v4183 = vadd.f32 0.0, %v4182
        %4184 = vmatmul.f32.gmra.mxu0 %v4145
        %v4185 = vpop.f32.mrf.mxu0
        %v4186 = vadd.f32 0.0, %v4185
        %4187 = vmatmul.f32.gmra.mxu0 %v4148
        %v4188 = vpop.f32.mrf.mxu0
        %v4189 = vadd.f32 0.0, %v4188
        %4190 = vmatmul.f32.gmra.mxu0 %v4151
        %v4191 = vpop.f32.mrf.mxu0
        %v4192 = vadd.f32 0.0, %v4191
        %4193 = vmatmul.f32.gmra.mxu0 %v4154
        %v4194 = vpop.f32.mrf.mxu0
        %v4195 = vadd.f32 0.0, %v4194
        %4196 = vmatmul.f32.gmra.mxu0 %v4157
        %v4197 = vpop.f32.mrf.mxu0
        %v4198 = vadd.f32 0.0, %v4197
        %4199 = vmatmul.f32.gmra.mxu0 %v4160
        %v4200 = vpop.f32.mrf.mxu0
        %v4201 = vadd.f32 0.0, %v4200
        %4202 = vmatmul.f32.gmra.mxu0 %v4163
        %v4203 = vpop.f32.mrf.mxu0
        %v4204 = vadd.f32 0.0, %v4203
        %4205 = vdwg.mxu0
        %v4207 = vsel %vm666, %v4183, 0
        %v4210 = vsel %vm666, %v4186, 0
        %v4213 = vsel %vm666, %v4189, 0
        %v4216 = vsel %vm666, %v4192, 0
        %v4219 = vsel %vm666, %v4195, 0
        %v4222 = vsel %vm666, %v4198, 0
        %v4225 = vsel %vm666, %v4201, 0
        %v4228 = vsel %vm666, %v4204, 0
        %4230 = vmatpush.msra.mxu0 0.0
        %4231 = vmatpush.msra.mxu0 0.0
        %4232 = vmatpush.msra.mxu0 0.0
        %4233 = vmatpush.msra.mxu0 0.0
        %4234 = vmatpush.msra.mxu0 0.0
        %4235 = vmatpush.msra.mxu0 0.0
        %4236 = vmatpush.msra.mxu0 0.0
        %4237 = vmatpush.msra.mxu0 0.0
        %4238 = vmatpush.msra.mxu0 0.0
        %4239 = vmatpush.msra.mxu0 0.0
        %4240 = vmatpush.msra.mxu0 0.0
        %4241 = vmatpush.msra.mxu0 0.0
        %4242 = vmatpush.msra.mxu0 0.0
        %4243 = vmatpush.msra.mxu0 0.0
        %4244 = vmatpush.msra.mxu0 0.0
        %4245 = vmatpush.msra.mxu0 %v4140
        %4246 = vmatmul.f32.gmra.mxu0 %v4207
        %v4247 = vpop.f32.mrf.mxu0
        %v4248 = vadd.f32 0.0, %v4247
        %4249 = vmatmul.f32.gmra.mxu0 %v4210
        %v4250 = vpop.f32.mrf.mxu0
        %v4251 = vadd.f32 0.0, %v4250
        %4252 = vmatmul.f32.gmra.mxu0 %v4213
        %v4253 = vpop.f32.mrf.mxu0
        %v4254 = vadd.f32 0.0, %v4253
        %4255 = vmatmul.f32.gmra.mxu0 %v4216
        %v4256 = vpop.f32.mrf.mxu0
        %v4257 = vadd.f32 0.0, %v4256
        %4258 = vmatmul.f32.gmra.mxu0 %v4219
        %v4259 = vpop.f32.mrf.mxu0
        %v4260 = vadd.f32 0.0, %v4259
        %4261 = vmatmul.f32.gmra.mxu0 %v4222
        %v4262 = vpop.f32.mrf.mxu0
        %v4263 = vadd.f32 0.0, %v4262
        %4264 = vmatmul.f32.gmra.mxu0 %v4225
        %v4265 = vpop.f32.mrf.mxu0
        %v4266 = vadd.f32 0.0, %v4265
        %4267 = vmatmul.f32.gmra.mxu0 %v4228
        %v4268 = vpop.f32.mrf.mxu0
        %v4269 = vadd.f32 0.0, %v4268
        %4270 = vdwg.mxu0
        %v4271 = vadd.f32 %v4122, %v4248
        %v4272 = vadd.f32 %v4123, %v4251
        %v4273 = vadd.f32 %v4124, %v4254
        %v4274 = vadd.f32 %v4125, %v4257
        %v4275 = vadd.f32 %v4126, %v4260
        %v4276 = vadd.f32 %v4127, %v4263
        %v4277 = vadd.f32 %v4128, %v4266
        %v4278 = vadd.f32 %v4129, %v4269
        %s4279 = scalar_lea.vmem [#allocation2], 3200
        %v4280 = vld [vmem:[%s4279] sm:$0xff]
        %v4281 = vld [vmem:[%s4279 + $0x10] sm:$0xff]
        %v4282 = vld [vmem:[%s4279 + $0x20] sm:$0xff]
        %v4283 = vld [vmem:[%s4279 + $0x30] sm:$0xff]
        %v4284 = vld [vmem:[%s4279 + $0x40] sm:$0xff]
        %v4285 = vld [vmem:[%s4279 + $0x50] sm:$0xff]
        %v4286 = vld [vmem:[%s4279 + $0x60] sm:$0xff]
        %v4287 = vld [vmem:[%s4279 + $0x70] sm:$0xff]
        %s4288 = scalar_lea.vmem [#allocation4], 400
        %v4289 = vld [vmem:[%s4288] sm:$0xff]
        %v4291 = vsel %vm2569, %v4280, 0
        %v4294 = vsel %vm2569, %v4281, 0
        %v4297 = vsel %vm2569, %v4282, 0
        %v4300 = vsel %vm2569, %v4283, 0
        %v4303 = vsel %vm2569, %v4284, 0
        %v4306 = vsel %vm2569, %v4285, 0
        %v4309 = vsel %vm2569, %v4286, 0
        %v4312 = vsel %vm2569, %v4287, 0
        %4314 = vmatpush.msra.mxu0 0.0
        %4315 = vmatpush.msra.mxu0 0.0
        %4316 = vmatpush.msra.mxu0 0.0
        %4317 = vmatpush.msra.mxu0 0.0
        %4318 = vmatpush.msra.mxu0 0.0
        %4319 = vmatpush.msra.mxu0 0.0
        %4320 = vmatpush.msra.mxu0 0.0
        %4321 = vmatpush.msra.mxu0 0.0
        %4322 = vmatpush.msra.mxu0 %v2563
        %4323 = vmatpush.msra.mxu0 %v2562
        %4324 = vmatpush.msra.mxu0 %v2561
        %4325 = vmatpush.msra.mxu0 %v2560
        %4326 = vmatpush.msra.mxu0 %v2559
        %4327 = vmatpush.msra.mxu0 %v2558
        %4328 = vmatpush.msra.mxu0 %v2557
        %4329 = vmatpush.msra.mxu0 %v2556
        %4330 = vmatmul.f32.gmra.mxu0 %v4291
        %v4331 = vpop.f32.mrf.mxu0
        %v4332 = vadd.f32 0.0, %v4331
        %4333 = vmatmul.f32.gmra.mxu0 %v4294
        %v4334 = vpop.f32.mrf.mxu0
        %v4335 = vadd.f32 0.0, %v4334
        %4336 = vmatmul.f32.gmra.mxu0 %v4297
        %v4337 = vpop.f32.mrf.mxu0
        %v4338 = vadd.f32 0.0, %v4337
        %4339 = vmatmul.f32.gmra.mxu0 %v4300
        %v4340 = vpop.f32.mrf.mxu0
        %v4341 = vadd.f32 0.0, %v4340
        %4342 = vmatmul.f32.gmra.mxu0 %v4303
        %v4343 = vpop.f32.mrf.mxu0
        %v4344 = vadd.f32 0.0, %v4343
        %4345 = vmatmul.f32.gmra.mxu0 %v4306
        %v4346 = vpop.f32.mrf.mxu0
        %v4347 = vadd.f32 0.0, %v4346
        %4348 = vmatmul.f32.gmra.mxu0 %v4309
        %v4349 = vpop.f32.mrf.mxu0
        %v4350 = vadd.f32 0.0, %v4349
        %4351 = vmatmul.f32.gmra.mxu0 %v4312
        %v4352 = vpop.f32.mrf.mxu0
        %v4353 = vadd.f32 0.0, %v4352
        %4354 = vdwg.mxu0
        %v4356 = vsel %vm666, %v4332, 0
        %v4359 = vsel %vm666, %v4335, 0
        %v4362 = vsel %vm666, %v4338, 0
        %v4365 = vsel %vm666, %v4341, 0
        %v4368 = vsel %vm666, %v4344, 0
        %v4371 = vsel %vm666, %v4347, 0
        %v4374 = vsel %vm666, %v4350, 0
        %v4377 = vsel %vm666, %v4353, 0
        %4379 = vmatpush.msra.mxu0 0.0
        %4380 = vmatpush.msra.mxu0 0.0
        %4381 = vmatpush.msra.mxu0 0.0
        %4382 = vmatpush.msra.mxu0 0.0
        %4383 = vmatpush.msra.mxu0 0.0
        %4384 = vmatpush.msra.mxu0 0.0
        %4385 = vmatpush.msra.mxu0 0.0
        %4386 = vmatpush.msra.mxu0 0.0
        %4387 = vmatpush.msra.mxu0 0.0
        %4388 = vmatpush.msra.mxu0 0.0
        %4389 = vmatpush.msra.mxu0 0.0
        %4390 = vmatpush.msra.mxu0 0.0
        %4391 = vmatpush.msra.mxu0 0.0
        %4392 = vmatpush.msra.mxu0 0.0
        %4393 = vmatpush.msra.mxu0 0.0
        %4394 = vmatpush.msra.mxu0 %v4289
        %4395 = vmatmul.f32.gmra.mxu0 %v4356
        %v4396 = vpop.f32.mrf.mxu0
        %v4397 = vadd.f32 0.0, %v4396
        %4398 = vmatmul.f32.gmra.mxu0 %v4359
        %v4399 = vpop.f32.mrf.mxu0
        %v4400 = vadd.f32 0.0, %v4399
        %4401 = vmatmul.f32.gmra.mxu0 %v4362
        %v4402 = vpop.f32.mrf.mxu0
        %v4403 = vadd.f32 0.0, %v4402
        %4404 = vmatmul.f32.gmra.mxu0 %v4365
        %v4405 = vpop.f32.mrf.mxu0
        %v4406 = vadd.f32 0.0, %v4405
        %4407 = vmatmul.f32.gmra.mxu0 %v4368
        %v4408 = vpop.f32.mrf.mxu0
        %v4409 = vadd.f32 0.0, %v4408
        %4410 = vmatmul.f32.gmra.mxu0 %v4371
        %v4411 = vpop.f32.mrf.mxu0
        %v4412 = vadd.f32 0.0, %v4411
        %4413 = vmatmul.f32.gmra.mxu0 %v4374
        %v4414 = vpop.f32.mrf.mxu0
        %v4415 = vadd.f32 0.0, %v4414
        %4416 = vmatmul.f32.gmra.mxu0 %v4377
        %v4417 = vpop.f32.mrf.mxu0
        %v4418 = vadd.f32 0.0, %v4417
        %4419 = vdwg.mxu0
        %v4420 = vadd.f32 %v4271, %v4397
        %v4421 = vadd.f32 %v4272, %v4400
        %v4422 = vadd.f32 %v4273, %v4403
        %v4423 = vadd.f32 %v4274, %v4406
        %v4424 = vadd.f32 %v4275, %v4409
        %v4425 = vadd.f32 %v4276, %v4412
        %v4426 = vadd.f32 %v4277, %v4415
        %v4427 = vadd.f32 %v4278, %v4418
        %s4428 = scalar_lea.vmem [#allocation2], 3328
        %v4429 = vld [vmem:[%s4428] sm:$0xff]
        %v4430 = vld [vmem:[%s4428 + $0x10] sm:$0xff]
        %v4431 = vld [vmem:[%s4428 + $0x20] sm:$0xff]
        %v4432 = vld [vmem:[%s4428 + $0x30] sm:$0xff]
        %v4433 = vld [vmem:[%s4428 + $0x40] sm:$0xff]
        %v4434 = vld [vmem:[%s4428 + $0x50] sm:$0xff]
        %v4435 = vld [vmem:[%s4428 + $0x60] sm:$0xff]
        %v4436 = vld [vmem:[%s4428 + $0x70] sm:$0xff]
        %s4437 = scalar_lea.vmem [#allocation4], 416
        %v4438 = vld [vmem:[%s4437] sm:$0xff]
        %v4440 = vsel %vm2569, %v4429, 0
        %v4443 = vsel %vm2569, %v4430, 0
        %v4446 = vsel %vm2569, %v4431, 0
        %v4449 = vsel %vm2569, %v4432, 0
        %v4452 = vsel %vm2569, %v4433, 0
        %v4455 = vsel %vm2569, %v4434, 0
        %v4458 = vsel %vm2569, %v4435, 0
        %v4461 = vsel %vm2569, %v4436, 0
        %4463 = vmatpush.msra.mxu0 0.0
        %4464 = vmatpush.msra.mxu0 0.0
        %4465 = vmatpush.msra.mxu0 0.0
        %4466 = vmatpush.msra.mxu0 0.0
        %4467 = vmatpush.msra.mxu0 0.0
        %4468 = vmatpush.msra.mxu0 0.0
        %4469 = vmatpush.msra.mxu0 0.0
        %4470 = vmatpush.msra.mxu0 0.0
        %4471 = vmatpush.msra.mxu0 %v2563
        %4472 = vmatpush.msra.mxu0 %v2562
        %4473 = vmatpush.msra.mxu0 %v2561
        %4474 = vmatpush.msra.mxu0 %v2560
        %4475 = vmatpush.msra.mxu0 %v2559
        %4476 = vmatpush.msra.mxu0 %v2558
        %4477 = vmatpush.msra.mxu0 %v2557
        %4478 = vmatpush.msra.mxu0 %v2556
        %4479 = vmatmul.f32.gmra.mxu0 %v4440
        %v4480 = vpop.f32.mrf.mxu0
        %v4481 = vadd.f32 0.0, %v4480
        %4482 = vmatmul.f32.gmra.mxu0 %v4443
        %v4483 = vpop.f32.mrf.mxu0
        %v4484 = vadd.f32 0.0, %v4483
        %4485 = vmatmul.f32.gmra.mxu0 %v4446
        %v4486 = vpop.f32.mrf.mxu0
        %v4487 = vadd.f32 0.0, %v4486
        %4488 = vmatmul.f32.gmra.mxu0 %v4449
        %v4489 = vpop.f32.mrf.mxu0
        %v4490 = vadd.f32 0.0, %v4489
        %4491 = vmatmul.f32.gmra.mxu0 %v4452
        %v4492 = vpop.f32.mrf.mxu0
        %v4493 = vadd.f32 0.0, %v4492
        %4494 = vmatmul.f32.gmra.mxu0 %v4455
        %v4495 = vpop.f32.mrf.mxu0
        %v4496 = vadd.f32 0.0, %v4495
        %4497 = vmatmul.f32.gmra.mxu0 %v4458
        %v4498 = vpop.f32.mrf.mxu0
        %v4499 = vadd.f32 0.0, %v4498
        %4500 = vmatmul.f32.gmra.mxu0 %v4461
        %v4501 = vpop.f32.mrf.mxu0
        %v4502 = vadd.f32 0.0, %v4501
        %4503 = vdwg.mxu0
        %v4505 = vsel %vm666, %v4481, 0
        %v4508 = vsel %vm666, %v4484, 0
        %v4511 = vsel %vm666, %v4487, 0
        %v4514 = vsel %vm666, %v4490, 0
        %v4517 = vsel %vm666, %v4493, 0
        %v4520 = vsel %vm666, %v4496, 0
        %v4523 = vsel %vm666, %v4499, 0
        %v4526 = vsel %vm666, %v4502, 0
        %4528 = vmatpush.msra.mxu0 0.0
        %4529 = vmatpush.msra.mxu0 0.0
        %4530 = vmatpush.msra.mxu0 0.0
        %4531 = vmatpush.msra.mxu0 0.0
        %4532 = vmatpush.msra.mxu0 0.0
        %4533 = vmatpush.msra.mxu0 0.0
        %4534 = vmatpush.msra.mxu0 0.0
        %4535 = vmatpush.msra.mxu0 0.0
        %4536 = vmatpush.msra.mxu0 0.0
        %4537 = vmatpush.msra.mxu0 0.0
        %4538 = vmatpush.msra.mxu0 0.0
        %4539 = vmatpush.msra.mxu0 0.0
        %4540 = vmatpush.msra.mxu0 0.0
        %4541 = vmatpush.msra.mxu0 0.0
        %4542 = vmatpush.msra.mxu0 0.0
        %4543 = vmatpush.msra.mxu0 %v4438
        %4544 = vmatmul.f32.gmra.mxu0 %v4505
        %v4545 = vpop.f32.mrf.mxu0
        %v4546 = vadd.f32 0.0, %v4545
        %4547 = vmatmul.f32.gmra.mxu0 %v4508
        %v4548 = vpop.f32.mrf.mxu0
        %v4549 = vadd.f32 0.0, %v4548
        %4550 = vmatmul.f32.gmra.mxu0 %v4511
        %v4551 = vpop.f32.mrf.mxu0
        %v4552 = vadd.f32 0.0, %v4551
        %4553 = vmatmul.f32.gmra.mxu0 %v4514
        %v4554 = vpop.f32.mrf.mxu0
        %v4555 = vadd.f32 0.0, %v4554
        %4556 = vmatmul.f32.gmra.mxu0 %v4517
        %v4557 = vpop.f32.mrf.mxu0
        %v4558 = vadd.f32 0.0, %v4557
        %4559 = vmatmul.f32.gmra.mxu0 %v4520
        %v4560 = vpop.f32.mrf.mxu0
        %v4561 = vadd.f32 0.0, %v4560
        %4562 = vmatmul.f32.gmra.mxu0 %v4523
        %v4563 = vpop.f32.mrf.mxu0
        %v4564 = vadd.f32 0.0, %v4563
        %4565 = vmatmul.f32.gmra.mxu0 %v4526
        %v4566 = vpop.f32.mrf.mxu0
        %v4567 = vadd.f32 0.0, %v4566
        %4568 = vdwg.mxu0
        %v4569 = vadd.f32 %v4420, %v4546
        %v4570 = vadd.f32 %v4421, %v4549
        %v4571 = vadd.f32 %v4422, %v4552
        %v4572 = vadd.f32 %v4423, %v4555
        %v4573 = vadd.f32 %v4424, %v4558
        %v4574 = vadd.f32 %v4425, %v4561
        %v4575 = vadd.f32 %v4426, %v4564
        %v4576 = vadd.f32 %v4427, %v4567
        %s4577 = scalar_lea.vmem %s6, 12
        %v4578 = vld [vmem:[%s4577] sm:$0x1]
        %v4579 = vperm.slane %v4578, 0
        %v4580 = vadd.f32 %v4569, %v4579
        %v4581 = vadd.f32 %v4570, %v4579
        %v4582 = vadd.f32 %v4571, %v4579
        %v4583 = vadd.f32 %v4572, %v4579
        %v4584 = vadd.f32 %v4573, %v4579
        %v4585 = vadd.f32 %v4574, %v4579
        %v4586 = vadd.f32 %v4575, %v4579
        %v4587 = vadd.f32 %v4576, %v4579
        %v4588 = vsel %vm666, %v4580, 0.0
        %v4589 = vsel %vm666, %v4581, 0.0
        %v4590 = vadd.f32 %v4588, %v4589
        %v4591 = vsel %vm666, %v4582, 0.0
        %v4592 = vadd.f32 %v4590, %v4591
        %v4593 = vsel %vm666, %v4583, 0.0
        %v4594 = vadd.f32 %v4592, %v4593
        %v4595 = vsel %vm666, %v4584, 0.0
        %v4596 = vadd.f32 %v4594, %v4595
        %v4597 = vsel %vm666, %v4585, 0.0
        %v4598 = vadd.f32 %v4596, %v4597
        %v4599 = vsel %vm666, %v4586, 0.0
        %v4600 = vadd.f32 %v4598, %v4599
        %v4601 = vsel %vm666, %v4587, 0.0
        %v4602 = vadd.f32 %v4600, %v4601
        %v4603 = vrot.slane %v4602, 4
        %v4604 = vadd.f32 %v4602, %v4603
        %v4605 = vrot.slane %v4604, 2
        %v4606 = vadd.f32 %v4604, %v4605
        %v4607 = vrot.slane %v4606, 1
        %v4608 = vadd.f32 %v4606, %v4607
        %v4609 = vmul.f32 %v4608, %v2470
        %s4610 = scalar_lea.vmem %s4, 96
        %v4611 = vld [vmem:[%s4610] sm:$0xff]
        %v4612 = vld [vmem:[%s4577 + $0x1] sm:$0x1]
        %v4614 = vsel %vm666, %v4609, 0
        %4616 = vmatpush.msra.mxu0 0.0
        %4617 = vmatpush.msra.mxu0 0.0
        %4618 = vmatpush.msra.mxu0 0.0
        %4619 = vmatpush.msra.mxu0 0.0
        %4620 = vmatpush.msra.mxu0 0.0
        %4621 = vmatpush.msra.mxu0 0.0
        %4622 = vmatpush.msra.mxu0 0.0
        %4623 = vmatpush.msra.mxu0 0.0
        %4624 = vmatpush.msra.mxu0 0.0
        %4625 = vmatpush.msra.mxu0 0.0
        %4626 = vmatpush.msra.mxu0 0.0
        %4627 = vmatpush.msra.mxu0 0.0
        %4628 = vmatpush.msra.mxu0 0.0
        %4629 = vmatpush.msra.mxu0 0.0
        %4630 = vmatpush.msra.mxu0 0.0
        %4631 = vmatpush.msra.mxu0 %v4611
        %4632 = vmatmul.f32.gmra.mxu0 %v4614
        %v4633 = vpop.f32.mrf.mxu0
        %v4634 = vadd.f32 %v4612, %v4633
        %4635 = vdwg.mxu0
        %v4636 = vmax.f32 %v4634, 0.0
        %s4637 = scalar_lea.vmem [#allocation6], 24
        %v4638 = vld [vmem:[%s4637] sm:$0x3]
        %v4639 = vld [vmem:[%s4577 + $0x2] sm:$0x1]
        %v4641 = vsel %vm772, %v4636, 0
        %v4644 = vsel %vm776, %v4638, 0
        %4646 = vmatpush.msra.mxu0 0.0
        %4647 = vmatpush.msra.mxu0 0.0
        %4648 = vmatpush.msra.mxu0 0.0
        %4649 = vmatpush.msra.mxu0 0.0
        %4650 = vmatpush.msra.mxu0 0.0
        %4651 = vmatpush.msra.mxu0 0.0
        %4652 = vmatpush.msra.mxu0 0.0
        %4653 = vmatpush.msra.mxu0 0.0
        %4654 = vmatpush.msra.mxu0 0.0
        %4655 = vmatpush.msra.mxu0 0.0
        %4656 = vmatpush.msra.mxu0 0.0
        %4657 = vmatpush.msra.mxu0 0.0
        %4658 = vmatpush.msra.mxu0 0.0
        %4659 = vmatpush.msra.mxu0 0.0
        %4660 = vmatpush.msra.mxu0 0.0
        %4661 = vmatpush.msra.mxu0 %v4644
        %4662 = vmatmul.f32.gmra.mxu0 %v4641
        %v4663 = vpop.f32.mrf.mxu0
        %v4664 = vadd.f32 %v4639, %v4663
        %4665 = vdwg.mxu0
        %v4666 = vxor.u32 %v4664, 2147483648
        %v4667 = vmul.f32 %v4666, 1.442695
        %v4668 = vpow.pop %v4667
        %v4669 = vadd.f32 %v4668, 1.0
        %v4670 = vrcp.pop %v4669
        %v4671 = vmul.f32 %v4669, %v4670
        %v4672 = vsub.f32 1.0, %v4671
        %v4673 = vmul.f32 %v4670, %v4672
        %v4674 = vadd.f32 %v4670, %v4673
        %vm4675 = vweird.f32 %v4669
        %vm4676 = vweird.f32 %v4670
        %vm4677 = vmor %vm4675, %vm4676
        %v4678 = vsel %vm4677, %v4670, %v4674
        %v4679 = vand.u32 2147483647, %v4669
        %vm4680 = vcmp.eq.f32.partialorder %v4679, 8.507059e+37
        %v4681 = vand.u32 %v4669, 2147483648
        %v4682 = vor.u32 1.1754944e-38, %v4681
        %v4683 = vsel %vm4680, %v4682, %v4678
        %v4684 = vmul.f32 1.0, %v4683
        %v4685 = vperm.slane %v4684, 0
        %v4686 = vmul.f32 %v4580, %v4685
        %v4687 = vmul.f32 %v4581, %v4685
        %v4688 = vmul.f32 %v4582, %v4685
        %v4689 = vmul.f32 %v4583, %v4685
        %v4690 = vmul.f32 %v4584, %v4685
        %v4691 = vmul.f32 %v4585, %v4685
        %v4692 = vmul.f32 %v4586, %v4685
        %v4693 = vmul.f32 %v4587, %v4685
        %v4694 = vmax.f32 %v4686, 0.0
        %v4695 = vmax.f32 %v4687, 0.0
        %v4696 = vmax.f32 %v4688, 0.0
        %v4697 = vmax.f32 %v4689, 0.0
        %v4698 = vmax.f32 %v4690, 0.0
        %v4699 = vmax.f32 %v4691, 0.0
        %v4700 = vmax.f32 %v4692, 0.0
        %v4701 = vmax.f32 %v4693, 0.0
        %s4702 = scalar_lea.vmem [#allocation4], 576
        %v4703 = vld [vmem:[%s4702] sm:$0xff]
        %4704 = vmatpush.msra.mxu0 0.0
        %4705 = vmatpush.msra.mxu0 0.0
        %4706 = vmatpush.msra.mxu0 0.0
        %4707 = vmatpush.msra.mxu0 0.0
        %4708 = vmatpush.msra.mxu0 0.0
        %4709 = vmatpush.msra.mxu0 0.0
        %4710 = vmatpush.msra.mxu0 0.0
        %4711 = vmatpush.msra.mxu0 0.0
        %4712 = vmatpush.msra.mxu0 %v4701
        %4713 = vmatpush.msra.mxu0 %v4700
        %4714 = vmatpush.msra.mxu0 %v4699
        %4715 = vmatpush.msra.mxu0 %v4698
        %4716 = vmatpush.msra.mxu0 %v4697
        %4717 = vmatpush.msra.mxu0 %v4696
        %4718 = vmatpush.msra.mxu0 %v4695
        %4719 = vmatpush.msra.mxu0 %v4694
        %4720 = vmatmul.f32.gmra.mxu0 %v2571
        %v4721 = vpop.f32.mrf.mxu0
        %v4722 = vadd.f32 0.0, %v4721
        %4723 = vmatmul.f32.gmra.mxu0 %v2574
        %v4724 = vpop.f32.mrf.mxu0
        %v4725 = vadd.f32 0.0, %v4724
        %4726 = vdwg.mxu0
        %s4727 = scalar_lea.vmem [#allocation4], 592
        %v4728 = vld [vmem:[%s4727] sm:$0xff]
        %4729 = vmatpush.msra.mxu0 0.0
        %4730 = vmatpush.msra.mxu0 0.0
        %4731 = vmatpush.msra.mxu0 0.0
        %4732 = vmatpush.msra.mxu0 0.0
        %4733 = vmatpush.msra.mxu0 0.0
        %4734 = vmatpush.msra.mxu0 0.0
        %4735 = vmatpush.msra.mxu0 0.0
        %4736 = vmatpush.msra.mxu0 0.0
        %4737 = vmatpush.msra.mxu0 %v4701
        %4738 = vmatpush.msra.mxu0 %v4700
        %4739 = vmatpush.msra.mxu0 %v4699
        %4740 = vmatpush.msra.mxu0 %v4698
        %4741 = vmatpush.msra.mxu0 %v4697
        %4742 = vmatpush.msra.mxu0 %v4696
        %4743 = vmatpush.msra.mxu0 %v4695
        %4744 = vmatpush.msra.mxu0 %v4694
        %4745 = vmatmul.f32.gmra.mxu0 %v2605
        %v4746 = vpop.f32.mrf.mxu0
        %v4747 = vadd.f32 0.0, %v4746
        %4748 = vmatmul.f32.gmra.mxu0 %v2608
        %v4749 = vpop.f32.mrf.mxu0
        %v4750 = vadd.f32 0.0, %v4749
        %4751 = vdwg.mxu0
        %v4753 = vsel %vm666, %v4747, 0
        %v4756 = vsel %vm666, %v4750, 0
        %4758 = vmatpush.msra.mxu0 0.0
        %4759 = vmatpush.msra.mxu0 0.0
        %4760 = vmatpush.msra.mxu0 0.0
        %4761 = vmatpush.msra.mxu0 0.0
        %4762 = vmatpush.msra.mxu0 0.0
        %4763 = vmatpush.msra.mxu0 0.0
        %4764 = vmatpush.msra.mxu0 0.0
        %4765 = vmatpush.msra.mxu0 0.0
        %4766 = vmatpush.msra.mxu0 0.0
        %4767 = vmatpush.msra.mxu0 0.0
        %4768 = vmatpush.msra.mxu0 0.0
        %4769 = vmatpush.msra.mxu0 0.0
        %4770 = vmatpush.msra.mxu0 0.0
        %4771 = vmatpush.msra.mxu0 0.0
        %4772 = vmatpush.msra.mxu0 0.0
        %4773 = vmatpush.msra.mxu0 %v4728
        %4774 = vmatmul.f32.gmra.mxu0 %v4753
        %v4775 = vpop.f32.mrf.mxu0
        %v4776 = vadd.f32 0.0, %v4775
        %4777 = vmatmul.f32.gmra.mxu0 %v4756
        %v4778 = vpop.f32.mrf.mxu0
        %v4779 = vadd.f32 0.0, %v4778
        %4780 = vdwg.mxu0
        %v4782 = vsel %vm666, %v4722, 0
        %v4785 = vsel %vm666, %v4725, 0
        %4787 = vmatpush.msra.mxu0 0.0
        %4788 = vmatpush.msra.mxu0 0.0
        %4789 = vmatpush.msra.mxu0 0.0
        %4790 = vmatpush.msra.mxu0 0.0
        %4791 = vmatpush.msra.mxu0 0.0
        %4792 = vmatpush.msra.mxu0 0.0
        %4793 = vmatpush.msra.mxu0 0.0
        %4794 = vmatpush.msra.mxu0 0.0
        %4795 = vmatpush.msra.mxu0 0.0
        %4796 = vmatpush.msra.mxu0 0.0
        %4797 = vmatpush.msra.mxu0 0.0
        %4798 = vmatpush.msra.mxu0 0.0
        %4799 = vmatpush.msra.mxu0 0.0
        %4800 = vmatpush.msra.mxu0 0.0
        %4801 = vmatpush.msra.mxu0 0.0
        %4802 = vmatpush.msra.mxu0 %v4703
        %4803 = vmatmul.f32.gmra.mxu0 %v4782
        %v4804 = vpop.f32.mrf.mxu0
        %v4805 = vadd.f32 %v4776, %v4804
        %4806 = vmatmul.f32.gmra.mxu0 %v4785
        %v4807 = vpop.f32.mrf.mxu0
        %v4808 = vadd.f32 %v4779, %v4807
        %4809 = vdwg.mxu0
        %s4810 = scalar_lea.vmem [#allocation4], 608
        %v4811 = vld [vmem:[%s4810] sm:$0xff]
        %4812 = vmatpush.msra.mxu0 0.0
        %4813 = vmatpush.msra.mxu0 0.0
        %4814 = vmatpush.msra.mxu0 0.0
        %4815 = vmatpush.msra.mxu0 0.0
        %4816 = vmatpush.msra.mxu0 0.0
        %4817 = vmatpush.msra.mxu0 0.0
        %4818 = vmatpush.msra.mxu0 0.0
        %4819 = vmatpush.msra.mxu0 0.0
        %4820 = vmatpush.msra.mxu0 %v4701
        %4821 = vmatpush.msra.mxu0 %v4700
        %4822 = vmatpush.msra.mxu0 %v4699
        %4823 = vmatpush.msra.mxu0 %v4698
        %4824 = vmatpush.msra.mxu0 %v4697
        %4825 = vmatpush.msra.mxu0 %v4696
        %4826 = vmatpush.msra.mxu0 %v4695
        %4827 = vmatpush.msra.mxu0 %v4694
        %4828 = vmatmul.f32.gmra.mxu0 %v2697
        %v4829 = vpop.f32.mrf.mxu0
        %v4830 = vadd.f32 0.0, %v4829
        %4831 = vmatmul.f32.gmra.mxu0 %v2700
        %v4832 = vpop.f32.mrf.mxu0
        %v4833 = vadd.f32 0.0, %v4832
        %4834 = vdwg.mxu0
        %v4836 = vsel %vm666, %v4830, 0
        %v4839 = vsel %vm666, %v4833, 0
        %4841 = vmatpush.msra.mxu0 0.0
        %4842 = vmatpush.msra.mxu0 0.0
        %4843 = vmatpush.msra.mxu0 0.0
        %4844 = vmatpush.msra.mxu0 0.0
        %4845 = vmatpush.msra.mxu0 0.0
        %4846 = vmatpush.msra.mxu0 0.0
        %4847 = vmatpush.msra.mxu0 0.0
        %4848 = vmatpush.msra.mxu0 0.0
        %4849 = vmatpush.msra.mxu0 0.0
        %4850 = vmatpush.msra.mxu0 0.0
        %4851 = vmatpush.msra.mxu0 0.0
        %4852 = vmatpush.msra.mxu0 0.0
        %4853 = vmatpush.msra.mxu0 0.0
        %4854 = vmatpush.msra.mxu0 0.0
        %4855 = vmatpush.msra.mxu0 0.0
        %4856 = vmatpush.msra.mxu0 %v4811
        %4857 = vmatmul.f32.gmra.mxu0 %v4836
        %v4858 = vpop.f32.mrf.mxu0
        %v4859 = vadd.f32 0.0, %v4858
        %4860 = vmatmul.f32.gmra.mxu0 %v4839
        %v4861 = vpop.f32.mrf.mxu0
        %v4862 = vadd.f32 0.0, %v4861
        %4863 = vdwg.mxu0
        %v4864 = vadd.f32 %v4805, %v4859
        %v4865 = vadd.f32 %v4808, %v4862
        %s4866 = scalar_lea.vmem [#allocation4], 624
        %v4867 = vld [vmem:[%s4866] sm:$0xff]
        %4868 = vmatpush.msra.mxu0 0.0
        %4869 = vmatpush.msra.mxu0 0.0
        %4870 = vmatpush.msra.mxu0 0.0
        %4871 = vmatpush.msra.mxu0 0.0
        %4872 = vmatpush.msra.mxu0 0.0
        %4873 = vmatpush.msra.mxu0 0.0
        %4874 = vmatpush.msra.mxu0 0.0
        %4875 = vmatpush.msra.mxu0 0.0
        %4876 = vmatpush.msra.mxu0 %v4701
        %4877 = vmatpush.msra.mxu0 %v4700
        %4878 = vmatpush.msra.mxu0 %v4699
        %4879 = vmatpush.msra.mxu0 %v4698
        %4880 = vmatpush.msra.mxu0 %v4697
        %4881 = vmatpush.msra.mxu0 %v4696
        %4882 = vmatpush.msra.mxu0 %v4695
        %4883 = vmatpush.msra.mxu0 %v4694
        %4884 = vmatmul.f32.gmra.mxu0 %v2762
        %v4885 = vpop.f32.mrf.mxu0
        %v4886 = vadd.f32 0.0, %v4885
        %4887 = vmatmul.f32.gmra.mxu0 %v2765
        %v4888 = vpop.f32.mrf.mxu0
        %v4889 = vadd.f32 0.0, %v4888
        %4890 = vdwg.mxu0
        %v4892 = vsel %vm666, %v4886, 0
        %v4895 = vsel %vm666, %v4889, 0
        %4897 = vmatpush.msra.mxu0 0.0
        %4898 = vmatpush.msra.mxu0 0.0
        %4899 = vmatpush.msra.mxu0 0.0
        %4900 = vmatpush.msra.mxu0 0.0
        %4901 = vmatpush.msra.mxu0 0.0
        %4902 = vmatpush.msra.mxu0 0.0
        %4903 = vmatpush.msra.mxu0 0.0
        %4904 = vmatpush.msra.mxu0 0.0
        %4905 = vmatpush.msra.mxu0 0.0
        %4906 = vmatpush.msra.mxu0 0.0
        %4907 = vmatpush.msra.mxu0 0.0
        %4908 = vmatpush.msra.mxu0 0.0
        %4909 = vmatpush.msra.mxu0 0.0
        %4910 = vmatpush.msra.mxu0 0.0
        %4911 = vmatpush.msra.mxu0 0.0
        %4912 = vmatpush.msra.mxu0 %v4867
        %4913 = vmatmul.f32.gmra.mxu0 %v4892
        %v4914 = vpop.f32.mrf.mxu0
        %v4915 = vadd.f32 0.0, %v4914
        %4916 = vmatmul.f32.gmra.mxu0 %v4895
        %v4917 = vpop.f32.mrf.mxu0
        %v4918 = vadd.f32 0.0, %v4917
        %4919 = vdwg.mxu0
        %v4920 = vadd.f32 %v4864, %v4915
        %v4921 = vadd.f32 %v4865, %v4918
        %s4922 = scalar_lea.vmem [#allocation4], 640
        %v4923 = vld [vmem:[%s4922] sm:$0xff]
        %4924 = vmatpush.msra.mxu0 0.0
        %4925 = vmatpush.msra.mxu0 0.0
        %4926 = vmatpush.msra.mxu0 0.0
        %4927 = vmatpush.msra.mxu0 0.0
        %4928 = vmatpush.msra.mxu0 0.0
        %4929 = vmatpush.msra.mxu0 0.0
        %4930 = vmatpush.msra.mxu0 0.0
        %4931 = vmatpush.msra.mxu0 0.0
        %4932 = vmatpush.msra.mxu0 %v4701
        %4933 = vmatpush.msra.mxu0 %v4700
        %4934 = vmatpush.msra.mxu0 %v4699
        %4935 = vmatpush.msra.mxu0 %v4698
        %4936 = vmatpush.msra.mxu0 %v4697
        %4937 = vmatpush.msra.mxu0 %v4696
        %4938 = vmatpush.msra.mxu0 %v4695
        %4939 = vmatpush.msra.mxu0 %v4694
        %4940 = vmatmul.f32.gmra.mxu0 %v2827
        %v4941 = vpop.f32.mrf.mxu0
        %v4942 = vadd.f32 0.0, %v4941
        %4943 = vmatmul.f32.gmra.mxu0 %v2830
        %v4944 = vpop.f32.mrf.mxu0
        %v4945 = vadd.f32 0.0, %v4944
        %4946 = vdwg.mxu0
        %v4948 = vsel %vm666, %v4942, 0
        %v4951 = vsel %vm666, %v4945, 0
        %4953 = vmatpush.msra.mxu0 0.0
        %4954 = vmatpush.msra.mxu0 0.0
        %4955 = vmatpush.msra.mxu0 0.0
        %4956 = vmatpush.msra.mxu0 0.0
        %4957 = vmatpush.msra.mxu0 0.0
        %4958 = vmatpush.msra.mxu0 0.0
        %4959 = vmatpush.msra.mxu0 0.0
        %4960 = vmatpush.msra.mxu0 0.0
        %4961 = vmatpush.msra.mxu0 0.0
        %4962 = vmatpush.msra.mxu0 0.0
        %4963 = vmatpush.msra.mxu0 0.0
        %4964 = vmatpush.msra.mxu0 0.0
        %4965 = vmatpush.msra.mxu0 0.0
        %4966 = vmatpush.msra.mxu0 0.0
        %4967 = vmatpush.msra.mxu0 0.0
        %4968 = vmatpush.msra.mxu0 %v4923
        %4969 = vmatmul.f32.gmra.mxu0 %v4948
        %v4970 = vpop.f32.mrf.mxu0
        %v4971 = vadd.f32 0.0, %v4970
        %4972 = vmatmul.f32.gmra.mxu0 %v4951
        %v4973 = vpop.f32.mrf.mxu0
        %v4974 = vadd.f32 0.0, %v4973
        %4975 = vdwg.mxu0
        %v4976 = vadd.f32 %v4920, %v4971
        %v4977 = vadd.f32 %v4921, %v4974
        %s4978 = scalar_lea.vmem [#allocation4], 656
        %v4979 = vld [vmem:[%s4978] sm:$0xff]
        %4980 = vmatpush.msra.mxu0 0.0
        %4981 = vmatpush.msra.mxu0 0.0
        %4982 = vmatpush.msra.mxu0 0.0
        %4983 = vmatpush.msra.mxu0 0.0
        %4984 = vmatpush.msra.mxu0 0.0
        %4985 = vmatpush.msra.mxu0 0.0
        %4986 = vmatpush.msra.mxu0 0.0
        %4987 = vmatpush.msra.mxu0 0.0
        %4988 = vmatpush.msra.mxu0 %v4701
        %4989 = vmatpush.msra.mxu0 %v4700
        %4990 = vmatpush.msra.mxu0 %v4699
        %4991 = vmatpush.msra.mxu0 %v4698
        %4992 = vmatpush.msra.mxu0 %v4697
        %4993 = vmatpush.msra.mxu0 %v4696
        %4994 = vmatpush.msra.mxu0 %v4695
        %4995 = vmatpush.msra.mxu0 %v4694
        %4996 = vmatmul.f32.gmra.mxu0 %v2892
        %v4997 = vpop.f32.mrf.mxu0
        %v4998 = vadd.f32 0.0, %v4997
        %4999 = vmatmul.f32.gmra.mxu0 %v2895
        %v5000 = vpop.f32.mrf.mxu0
        %v5001 = vadd.f32 0.0, %v5000
        %5002 = vdwg.mxu0
        %v5004 = vsel %vm666, %v4998, 0
        %v5007 = vsel %vm666, %v5001, 0
        %5009 = vmatpush.msra.mxu0 0.0
        %5010 = vmatpush.msra.mxu0 0.0
        %5011 = vmatpush.msra.mxu0 0.0
        %5012 = vmatpush.msra.mxu0 0.0
        %5013 = vmatpush.msra.mxu0 0.0
        %5014 = vmatpush.msra.mxu0 0.0
        %5015 = vmatpush.msra.mxu0 0.0
        %5016 = vmatpush.msra.mxu0 0.0
        %5017 = vmatpush.msra.mxu0 0.0
        %5018 = vmatpush.msra.mxu0 0.0
        %5019 = vmatpush.msra.mxu0 0.0
        %5020 = vmatpush.msra.mxu0 0.0
        %5021 = vmatpush.msra.mxu0 0.0
        %5022 = vmatpush.msra.mxu0 0.0
        %5023 = vmatpush.msra.mxu0 0.0
        %5024 = vmatpush.msra.mxu0 %v4979
        %5025 = vmatmul.f32.gmra.mxu0 %v5004
        %v5026 = vpop.f32.mrf.mxu0
        %v5027 = vadd.f32 0.0, %v5026
        %5028 = vmatmul.f32.gmra.mxu0 %v5007
        %v5029 = vpop.f32.mrf.mxu0
        %v5030 = vadd.f32 0.0, %v5029
        %5031 = vdwg.mxu0
        %v5032 = vadd.f32 %v4976, %v5027
        %v5033 = vadd.f32 %v4977, %v5030
        %s5034 = scalar_lea.vmem [#allocation4], 672
        %v5035 = vld [vmem:[%s5034] sm:$0xff]
        %5036 = vmatpush.msra.mxu0 0.0
        %5037 = vmatpush.msra.mxu0 0.0
        %5038 = vmatpush.msra.mxu0 0.0
        %5039 = vmatpush.msra.mxu0 0.0
        %5040 = vmatpush.msra.mxu0 0.0
        %5041 = vmatpush.msra.mxu0 0.0
        %5042 = vmatpush.msra.mxu0 0.0
        %5043 = vmatpush.msra.mxu0 0.0
        %5044 = vmatpush.msra.mxu0 %v4701
        %5045 = vmatpush.msra.mxu0 %v4700
        %5046 = vmatpush.msra.mxu0 %v4699
        %5047 = vmatpush.msra.mxu0 %v4698
        %5048 = vmatpush.msra.mxu0 %v4697
        %5049 = vmatpush.msra.mxu0 %v4696
        %5050 = vmatpush.msra.mxu0 %v4695
        %5051 = vmatpush.msra.mxu0 %v4694
        %5052 = vmatmul.f32.gmra.mxu0 %v2957
        %v5053 = vpop.f32.mrf.mxu0
        %v5054 = vadd.f32 0.0, %v5053
        %5055 = vmatmul.f32.gmra.mxu0 %v2960
        %v5056 = vpop.f32.mrf.mxu0
        %v5057 = vadd.f32 0.0, %v5056
        %5058 = vdwg.mxu0
        %v5060 = vsel %vm666, %v5054, 0
        %v5063 = vsel %vm666, %v5057, 0
        %5065 = vmatpush.msra.mxu0 0.0
        %5066 = vmatpush.msra.mxu0 0.0
        %5067 = vmatpush.msra.mxu0 0.0
        %5068 = vmatpush.msra.mxu0 0.0
        %5069 = vmatpush.msra.mxu0 0.0
        %5070 = vmatpush.msra.mxu0 0.0
        %5071 = vmatpush.msra.mxu0 0.0
        %5072 = vmatpush.msra.mxu0 0.0
        %5073 = vmatpush.msra.mxu0 0.0
        %5074 = vmatpush.msra.mxu0 0.0
        %5075 = vmatpush.msra.mxu0 0.0
        %5076 = vmatpush.msra.mxu0 0.0
        %5077 = vmatpush.msra.mxu0 0.0
        %5078 = vmatpush.msra.mxu0 0.0
        %5079 = vmatpush.msra.mxu0 0.0
        %5080 = vmatpush.msra.mxu0 %v5035
        %5081 = vmatmul.f32.gmra.mxu0 %v5060
        %v5082 = vpop.f32.mrf.mxu0
        %v5083 = vadd.f32 0.0, %v5082
        %5084 = vmatmul.f32.gmra.mxu0 %v5063
        %v5085 = vpop.f32.mrf.mxu0
        %v5086 = vadd.f32 0.0, %v5085
        %5087 = vdwg.mxu0
        %v5088 = vadd.f32 %v5032, %v5083
        %v5089 = vadd.f32 %v5033, %v5086
        %s5090 = scalar_lea.vmem [#allocation4], 688
        %v5091 = vld [vmem:[%s5090] sm:$0xff]
        %5092 = vmatpush.msra.mxu0 0.0
        %5093 = vmatpush.msra.mxu0 0.0
        %5094 = vmatpush.msra.mxu0 0.0
        %5095 = vmatpush.msra.mxu0 0.0
        %5096 = vmatpush.msra.mxu0 0.0
        %5097 = vmatpush.msra.mxu0 0.0
        %5098 = vmatpush.msra.mxu0 0.0
        %5099 = vmatpush.msra.mxu0 0.0
        %5100 = vmatpush.msra.mxu0 %v4701
        %5101 = vmatpush.msra.mxu0 %v4700
        %5102 = vmatpush.msra.mxu0 %v4699
        %5103 = vmatpush.msra.mxu0 %v4698
        %5104 = vmatpush.msra.mxu0 %v4697
        %5105 = vmatpush.msra.mxu0 %v4696
        %5106 = vmatpush.msra.mxu0 %v4695
        %5107 = vmatpush.msra.mxu0 %v4694
        %5108 = vmatmul.f32.gmra.mxu0 %v3022
        %v5109 = vpop.f32.mrf.mxu0
        %v5110 = vadd.f32 0.0, %v5109
        %5111 = vmatmul.f32.gmra.mxu0 %v3025
        %v5112 = vpop.f32.mrf.mxu0
        %v5113 = vadd.f32 0.0, %v5112
        %5114 = vdwg.mxu0
        %v5116 = vsel %vm666, %v5110, 0
        %v5119 = vsel %vm666, %v5113, 0
        %5121 = vmatpush.msra.mxu0 0.0
        %5122 = vmatpush.msra.mxu0 0.0
        %5123 = vmatpush.msra.mxu0 0.0
        %5124 = vmatpush.msra.mxu0 0.0
        %5125 = vmatpush.msra.mxu0 0.0
        %5126 = vmatpush.msra.mxu0 0.0
        %5127 = vmatpush.msra.mxu0 0.0
        %5128 = vmatpush.msra.mxu0 0.0
        %5129 = vmatpush.msra.mxu0 0.0
        %5130 = vmatpush.msra.mxu0 0.0
        %5131 = vmatpush.msra.mxu0 0.0
        %5132 = vmatpush.msra.mxu0 0.0
        %5133 = vmatpush.msra.mxu0 0.0
        %5134 = vmatpush.msra.mxu0 0.0
        %5135 = vmatpush.msra.mxu0 0.0
        %5136 = vmatpush.msra.mxu0 %v5091
        %5137 = vmatmul.f32.gmra.mxu0 %v5116
        %v5138 = vpop.f32.mrf.mxu0
        %v5139 = vadd.f32 0.0, %v5138
        %5140 = vmatmul.f32.gmra.mxu0 %v5119
        %v5141 = vpop.f32.mrf.mxu0
        %v5142 = vadd.f32 0.0, %v5141
        %5143 = vdwg.mxu0
        %v5144 = vadd.f32 %v5088, %v5139
        %v5145 = vadd.f32 %v5089, %v5142
        %s5146 = scalar_lea.vmem [#allocation4], 704
        %v5147 = vld [vmem:[%s5146] sm:$0xff]
        %5148 = vmatpush.msra.mxu0 0.0
        %5149 = vmatpush.msra.mxu0 0.0
        %5150 = vmatpush.msra.mxu0 0.0
        %5151 = vmatpush.msra.mxu0 0.0
        %5152 = vmatpush.msra.mxu0 0.0
        %5153 = vmatpush.msra.mxu0 0.0
        %5154 = vmatpush.msra.mxu0 0.0
        %5155 = vmatpush.msra.mxu0 0.0
        %5156 = vmatpush.msra.mxu0 %v4701
        %5157 = vmatpush.msra.mxu0 %v4700
        %5158 = vmatpush.msra.mxu0 %v4699
        %5159 = vmatpush.msra.mxu0 %v4698
        %5160 = vmatpush.msra.mxu0 %v4697
        %5161 = vmatpush.msra.mxu0 %v4696
        %5162 = vmatpush.msra.mxu0 %v4695
        %5163 = vmatpush.msra.mxu0 %v4694
        %5164 = vmatmul.f32.gmra.mxu0 %v3087
        %v5165 = vpop.f32.mrf.mxu0
        %v5166 = vadd.f32 0.0, %v5165
        %5167 = vmatmul.f32.gmra.mxu0 %v3090
        %v5168 = vpop.f32.mrf.mxu0
        %v5169 = vadd.f32 0.0, %v5168
        %5170 = vdwg.mxu0
        %v5172 = vsel %vm666, %v5166, 0
        %v5175 = vsel %vm666, %v5169, 0
        %5177 = vmatpush.msra.mxu0 0.0
        %5178 = vmatpush.msra.mxu0 0.0
        %5179 = vmatpush.msra.mxu0 0.0
        %5180 = vmatpush.msra.mxu0 0.0
        %5181 = vmatpush.msra.mxu0 0.0
        %5182 = vmatpush.msra.mxu0 0.0
        %5183 = vmatpush.msra.mxu0 0.0
        %5184 = vmatpush.msra.mxu0 0.0
        %5185 = vmatpush.msra.mxu0 0.0
        %5186 = vmatpush.msra.mxu0 0.0
        %5187 = vmatpush.msra.mxu0 0.0
        %5188 = vmatpush.msra.mxu0 0.0
        %5189 = vmatpush.msra.mxu0 0.0
        %5190 = vmatpush.msra.mxu0 0.0
        %5191 = vmatpush.msra.mxu0 0.0
        %5192 = vmatpush.msra.mxu0 %v5147
        %5193 = vmatmul.f32.gmra.mxu0 %v5172
        %v5194 = vpop.f32.mrf.mxu0
        %v5195 = vadd.f32 0.0, %v5194
        %5196 = vmatmul.f32.gmra.mxu0 %v5175
        %v5197 = vpop.f32.mrf.mxu0
        %v5198 = vadd.f32 0.0, %v5197
        %5199 = vdwg.mxu0
        %v5200 = vadd.f32 %v5144, %v5195
        %v5201 = vadd.f32 %v5145, %v5198
        %s5202 = scalar_lea.vmem %s6, 20
        %v5203 = vld [vmem:[%s5202] sm:$0x1]
        %v5204 = vperm.slane %v5203, 0
        %v5205 = vadd.f32 %v5200, %v5204
        %v5206 = vadd.f32 %v5201, %v5204
        %v5207 = vsel %vm3151, %v5205, 0.0
        %v5208 = vsel %vm3151, %v5206, 0.0
        %v5209 = vadd.f32 %v5207, %v5208
        %v5210 = vrot.slane %v5209, 4
        %v5211 = vadd.f32 %v5209, %v5210
        %v5212 = vrot.slane %v5211, 2
        %v5213 = vadd.f32 %v5211, %v5212
        %v5214 = vrot.slane %v5213, 1
        %v5215 = vadd.f32 %v5213, %v5214
        %v5216 = vmul.f32 %v5215, %v3167
        %s5217 = scalar_lea.vmem %s4, 160
        %v5218 = vld [vmem:[%s5217] sm:$0xff]
        %v5219 = vld [vmem:[%s5217 + $0x8] sm:$0xff]
        %v5220 = vld [vmem:[%s5202 + $0x1] sm:$0x1]
        %v5222 = vsel %vm3151, %v5216, 0
        %5224 = vmatpush.msra.mxu0 0.0
        %5225 = vmatpush.msra.mxu0 0.0
        %5226 = vmatpush.msra.mxu0 0.0
        %5227 = vmatpush.msra.mxu0 0.0
        %5228 = vmatpush.msra.mxu0 0.0
        %5229 = vmatpush.msra.mxu0 0.0
        %5230 = vmatpush.msra.mxu0 0.0
        %5231 = vmatpush.msra.mxu0 0.0
        %5232 = vmatpush.msra.mxu0 0.0
        %5233 = vmatpush.msra.mxu0 0.0
        %5234 = vmatpush.msra.mxu0 0.0
        %5235 = vmatpush.msra.mxu0 0.0
        %5236 = vmatpush.msra.mxu0 0.0
        %5237 = vmatpush.msra.mxu0 0.0
        %5238 = vmatpush.msra.mxu0 %v5219
        %5239 = vmatpush.msra.mxu0 %v5218
        %5240 = vmatmul.f32.gmra.mxu0 %v5222
        %v5241 = vpop.f32.mrf.mxu0
        %v5242 = vadd.f32 %v5220, %v5241
        %5243 = vdwg.mxu0
        %v5244 = vmax.f32 %v5242, 0.0
        %s5245 = scalar_lea.vmem [#allocation6], 40
        %v5246 = vld [vmem:[%s5245] sm:$0xf]
        %v5247 = vld [vmem:[%s5202 + $0x2] sm:$0x1]
        %v5249 = vsel %vm3200, %v5244, 0
        %v5252 = vsel %vm3204, %v5246, 0
        %5254 = vmatpush.msra.mxu0 0.0
        %5255 = vmatpush.msra.mxu0 0.0
        %5256 = vmatpush.msra.mxu0 0.0
        %5257 = vmatpush.msra.mxu0 0.0
        %5258 = vmatpush.msra.mxu0 0.0
        %5259 = vmatpush.msra.mxu0 0.0
        %5260 = vmatpush.msra.mxu0 0.0
        %5261 = vmatpush.msra.mxu0 0.0
        %5262 = vmatpush.msra.mxu0 0.0
        %5263 = vmatpush.msra.mxu0 0.0
        %5264 = vmatpush.msra.mxu0 0.0
        %5265 = vmatpush.msra.mxu0 0.0
        %5266 = vmatpush.msra.mxu0 0.0
        %5267 = vmatpush.msra.mxu0 0.0
        %5268 = vmatpush.msra.mxu0 0.0
        %5269 = vmatpush.msra.mxu0 %v5252
        %5270 = vmatmul.f32.gmra.mxu0 %v5249
        %v5271 = vpop.f32.mrf.mxu0
        %v5272 = vadd.f32 %v5247, %v5271
        %5273 = vdwg.mxu0
        %v5274 = vxor.u32 %v5272, 2147483648
        %v5275 = vmul.f32 %v5274, 1.442695
        %v5276 = vpow.pop %v5275
        %v5277 = vadd.f32 %v5276, 1.0
        %v5278 = vrcp.pop %v5277
        %v5279 = vmul.f32 %v5277, %v5278
        %v5280 = vsub.f32 1.0, %v5279
        %v5281 = vmul.f32 %v5278, %v5280
        %v5282 = vadd.f32 %v5278, %v5281
        %vm5283 = vweird.f32 %v5277
        %vm5284 = vweird.f32 %v5278
        %vm5285 = vmor %vm5283, %vm5284
        %v5286 = vsel %vm5285, %v5278, %v5282
        %v5287 = vand.u32 2147483647, %v5277
        %vm5288 = vcmp.eq.f32.partialorder %v5287, 8.507059e+37
        %v5289 = vand.u32 %v5277, 2147483648
        %v5290 = vor.u32 1.1754944e-38, %v5289
        %v5291 = vsel %vm5288, %v5290, %v5286
        %v5292 = vmul.f32 1.0, %v5291
        %v5293 = vperm.slane %v5292, 0
        %v5294 = vmul.f32 %v5205, %v5293
        %v5295 = vmul.f32 %v5206, %v5293
        %v5296 = vmax.f32 %v5294, 0.0
        %v5297 = vmax.f32 %v5295, 0.0
        %s5298 = scalar_lea.vmem [#allocation2], 3456
        %v5299 = vld [vmem:[%s5298] sm:$0xff]
        %v5300 = vld [vmem:[%s5298 + $0x10] sm:$0xff]
        %s5301 = scalar_lea.vmem [#allocation4], 432
        %v5302 = vld [vmem:[%s5301] sm:$0xff]
        %v5303 = vld [vmem:[%s5301 + $0x8] sm:$0xff]
        %v5305 = vsel %vm3151, %v5299, 0
        %v5308 = vsel %vm3151, %v5300, 0
        %5310 = vmatpush.msra.mxu0 0.0
        %5311 = vmatpush.msra.mxu0 0.0
        %5312 = vmatpush.msra.mxu0 0.0
        %5313 = vmatpush.msra.mxu0 0.0
        %5314 = vmatpush.msra.mxu0 0.0
        %5315 = vmatpush.msra.mxu0 0.0
        %5316 = vmatpush.msra.mxu0 0.0
        %5317 = vmatpush.msra.mxu0 0.0
        %5318 = vmatpush.msra.mxu0 0.0
        %5319 = vmatpush.msra.mxu0 0.0
        %5320 = vmatpush.msra.mxu0 0.0
        %5321 = vmatpush.msra.mxu0 0.0
        %5322 = vmatpush.msra.mxu0 0.0
        %5323 = vmatpush.msra.mxu0 0.0
        %5324 = vmatpush.msra.mxu0 %v3251
        %5325 = vmatpush.msra.mxu0 %v3250
        %5326 = vmatmul.f32.gmra.mxu0 %v5305
        %v5327 = vpop.f32.mrf.mxu0
        %v5328 = vadd.f32 0.0, %v5327
        %5329 = vmatmul.f32.gmra.mxu0 %v5308
        %v5330 = vpop.f32.mrf.mxu0
        %v5331 = vadd.f32 0.0, %v5330
        %5332 = vdwg.mxu0
        %s5333 = scalar_lea.vmem [#allocation2], 3584
        %v5334 = vld [vmem:[%s5333] sm:$0xff]
        %v5335 = vld [vmem:[%s5333 + $0x10] sm:$0xff]
        %s5336 = scalar_lea.vmem [#allocation4], 448
        %v5337 = vld [vmem:[%s5336] sm:$0xff]
        %v5338 = vld [vmem:[%s5336 + $0x8] sm:$0xff]
        %v5340 = vsel %vm3151, %v5334, 0
        %v5343 = vsel %vm3151, %v5335, 0
        %5345 = vmatpush.msra.mxu0 0.0
        %5346 = vmatpush.msra.mxu0 0.0
        %5347 = vmatpush.msra.mxu0 0.0
        %5348 = vmatpush.msra.mxu0 0.0
        %5349 = vmatpush.msra.mxu0 0.0
        %5350 = vmatpush.msra.mxu0 0.0
        %5351 = vmatpush.msra.mxu0 0.0
        %5352 = vmatpush.msra.mxu0 0.0
        %5353 = vmatpush.msra.mxu0 0.0
        %5354 = vmatpush.msra.mxu0 0.0
        %5355 = vmatpush.msra.mxu0 0.0
        %5356 = vmatpush.msra.mxu0 0.0
        %5357 = vmatpush.msra.mxu0 0.0
        %5358 = vmatpush.msra.mxu0 0.0
        %5359 = vmatpush.msra.mxu0 %v3251
        %5360 = vmatpush.msra.mxu0 %v3250
        %5361 = vmatmul.f32.gmra.mxu0 %v5340
        %v5362 = vpop.f32.mrf.mxu0
        %v5363 = vadd.f32 0.0, %v5362
        %5364 = vmatmul.f32.gmra.mxu0 %v5343
        %v5365 = vpop.f32.mrf.mxu0
        %v5366 = vadd.f32 0.0, %v5365
        %5367 = vdwg.mxu0
        %v5369 = vsel %vm3151, %v5363, 0
        %v5372 = vsel %vm3151, %v5366, 0
        %5374 = vmatpush.msra.mxu0 0.0
        %5375 = vmatpush.msra.mxu0 0.0
        %5376 = vmatpush.msra.mxu0 0.0
        %5377 = vmatpush.msra.mxu0 0.0
        %5378 = vmatpush.msra.mxu0 0.0
        %5379 = vmatpush.msra.mxu0 0.0
        %5380 = vmatpush.msra.mxu0 0.0
        %5381 = vmatpush.msra.mxu0 0.0
        %5382 = vmatpush.msra.mxu0 0.0
        %5383 = vmatpush.msra.mxu0 0.0
        %5384 = vmatpush.msra.mxu0 0.0
        %5385 = vmatpush.msra.mxu0 0.0
        %5386 = vmatpush.msra.mxu0 0.0
        %5387 = vmatpush.msra.mxu0 0.0
        %5388 = vmatpush.msra.mxu0 %v5338
        %5389 = vmatpush.msra.mxu0 %v5337
        %5390 = vmatmul.f32.gmra.mxu0 %v5369
        %v5391 = vpop.f32.mrf.mxu0
        %v5392 = vadd.f32 0.0, %v5391
        %5393 = vmatmul.f32.gmra.mxu0 %v5372
        %v5394 = vpop.f32.mrf.mxu0
        %v5395 = vadd.f32 0.0, %v5394
        %5396 = vdwg.mxu0
        %v5398 = vsel %vm3151, %v5328, 0
        %v5401 = vsel %vm3151, %v5331, 0
        %5403 = vmatpush.msra.mxu0 0.0
        %5404 = vmatpush.msra.mxu0 0.0
        %5405 = vmatpush.msra.mxu0 0.0
        %5406 = vmatpush.msra.mxu0 0.0
        %5407 = vmatpush.msra.mxu0 0.0
        %5408 = vmatpush.msra.mxu0 0.0
        %5409 = vmatpush.msra.mxu0 0.0
        %5410 = vmatpush.msra.mxu0 0.0
        %5411 = vmatpush.msra.mxu0 0.0
        %5412 = vmatpush.msra.mxu0 0.0
        %5413 = vmatpush.msra.mxu0 0.0
        %5414 = vmatpush.msra.mxu0 0.0
        %5415 = vmatpush.msra.mxu0 0.0
        %5416 = vmatpush.msra.mxu0 0.0
        %5417 = vmatpush.msra.mxu0 %v5303
        %5418 = vmatpush.msra.mxu0 %v5302
        %5419 = vmatmul.f32.gmra.mxu0 %v5398
        %v5420 = vpop.f32.mrf.mxu0
        %v5421 = vadd.f32 %v5392, %v5420
        %5422 = vmatmul.f32.gmra.mxu0 %v5401
        %v5423 = vpop.f32.mrf.mxu0
        %v5424 = vadd.f32 %v5395, %v5423
        %5425 = vdwg.mxu0
        %s5426 = scalar_lea.vmem [#allocation2], 3712
        %v5427 = vld [vmem:[%s5426] sm:$0xff]
        %v5428 = vld [vmem:[%s5426 + $0x10] sm:$0xff]
        %s5429 = scalar_lea.vmem [#allocation4], 464
        %v5430 = vld [vmem:[%s5429] sm:$0xff]
        %v5431 = vld [vmem:[%s5429 + $0x8] sm:$0xff]
        %v5433 = vsel %vm3151, %v5427, 0
        %v5436 = vsel %vm3151, %v5428, 0
        %5438 = vmatpush.msra.mxu0 0.0
        %5439 = vmatpush.msra.mxu0 0.0
        %5440 = vmatpush.msra.mxu0 0.0
        %5441 = vmatpush.msra.mxu0 0.0
        %5442 = vmatpush.msra.mxu0 0.0
        %5443 = vmatpush.msra.mxu0 0.0
        %5444 = vmatpush.msra.mxu0 0.0
        %5445 = vmatpush.msra.mxu0 0.0
        %5446 = vmatpush.msra.mxu0 0.0
        %5447 = vmatpush.msra.mxu0 0.0
        %5448 = vmatpush.msra.mxu0 0.0
        %5449 = vmatpush.msra.mxu0 0.0
        %5450 = vmatpush.msra.mxu0 0.0
        %5451 = vmatpush.msra.mxu0 0.0
        %5452 = vmatpush.msra.mxu0 %v3251
        %5453 = vmatpush.msra.mxu0 %v3250
        %5454 = vmatmul.f32.gmra.mxu0 %v5433
        %v5455 = vpop.f32.mrf.mxu0
        %v5456 = vadd.f32 0.0, %v5455
        %5457 = vmatmul.f32.gmra.mxu0 %v5436
        %v5458 = vpop.f32.mrf.mxu0
        %v5459 = vadd.f32 0.0, %v5458
        %5460 = vdwg.mxu0
        %v5462 = vsel %vm3151, %v5456, 0
        %v5465 = vsel %vm3151, %v5459, 0
        %5467 = vmatpush.msra.mxu0 0.0
        %5468 = vmatpush.msra.mxu0 0.0
        %5469 = vmatpush.msra.mxu0 0.0
        %5470 = vmatpush.msra.mxu0 0.0
        %5471 = vmatpush.msra.mxu0 0.0
        %5472 = vmatpush.msra.mxu0 0.0
        %5473 = vmatpush.msra.mxu0 0.0
        %5474 = vmatpush.msra.mxu0 0.0
        %5475 = vmatpush.msra.mxu0 0.0
        %5476 = vmatpush.msra.mxu0 0.0
        %5477 = vmatpush.msra.mxu0 0.0
        %5478 = vmatpush.msra.mxu0 0.0
        %5479 = vmatpush.msra.mxu0 0.0
        %5480 = vmatpush.msra.mxu0 0.0
        %5481 = vmatpush.msra.mxu0 %v5431
        %5482 = vmatpush.msra.mxu0 %v5430
        %5483 = vmatmul.f32.gmra.mxu0 %v5462
        %v5484 = vpop.f32.mrf.mxu0
        %v5485 = vadd.f32 0.0, %v5484
        %5486 = vmatmul.f32.gmra.mxu0 %v5465
        %v5487 = vpop.f32.mrf.mxu0
        %v5488 = vadd.f32 0.0, %v5487
        %5489 = vdwg.mxu0
        %v5490 = vadd.f32 %v5421, %v5485
        %v5491 = vadd.f32 %v5424, %v5488
        %s5492 = scalar_lea.vmem [#allocation2], 3840
        %v5493 = vld [vmem:[%s5492] sm:$0xff]
        %v5494 = vld [vmem:[%s5492 + $0x10] sm:$0xff]
        %s5495 = scalar_lea.vmem [#allocation4], 480
        %v5496 = vld [vmem:[%s5495] sm:$0xff]
        %v5497 = vld [vmem:[%s5495 + $0x8] sm:$0xff]
        %v5499 = vsel %vm3151, %v5493, 0
        %v5502 = vsel %vm3151, %v5494, 0
        %5504 = vmatpush.msra.mxu0 0.0
        %5505 = vmatpush.msra.mxu0 0.0
        %5506 = vmatpush.msra.mxu0 0.0
        %5507 = vmatpush.msra.mxu0 0.0
        %5508 = vmatpush.msra.mxu0 0.0
        %5509 = vmatpush.msra.mxu0 0.0
        %5510 = vmatpush.msra.mxu0 0.0
        %5511 = vmatpush.msra.mxu0 0.0
        %5512 = vmatpush.msra.mxu0 0.0
        %5513 = vmatpush.msra.mxu0 0.0
        %5514 = vmatpush.msra.mxu0 0.0
        %5515 = vmatpush.msra.mxu0 0.0
        %5516 = vmatpush.msra.mxu0 0.0
        %5517 = vmatpush.msra.mxu0 0.0
        %5518 = vmatpush.msra.mxu0 %v3251
        %5519 = vmatpush.msra.mxu0 %v3250
        %5520 = vmatmul.f32.gmra.mxu0 %v5499
        %v5521 = vpop.f32.mrf.mxu0
        %v5522 = vadd.f32 0.0, %v5521
        %5523 = vmatmul.f32.gmra.mxu0 %v5502
        %v5524 = vpop.f32.mrf.mxu0
        %v5525 = vadd.f32 0.0, %v5524
        %5526 = vdwg.mxu0
        %v5528 = vsel %vm3151, %v5522, 0
        %v5531 = vsel %vm3151, %v5525, 0
        %5533 = vmatpush.msra.mxu0 0.0
        %5534 = vmatpush.msra.mxu0 0.0
        %5535 = vmatpush.msra.mxu0 0.0
        %5536 = vmatpush.msra.mxu0 0.0
        %5537 = vmatpush.msra.mxu0 0.0
        %5538 = vmatpush.msra.mxu0 0.0
        %5539 = vmatpush.msra.mxu0 0.0
        %5540 = vmatpush.msra.mxu0 0.0
        %5541 = vmatpush.msra.mxu0 0.0
        %5542 = vmatpush.msra.mxu0 0.0
        %5543 = vmatpush.msra.mxu0 0.0
        %5544 = vmatpush.msra.mxu0 0.0
        %5545 = vmatpush.msra.mxu0 0.0
        %5546 = vmatpush.msra.mxu0 0.0
        %5547 = vmatpush.msra.mxu0 %v5497
        %5548 = vmatpush.msra.mxu0 %v5496
        %5549 = vmatmul.f32.gmra.mxu0 %v5528
        %v5550 = vpop.f32.mrf.mxu0
        %v5551 = vadd.f32 0.0, %v5550
        %5552 = vmatmul.f32.gmra.mxu0 %v5531
        %v5553 = vpop.f32.mrf.mxu0
        %v5554 = vadd.f32 0.0, %v5553
        %5555 = vdwg.mxu0
        %v5556 = vadd.f32 %v5490, %v5551
        %v5557 = vadd.f32 %v5491, %v5554
        %s5558 = scalar_lea.vmem [#allocation2], 3968
        %v5559 = vld [vmem:[%s5558] sm:$0xff]
        %v5560 = vld [vmem:[%s5558 + $0x10] sm:$0xff]
        %s5561 = scalar_lea.vmem [#allocation4], 496
        %v5562 = vld [vmem:[%s5561] sm:$0xff]
        %v5563 = vld [vmem:[%s5561 + $0x8] sm:$0xff]
        %v5565 = vsel %vm3151, %v5559, 0
        %v5568 = vsel %vm3151, %v5560, 0
        %5570 = vmatpush.msra.mxu0 0.0
        %5571 = vmatpush.msra.mxu0 0.0
        %5572 = vmatpush.msra.mxu0 0.0
        %5573 = vmatpush.msra.mxu0 0.0
        %5574 = vmatpush.msra.mxu0 0.0
        %5575 = vmatpush.msra.mxu0 0.0
        %5576 = vmatpush.msra.mxu0 0.0
        %5577 = vmatpush.msra.mxu0 0.0
        %5578 = vmatpush.msra.mxu0 0.0
        %5579 = vmatpush.msra.mxu0 0.0
        %5580 = vmatpush.msra.mxu0 0.0
        %5581 = vmatpush.msra.mxu0 0.0
        %5582 = vmatpush.msra.mxu0 0.0
        %5583 = vmatpush.msra.mxu0 0.0
        %5584 = vmatpush.msra.mxu0 %v3251
        %5585 = vmatpush.msra.mxu0 %v3250
        %5586 = vmatmul.f32.gmra.mxu0 %v5565
        %v5587 = vpop.f32.mrf.mxu0
        %v5588 = vadd.f32 0.0, %v5587
        %5589 = vmatmul.f32.gmra.mxu0 %v5568
        %v5590 = vpop.f32.mrf.mxu0
        %v5591 = vadd.f32 0.0, %v5590
        %5592 = vdwg.mxu0
        %v5594 = vsel %vm3151, %v5588, 0
        %v5597 = vsel %vm3151, %v5591, 0
        %5599 = vmatpush.msra.mxu0 0.0
        %5600 = vmatpush.msra.mxu0 0.0
        %5601 = vmatpush.msra.mxu0 0.0
        %5602 = vmatpush.msra.mxu0 0.0
        %5603 = vmatpush.msra.mxu0 0.0
        %5604 = vmatpush.msra.mxu0 0.0
        %5605 = vmatpush.msra.mxu0 0.0
        %5606 = vmatpush.msra.mxu0 0.0
        %5607 = vmatpush.msra.mxu0 0.0
        %5608 = vmatpush.msra.mxu0 0.0
        %5609 = vmatpush.msra.mxu0 0.0
        %5610 = vmatpush.msra.mxu0 0.0
        %5611 = vmatpush.msra.mxu0 0.0
        %5612 = vmatpush.msra.mxu0 0.0
        %5613 = vmatpush.msra.mxu0 %v5563
        %5614 = vmatpush.msra.mxu0 %v5562
        %5615 = vmatmul.f32.gmra.mxu0 %v5594
        %v5616 = vpop.f32.mrf.mxu0
        %v5617 = vadd.f32 0.0, %v5616
        %5618 = vmatmul.f32.gmra.mxu0 %v5597
        %v5619 = vpop.f32.mrf.mxu0
        %v5620 = vadd.f32 0.0, %v5619
        %5621 = vdwg.mxu0
        %v5622 = vadd.f32 %v5556, %v5617
        %v5623 = vadd.f32 %v5557, %v5620
        %s5624 = scalar_lea.vmem [#allocation2], 4096
        %v5625 = vld [vmem:[%s5624] sm:$0xff]
        %v5626 = vld [vmem:[%s5624 + $0x10] sm:$0xff]
        %s5627 = scalar_lea.vmem [#allocation4], 512
        %v5628 = vld [vmem:[%s5627] sm:$0xff]
        %v5629 = vld [vmem:[%s5627 + $0x8] sm:$0xff]
        %v5631 = vsel %vm3151, %v5625, 0
        %v5634 = vsel %vm3151, %v5626, 0
        %5636 = vmatpush.msra.mxu0 0.0
        %5637 = vmatpush.msra.mxu0 0.0
        %5638 = vmatpush.msra.mxu0 0.0
        %5639 = vmatpush.msra.mxu0 0.0
        %5640 = vmatpush.msra.mxu0 0.0
        %5641 = vmatpush.msra.mxu0 0.0
        %5642 = vmatpush.msra.mxu0 0.0
        %5643 = vmatpush.msra.mxu0 0.0
        %5644 = vmatpush.msra.mxu0 0.0
        %5645 = vmatpush.msra.mxu0 0.0
        %5646 = vmatpush.msra.mxu0 0.0
        %5647 = vmatpush.msra.mxu0 0.0
        %5648 = vmatpush.msra.mxu0 0.0
        %5649 = vmatpush.msra.mxu0 0.0
        %5650 = vmatpush.msra.mxu0 %v3251
        %5651 = vmatpush.msra.mxu0 %v3250
        %5652 = vmatmul.f32.gmra.mxu0 %v5631
        %v5653 = vpop.f32.mrf.mxu0
        %v5654 = vadd.f32 0.0, %v5653
        %5655 = vmatmul.f32.gmra.mxu0 %v5634
        %v5656 = vpop.f32.mrf.mxu0
        %v5657 = vadd.f32 0.0, %v5656
        %5658 = vdwg.mxu0
        %v5660 = vsel %vm3151, %v5654, 0
        %v5663 = vsel %vm3151, %v5657, 0
        %5665 = vmatpush.msra.mxu0 0.0
        %5666 = vmatpush.msra.mxu0 0.0
        %5667 = vmatpush.msra.mxu0 0.0
        %5668 = vmatpush.msra.mxu0 0.0
        %5669 = vmatpush.msra.mxu0 0.0
        %5670 = vmatpush.msra.mxu0 0.0
        %5671 = vmatpush.msra.mxu0 0.0
        %5672 = vmatpush.msra.mxu0 0.0
        %5673 = vmatpush.msra.mxu0 0.0
        %5674 = vmatpush.msra.mxu0 0.0
        %5675 = vmatpush.msra.mxu0 0.0
        %5676 = vmatpush.msra.mxu0 0.0
        %5677 = vmatpush.msra.mxu0 0.0
        %5678 = vmatpush.msra.mxu0 0.0
        %5679 = vmatpush.msra.mxu0 %v5629
        %5680 = vmatpush.msra.mxu0 %v5628
        %5681 = vmatmul.f32.gmra.mxu0 %v5660
        %v5682 = vpop.f32.mrf.mxu0
        %v5683 = vadd.f32 0.0, %v5682
        %5684 = vmatmul.f32.gmra.mxu0 %v5663
        %v5685 = vpop.f32.mrf.mxu0
        %v5686 = vadd.f32 0.0, %v5685
        %5687 = vdwg.mxu0
        %v5688 = vadd.f32 %v5622, %v5683
        %v5689 = vadd.f32 %v5623, %v5686
        %s5690 = scalar_lea.vmem [#allocation2], 4224
        %v5691 = vld [vmem:[%s5690] sm:$0xff]
        %v5692 = vld [vmem:[%s5690 + $0x10] sm:$0xff]
        %s5693 = scalar_lea.vmem [#allocation4], 528
        %v5694 = vld [vmem:[%s5693] sm:$0xff]
        %v5695 = vld [vmem:[%s5693 + $0x8] sm:$0xff]
        %v5697 = vsel %vm3151, %v5691, 0
        %v5700 = vsel %vm3151, %v5692, 0
        %5702 = vmatpush.msra.mxu0 0.0
        %5703 = vmatpush.msra.mxu0 0.0
        %5704 = vmatpush.msra.mxu0 0.0
        %5705 = vmatpush.msra.mxu0 0.0
        %5706 = vmatpush.msra.mxu0 0.0
        %5707 = vmatpush.msra.mxu0 0.0
        %5708 = vmatpush.msra.mxu0 0.0
        %5709 = vmatpush.msra.mxu0 0.0
        %5710 = vmatpush.msra.mxu0 0.0
        %5711 = vmatpush.msra.mxu0 0.0
        %5712 = vmatpush.msra.mxu0 0.0
        %5713 = vmatpush.msra.mxu0 0.0
        %5714 = vmatpush.msra.mxu0 0.0
        %5715 = vmatpush.msra.mxu0 0.0
        %5716 = vmatpush.msra.mxu0 %v3251
        %5717 = vmatpush.msra.mxu0 %v3250
        %5718 = vmatmul.f32.gmra.mxu0 %v5697
        %v5719 = vpop.f32.mrf.mxu0
        %v5720 = vadd.f32 0.0, %v5719
        %5721 = vmatmul.f32.gmra.mxu0 %v5700
        %v5722 = vpop.f32.mrf.mxu0
        %v5723 = vadd.f32 0.0, %v5722
        %5724 = vdwg.mxu0
        %v5726 = vsel %vm3151, %v5720, 0
        %v5729 = vsel %vm3151, %v5723, 0
        %5731 = vmatpush.msra.mxu0 0.0
        %5732 = vmatpush.msra.mxu0 0.0
        %5733 = vmatpush.msra.mxu0 0.0
        %5734 = vmatpush.msra.mxu0 0.0
        %5735 = vmatpush.msra.mxu0 0.0
        %5736 = vmatpush.msra.mxu0 0.0
        %5737 = vmatpush.msra.mxu0 0.0
        %5738 = vmatpush.msra.mxu0 0.0
        %5739 = vmatpush.msra.mxu0 0.0
        %5740 = vmatpush.msra.mxu0 0.0
        %5741 = vmatpush.msra.mxu0 0.0
        %5742 = vmatpush.msra.mxu0 0.0
        %5743 = vmatpush.msra.mxu0 0.0
        %5744 = vmatpush.msra.mxu0 0.0
        %5745 = vmatpush.msra.mxu0 %v5695
        %5746 = vmatpush.msra.mxu0 %v5694
        %5747 = vmatmul.f32.gmra.mxu0 %v5726
        %v5748 = vpop.f32.mrf.mxu0
        %v5749 = vadd.f32 0.0, %v5748
        %5750 = vmatmul.f32.gmra.mxu0 %v5729
        %v5751 = vpop.f32.mrf.mxu0
        %v5752 = vadd.f32 0.0, %v5751
        %5753 = vdwg.mxu0
        %v5754 = vadd.f32 %v5688, %v5749
        %v5755 = vadd.f32 %v5689, %v5752
        %s5756 = scalar_lea.vmem [#allocation2], 4352
        %v5757 = vld [vmem:[%s5756] sm:$0xff]
        %v5758 = vld [vmem:[%s5756 + $0x10] sm:$0xff]
        %s5759 = scalar_lea.vmem [#allocation4], 544
        %v5760 = vld [vmem:[%s5759] sm:$0xff]
        %v5761 = vld [vmem:[%s5759 + $0x8] sm:$0xff]
        %v5763 = vsel %vm3151, %v5757, 0
        %v5766 = vsel %vm3151, %v5758, 0
        %5768 = vmatpush.msra.mxu0 0.0
        %5769 = vmatpush.msra.mxu0 0.0
        %5770 = vmatpush.msra.mxu0 0.0
        %5771 = vmatpush.msra.mxu0 0.0
        %5772 = vmatpush.msra.mxu0 0.0
        %5773 = vmatpush.msra.mxu0 0.0
        %5774 = vmatpush.msra.mxu0 0.0
        %5775 = vmatpush.msra.mxu0 0.0
        %5776 = vmatpush.msra.mxu0 0.0
        %5777 = vmatpush.msra.mxu0 0.0
        %5778 = vmatpush.msra.mxu0 0.0
        %5779 = vmatpush.msra.mxu0 0.0
        %5780 = vmatpush.msra.mxu0 0.0
        %5781 = vmatpush.msra.mxu0 0.0
        %5782 = vmatpush.msra.mxu0 %v3251
        %5783 = vmatpush.msra.mxu0 %v3250
        %5784 = vmatmul.f32.gmra.mxu0 %v5763
        %v5785 = vpop.f32.mrf.mxu0
        %v5786 = vadd.f32 0.0, %v5785
        %5787 = vmatmul.f32.gmra.mxu0 %v5766
        %v5788 = vpop.f32.mrf.mxu0
        %v5789 = vadd.f32 0.0, %v5788
        %5790 = vdwg.mxu0
        %v5792 = vsel %vm3151, %v5786, 0
        %v5795 = vsel %vm3151, %v5789, 0
        %5797 = vmatpush.msra.mxu0 0.0
        %5798 = vmatpush.msra.mxu0 0.0
        %5799 = vmatpush.msra.mxu0 0.0
        %5800 = vmatpush.msra.mxu0 0.0
        %5801 = vmatpush.msra.mxu0 0.0
        %5802 = vmatpush.msra.mxu0 0.0
        %5803 = vmatpush.msra.mxu0 0.0
        %5804 = vmatpush.msra.mxu0 0.0
        %5805 = vmatpush.msra.mxu0 0.0
        %5806 = vmatpush.msra.mxu0 0.0
        %5807 = vmatpush.msra.mxu0 0.0
        %5808 = vmatpush.msra.mxu0 0.0
        %5809 = vmatpush.msra.mxu0 0.0
        %5810 = vmatpush.msra.mxu0 0.0
        %5811 = vmatpush.msra.mxu0 %v5761
        %5812 = vmatpush.msra.mxu0 %v5760
        %5813 = vmatmul.f32.gmra.mxu0 %v5792
        %v5814 = vpop.f32.mrf.mxu0
        %v5815 = vadd.f32 0.0, %v5814
        %5816 = vmatmul.f32.gmra.mxu0 %v5795
        %v5817 = vpop.f32.mrf.mxu0
        %v5818 = vadd.f32 0.0, %v5817
        %5819 = vdwg.mxu0
        %v5820 = vadd.f32 %v5754, %v5815
        %v5821 = vadd.f32 %v5755, %v5818
        %s5822 = scalar_lea.vmem [#allocation2], 4480
        %v5823 = vld [vmem:[%s5822] sm:$0xff]
        %v5824 = vld [vmem:[%s5822 + $0x10] sm:$0xff]
        %s5825 = scalar_lea.vmem [#allocation4], 560
        %v5826 = vld [vmem:[%s5825] sm:$0xff]
        %v5827 = vld [vmem:[%s5825 + $0x8] sm:$0xff]
        %v5829 = vsel %vm3151, %v5823, 0
        %v5832 = vsel %vm3151, %v5824, 0
        %5834 = vmatpush.msra.mxu0 0.0
        %5835 = vmatpush.msra.mxu0 0.0
        %5836 = vmatpush.msra.mxu0 0.0
        %5837 = vmatpush.msra.mxu0 0.0
        %5838 = vmatpush.msra.mxu0 0.0
        %5839 = vmatpush.msra.mxu0 0.0
        %5840 = vmatpush.msra.mxu0 0.0
        %5841 = vmatpush.msra.mxu0 0.0
        %5842 = vmatpush.msra.mxu0 0.0
        %5843 = vmatpush.msra.mxu0 0.0
        %5844 = vmatpush.msra.mxu0 0.0
        %5845 = vmatpush.msra.mxu0 0.0
        %5846 = vmatpush.msra.mxu0 0.0
        %5847 = vmatpush.msra.mxu0 0.0
        %5848 = vmatpush.msra.mxu0 %v3251
        %5849 = vmatpush.msra.mxu0 %v3250
        %5850 = vmatmul.f32.gmra.mxu0 %v5829
        %v5851 = vpop.f32.mrf.mxu0
        %v5852 = vadd.f32 0.0, %v5851
        %5853 = vmatmul.f32.gmra.mxu0 %v5832
        %v5854 = vpop.f32.mrf.mxu0
        %v5855 = vadd.f32 0.0, %v5854
        %5856 = vdwg.mxu0
        %v5858 = vsel %vm3151, %v5852, 0
        %v5861 = vsel %vm3151, %v5855, 0
        %5863 = vmatpush.msra.mxu0 0.0
        %5864 = vmatpush.msra.mxu0 0.0
        %5865 = vmatpush.msra.mxu0 0.0
        %5866 = vmatpush.msra.mxu0 0.0
        %5867 = vmatpush.msra.mxu0 0.0
        %5868 = vmatpush.msra.mxu0 0.0
        %5869 = vmatpush.msra.mxu0 0.0
        %5870 = vmatpush.msra.mxu0 0.0
        %5871 = vmatpush.msra.mxu0 0.0
        %5872 = vmatpush.msra.mxu0 0.0
        %5873 = vmatpush.msra.mxu0 0.0
        %5874 = vmatpush.msra.mxu0 0.0
        %5875 = vmatpush.msra.mxu0 0.0
        %5876 = vmatpush.msra.mxu0 0.0
        %5877 = vmatpush.msra.mxu0 %v5827
        %5878 = vmatpush.msra.mxu0 %v5826
        %5879 = vmatmul.f32.gmra.mxu0 %v5858
        %v5880 = vpop.f32.mrf.mxu0
        %v5881 = vadd.f32 0.0, %v5880
        %5882 = vmatmul.f32.gmra.mxu0 %v5861
        %v5883 = vpop.f32.mrf.mxu0
        %v5884 = vadd.f32 0.0, %v5883
        %5885 = vdwg.mxu0
        %v5886 = vadd.f32 %v5820, %v5881
        %v5887 = vadd.f32 %v5821, %v5884
        %s5888 = scalar_lea.vmem %s6, 16
        %v5889 = vld [vmem:[%s5888] sm:$0x1]
        %v5890 = vperm.slane %v5889, 0
        %v5891 = vadd.f32 %v5886, %v5890
        %v5892 = vadd.f32 %v5887, %v5890
        %v5893 = vsel %vm3151, %v5891, 0.0
        %v5894 = vsel %vm3151, %v5892, 0.0
        %v5895 = vadd.f32 %v5893, %v5894
        %v5896 = vrot.slane %v5895, 4
        %v5897 = vadd.f32 %v5895, %v5896
        %v5898 = vrot.slane %v5897, 2
        %v5899 = vadd.f32 %v5897, %v5898
        %v5900 = vrot.slane %v5899, 1
        %v5901 = vadd.f32 %v5899, %v5900
        %v5902 = vmul.f32 %v5901, %v3167
        %s5903 = scalar_lea.vmem %s4, 128
        %v5904 = vld [vmem:[%s5903] sm:$0xff]
        %v5905 = vld [vmem:[%s5903 + $0x8] sm:$0xff]
        %v5906 = vld [vmem:[%s5888 + $0x1] sm:$0x1]
        %v5908 = vsel %vm3151, %v5902, 0
        %5910 = vmatpush.msra.mxu0 0.0
        %5911 = vmatpush.msra.mxu0 0.0
        %5912 = vmatpush.msra.mxu0 0.0
        %5913 = vmatpush.msra.mxu0 0.0
        %5914 = vmatpush.msra.mxu0 0.0
        %5915 = vmatpush.msra.mxu0 0.0
        %5916 = vmatpush.msra.mxu0 0.0
        %5917 = vmatpush.msra.mxu0 0.0
        %5918 = vmatpush.msra.mxu0 0.0
        %5919 = vmatpush.msra.mxu0 0.0
        %5920 = vmatpush.msra.mxu0 0.0
        %5921 = vmatpush.msra.mxu0 0.0
        %5922 = vmatpush.msra.mxu0 0.0
        %5923 = vmatpush.msra.mxu0 0.0
        %5924 = vmatpush.msra.mxu0 %v5905
        %5925 = vmatpush.msra.mxu0 %v5904
        %5926 = vmatmul.f32.gmra.mxu0 %v5908
        %v5927 = vpop.f32.mrf.mxu0
        %v5928 = vadd.f32 %v5906, %v5927
        %5929 = vdwg.mxu0
        %v5930 = vmax.f32 %v5928, 0.0
        %s5931 = scalar_lea.vmem [#allocation6], 32
        %v5932 = vld [vmem:[%s5931] sm:$0xf]
        %v5933 = vld [vmem:[%s5888 + $0x2] sm:$0x1]
        %v5935 = vsel %vm3200, %v5930, 0
        %v5938 = vsel %vm3204, %v5932, 0
        %5940 = vmatpush.msra.mxu0 0.0
        %5941 = vmatpush.msra.mxu0 0.0
        %5942 = vmatpush.msra.mxu0 0.0
        %5943 = vmatpush.msra.mxu0 0.0
        %5944 = vmatpush.msra.mxu0 0.0
        %5945 = vmatpush.msra.mxu0 0.0
        %5946 = vmatpush.msra.mxu0 0.0
        %5947 = vmatpush.msra.mxu0 0.0
        %5948 = vmatpush.msra.mxu0 0.0
        %5949 = vmatpush.msra.mxu0 0.0
        %5950 = vmatpush.msra.mxu0 0.0
        %5951 = vmatpush.msra.mxu0 0.0
        %5952 = vmatpush.msra.mxu0 0.0
        %5953 = vmatpush.msra.mxu0 0.0
        %5954 = vmatpush.msra.mxu0 0.0
        %5955 = vmatpush.msra.mxu0 %v5938
        %5956 = vmatmul.f32.gmra.mxu0 %v5935
        %v5957 = vpop.f32.mrf.mxu0
        %v5958 = vadd.f32 %v5933, %v5957
        %5959 = vdwg.mxu0
        %v5960 = vxor.u32 %v5958, 2147483648
        %v5961 = vmul.f32 %v5960, 1.442695
        %v5962 = vpow.pop %v5961
        %v5963 = vadd.f32 %v5962, 1.0
        %v5964 = vrcp.pop %v5963
        %v5965 = vmul.f32 %v5963, %v5964
        %v5966 = vsub.f32 1.0, %v5965
        %v5967 = vmul.f32 %v5964, %v5966
        %v5968 = vadd.f32 %v5964, %v5967
        %vm5969 = vweird.f32 %v5963
        %vm5970 = vweird.f32 %v5964
        %vm5971 = vmor %vm5969, %vm5970
        %v5972 = vsel %vm5971, %v5964, %v5968
        %v5973 = vand.u32 2147483647, %v5963
        %vm5974 = vcmp.eq.f32.partialorder %v5973, 8.507059e+37
        %v5975 = vand.u32 %v5963, 2147483648
        %v5976 = vor.u32 1.1754944e-38, %v5975
        %v5977 = vsel %vm5974, %v5976, %v5972
        %v5978 = vmul.f32 1.0, %v5977
        %v5979 = vperm.slane %v5978, 0
        %v5980 = vmul.f32 %v5891, %v5979
        %v5981 = vmul.f32 %v5892, %v5979
        %v5982 = vmax.f32 %v5980, 0.0
        %v5983 = vmax.f32 %v5981, 0.0
        %v5984 = vld [vmem:[#allocation7] sm:$0x1]
        %v5985 = vperm.slane %v5984, 0
        %v5986 = vmul.f32 %v5982, %v5985
        %v5987 = vmul.f32 %v5983, %v5985
        %v5988 = vld [vmem:[#allocation7 + $0x1] sm:$0x1]
        %v5989 = vperm.slane %v5988, 0
        %v5990 = vadd.f32 %v5986, %v5989
        %v5991 = vadd.f32 %v5987, %v5989
        %s5992 = scalar_lea.vmem [#allocation7], 2
        %v5993 = vld [vmem:[%s5992] sm:$0x1]
        %v5994 = vperm.slane %v5993, 0
        %v5995 = vmul.f32 %v5296, %v5994
        %v5996 = vmul.f32 %v5297, %v5994
        %v5997 = vld [vmem:[%s5992 + $0x1] sm:$0x1]
        %v5998 = vperm.slane %v5997, 0
        %v5999 = vadd.f32 %v5995, %v5998
        %v6000 = vadd.f32 %v5996, %v5998
        %s6001 = scalar_lea.vmem [#allocation4], 720
        %v6002 = vld [vmem:[%s6001] sm:$0xff]
        %v6003 = vld [vmem:[%s6001 + $0x8] sm:$0xff]
        %s6004 = scalar_lea.vmem [#allocation4], 864
        %v6005 = vld [vmem:[%s6004] sm:$0xff]
        %v6006 = vld [vmem:[%s6004 + $0x8] sm:$0xff]
        %v6008 = vsel %vm3151, %v5999, 0
        %v6011 = vsel %vm3151, %v6000, 0
        %6013 = vmatpush.msra.mxu0 0.0
        %6014 = vmatpush.msra.mxu0 0.0
        %6015 = vmatpush.msra.mxu0 0.0
        %6016 = vmatpush.msra.mxu0 0.0
        %6017 = vmatpush.msra.mxu0 0.0
        %6018 = vmatpush.msra.mxu0 0.0
        %6019 = vmatpush.msra.mxu0 0.0
        %6020 = vmatpush.msra.mxu0 0.0
        %6021 = vmatpush.msra.mxu0 0.0
        %6022 = vmatpush.msra.mxu0 0.0
        %6023 = vmatpush.msra.mxu0 0.0
        %6024 = vmatpush.msra.mxu0 0.0
        %6025 = vmatpush.msra.mxu0 0.0
        %6026 = vmatpush.msra.mxu0 0.0
        %6027 = vmatpush.msra.mxu0 %v6006
        %6028 = vmatpush.msra.mxu0 %v6005
        %6029 = vmatmul.f32.gmra.mxu0 %v6008
        %v6030 = vpop.f32.mrf.mxu0
        %v6031 = vadd.f32 0.0, %v6030
        %6032 = vmatmul.f32.gmra.mxu0 %v6011
        %v6033 = vpop.f32.mrf.mxu0
        %v6034 = vadd.f32 0.0, %v6033
        %6035 = vdwg.mxu0
        %v6037 = vsel %vm3151, %v5990, 0
        %v6040 = vsel %vm3151, %v5991, 0
        %6042 = vmatpush.msra.mxu0 0.0
        %6043 = vmatpush.msra.mxu0 0.0
        %6044 = vmatpush.msra.mxu0 0.0
        %6045 = vmatpush.msra.mxu0 0.0
        %6046 = vmatpush.msra.mxu0 0.0
        %6047 = vmatpush.msra.mxu0 0.0
        %6048 = vmatpush.msra.mxu0 0.0
        %6049 = vmatpush.msra.mxu0 0.0
        %6050 = vmatpush.msra.mxu0 0.0
        %6051 = vmatpush.msra.mxu0 0.0
        %6052 = vmatpush.msra.mxu0 0.0
        %6053 = vmatpush.msra.mxu0 0.0
        %6054 = vmatpush.msra.mxu0 0.0
        %6055 = vmatpush.msra.mxu0 0.0
        %6056 = vmatpush.msra.mxu0 %v6003
        %6057 = vmatpush.msra.mxu0 %v6002
        %6058 = vmatmul.f32.gmra.mxu0 %v6037
        %v6059 = vpop.f32.mrf.mxu0
        %v6060 = vadd.f32 %v6031, %v6059
        %6061 = vmatmul.f32.gmra.mxu0 %v6040
        %v6062 = vpop.f32.mrf.mxu0
        %v6063 = vadd.f32 %v6034, %v6062
        %6064 = vdwg.mxu0
        %s6065 = scalar_lea.vmem [#allocation4], 736
        %v6066 = vld [vmem:[%s6065] sm:$0xff]
        %v6067 = vld [vmem:[%s6065 + $0x8] sm:$0xff]
        %s6068 = scalar_lea.vmem [#allocation4], 880
        %v6069 = vld [vmem:[%s6068] sm:$0xff]
        %v6070 = vld [vmem:[%s6068 + $0x8] sm:$0xff]
        %6071 = vmatpush.msra.mxu0 0.0
        %6072 = vmatpush.msra.mxu0 0.0
        %6073 = vmatpush.msra.mxu0 0.0
        %6074 = vmatpush.msra.mxu0 0.0
        %6075 = vmatpush.msra.mxu0 0.0
        %6076 = vmatpush.msra.mxu0 0.0
        %6077 = vmatpush.msra.mxu0 0.0
        %6078 = vmatpush.msra.mxu0 0.0
        %6079 = vmatpush.msra.mxu0 0.0
        %6080 = vmatpush.msra.mxu0 0.0
        %6081 = vmatpush.msra.mxu0 0.0
        %6082 = vmatpush.msra.mxu0 0.0
        %6083 = vmatpush.msra.mxu0 0.0
        %6084 = vmatpush.msra.mxu0 0.0
        %6085 = vmatpush.msra.mxu0 %v6070
        %6086 = vmatpush.msra.mxu0 %v6069
        %6087 = vmatmul.f32.gmra.mxu0 %v6008
        %v6088 = vpop.f32.mrf.mxu0
        %v6089 = vadd.f32 0.0, %v6088
        %6090 = vmatmul.f32.gmra.mxu0 %v6011
        %v6091 = vpop.f32.mrf.mxu0
        %v6092 = vadd.f32 0.0, %v6091
        %6093 = vdwg.mxu0
        %6094 = vmatpush.msra.mxu0 0.0
        %6095 = vmatpush.msra.mxu0 0.0
        %6096 = vmatpush.msra.mxu0 0.0
        %6097 = vmatpush.msra.mxu0 0.0
        %6098 = vmatpush.msra.mxu0 0.0
        %6099 = vmatpush.msra.mxu0 0.0
        %6100 = vmatpush.msra.mxu0 0.0
        %6101 = vmatpush.msra.mxu0 0.0
        %6102 = vmatpush.msra.mxu0 0.0
        %6103 = vmatpush.msra.mxu0 0.0
        %6104 = vmatpush.msra.mxu0 0.0
        %6105 = vmatpush.msra.mxu0 0.0
        %6106 = vmatpush.msra.mxu0 0.0
        %6107 = vmatpush.msra.mxu0 0.0
        %6108 = vmatpush.msra.mxu0 %v6067
        %6109 = vmatpush.msra.mxu0 %v6066
        %6110 = vmatmul.f32.gmra.mxu0 %v6037
        %v6111 = vpop.f32.mrf.mxu0
        %v6112 = vadd.f32 %v6089, %v6111
        %6113 = vmatmul.f32.gmra.mxu0 %v6040
        %v6114 = vpop.f32.mrf.mxu0
        %v6115 = vadd.f32 %v6092, %v6114
        %6116 = vdwg.mxu0
        %6117 = vmatpush.msra.mxu0 0.0
        %6118 = vmatpush.msra.mxu0 0.0
        %6119 = vmatpush.msra.mxu0 0.0
        %6120 = vmatpush.msra.mxu0 0.0
        %6121 = vmatpush.msra.mxu0 0.0
        %6122 = vmatpush.msra.mxu0 0.0
        %6123 = vmatpush.msra.mxu0 0.0
        %6124 = vmatpush.msra.mxu0 0.0
        %6125 = vmatpush.msra.mxu0 0.0
        %6126 = vmatpush.msra.mxu0 0.0
        %6127 = vmatpush.msra.mxu0 0.0
        %6128 = vmatpush.msra.mxu0 0.0
        %6129 = vmatpush.msra.mxu0 0.0
        %6130 = vmatpush.msra.mxu0 0.0
        %6131 = vmatpush.msra.mxu0 %v6115
        %6132 = vmatpush.msra.mxu0 %v6112
        %6133 = vmatmul.f32.gmra.mxu0 %v5340
        %v6134 = vpop.f32.mrf.mxu0
        %v6135 = vadd.f32 0.0, %v6134
        %6136 = vmatmul.f32.gmra.mxu0 %v5343
        %v6137 = vpop.f32.mrf.mxu0
        %v6138 = vadd.f32 0.0, %v6137
        %6139 = vdwg.mxu0
        %6140 = vmatpush.msra.mxu0 0.0
        %6141 = vmatpush.msra.mxu0 0.0
        %6142 = vmatpush.msra.mxu0 0.0
        %6143 = vmatpush.msra.mxu0 0.0
        %6144 = vmatpush.msra.mxu0 0.0
        %6145 = vmatpush.msra.mxu0 0.0
        %6146 = vmatpush.msra.mxu0 0.0
        %6147 = vmatpush.msra.mxu0 0.0
        %6148 = vmatpush.msra.mxu0 0.0
        %6149 = vmatpush.msra.mxu0 0.0
        %6150 = vmatpush.msra.mxu0 0.0
        %6151 = vmatpush.msra.mxu0 0.0
        %6152 = vmatpush.msra.mxu0 0.0
        %6153 = vmatpush.msra.mxu0 0.0
        %6154 = vmatpush.msra.mxu0 %v6063
        %6155 = vmatpush.msra.mxu0 %v6060
        %6156 = vmatmul.f32.gmra.mxu0 %v5305
        %v6157 = vpop.f32.mrf.mxu0
        %v6158 = vadd.f32 %v6135, %v6157
        %6159 = vmatmul.f32.gmra.mxu0 %v5308
        %v6160 = vpop.f32.mrf.mxu0
        %v6161 = vadd.f32 %v6138, %v6160
        %6162 = vdwg.mxu0
        %s6163 = scalar_lea.vmem [#allocation4], 752
        %v6164 = vld [vmem:[%s6163] sm:$0xff]
        %v6165 = vld [vmem:[%s6163 + $0x8] sm:$0xff]
        %s6166 = scalar_lea.vmem [#allocation4], 896
        %v6167 = vld [vmem:[%s6166] sm:$0xff]
        %v6168 = vld [vmem:[%s6166 + $0x8] sm:$0xff]
        %6169 = vmatpush.msra.mxu0 0.0
        %6170 = vmatpush.msra.mxu0 0.0
        %6171 = vmatpush.msra.mxu0 0.0
        %6172 = vmatpush.msra.mxu0 0.0
        %6173 = vmatpush.msra.mxu0 0.0
        %6174 = vmatpush.msra.mxu0 0.0
        %6175 = vmatpush.msra.mxu0 0.0
        %6176 = vmatpush.msra.mxu0 0.0
        %6177 = vmatpush.msra.mxu0 0.0
        %6178 = vmatpush.msra.mxu0 0.0
        %6179 = vmatpush.msra.mxu0 0.0
        %6180 = vmatpush.msra.mxu0 0.0
        %6181 = vmatpush.msra.mxu0 0.0
        %6182 = vmatpush.msra.mxu0 0.0
        %6183 = vmatpush.msra.mxu0 %v6168
        %6184 = vmatpush.msra.mxu0 %v6167
        %6185 = vmatmul.f32.gmra.mxu0 %v6008
        %v6186 = vpop.f32.mrf.mxu0
        %v6187 = vadd.f32 0.0, %v6186
        %6188 = vmatmul.f32.gmra.mxu0 %v6011
        %v6189 = vpop.f32.mrf.mxu0
        %v6190 = vadd.f32 0.0, %v6189
        %6191 = vdwg.mxu0
        %6192 = vmatpush.msra.mxu0 0.0
        %6193 = vmatpush.msra.mxu0 0.0
        %6194 = vmatpush.msra.mxu0 0.0
        %6195 = vmatpush.msra.mxu0 0.0
        %6196 = vmatpush.msra.mxu0 0.0
        %6197 = vmatpush.msra.mxu0 0.0
        %6198 = vmatpush.msra.mxu0 0.0
        %6199 = vmatpush.msra.mxu0 0.0
        %6200 = vmatpush.msra.mxu0 0.0
        %6201 = vmatpush.msra.mxu0 0.0
        %6202 = vmatpush.msra.mxu0 0.0
        %6203 = vmatpush.msra.mxu0 0.0
        %6204 = vmatpush.msra.mxu0 0.0
        %6205 = vmatpush.msra.mxu0 0.0
        %6206 = vmatpush.msra.mxu0 %v6165
        %6207 = vmatpush.msra.mxu0 %v6164
        %6208 = vmatmul.f32.gmra.mxu0 %v6037
        %v6209 = vpop.f32.mrf.mxu0
        %v6210 = vadd.f32 %v6187, %v6209
        %6211 = vmatmul.f32.gmra.mxu0 %v6040
        %v6212 = vpop.f32.mrf.mxu0
        %v6213 = vadd.f32 %v6190, %v6212
        %6214 = vdwg.mxu0
        %6215 = vmatpush.msra.mxu0 0.0
        %6216 = vmatpush.msra.mxu0 0.0
        %6217 = vmatpush.msra.mxu0 0.0
        %6218 = vmatpush.msra.mxu0 0.0
        %6219 = vmatpush.msra.mxu0 0.0
        %6220 = vmatpush.msra.mxu0 0.0
        %6221 = vmatpush.msra.mxu0 0.0
        %6222 = vmatpush.msra.mxu0 0.0
        %6223 = vmatpush.msra.mxu0 0.0
        %6224 = vmatpush.msra.mxu0 0.0
        %6225 = vmatpush.msra.mxu0 0.0
        %6226 = vmatpush.msra.mxu0 0.0
        %6227 = vmatpush.msra.mxu0 0.0
        %6228 = vmatpush.msra.mxu0 0.0
        %6229 = vmatpush.msra.mxu0 %v6213
        %6230 = vmatpush.msra.mxu0 %v6210
        %6231 = vmatmul.f32.gmra.mxu0 %v5433
        %v6232 = vpop.f32.mrf.mxu0
        %v6233 = vadd.f32 0.0, %v6232
        %6234 = vmatmul.f32.gmra.mxu0 %v5436
        %v6235 = vpop.f32.mrf.mxu0
        %v6236 = vadd.f32 0.0, %v6235
        %6237 = vdwg.mxu0
        %v6238 = vadd.f32 %v6158, %v6233
        %v6239 = vadd.f32 %v6161, %v6236
        %s6240 = scalar_lea.vmem [#allocation4], 768
        %v6241 = vld [vmem:[%s6240] sm:$0xff]
        %v6242 = vld [vmem:[%s6240 + $0x8] sm:$0xff]
        %s6243 = scalar_lea.vmem [#allocation4], 912
        %v6244 = vld [vmem:[%s6243] sm:$0xff]
        %v6245 = vld [vmem:[%s6243 + $0x8] sm:$0xff]
        %6246 = vmatpush.msra.mxu0 0.0
        %6247 = vmatpush.msra.mxu0 0.0
        %6248 = vmatpush.msra.mxu0 0.0
        %6249 = vmatpush.msra.mxu0 0.0
        %6250 = vmatpush.msra.mxu0 0.0
        %6251 = vmatpush.msra.mxu0 0.0
        %6252 = vmatpush.msra.mxu0 0.0
        %6253 = vmatpush.msra.mxu0 0.0
        %6254 = vmatpush.msra.mxu0 0.0
        %6255 = vmatpush.msra.mxu0 0.0
        %6256 = vmatpush.msra.mxu0 0.0
        %6257 = vmatpush.msra.mxu0 0.0
        %6258 = vmatpush.msra.mxu0 0.0
        %6259 = vmatpush.msra.mxu0 0.0
        %6260 = vmatpush.msra.mxu0 %v6245
        %6261 = vmatpush.msra.mxu0 %v6244
        %6262 = vmatmul.f32.gmra.mxu0 %v6008
        %v6263 = vpop.f32.mrf.mxu0
        %v6264 = vadd.f32 0.0, %v6263
        %6265 = vmatmul.f32.gmra.mxu0 %v6011
        %v6266 = vpop.f32.mrf.mxu0
        %v6267 = vadd.f32 0.0, %v6266
        %6268 = vdwg.mxu0
        %6269 = vmatpush.msra.mxu0 0.0
        %6270 = vmatpush.msra.mxu0 0.0
        %6271 = vmatpush.msra.mxu0 0.0
        %6272 = vmatpush.msra.mxu0 0.0
        %6273 = vmatpush.msra.mxu0 0.0
        %6274 = vmatpush.msra.mxu0 0.0
        %6275 = vmatpush.msra.mxu0 0.0
        %6276 = vmatpush.msra.mxu0 0.0
        %6277 = vmatpush.msra.mxu0 0.0
        %6278 = vmatpush.msra.mxu0 0.0
        %6279 = vmatpush.msra.mxu0 0.0
        %6280 = vmatpush.msra.mxu0 0.0
        %6281 = vmatpush.msra.mxu0 0.0
        %6282 = vmatpush.msra.mxu0 0.0
        %6283 = vmatpush.msra.mxu0 %v6242
        %6284 = vmatpush.msra.mxu0 %v6241
        %6285 = vmatmul.f32.gmra.mxu0 %v6037
        %v6286 = vpop.f32.mrf.mxu0
        %v6287 = vadd.f32 %v6264, %v6286
        %6288 = vmatmul.f32.gmra.mxu0 %v6040
        %v6289 = vpop.f32.mrf.mxu0
        %v6290 = vadd.f32 %v6267, %v6289
        %6291 = vdwg.mxu0
        %6292 = vmatpush.msra.mxu0 0.0
        %6293 = vmatpush.msra.mxu0 0.0
        %6294 = vmatpush.msra.mxu0 0.0
        %6295 = vmatpush.msra.mxu0 0.0
        %6296 = vmatpush.msra.mxu0 0.0
        %6297 = vmatpush.msra.mxu0 0.0
        %6298 = vmatpush.msra.mxu0 0.0
        %6299 = vmatpush.msra.mxu0 0.0
        %6300 = vmatpush.msra.mxu0 0.0
        %6301 = vmatpush.msra.mxu0 0.0
        %6302 = vmatpush.msra.mxu0 0.0
        %6303 = vmatpush.msra.mxu0 0.0
        %6304 = vmatpush.msra.mxu0 0.0
        %6305 = vmatpush.msra.mxu0 0.0
        %6306 = vmatpush.msra.mxu0 %v6290
        %6307 = vmatpush.msra.mxu0 %v6287
        %6308 = vmatmul.f32.gmra.mxu0 %v5499
        %v6309 = vpop.f32.mrf.mxu0
        %v6310 = vadd.f32 0.0, %v6309
        %6311 = vmatmul.f32.gmra.mxu0 %v5502
        %v6312 = vpop.f32.mrf.mxu0
        %v6313 = vadd.f32 0.0, %v6312
        %6314 = vdwg.mxu0
        %v6315 = vadd.f32 %v6238, %v6310
        %v6316 = vadd.f32 %v6239, %v6313
        %s6317 = scalar_lea.vmem [#allocation4], 784
        %v6318 = vld [vmem:[%s6317] sm:$0xff]
        %v6319 = vld [vmem:[%s6317 + $0x8] sm:$0xff]
        %s6320 = scalar_lea.vmem [#allocation4], 928
        %v6321 = vld [vmem:[%s6320] sm:$0xff]
        %v6322 = vld [vmem:[%s6320 + $0x8] sm:$0xff]
        %6323 = vmatpush.msra.mxu0 0.0
        %6324 = vmatpush.msra.mxu0 0.0
        %6325 = vmatpush.msra.mxu0 0.0
        %6326 = vmatpush.msra.mxu0 0.0
        %6327 = vmatpush.msra.mxu0 0.0
        %6328 = vmatpush.msra.mxu0 0.0
        %6329 = vmatpush.msra.mxu0 0.0
        %6330 = vmatpush.msra.mxu0 0.0
        %6331 = vmatpush.msra.mxu0 0.0
        %6332 = vmatpush.msra.mxu0 0.0
        %6333 = vmatpush.msra.mxu0 0.0
        %6334 = vmatpush.msra.mxu0 0.0
        %6335 = vmatpush.msra.mxu0 0.0
        %6336 = vmatpush.msra.mxu0 0.0
        %6337 = vmatpush.msra.mxu0 %v6322
        %6338 = vmatpush.msra.mxu0 %v6321
        %6339 = vmatmul.f32.gmra.mxu0 %v6008
        %v6340 = vpop.f32.mrf.mxu0
        %v6341 = vadd.f32 0.0, %v6340
        %6342 = vmatmul.f32.gmra.mxu0 %v6011
        %v6343 = vpop.f32.mrf.mxu0
        %v6344 = vadd.f32 0.0, %v6343
        %6345 = vdwg.mxu0
        %6346 = vmatpush.msra.mxu0 0.0
        %6347 = vmatpush.msra.mxu0 0.0
        %6348 = vmatpush.msra.mxu0 0.0
        %6349 = vmatpush.msra.mxu0 0.0
        %6350 = vmatpush.msra.mxu0 0.0
        %6351 = vmatpush.msra.mxu0 0.0
        %6352 = vmatpush.msra.mxu0 0.0
        %6353 = vmatpush.msra.mxu0 0.0
        %6354 = vmatpush.msra.mxu0 0.0
        %6355 = vmatpush.msra.mxu0 0.0
        %6356 = vmatpush.msra.mxu0 0.0
        %6357 = vmatpush.msra.mxu0 0.0
        %6358 = vmatpush.msra.mxu0 0.0
        %6359 = vmatpush.msra.mxu0 0.0
        %6360 = vmatpush.msra.mxu0 %v6319
        %6361 = vmatpush.msra.mxu0 %v6318
        %6362 = vmatmul.f32.gmra.mxu0 %v6037
        %v6363 = vpop.f32.mrf.mxu0
        %v6364 = vadd.f32 %v6341, %v6363
        %6365 = vmatmul.f32.gmra.mxu0 %v6040
        %v6366 = vpop.f32.mrf.mxu0
        %v6367 = vadd.f32 %v6344, %v6366
        %6368 = vdwg.mxu0
        %6369 = vmatpush.msra.mxu0 0.0
        %6370 = vmatpush.msra.mxu0 0.0
        %6371 = vmatpush.msra.mxu0 0.0
        %6372 = vmatpush.msra.mxu0 0.0
        %6373 = vmatpush.msra.mxu0 0.0
        %6374 = vmatpush.msra.mxu0 0.0
        %6375 = vmatpush.msra.mxu0 0.0
        %6376 = vmatpush.msra.mxu0 0.0
        %6377 = vmatpush.msra.mxu0 0.0
        %6378 = vmatpush.msra.mxu0 0.0
        %6379 = vmatpush.msra.mxu0 0.0
        %6380 = vmatpush.msra.mxu0 0.0
        %6381 = vmatpush.msra.mxu0 0.0
        %6382 = vmatpush.msra.mxu0 0.0
        %6383 = vmatpush.msra.mxu0 %v6367
        %6384 = vmatpush.msra.mxu0 %v6364
        %6385 = vmatmul.f32.gmra.mxu0 %v5565
        %v6386 = vpop.f32.mrf.mxu0
        %v6387 = vadd.f32 0.0, %v6386
        %6388 = vmatmul.f32.gmra.mxu0 %v5568
        %v6389 = vpop.f32.mrf.mxu0
        %v6390 = vadd.f32 0.0, %v6389
        %6391 = vdwg.mxu0
        %v6392 = vadd.f32 %v6315, %v6387
        %v6393 = vadd.f32 %v6316, %v6390
        %s6394 = scalar_lea.vmem [#allocation4], 800
        %v6395 = vld [vmem:[%s6394] sm:$0xff]
        %v6396 = vld [vmem:[%s6394 + $0x8] sm:$0xff]
        %s6397 = scalar_lea.vmem [#allocation4], 944
        %v6398 = vld [vmem:[%s6397] sm:$0xff]
        %v6399 = vld [vmem:[%s6397 + $0x8] sm:$0xff]
        %6400 = vmatpush.msra.mxu0 0.0
        %6401 = vmatpush.msra.mxu0 0.0
        %6402 = vmatpush.msra.mxu0 0.0
        %6403 = vmatpush.msra.mxu0 0.0
        %6404 = vmatpush.msra.mxu0 0.0
        %6405 = vmatpush.msra.mxu0 0.0
        %6406 = vmatpush.msra.mxu0 0.0
        %6407 = vmatpush.msra.mxu0 0.0
        %6408 = vmatpush.msra.mxu0 0.0
        %6409 = vmatpush.msra.mxu0 0.0
        %6410 = vmatpush.msra.mxu0 0.0
        %6411 = vmatpush.msra.mxu0 0.0
        %6412 = vmatpush.msra.mxu0 0.0
        %6413 = vmatpush.msra.mxu0 0.0
        %6414 = vmatpush.msra.mxu0 %v6399
        %6415 = vmatpush.msra.mxu0 %v6398
        %6416 = vmatmul.f32.gmra.mxu0 %v6008
        %v6417 = vpop.f32.mrf.mxu0
        %v6418 = vadd.f32 0.0, %v6417
        %6419 = vmatmul.f32.gmra.mxu0 %v6011
        %v6420 = vpop.f32.mrf.mxu0
        %v6421 = vadd.f32 0.0, %v6420
        %6422 = vdwg.mxu0
        %6423 = vmatpush.msra.mxu0 0.0
        %6424 = vmatpush.msra.mxu0 0.0
        %6425 = vmatpush.msra.mxu0 0.0
        %6426 = vmatpush.msra.mxu0 0.0
        %6427 = vmatpush.msra.mxu0 0.0
        %6428 = vmatpush.msra.mxu0 0.0
        %6429 = vmatpush.msra.mxu0 0.0
        %6430 = vmatpush.msra.mxu0 0.0
        %6431 = vmatpush.msra.mxu0 0.0
        %6432 = vmatpush.msra.mxu0 0.0
        %6433 = vmatpush.msra.mxu0 0.0
        %6434 = vmatpush.msra.mxu0 0.0
        %6435 = vmatpush.msra.mxu0 0.0
        %6436 = vmatpush.msra.mxu0 0.0
        %6437 = vmatpush.msra.mxu0 %v6396
        %6438 = vmatpush.msra.mxu0 %v6395
        %6439 = vmatmul.f32.gmra.mxu0 %v6037
        %v6440 = vpop.f32.mrf.mxu0
        %v6441 = vadd.f32 %v6418, %v6440
        %6442 = vmatmul.f32.gmra.mxu0 %v6040
        %v6443 = vpop.f32.mrf.mxu0
        %v6444 = vadd.f32 %v6421, %v6443
        %6445 = vdwg.mxu0
        %6446 = vmatpush.msra.mxu0 0.0
        %6447 = vmatpush.msra.mxu0 0.0
        %6448 = vmatpush.msra.mxu0 0.0
        %6449 = vmatpush.msra.mxu0 0.0
        %6450 = vmatpush.msra.mxu0 0.0
        %6451 = vmatpush.msra.mxu0 0.0
        %6452 = vmatpush.msra.mxu0 0.0
        %6453 = vmatpush.msra.mxu0 0.0
        %6454 = vmatpush.msra.mxu0 0.0
        %6455 = vmatpush.msra.mxu0 0.0
        %6456 = vmatpush.msra.mxu0 0.0
        %6457 = vmatpush.msra.mxu0 0.0
        %6458 = vmatpush.msra.mxu0 0.0
        %6459 = vmatpush.msra.mxu0 0.0
        %6460 = vmatpush.msra.mxu0 %v6444
        %6461 = vmatpush.msra.mxu0 %v6441
        %6462 = vmatmul.f32.gmra.mxu0 %v5631
        %v6463 = vpop.f32.mrf.mxu0
        %v6464 = vadd.f32 0.0, %v6463
        %6465 = vmatmul.f32.gmra.mxu0 %v5634
        %v6466 = vpop.f32.mrf.mxu0
        %v6467 = vadd.f32 0.0, %v6466
        %6468 = vdwg.mxu0
        %v6469 = vadd.f32 %v6392, %v6464
        %v6470 = vadd.f32 %v6393, %v6467
        %s6471 = scalar_lea.vmem [#allocation4], 816
        %v6472 = vld [vmem:[%s6471] sm:$0xff]
        %v6473 = vld [vmem:[%s6471 + $0x8] sm:$0xff]
        %s6474 = scalar_lea.vmem [#allocation4], 960
        %v6475 = vld [vmem:[%s6474] sm:$0xff]
        %v6476 = vld [vmem:[%s6474 + $0x8] sm:$0xff]
        %6477 = vmatpush.msra.mxu0 0.0
        %6478 = vmatpush.msra.mxu0 0.0
        %6479 = vmatpush.msra.mxu0 0.0
        %6480 = vmatpush.msra.mxu0 0.0
        %6481 = vmatpush.msra.mxu0 0.0
        %6482 = vmatpush.msra.mxu0 0.0
        %6483 = vmatpush.msra.mxu0 0.0
        %6484 = vmatpush.msra.mxu0 0.0
        %6485 = vmatpush.msra.mxu0 0.0
        %6486 = vmatpush.msra.mxu0 0.0
        %6487 = vmatpush.msra.mxu0 0.0
        %6488 = vmatpush.msra.mxu0 0.0
        %6489 = vmatpush.msra.mxu0 0.0
        %6490 = vmatpush.msra.mxu0 0.0
        %6491 = vmatpush.msra.mxu0 %v6476
        %6492 = vmatpush.msra.mxu0 %v6475
        %6493 = vmatmul.f32.gmra.mxu0 %v6008
        %v6494 = vpop.f32.mrf.mxu0
        %v6495 = vadd.f32 0.0, %v6494
        %6496 = vmatmul.f32.gmra.mxu0 %v6011
        %v6497 = vpop.f32.mrf.mxu0
        %v6498 = vadd.f32 0.0, %v6497
        %6499 = vdwg.mxu0
        %6500 = vmatpush.msra.mxu0 0.0
        %6501 = vmatpush.msra.mxu0 0.0
        %6502 = vmatpush.msra.mxu0 0.0
        %6503 = vmatpush.msra.mxu0 0.0
        %6504 = vmatpush.msra.mxu0 0.0
        %6505 = vmatpush.msra.mxu0 0.0
        %6506 = vmatpush.msra.mxu0 0.0
        %6507 = vmatpush.msra.mxu0 0.0
        %6508 = vmatpush.msra.mxu0 0.0
        %6509 = vmatpush.msra.mxu0 0.0
        %6510 = vmatpush.msra.mxu0 0.0
        %6511 = vmatpush.msra.mxu0 0.0
        %6512 = vmatpush.msra.mxu0 0.0
        %6513 = vmatpush.msra.mxu0 0.0
        %6514 = vmatpush.msra.mxu0 %v6473
        %6515 = vmatpush.msra.mxu0 %v6472
        %6516 = vmatmul.f32.gmra.mxu0 %v6037
        %v6517 = vpop.f32.mrf.mxu0
        %v6518 = vadd.f32 %v6495, %v6517
        %6519 = vmatmul.f32.gmra.mxu0 %v6040
        %v6520 = vpop.f32.mrf.mxu0
        %v6521 = vadd.f32 %v6498, %v6520
        %6522 = vdwg.mxu0
        %6523 = vmatpush.msra.mxu0 0.0
        %6524 = vmatpush.msra.mxu0 0.0
        %6525 = vmatpush.msra.mxu0 0.0
        %6526 = vmatpush.msra.mxu0 0.0
        %6527 = vmatpush.msra.mxu0 0.0
        %6528 = vmatpush.msra.mxu0 0.0
        %6529 = vmatpush.msra.mxu0 0.0
        %6530 = vmatpush.msra.mxu0 0.0
        %6531 = vmatpush.msra.mxu0 0.0
        %6532 = vmatpush.msra.mxu0 0.0
        %6533 = vmatpush.msra.mxu0 0.0
        %6534 = vmatpush.msra.mxu0 0.0
        %6535 = vmatpush.msra.mxu0 0.0
        %6536 = vmatpush.msra.mxu0 0.0
        %6537 = vmatpush.msra.mxu0 %v6521
        %6538 = vmatpush.msra.mxu0 %v6518
        %6539 = vmatmul.f32.gmra.mxu0 %v5697
        %v6540 = vpop.f32.mrf.mxu0
        %v6541 = vadd.f32 0.0, %v6540
        %6542 = vmatmul.f32.gmra.mxu0 %v5700
        %v6543 = vpop.f32.mrf.mxu0
        %v6544 = vadd.f32 0.0, %v6543
        %6545 = vdwg.mxu0
        %v6546 = vadd.f32 %v6469, %v6541
        %v6547 = vadd.f32 %v6470, %v6544
        %s6548 = scalar_lea.vmem [#allocation4], 832
        %v6549 = vld [vmem:[%s6548] sm:$0xff]
        %v6550 = vld [vmem:[%s6548 + $0x8] sm:$0xff]
        %s6551 = scalar_lea.vmem [#allocation4], 976
        %v6552 = vld [vmem:[%s6551] sm:$0xff]
        %v6553 = vld [vmem:[%s6551 + $0x8] sm:$0xff]
        %6554 = vmatpush.msra.mxu0 0.0
        %6555 = vmatpush.msra.mxu0 0.0
        %6556 = vmatpush.msra.mxu0 0.0
        %6557 = vmatpush.msra.mxu0 0.0
        %6558 = vmatpush.msra.mxu0 0.0
        %6559 = vmatpush.msra.mxu0 0.0
        %6560 = vmatpush.msra.mxu0 0.0
        %6561 = vmatpush.msra.mxu0 0.0
        %6562 = vmatpush.msra.mxu0 0.0
        %6563 = vmatpush.msra.mxu0 0.0
        %6564 = vmatpush.msra.mxu0 0.0
        %6565 = vmatpush.msra.mxu0 0.0
        %6566 = vmatpush.msra.mxu0 0.0
        %6567 = vmatpush.msra.mxu0 0.0
        %6568 = vmatpush.msra.mxu0 %v6553
        %6569 = vmatpush.msra.mxu0 %v6552
        %6570 = vmatmul.f32.gmra.mxu0 %v6008
        %v6571 = vpop.f32.mrf.mxu0
        %v6572 = vadd.f32 0.0, %v6571
        %6573 = vmatmul.f32.gmra.mxu0 %v6011
        %v6574 = vpop.f32.mrf.mxu0
        %v6575 = vadd.f32 0.0, %v6574
        %6576 = vdwg.mxu0
        %6577 = vmatpush.msra.mxu0 0.0
        %6578 = vmatpush.msra.mxu0 0.0
        %6579 = vmatpush.msra.mxu0 0.0
        %6580 = vmatpush.msra.mxu0 0.0
        %6581 = vmatpush.msra.mxu0 0.0
        %6582 = vmatpush.msra.mxu0 0.0
        %6583 = vmatpush.msra.mxu0 0.0
        %6584 = vmatpush.msra.mxu0 0.0
        %6585 = vmatpush.msra.mxu0 0.0
        %6586 = vmatpush.msra.mxu0 0.0
        %6587 = vmatpush.msra.mxu0 0.0
        %6588 = vmatpush.msra.mxu0 0.0
        %6589 = vmatpush.msra.mxu0 0.0
        %6590 = vmatpush.msra.mxu0 0.0
        %6591 = vmatpush.msra.mxu0 %v6550
        %6592 = vmatpush.msra.mxu0 %v6549
        %6593 = vmatmul.f32.gmra.mxu0 %v6037
        %v6594 = vpop.f32.mrf.mxu0
        %v6595 = vadd.f32 %v6572, %v6594
        %6596 = vmatmul.f32.gmra.mxu0 %v6040
        %v6597 = vpop.f32.mrf.mxu0
        %v6598 = vadd.f32 %v6575, %v6597
        %6599 = vdwg.mxu0
        %6600 = vmatpush.msra.mxu0 0.0
        %6601 = vmatpush.msra.mxu0 0.0
        %6602 = vmatpush.msra.mxu0 0.0
        %6603 = vmatpush.msra.mxu0 0.0
        %6604 = vmatpush.msra.mxu0 0.0
        %6605 = vmatpush.msra.mxu0 0.0
        %6606 = vmatpush.msra.mxu0 0.0
        %6607 = vmatpush.msra.mxu0 0.0
        %6608 = vmatpush.msra.mxu0 0.0
        %6609 = vmatpush.msra.mxu0 0.0
        %6610 = vmatpush.msra.mxu0 0.0
        %6611 = vmatpush.msra.mxu0 0.0
        %6612 = vmatpush.msra.mxu0 0.0
        %6613 = vmatpush.msra.mxu0 0.0
        %6614 = vmatpush.msra.mxu0 %v6598
        %6615 = vmatpush.msra.mxu0 %v6595
        %6616 = vmatmul.f32.gmra.mxu0 %v5763
        %v6617 = vpop.f32.mrf.mxu0
        %v6618 = vadd.f32 0.0, %v6617
        %6619 = vmatmul.f32.gmra.mxu0 %v5766
        %v6620 = vpop.f32.mrf.mxu0
        %v6621 = vadd.f32 0.0, %v6620
        %6622 = vdwg.mxu0
        %v6623 = vadd.f32 %v6546, %v6618
        %v6624 = vadd.f32 %v6547, %v6621
        %s6625 = scalar_lea.vmem [#allocation4], 848
        %v6626 = vld [vmem:[%s6625] sm:$0xff]
        %v6627 = vld [vmem:[%s6625 + $0x8] sm:$0xff]
        %s6628 = scalar_lea.vmem [#allocation4], 992
        %v6629 = vld [vmem:[%s6628] sm:$0xff]
        %v6630 = vld [vmem:[%s6628 + $0x8] sm:$0xff]
        %6631 = vmatpush.msra.mxu0 0.0
        %6632 = vmatpush.msra.mxu0 0.0
        %6633 = vmatpush.msra.mxu0 0.0
        %6634 = vmatpush.msra.mxu0 0.0
        %6635 = vmatpush.msra.mxu0 0.0
        %6636 = vmatpush.msra.mxu0 0.0
        %6637 = vmatpush.msra.mxu0 0.0
        %6638 = vmatpush.msra.mxu0 0.0
        %6639 = vmatpush.msra.mxu0 0.0
        %6640 = vmatpush.msra.mxu0 0.0
        %6641 = vmatpush.msra.mxu0 0.0
        %6642 = vmatpush.msra.mxu0 0.0
        %6643 = vmatpush.msra.mxu0 0.0
        %6644 = vmatpush.msra.mxu0 0.0
        %6645 = vmatpush.msra.mxu0 %v6630
        %6646 = vmatpush.msra.mxu0 %v6629
        %6647 = vmatmul.f32.gmra.mxu0 %v6008
        %v6648 = vpop.f32.mrf.mxu0
        %v6649 = vadd.f32 0.0, %v6648
        %6650 = vmatmul.f32.gmra.mxu0 %v6011
        %v6651 = vpop.f32.mrf.mxu0
        %v6652 = vadd.f32 0.0, %v6651
        %6653 = vdwg.mxu0
        %6654 = vmatpush.msra.mxu0 0.0
        %6655 = vmatpush.msra.mxu0 0.0
        %6656 = vmatpush.msra.mxu0 0.0
        %6657 = vmatpush.msra.mxu0 0.0
        %6658 = vmatpush.msra.mxu0 0.0
        %6659 = vmatpush.msra.mxu0 0.0
        %6660 = vmatpush.msra.mxu0 0.0
        %6661 = vmatpush.msra.mxu0 0.0
        %6662 = vmatpush.msra.mxu0 0.0
        %6663 = vmatpush.msra.mxu0 0.0
        %6664 = vmatpush.msra.mxu0 0.0
        %6665 = vmatpush.msra.mxu0 0.0
        %6666 = vmatpush.msra.mxu0 0.0
        %6667 = vmatpush.msra.mxu0 0.0
        %6668 = vmatpush.msra.mxu0 %v6627
        %6669 = vmatpush.msra.mxu0 %v6626
        %6670 = vmatmul.f32.gmra.mxu0 %v6037
        %v6671 = vpop.f32.mrf.mxu0
        %v6672 = vadd.f32 %v6649, %v6671
        %6673 = vmatmul.f32.gmra.mxu0 %v6040
        %v6674 = vpop.f32.mrf.mxu0
        %v6675 = vadd.f32 %v6652, %v6674
        %6676 = vdwg.mxu0
        %6677 = vmatpush.msra.mxu0 0.0
        %6678 = vmatpush.msra.mxu0 0.0
        %6679 = vmatpush.msra.mxu0 0.0
        %6680 = vmatpush.msra.mxu0 0.0
        %6681 = vmatpush.msra.mxu0 0.0
        %6682 = vmatpush.msra.mxu0 0.0
        %6683 = vmatpush.msra.mxu0 0.0
        %6684 = vmatpush.msra.mxu0 0.0
        %6685 = vmatpush.msra.mxu0 0.0
        %6686 = vmatpush.msra.mxu0 0.0
        %6687 = vmatpush.msra.mxu0 0.0
        %6688 = vmatpush.msra.mxu0 0.0
        %6689 = vmatpush.msra.mxu0 0.0
        %6690 = vmatpush.msra.mxu0 0.0
        %6691 = vmatpush.msra.mxu0 %v6675
        %6692 = vmatpush.msra.mxu0 %v6672
        %6693 = vmatmul.f32.gmra.mxu0 %v5829
        %v6694 = vpop.f32.mrf.mxu0
        %v6695 = vadd.f32 0.0, %v6694
        %6696 = vmatmul.f32.gmra.mxu0 %v5832
        %v6697 = vpop.f32.mrf.mxu0
        %v6698 = vadd.f32 0.0, %v6697
        %6699 = vdwg.mxu0
        %v6700 = vadd.f32 %v6623, %v6695
        %v6701 = vadd.f32 %v6624, %v6698
        %s6702 = scalar_lea.vmem %s6, 24
        %v6703 = vld [vmem:[%s6702] sm:$0x1]
        %v6704 = vperm.slane %v6703, 0
        %v6705 = vadd.f32 %v6700, %v6704
        %v6706 = vadd.f32 %v6701, %v6704
        %v6707 = vsel %vm3151, %v6705, 0.0
        %v6708 = vsel %vm3151, %v6706, 0.0
        %v6709 = vadd.f32 %v6707, %v6708
        %v6710 = vrot.slane %v6709, 4
        %v6711 = vadd.f32 %v6709, %v6710
        %v6712 = vrot.slane %v6711, 2
        %v6713 = vadd.f32 %v6711, %v6712
        %v6714 = vrot.slane %v6713, 1
        %v6715 = vadd.f32 %v6713, %v6714
        %v6716 = vmul.f32 %v6715, %v3167
        %s6717 = scalar_lea.vmem %s4, 192
        %v6718 = vld [vmem:[%s6717] sm:$0xff]
        %v6719 = vld [vmem:[%s6717 + $0x8] sm:$0xff]
        %v6720 = vld [vmem:[%s6702 + $0x1] sm:$0x1]
        %v6722 = vsel %vm3151, %v6716, 0
        %6724 = vmatpush.msra.mxu0 0.0
        %6725 = vmatpush.msra.mxu0 0.0
        %6726 = vmatpush.msra.mxu0 0.0
        %6727 = vmatpush.msra.mxu0 0.0
        %6728 = vmatpush.msra.mxu0 0.0
        %6729 = vmatpush.msra.mxu0 0.0
        %6730 = vmatpush.msra.mxu0 0.0
        %6731 = vmatpush.msra.mxu0 0.0
        %6732 = vmatpush.msra.mxu0 0.0
        %6733 = vmatpush.msra.mxu0 0.0
        %6734 = vmatpush.msra.mxu0 0.0
        %6735 = vmatpush.msra.mxu0 0.0
        %6736 = vmatpush.msra.mxu0 0.0
        %6737 = vmatpush.msra.mxu0 0.0
        %6738 = vmatpush.msra.mxu0 %v6719
        %6739 = vmatpush.msra.mxu0 %v6718
        %6740 = vmatmul.f32.gmra.mxu0 %v6722
        %v6741 = vpop.f32.mrf.mxu0
        %v6742 = vadd.f32 %v6720, %v6741
        %6743 = vdwg.mxu0
        %v6744 = vmax.f32 %v6742, 0.0
        %s6745 = scalar_lea.vmem [#allocation6], 48
        %v6746 = vld [vmem:[%s6745] sm:$0xf]
        %v6747 = vld [vmem:[%s6702 + $0x2] sm:$0x1]
        %v6749 = vsel %vm3200, %v6744, 0
        %v6752 = vsel %vm3204, %v6746, 0
        %6754 = vmatpush.msra.mxu0 0.0
        %6755 = vmatpush.msra.mxu0 0.0
        %6756 = vmatpush.msra.mxu0 0.0
        %6757 = vmatpush.msra.mxu0 0.0
        %6758 = vmatpush.msra.mxu0 0.0
        %6759 = vmatpush.msra.mxu0 0.0
        %6760 = vmatpush.msra.mxu0 0.0
        %6761 = vmatpush.msra.mxu0 0.0
        %6762 = vmatpush.msra.mxu0 0.0
        %6763 = vmatpush.msra.mxu0 0.0
        %6764 = vmatpush.msra.mxu0 0.0
        %6765 = vmatpush.msra.mxu0 0.0
        %6766 = vmatpush.msra.mxu0 0.0
        %6767 = vmatpush.msra.mxu0 0.0
        %6768 = vmatpush.msra.mxu0 0.0
        %6769 = vmatpush.msra.mxu0 %v6752
        %6770 = vmatmul.f32.gmra.mxu0 %v6749
        %v6771 = vpop.f32.mrf.mxu0
        %v6772 = vadd.f32 %v6747, %v6771
        %6773 = vdwg.mxu0
        %v6774 = vxor.u32 %v6772, 2147483648
        %v6775 = vmul.f32 %v6774, 1.442695
        %v6776 = vpow.pop %v6775
        %v6777 = vadd.f32 %v6776, 1.0
        %v6778 = vrcp.pop %v6777
        %v6779 = vmul.f32 %v6777, %v6778
        %v6780 = vsub.f32 1.0, %v6779
        %v6781 = vmul.f32 %v6778, %v6780
        %v6782 = vadd.f32 %v6778, %v6781
        %vm6783 = vweird.f32 %v6777
        %vm6784 = vweird.f32 %v6778
        %vm6785 = vmor %vm6783, %vm6784
        %v6786 = vsel %vm6785, %v6778, %v6782
        %v6787 = vand.u32 2147483647, %v6777
        %vm6788 = vcmp.eq.f32.partialorder %v6787, 8.507059e+37
        %v6789 = vand.u32 %v6777, 2147483648
        %v6790 = vor.u32 1.1754944e-38, %v6789
        %v6791 = vsel %vm6788, %v6790, %v6786
        %v6792 = vmul.f32 1.0, %v6791
        %v6793 = vperm.slane %v6792, 0
        %v6794 = vmul.f32 %v6705, %v6793
        %v6795 = vmul.f32 %v6706, %v6793
        %v6796 = vmax.f32 %v6794, 0.0
        %v6797 = vmax.f32 %v6795, 0.0
        %s6798 = scalar_lea.vmem [#allocation2], 4608
        %v6799 = vld [vmem:[%s6798] sm:$0xf]
        %s6800 = scalar_lea.vmem [#allocation4], 1008
        %v6801 = vld [vmem:[%s6800] sm:$0xff]
        %v6802 = vld [vmem:[%s6800 + $0x8] sm:$0xff]
        %v6804 = vsel %vm3151, %v6799, 0
        %6806 = vmatpush.msra.mxu0 0.0
        %6807 = vmatpush.msra.mxu0 0.0
        %6808 = vmatpush.msra.mxu0 0.0
        %6809 = vmatpush.msra.mxu0 0.0
        %6810 = vmatpush.msra.mxu0 0.0
        %6811 = vmatpush.msra.mxu0 0.0
        %6812 = vmatpush.msra.mxu0 0.0
        %6813 = vmatpush.msra.mxu0 0.0
        %6814 = vmatpush.msra.mxu0 0.0
        %6815 = vmatpush.msra.mxu0 0.0
        %6816 = vmatpush.msra.mxu0 0.0
        %6817 = vmatpush.msra.mxu0 0.0
        %6818 = vmatpush.msra.mxu0 0.0
        %6819 = vmatpush.msra.mxu0 0.0
        %6820 = vmatpush.msra.mxu0 %v6797
        %6821 = vmatpush.msra.mxu0 %v6796
        %6822 = vmatmul.f32.gmra.mxu0 %v6804
        %v6823 = vpop.f32.mrf.mxu0
        %v6824 = vadd.f32 0.0, %v6823
        %6825 = vdwg.mxu0
        %s6826 = scalar_lea.vmem [#allocation2], 4736
        %v6827 = vld [vmem:[%s6826] sm:$0xf]
        %s6828 = scalar_lea.vmem [#allocation4], 1024
        %v6829 = vld [vmem:[%s6828] sm:$0xff]
        %v6830 = vld [vmem:[%s6828 + $0x8] sm:$0xff]
        %v6832 = vsel %vm3151, %v6827, 0
        %6834 = vmatpush.msra.mxu0 0.0
        %6835 = vmatpush.msra.mxu0 0.0
        %6836 = vmatpush.msra.mxu0 0.0
        %6837 = vmatpush.msra.mxu0 0.0
        %6838 = vmatpush.msra.mxu0 0.0
        %6839 = vmatpush.msra.mxu0 0.0
        %6840 = vmatpush.msra.mxu0 0.0
        %6841 = vmatpush.msra.mxu0 0.0
        %6842 = vmatpush.msra.mxu0 0.0
        %6843 = vmatpush.msra.mxu0 0.0
        %6844 = vmatpush.msra.mxu0 0.0
        %6845 = vmatpush.msra.mxu0 0.0
        %6846 = vmatpush.msra.mxu0 0.0
        %6847 = vmatpush.msra.mxu0 0.0
        %6848 = vmatpush.msra.mxu0 %v6797
        %6849 = vmatpush.msra.mxu0 %v6796
        %6850 = vmatmul.f32.gmra.mxu0 %v6832
        %v6851 = vpop.f32.mrf.mxu0
        %v6852 = vadd.f32 0.0, %v6851
        %6853 = vdwg.mxu0
        %v6855 = vsel %vm3151, %v6852, 0
        %6857 = vmatpush.msra.mxu0 0.0
        %6858 = vmatpush.msra.mxu0 0.0
        %6859 = vmatpush.msra.mxu0 0.0
        %6860 = vmatpush.msra.mxu0 0.0
        %6861 = vmatpush.msra.mxu0 0.0
        %6862 = vmatpush.msra.mxu0 0.0
        %6863 = vmatpush.msra.mxu0 0.0
        %6864 = vmatpush.msra.mxu0 0.0
        %6865 = vmatpush.msra.mxu0 0.0
        %6866 = vmatpush.msra.mxu0 0.0
        %6867 = vmatpush.msra.mxu0 0.0
        %6868 = vmatpush.msra.mxu0 0.0
        %6869 = vmatpush.msra.mxu0 0.0
        %6870 = vmatpush.msra.mxu0 0.0
        %6871 = vmatpush.msra.mxu0 %v6830
        %6872 = vmatpush.msra.mxu0 %v6829
        %6873 = vmatmul.f32.gmra.mxu0 %v6855
        %v6874 = vpop.f32.mrf.mxu0
        %v6875 = vadd.f32 0.0, %v6874
        %6876 = vdwg.mxu0
        %v6878 = vsel %vm3151, %v6824, 0
        %6880 = vmatpush.msra.mxu0 0.0
        %6881 = vmatpush.msra.mxu0 0.0
        %6882 = vmatpush.msra.mxu0 0.0
        %6883 = vmatpush.msra.mxu0 0.0
        %6884 = vmatpush.msra.mxu0 0.0
        %6885 = vmatpush.msra.mxu0 0.0
        %6886 = vmatpush.msra.mxu0 0.0
        %6887 = vmatpush.msra.mxu0 0.0
        %6888 = vmatpush.msra.mxu0 0.0
        %6889 = vmatpush.msra.mxu0 0.0
        %6890 = vmatpush.msra.mxu0 0.0
        %6891 = vmatpush.msra.mxu0 0.0
        %6892 = vmatpush.msra.mxu0 0.0
        %6893 = vmatpush.msra.mxu0 0.0
        %6894 = vmatpush.msra.mxu0 %v6802
        %6895 = vmatpush.msra.mxu0 %v6801
        %6896 = vmatmul.f32.gmra.mxu0 %v6878
        %v6897 = vpop.f32.mrf.mxu0
        %v6898 = vadd.f32 %v6875, %v6897
        %6899 = vdwg.mxu0
        %s6900 = scalar_lea.vmem [#allocation2], 4864
        %v6901 = vld [vmem:[%s6900] sm:$0xf]
        %s6902 = scalar_lea.vmem [#allocation4], 1040
        %v6903 = vld [vmem:[%s6902] sm:$0xff]
        %v6904 = vld [vmem:[%s6902 + $0x8] sm:$0xff]
        %v6906 = vsel %vm3151, %v6901, 0
        %6908 = vmatpush.msra.mxu0 0.0
        %6909 = vmatpush.msra.mxu0 0.0
        %6910 = vmatpush.msra.mxu0 0.0
        %6911 = vmatpush.msra.mxu0 0.0
        %6912 = vmatpush.msra.mxu0 0.0
        %6913 = vmatpush.msra.mxu0 0.0
        %6914 = vmatpush.msra.mxu0 0.0
        %6915 = vmatpush.msra.mxu0 0.0
        %6916 = vmatpush.msra.mxu0 0.0
        %6917 = vmatpush.msra.mxu0 0.0
        %6918 = vmatpush.msra.mxu0 0.0
        %6919 = vmatpush.msra.mxu0 0.0
        %6920 = vmatpush.msra.mxu0 0.0
        %6921 = vmatpush.msra.mxu0 0.0
        %6922 = vmatpush.msra.mxu0 %v6797
        %6923 = vmatpush.msra.mxu0 %v6796
        %6924 = vmatmul.f32.gmra.mxu0 %v6906
        %v6925 = vpop.f32.mrf.mxu0
        %v6926 = vadd.f32 0.0, %v6925
        %6927 = vdwg.mxu0
        %v6929 = vsel %vm3151, %v6926, 0
        %6931 = vmatpush.msra.mxu0 0.0
        %6932 = vmatpush.msra.mxu0 0.0
        %6933 = vmatpush.msra.mxu0 0.0
        %6934 = vmatpush.msra.mxu0 0.0
        %6935 = vmatpush.msra.mxu0 0.0
        %6936 = vmatpush.msra.mxu0 0.0
        %6937 = vmatpush.msra.mxu0 0.0
        %6938 = vmatpush.msra.mxu0 0.0
        %6939 = vmatpush.msra.mxu0 0.0
        %6940 = vmatpush.msra.mxu0 0.0
        %6941 = vmatpush.msra.mxu0 0.0
        %6942 = vmatpush.msra.mxu0 0.0
        %6943 = vmatpush.msra.mxu0 0.0
        %6944 = vmatpush.msra.mxu0 0.0
        %6945 = vmatpush.msra.mxu0 %v6904
        %6946 = vmatpush.msra.mxu0 %v6903
        %6947 = vmatmul.f32.gmra.mxu0 %v6929
        %v6948 = vpop.f32.mrf.mxu0
        %v6949 = vadd.f32 0.0, %v6948
        %6950 = vdwg.mxu0
        %v6951 = vadd.f32 %v6898, %v6949
        %s6952 = scalar_lea.vmem [#allocation2], 4992
        %v6953 = vld [vmem:[%s6952] sm:$0xf]
        %s6954 = scalar_lea.vmem [#allocation4], 1056
        %v6955 = vld [vmem:[%s6954] sm:$0xff]
        %v6956 = vld [vmem:[%s6954 + $0x8] sm:$0xff]
        %v6958 = vsel %vm3151, %v6953, 0
        %6960 = vmatpush.msra.mxu0 0.0
        %6961 = vmatpush.msra.mxu0 0.0
        %6962 = vmatpush.msra.mxu0 0.0
        %6963 = vmatpush.msra.mxu0 0.0
        %6964 = vmatpush.msra.mxu0 0.0
        %6965 = vmatpush.msra.mxu0 0.0
        %6966 = vmatpush.msra.mxu0 0.0
        %6967 = vmatpush.msra.mxu0 0.0
        %6968 = vmatpush.msra.mxu0 0.0
        %6969 = vmatpush.msra.mxu0 0.0
        %6970 = vmatpush.msra.mxu0 0.0
        %6971 = vmatpush.msra.mxu0 0.0
        %6972 = vmatpush.msra.mxu0 0.0
        %6973 = vmatpush.msra.mxu0 0.0
        %6974 = vmatpush.msra.mxu0 %v6797
        %6975 = vmatpush.msra.mxu0 %v6796
        %6976 = vmatmul.f32.gmra.mxu0 %v6958
        %v6977 = vpop.f32.mrf.mxu0
        %v6978 = vadd.f32 0.0, %v6977
        %6979 = vdwg.mxu0
        %v6981 = vsel %vm3151, %v6978, 0
        %6983 = vmatpush.msra.mxu0 0.0
        %6984 = vmatpush.msra.mxu0 0.0
        %6985 = vmatpush.msra.mxu0 0.0
        %6986 = vmatpush.msra.mxu0 0.0
        %6987 = vmatpush.msra.mxu0 0.0
        %6988 = vmatpush.msra.mxu0 0.0
        %6989 = vmatpush.msra.mxu0 0.0
        %6990 = vmatpush.msra.mxu0 0.0
        %6991 = vmatpush.msra.mxu0 0.0
        %6992 = vmatpush.msra.mxu0 0.0
        %6993 = vmatpush.msra.mxu0 0.0
        %6994 = vmatpush.msra.mxu0 0.0
        %6995 = vmatpush.msra.mxu0 0.0
        %6996 = vmatpush.msra.mxu0 0.0
        %6997 = vmatpush.msra.mxu0 %v6956
        %6998 = vmatpush.msra.mxu0 %v6955
        %6999 = vmatmul.f32.gmra.mxu0 %v6981
        %v7000 = vpop.f32.mrf.mxu0
        %v7001 = vadd.f32 0.0, %v7000
        %7002 = vdwg.mxu0
        %v7003 = vadd.f32 %v6951, %v7001
        %s7004 = scalar_lea.vmem [#allocation2], 5120
        %v7005 = vld [vmem:[%s7004] sm:$0xf]
        %s7006 = scalar_lea.vmem [#allocation4], 1072
        %v7007 = vld [vmem:[%s7006] sm:$0xff]
        %v7008 = vld [vmem:[%s7006 + $0x8] sm:$0xff]
        %v7010 = vsel %vm3151, %v7005, 0
        %7012 = vmatpush.msra.mxu0 0.0
        %7013 = vmatpush.msra.mxu0 0.0
        %7014 = vmatpush.msra.mxu0 0.0
        %7015 = vmatpush.msra.mxu0 0.0
        %7016 = vmatpush.msra.mxu0 0.0
        %7017 = vmatpush.msra.mxu0 0.0
        %7018 = vmatpush.msra.mxu0 0.0
        %7019 = vmatpush.msra.mxu0 0.0
        %7020 = vmatpush.msra.mxu0 0.0
        %7021 = vmatpush.msra.mxu0 0.0
        %7022 = vmatpush.msra.mxu0 0.0
        %7023 = vmatpush.msra.mxu0 0.0
        %7024 = vmatpush.msra.mxu0 0.0
        %7025 = vmatpush.msra.mxu0 0.0
        %7026 = vmatpush.msra.mxu0 %v6797
        %7027 = vmatpush.msra.mxu0 %v6796
        %7028 = vmatmul.f32.gmra.mxu0 %v7010
        %v7029 = vpop.f32.mrf.mxu0
        %v7030 = vadd.f32 0.0, %v7029
        %7031 = vdwg.mxu0
        %v7033 = vsel %vm3151, %v7030, 0
        %7035 = vmatpush.msra.mxu0 0.0
        %7036 = vmatpush.msra.mxu0 0.0
        %7037 = vmatpush.msra.mxu0 0.0
        %7038 = vmatpush.msra.mxu0 0.0
        %7039 = vmatpush.msra.mxu0 0.0
        %7040 = vmatpush.msra.mxu0 0.0
        %7041 = vmatpush.msra.mxu0 0.0
        %7042 = vmatpush.msra.mxu0 0.0
        %7043 = vmatpush.msra.mxu0 0.0
        %7044 = vmatpush.msra.mxu0 0.0
        %7045 = vmatpush.msra.mxu0 0.0
        %7046 = vmatpush.msra.mxu0 0.0
        %7047 = vmatpush.msra.mxu0 0.0
        %7048 = vmatpush.msra.mxu0 0.0
        %7049 = vmatpush.msra.mxu0 %v7008
        %7050 = vmatpush.msra.mxu0 %v7007
        %7051 = vmatmul.f32.gmra.mxu0 %v7033
        %v7052 = vpop.f32.mrf.mxu0
        %v7053 = vadd.f32 0.0, %v7052
        %7054 = vdwg.mxu0
        %v7055 = vadd.f32 %v7003, %v7053
        %s7056 = scalar_lea.vmem [#allocation2], 5248
        %v7057 = vld [vmem:[%s7056] sm:$0xf]
        %s7058 = scalar_lea.vmem [#allocation4], 1088
        %v7059 = vld [vmem:[%s7058] sm:$0xff]
        %v7060 = vld [vmem:[%s7058 + $0x8] sm:$0xff]
        %v7062 = vsel %vm3151, %v7057, 0
        %7064 = vmatpush.msra.mxu0 0.0
        %7065 = vmatpush.msra.mxu0 0.0
        %7066 = vmatpush.msra.mxu0 0.0
        %7067 = vmatpush.msra.mxu0 0.0
        %7068 = vmatpush.msra.mxu0 0.0
        %7069 = vmatpush.msra.mxu0 0.0
        %7070 = vmatpush.msra.mxu0 0.0
        %7071 = vmatpush.msra.mxu0 0.0
        %7072 = vmatpush.msra.mxu0 0.0
        %7073 = vmatpush.msra.mxu0 0.0
        %7074 = vmatpush.msra.mxu0 0.0
        %7075 = vmatpush.msra.mxu0 0.0
        %7076 = vmatpush.msra.mxu0 0.0
        %7077 = vmatpush.msra.mxu0 0.0
        %7078 = vmatpush.msra.mxu0 %v6797
        %7079 = vmatpush.msra.mxu0 %v6796
        %7080 = vmatmul.f32.gmra.mxu0 %v7062
        %v7081 = vpop.f32.mrf.mxu0
        %v7082 = vadd.f32 0.0, %v7081
        %7083 = vdwg.mxu0
        %v7085 = vsel %vm3151, %v7082, 0
        %7087 = vmatpush.msra.mxu0 0.0
        %7088 = vmatpush.msra.mxu0 0.0
        %7089 = vmatpush.msra.mxu0 0.0
        %7090 = vmatpush.msra.mxu0 0.0
        %7091 = vmatpush.msra.mxu0 0.0
        %7092 = vmatpush.msra.mxu0 0.0
        %7093 = vmatpush.msra.mxu0 0.0
        %7094 = vmatpush.msra.mxu0 0.0
        %7095 = vmatpush.msra.mxu0 0.0
        %7096 = vmatpush.msra.mxu0 0.0
        %7097 = vmatpush.msra.mxu0 0.0
        %7098 = vmatpush.msra.mxu0 0.0
        %7099 = vmatpush.msra.mxu0 0.0
        %7100 = vmatpush.msra.mxu0 0.0
        %7101 = vmatpush.msra.mxu0 %v7060
        %7102 = vmatpush.msra.mxu0 %v7059
        %7103 = vmatmul.f32.gmra.mxu0 %v7085
        %v7104 = vpop.f32.mrf.mxu0
        %v7105 = vadd.f32 0.0, %v7104
        %7106 = vdwg.mxu0
        %v7107 = vadd.f32 %v7055, %v7105
        %s7108 = scalar_lea.vmem [#allocation2], 5376
        %v7109 = vld [vmem:[%s7108] sm:$0xf]
        %s7110 = scalar_lea.vmem [#allocation4], 1104
        %v7111 = vld [vmem:[%s7110] sm:$0xff]
        %v7112 = vld [vmem:[%s7110 + $0x8] sm:$0xff]
        %v7114 = vsel %vm3151, %v7109, 0
        %7116 = vmatpush.msra.mxu0 0.0
        %7117 = vmatpush.msra.mxu0 0.0
        %7118 = vmatpush.msra.mxu0 0.0
        %7119 = vmatpush.msra.mxu0 0.0
        %7120 = vmatpush.msra.mxu0 0.0
        %7121 = vmatpush.msra.mxu0 0.0
        %7122 = vmatpush.msra.mxu0 0.0
        %7123 = vmatpush.msra.mxu0 0.0
        %7124 = vmatpush.msra.mxu0 0.0
        %7125 = vmatpush.msra.mxu0 0.0
        %7126 = vmatpush.msra.mxu0 0.0
        %7127 = vmatpush.msra.mxu0 0.0
        %7128 = vmatpush.msra.mxu0 0.0
        %7129 = vmatpush.msra.mxu0 0.0
        %7130 = vmatpush.msra.mxu0 %v6797
        %7131 = vmatpush.msra.mxu0 %v6796
        %7132 = vmatmul.f32.gmra.mxu0 %v7114
        %v7133 = vpop.f32.mrf.mxu0
        %v7134 = vadd.f32 0.0, %v7133
        %7135 = vdwg.mxu0
        %v7137 = vsel %vm3151, %v7134, 0
        %7139 = vmatpush.msra.mxu0 0.0
        %7140 = vmatpush.msra.mxu0 0.0
        %7141 = vmatpush.msra.mxu0 0.0
        %7142 = vmatpush.msra.mxu0 0.0
        %7143 = vmatpush.msra.mxu0 0.0
        %7144 = vmatpush.msra.mxu0 0.0
        %7145 = vmatpush.msra.mxu0 0.0
        %7146 = vmatpush.msra.mxu0 0.0
        %7147 = vmatpush.msra.mxu0 0.0
        %7148 = vmatpush.msra.mxu0 0.0
        %7149 = vmatpush.msra.mxu0 0.0
        %7150 = vmatpush.msra.mxu0 0.0
        %7151 = vmatpush.msra.mxu0 0.0
        %7152 = vmatpush.msra.mxu0 0.0
        %7153 = vmatpush.msra.mxu0 %v7112
        %7154 = vmatpush.msra.mxu0 %v7111
        %7155 = vmatmul.f32.gmra.mxu0 %v7137
        %v7156 = vpop.f32.mrf.mxu0
        %v7157 = vadd.f32 0.0, %v7156
        %7158 = vdwg.mxu0
        %v7159 = vadd.f32 %v7107, %v7157
        %s7160 = scalar_lea.vmem [#allocation2], 5504
        %v7161 = vld [vmem:[%s7160] sm:$0xf]
        %s7162 = scalar_lea.vmem [#allocation4], 1120
        %v7163 = vld [vmem:[%s7162] sm:$0xff]
        %v7164 = vld [vmem:[%s7162 + $0x8] sm:$0xff]
        %v7166 = vsel %vm3151, %v7161, 0
        %7168 = vmatpush.msra.mxu0 0.0
        %7169 = vmatpush.msra.mxu0 0.0
        %7170 = vmatpush.msra.mxu0 0.0
        %7171 = vmatpush.msra.mxu0 0.0
        %7172 = vmatpush.msra.mxu0 0.0
        %7173 = vmatpush.msra.mxu0 0.0
        %7174 = vmatpush.msra.mxu0 0.0
        %7175 = vmatpush.msra.mxu0 0.0
        %7176 = vmatpush.msra.mxu0 0.0
        %7177 = vmatpush.msra.mxu0 0.0
        %7178 = vmatpush.msra.mxu0 0.0
        %7179 = vmatpush.msra.mxu0 0.0
        %7180 = vmatpush.msra.mxu0 0.0
        %7181 = vmatpush.msra.mxu0 0.0
        %7182 = vmatpush.msra.mxu0 %v6797
        %7183 = vmatpush.msra.mxu0 %v6796
        %7184 = vmatmul.f32.gmra.mxu0 %v7166
        %v7185 = vpop.f32.mrf.mxu0
        %v7186 = vadd.f32 0.0, %v7185
        %7187 = vdwg.mxu0
        %v7189 = vsel %vm3151, %v7186, 0
        %7191 = vmatpush.msra.mxu0 0.0
        %7192 = vmatpush.msra.mxu0 0.0
        %7193 = vmatpush.msra.mxu0 0.0
        %7194 = vmatpush.msra.mxu0 0.0
        %7195 = vmatpush.msra.mxu0 0.0
        %7196 = vmatpush.msra.mxu0 0.0
        %7197 = vmatpush.msra.mxu0 0.0
        %7198 = vmatpush.msra.mxu0 0.0
        %7199 = vmatpush.msra.mxu0 0.0
        %7200 = vmatpush.msra.mxu0 0.0
        %7201 = vmatpush.msra.mxu0 0.0
        %7202 = vmatpush.msra.mxu0 0.0
        %7203 = vmatpush.msra.mxu0 0.0
        %7204 = vmatpush.msra.mxu0 0.0
        %7205 = vmatpush.msra.mxu0 %v7164
        %7206 = vmatpush.msra.mxu0 %v7163
        %7207 = vmatmul.f32.gmra.mxu0 %v7189
        %v7208 = vpop.f32.mrf.mxu0
        %v7209 = vadd.f32 0.0, %v7208
        %7210 = vdwg.mxu0
        %v7211 = vadd.f32 %v7159, %v7209
        %s7212 = scalar_lea.vmem [#allocation2], 5632
        %v7213 = vld [vmem:[%s7212] sm:$0xf]
        %s7214 = scalar_lea.vmem [#allocation4], 1136
        %v7215 = vld [vmem:[%s7214] sm:$0xff]
        %v7216 = vld [vmem:[%s7214 + $0x8] sm:$0xff]
        %v7218 = vsel %vm3151, %v7213, 0
        %7220 = vmatpush.msra.mxu0 0.0
        %7221 = vmatpush.msra.mxu0 0.0
        %7222 = vmatpush.msra.mxu0 0.0
        %7223 = vmatpush.msra.mxu0 0.0
        %7224 = vmatpush.msra.mxu0 0.0
        %7225 = vmatpush.msra.mxu0 0.0
        %7226 = vmatpush.msra.mxu0 0.0
        %7227 = vmatpush.msra.mxu0 0.0
        %7228 = vmatpush.msra.mxu0 0.0
        %7229 = vmatpush.msra.mxu0 0.0
        %7230 = vmatpush.msra.mxu0 0.0
        %7231 = vmatpush.msra.mxu0 0.0
        %7232 = vmatpush.msra.mxu0 0.0
        %7233 = vmatpush.msra.mxu0 0.0
        %7234 = vmatpush.msra.mxu0 %v6797
        %7235 = vmatpush.msra.mxu0 %v6796
        %7236 = vmatmul.f32.gmra.mxu0 %v7218
        %v7237 = vpop.f32.mrf.mxu0
        %v7238 = vadd.f32 0.0, %v7237
        %7239 = vdwg.mxu0
        %v7241 = vsel %vm3151, %v7238, 0
        %7243 = vmatpush.msra.mxu0 0.0
        %7244 = vmatpush.msra.mxu0 0.0
        %7245 = vmatpush.msra.mxu0 0.0
        %7246 = vmatpush.msra.mxu0 0.0
        %7247 = vmatpush.msra.mxu0 0.0
        %7248 = vmatpush.msra.mxu0 0.0
        %7249 = vmatpush.msra.mxu0 0.0
        %7250 = vmatpush.msra.mxu0 0.0
        %7251 = vmatpush.msra.mxu0 0.0
        %7252 = vmatpush.msra.mxu0 0.0
        %7253 = vmatpush.msra.mxu0 0.0
        %7254 = vmatpush.msra.mxu0 0.0
        %7255 = vmatpush.msra.mxu0 0.0
        %7256 = vmatpush.msra.mxu0 0.0
        %7257 = vmatpush.msra.mxu0 %v7216
        %7258 = vmatpush.msra.mxu0 %v7215
        %7259 = vmatmul.f32.gmra.mxu0 %v7241
        %v7260 = vpop.f32.mrf.mxu0
        %v7261 = vadd.f32 0.0, %v7260
        %7262 = vdwg.mxu0
        %v7263 = vadd.f32 %v7211, %v7261
        %s7264 = scalar_lea.vmem %s6, 28
        %v7265 = vld [vmem:[%s7264] sm:$0x1]
        %v7266 = vperm.slane %v7265, 0
        %v7267 = vadd.f32 %v7263, %v7266
        %vm7268 = vcmask 257024
        %v7269 = vsel %vm7268, %v7267, 0.0
        %v7270 = vrot.slane %v7269, 4
        %v7271 = vadd.f32 %v7269, %v7270
        %v7272 = vrot.slane %v7271, 2
        %v7273 = vadd.f32 %v7271, %v7272
        %v7274 = vrot.slane %v7273, 1
        %v7275 = vadd.f32 %v7273, %v7274
        %v7276 = vrcp.pop 4.0
        %v7277 = vmul.f32 4.0, %v7276
        %v7278 = vsub.f32 1.0, %v7277
        %v7279 = vmul.f32 %v7276, %v7278
        %v7280 = vadd.f32 %v7276, %v7279
        %vm7281 = vweird.f32 %v7276
        %v7282 = vsel %vm7281, %v7276, %v7280
        %v7283 = vmul.f32 %v7275, %v7282
        %s7284 = scalar_lea.vmem %s4, 224
        %v7285 = vld [vmem:[%s7284] sm:$0xff]
        %v7286 = vld [vmem:[%s7284 + $0x8] sm:$0xff]
        %v7287 = vld [vmem:[%s7284 + $0x10] sm:$0xff]
        %v7288 = vld [vmem:[%s7284 + $0x18] sm:$0xff]
        %v7289 = vld [vmem:[%s7264 + $0x1] sm:$0x1]
        %vm7290 = vcmask 261120
        %v7292 = vsel %vm7290, %v7283, 0
        %7294 = vmatpush.msra.mxu0 0.0
        %7295 = vmatpush.msra.mxu0 0.0
        %7296 = vmatpush.msra.mxu0 0.0
        %7297 = vmatpush.msra.mxu0 0.0
        %7298 = vmatpush.msra.mxu0 0.0
        %7299 = vmatpush.msra.mxu0 0.0
        %7300 = vmatpush.msra.mxu0 0.0
        %7301 = vmatpush.msra.mxu0 0.0
        %7302 = vmatpush.msra.mxu0 0.0
        %7303 = vmatpush.msra.mxu0 0.0
        %7304 = vmatpush.msra.mxu0 0.0
        %7305 = vmatpush.msra.mxu0 0.0
        %7306 = vmatpush.msra.mxu0 %v7288
        %7307 = vmatpush.msra.mxu0 %v7287
        %7308 = vmatpush.msra.mxu0 %v7286
        %7309 = vmatpush.msra.mxu0 %v7285
        %7310 = vmatmul.f32.gmra.mxu0 %v7292
        %v7311 = vpop.f32.mrf.mxu0
        %v7312 = vadd.f32 %v7289, %v7311
        %7313 = vdwg.mxu0
        %v7314 = vmax.f32 %v7312, 0.0
        %s7315 = scalar_lea.vmem [#allocation6], 56
        %v7316 = vld [vmem:[%s7315] sm:$0xff]
        %v7317 = vld [vmem:[%s7264 + $0x2] sm:$0x1]
        %v7319 = vsel %vm666, %v7314, 0
        %7321 = vmatpush.msra.mxu0 0.0
        %7322 = vmatpush.msra.mxu0 0.0
        %7323 = vmatpush.msra.mxu0 0.0
        %7324 = vmatpush.msra.mxu0 0.0
        %7325 = vmatpush.msra.mxu0 0.0
        %7326 = vmatpush.msra.mxu0 0.0
        %7327 = vmatpush.msra.mxu0 0.0
        %7328 = vmatpush.msra.mxu0 0.0
        %7329 = vmatpush.msra.mxu0 0.0
        %7330 = vmatpush.msra.mxu0 0.0
        %7331 = vmatpush.msra.mxu0 0.0
        %7332 = vmatpush.msra.mxu0 0.0
        %7333 = vmatpush.msra.mxu0 0.0
        %7334 = vmatpush.msra.mxu0 0.0
        %7335 = vmatpush.msra.mxu0 0.0
        %7336 = vmatpush.msra.mxu0 %v7316
        %7337 = vmatmul.f32.gmra.mxu0 %v7319
        %v7338 = vpop.f32.mrf.mxu0
        %v7339 = vadd.f32 %v7317, %v7338
        %7340 = vdwg.mxu0
        %v7341 = vxor.u32 %v7339, 2147483648
        %v7342 = vmul.f32 %v7341, 1.442695
        %v7343 = vpow.pop %v7342
        %v7344 = vadd.f32 %v7343, 1.0
        %v7345 = vrcp.pop %v7344
        %v7346 = vmul.f32 %v7344, %v7345
        %v7347 = vsub.f32 1.0, %v7346
        %v7348 = vmul.f32 %v7345, %v7347
        %v7349 = vadd.f32 %v7345, %v7348
        %vm7350 = vweird.f32 %v7344
        %vm7351 = vweird.f32 %v7345
        %vm7352 = vmor %vm7350, %vm7351
        %v7353 = vsel %vm7352, %v7345, %v7349
        %v7354 = vand.u32 2147483647, %v7344
        %vm7355 = vcmp.eq.f32.partialorder %v7354, 8.507059e+37
        %v7356 = vand.u32 %v7344, 2147483648
        %v7357 = vor.u32 1.1754944e-38, %v7356
        %v7358 = vsel %vm7355, %v7357, %v7353
        %v7359 = vmul.f32 1.0, %v7358
        %v7360 = vperm.slane %v7359, 0
        %v7361 = vmul.f32 %v7267, %v7360
        %v7362 = vmax.f32 %v7361, 0.0
        %v7363 = vsel %vm7268, %v7362, 0.0
        %v7364 = vrot.slane %v7363, 4
        %v7365 = vadd.f32 %v7363, %v7364
        %v7366 = vrot.slane %v7365, 2
        %v7367 = vadd.f32 %v7365, %v7366
        %v7368 = vrot.slane %v7367, 1
        %v7369 = vadd.f32 %v7367, %v7368
        %v7370 = vmul.f32 %v7369, %v7282
        %v7371 = vld [vmem:[#allocation9] sm:$0xff]
        %v7372 = vld [vmem:[#allocation9 + $0x8] sm:$0xff]
        %v7373 = vld [vmem:[#allocation9 + $0x10] sm:$0xff]
        %v7374 = vld [vmem:[#allocation9 + $0x18] sm:$0xff]
        %v7375 = vld [vmem:[#allocation9 + $0x20] sm:$0xff]
        %v7376 = vld [vmem:[#allocation9 + $0x28] sm:$0xff]
        %v7377 = vld [vmem:[#allocation9 + $0x30] sm:$0xff]
        %v7378 = vld [vmem:[#allocation9 + $0x38] sm:$0xff]
        %v7379 = vld [vmem:[#allocation9 + $0x40] sm:$0xff]
        %v7380 = vld [vmem:[#allocation9 + $0x48] sm:$0xff]
        %v7381 = vld [vmem:[#allocation9 + $0x50] sm:$0xff]
        %v7382 = vld [vmem:[#allocation9 + $0x58] sm:$0xff]
        %v7383 = vld [vmem:[#allocation9 + $0x60] sm:$0xff]
        %v7384 = vld [vmem:[#allocation9 + $0x68] sm:$0xff]
        %v7385 = vld [vmem:[#allocation9 + $0x70] sm:$0xff]
        %v7386 = vld [vmem:[#allocation9 + $0x78] sm:$0xff]
        %v7387 = vld [vmem:[#allocation9 + $0x80] sm:$0xff]
        %v7388 = vld [vmem:[#allocation9 + $0x88] sm:$0xff]
        %v7389 = vld [vmem:[#allocation9 + $0x90] sm:$0xff]
        %v7390 = vld [vmem:[#allocation9 + $0x98] sm:$0xff]
        %v7391 = vld [vmem:[#allocation9 + $0xa0] sm:$0xff]
        %v7392 = vld [vmem:[#allocation9 + $0xa8] sm:$0xff]
        %v7393 = vld [vmem:[#allocation9 + $0xb0] sm:$0xff]
        %v7394 = vld [vmem:[#allocation9 + $0xb8] sm:$0xff]
        %v7395 = vld [vmem:[#allocation9 + $0xc0] sm:$0xff]
        %v7396 = vld [vmem:[#allocation9 + $0xc8] sm:$0xff]
        %v7397 = vld [vmem:[#allocation9 + $0xd0] sm:$0xff]
        %v7398 = vld [vmem:[#allocation9 + $0xd8] sm:$0xff]
        %v7399 = vld [vmem:[#allocation9 + $0xe0] sm:$0xff]
        %v7400 = vld [vmem:[#allocation9 + $0xe8] sm:$0xff]
        %v7401 = vld [vmem:[#allocation9 + $0xf0] sm:$0xff]
        %v7402 = vld [vmem:[#allocation9 + $0xf8] sm:$0xff]
        %s7403 = scalar_lea.vmem [#allocation9], 256
        %v7404 = vld [vmem:[%s7403] ss:$8 sm:$0xf]
        %v7405 = vld [vmem:[%s7403] ss:$8 sm:$0xf0]
        %v7406 = vor.u32 %v7404, %v7405
        %v7408 = vperm.slane %v7406, 0
        %v7409 = vperm.slane %v7406, 1
        %v7410 = vperm.slane %v7406, 2
        %v7411 = vperm.slane %v7406, 3
        %v7412 = vperm.slane %v7406, 4
        %v7413 = vperm.slane %v7406, 5
        %v7414 = vperm.slane %v7406, 6
        %v7415 = vperm.slane %v7406, 7
        %v7425 = vsel %vm7290, %v7370, 0
        %7427 = vmatpush.msra.mxu0 0.0
        %7428 = vmatpush.msra.mxu0 0.0
        %7429 = vmatpush.msra.mxu0 0.0
        %7430 = vmatpush.msra.mxu0 0.0
        %7431 = vmatpush.msra.mxu0 0.0
        %7432 = vmatpush.msra.mxu0 0.0
        %7433 = vmatpush.msra.mxu0 0.0
        %7434 = vmatpush.msra.mxu0 0.0
        %7435 = vmatpush.msra.mxu0 0.0
        %7436 = vmatpush.msra.mxu0 0.0
        %7437 = vmatpush.msra.mxu0 0.0
        %7438 = vmatpush.msra.mxu0 0.0
        %7439 = vmatpush.msra.mxu0 %v7395
        %7440 = vmatpush.msra.mxu0 %v7387
        %7441 = vmatpush.msra.mxu0 %v7379
        %7442 = vmatpush.msra.mxu0 %v7371
        %7443 = vmatmul.f32.gmra.mxu0 %v7425
        %v7444 = vpop.f32.mrf.mxu0
        %v7445 = vadd.f32 %v7408, %v7444
        %7446 = vdwg.mxu0
        %7447 = vmatpush.msra.mxu0 0.0
        %7448 = vmatpush.msra.mxu0 0.0
        %7449 = vmatpush.msra.mxu0 0.0
        %7450 = vmatpush.msra.mxu0 0.0
        %7451 = vmatpush.msra.mxu0 0.0
        %7452 = vmatpush.msra.mxu0 0.0
        %7453 = vmatpush.msra.mxu0 0.0
        %7454 = vmatpush.msra.mxu0 0.0
        %7455 = vmatpush.msra.mxu0 0.0
        %7456 = vmatpush.msra.mxu0 0.0
        %7457 = vmatpush.msra.mxu0 0.0
        %7458 = vmatpush.msra.mxu0 0.0
        %7459 = vmatpush.msra.mxu0 %v7396
        %7460 = vmatpush.msra.mxu0 %v7388
        %7461 = vmatpush.msra.mxu0 %v7380
        %7462 = vmatpush.msra.mxu0 %v7372
        %7463 = vmatmul.f32.gmra.mxu0 %v7425
        %v7464 = vpop.f32.mrf.mxu0
        %v7465 = vadd.f32 %v7409, %v7464
        %7466 = vdwg.mxu0
        %7467 = vmatpush.msra.mxu0 0.0
        %7468 = vmatpush.msra.mxu0 0.0
        %7469 = vmatpush.msra.mxu0 0.0
        %7470 = vmatpush.msra.mxu0 0.0
        %7471 = vmatpush.msra.mxu0 0.0
        %7472 = vmatpush.msra.mxu0 0.0
        %7473 = vmatpush.msra.mxu0 0.0
        %7474 = vmatpush.msra.mxu0 0.0
        %7475 = vmatpush.msra.mxu0 0.0
        %7476 = vmatpush.msra.mxu0 0.0
        %7477 = vmatpush.msra.mxu0 0.0
        %7478 = vmatpush.msra.mxu0 0.0
        %7479 = vmatpush.msra.mxu0 %v7397
        %7480 = vmatpush.msra.mxu0 %v7389
        %7481 = vmatpush.msra.mxu0 %v7381
        %7482 = vmatpush.msra.mxu0 %v7373
        %7483 = vmatmul.f32.gmra.mxu0 %v7425
        %v7484 = vpop.f32.mrf.mxu0
        %v7485 = vadd.f32 %v7410, %v7484
        %7486 = vdwg.mxu0
        %7487 = vmatpush.msra.mxu0 0.0
        %7488 = vmatpush.msra.mxu0 0.0
        %7489 = vmatpush.msra.mxu0 0.0
        %7490 = vmatpush.msra.mxu0 0.0
        %7491 = vmatpush.msra.mxu0 0.0
        %7492 = vmatpush.msra.mxu0 0.0
        %7493 = vmatpush.msra.mxu0 0.0
        %7494 = vmatpush.msra.mxu0 0.0
        %7495 = vmatpush.msra.mxu0 0.0
        %7496 = vmatpush.msra.mxu0 0.0
        %7497 = vmatpush.msra.mxu0 0.0
        %7498 = vmatpush.msra.mxu0 0.0
        %7499 = vmatpush.msra.mxu0 %v7398
        %7500 = vmatpush.msra.mxu0 %v7390
        %7501 = vmatpush.msra.mxu0 %v7382
        %7502 = vmatpush.msra.mxu0 %v7374
        %7503 = vmatmul.f32.gmra.mxu0 %v7425
        %v7504 = vpop.f32.mrf.mxu0
        %v7505 = vadd.f32 %v7411, %v7504
        %7506 = vdwg.mxu0
        %7507 = vmatpush.msra.mxu0 0.0
        %7508 = vmatpush.msra.mxu0 0.0
        %7509 = vmatpush.msra.mxu0 0.0
        %7510 = vmatpush.msra.mxu0 0.0
        %7511 = vmatpush.msra.mxu0 0.0
        %7512 = vmatpush.msra.mxu0 0.0
        %7513 = vmatpush.msra.mxu0 0.0
        %7514 = vmatpush.msra.mxu0 0.0
        %7515 = vmatpush.msra.mxu0 0.0
        %7516 = vmatpush.msra.mxu0 0.0
        %7517 = vmatpush.msra.mxu0 0.0
        %7518 = vmatpush.msra.mxu0 0.0
        %7519 = vmatpush.msra.mxu0 %v7399
        %7520 = vmatpush.msra.mxu0 %v7391
        %7521 = vmatpush.msra.mxu0 %v7383
        %7522 = vmatpush.msra.mxu0 %v7375
        %7523 = vmatmul.f32.gmra.mxu0 %v7425
        %v7524 = vpop.f32.mrf.mxu0
        %v7525 = vadd.f32 %v7412, %v7524
        %7526 = vdwg.mxu0
        %7527 = vmatpush.msra.mxu0 0.0
        %7528 = vmatpush.msra.mxu0 0.0
        %7529 = vmatpush.msra.mxu0 0.0
        %7530 = vmatpush.msra.mxu0 0.0
        %7531 = vmatpush.msra.mxu0 0.0
        %7532 = vmatpush.msra.mxu0 0.0
        %7533 = vmatpush.msra.mxu0 0.0
        %7534 = vmatpush.msra.mxu0 0.0
        %7535 = vmatpush.msra.mxu0 0.0
        %7536 = vmatpush.msra.mxu0 0.0
        %7537 = vmatpush.msra.mxu0 0.0
        %7538 = vmatpush.msra.mxu0 0.0
        %7539 = vmatpush.msra.mxu0 %v7400
        %7540 = vmatpush.msra.mxu0 %v7392
        %7541 = vmatpush.msra.mxu0 %v7384
        %7542 = vmatpush.msra.mxu0 %v7376
        %7543 = vmatmul.f32.gmra.mxu0 %v7425
        %v7544 = vpop.f32.mrf.mxu0
        %v7545 = vadd.f32 %v7413, %v7544
        %7546 = vdwg.mxu0
        %7547 = vmatpush.msra.mxu0 0.0
        %7548 = vmatpush.msra.mxu0 0.0
        %7549 = vmatpush.msra.mxu0 0.0
        %7550 = vmatpush.msra.mxu0 0.0
        %7551 = vmatpush.msra.mxu0 0.0
        %7552 = vmatpush.msra.mxu0 0.0
        %7553 = vmatpush.msra.mxu0 0.0
        %7554 = vmatpush.msra.mxu0 0.0
        %7555 = vmatpush.msra.mxu0 0.0
        %7556 = vmatpush.msra.mxu0 0.0
        %7557 = vmatpush.msra.mxu0 0.0
        %7558 = vmatpush.msra.mxu0 0.0
        %7559 = vmatpush.msra.mxu0 %v7401
        %7560 = vmatpush.msra.mxu0 %v7393
        %7561 = vmatpush.msra.mxu0 %v7385
        %7562 = vmatpush.msra.mxu0 %v7377
        %7563 = vmatmul.f32.gmra.mxu0 %v7425
        %v7564 = vpop.f32.mrf.mxu0
        %v7565 = vadd.f32 %v7414, %v7564
        %7566 = vdwg.mxu0
        %7567 = vmatpush.msra.mxu0 0.0
        %7568 = vmatpush.msra.mxu0 0.0
        %7569 = vmatpush.msra.mxu0 0.0
        %7570 = vmatpush.msra.mxu0 0.0
        %7571 = vmatpush.msra.mxu0 0.0
        %7572 = vmatpush.msra.mxu0 0.0
        %7573 = vmatpush.msra.mxu0 0.0
        %7574 = vmatpush.msra.mxu0 0.0
        %7575 = vmatpush.msra.mxu0 0.0
        %7576 = vmatpush.msra.mxu0 0.0
        %7577 = vmatpush.msra.mxu0 0.0
        %7578 = vmatpush.msra.mxu0 0.0
        %7579 = vmatpush.msra.mxu0 %v7402
        %7580 = vmatpush.msra.mxu0 %v7394
        %7581 = vmatpush.msra.mxu0 %v7386
        %7582 = vmatpush.msra.mxu0 %v7378
        %7583 = vmatmul.f32.gmra.mxu0 %v7425
        %v7584 = vpop.f32.mrf.mxu0
        %v7585 = vadd.f32 %v7415, %v7584
        %7586 = vdwg.mxu0
        %v7595 = vrot.slane %v7465, 7
        %v7596 = vrot.slane %v7485, 6
        %v7597 = vrot.slane %v7505, 5
        %v7598 = vrot.slane %v7525, 4
        %v7599 = vrot.slane %v7545, 3
        %v7600 = vrot.slane %v7565, 2
        %v7601 = vrot.slane %v7585, 1
        %vm7602 = vcmask 1040384
        %v7603 = vsel %vm7602, %v7445, %v7595
        %vm7604 = vcmask 1042434
        %v7605 = vsel %vm7604, %v7596, %v7597
        %v7606 = vsel %vm776, %v7603, %v7605
        %vm7607 = vcmask 1044484
        %v7608 = vsel %vm7607, %v7598, %v7599
        %vm7609 = vcmask 1046534
        %v7610 = vsel %vm7609, %v7600, %v7601
        %vm7611 = vcmask 1045508
        %v7612 = vsel %vm7611, %v7608, %v7610
        %v7613 = vsel %vm3204, %v7606, %v7612
        %7615 = vst [vmem:[%s413] sm:$0xff] %v7613
        %p7616 = scmp.lt.s32.totalorder %s23, 1
        %s7617 = scalar_select %p7616, %s23, 1
        %s7618 = smul.addr %s7617, 8
        %s7619 = scalar_lea.vmem %s9, %s7618
        // Predicated region
        $region77: #{forward.1} parent=55 // pred_check
          %p7620 = pneg %p235
        $region78: #{forward.1} parent=55 // pred_check_branch
          %7622 = sbr.rel (%p7620) target = $region80
        $region79: #{forward.1} parent=55 // pred_region
          _
        $region80: #{forward.1} parent=55 // pred_fallthru
          _
      $region56: #{forward.1} parent=5 // pred_fallthru
        _
      %p7623 = scmp.le.s32.totalorder 2, %s18
      // Predicated region
      $region81: #{forward.1} parent=5 // pred_check
        %p7624 = pneg %p7623
      $region82: #{forward.1} parent=5 // pred_check_branch
        %7626 = sbr.rel (%p7624) target = $region84
      $region83: #{forward.1} parent=5 // pred_region
        %s7627 = ssub.s32 %s18, 2
        // Predicated region
        $region85: #{forward.1} parent=83 // pred_check
          %p7628 = pneg %p241
        $region86: #{forward.1} parent=83 // pred_check_branch
          %7630 = sbr.rel (%p7628) target = $region88
        $region87: #{forward.1} parent=83 // pred_region
          %p7631 = scmp.lt.s32.totalorder %s24, 1
          %s7632 = scalar_select %p7631, %s24, 1
          %s7633 = smul.addr %s7632, 8
          %s7634 = scalar_lea.vmem %s9, %s7633
        $region88: #{forward.1} parent=83 // pred_fallthru
          _
      $region84: #{forward.1} parent=5 // pred_fallthru
        _
    $region6: #{forward.1} parent=1 // loop_footer
      %s22 = sadd.s32 1, %s18
    $region7: #{forward.1} parent=1 // loop_footer_branch
      %17 = sbr.rel target = $region3
    $region8: #{forward.1} parent=1 // loop_exit
      _
    %7635 = vsyncpa [#allocation3], 1
    %s7636 = scalar_lea.sflag [#allocation3], 1
    %7637 = vsyncpa %s7636, 1
    %7638 = vsyncpa [#allocation5], 1
    %7639 = vsyncpa [#allocation8], 1

</llo_original>
